<compile_context>
chip_gen: v7x
topology: tpu7x:2x2x1
jax: 0.10.0
libtpu: 0.0.40
codegen_flags: <defaults>
</compile_context>

<pallas_src>
import functools

import jax
import jax.numpy as jnp
from jax import lax
from jax.experimental import pallas as pl
from jax.experimental.pallas import tpu as pltpu


# ----------------------------------------------------------------------------
# TPU generation probe (only v7x has 2 TensorCores worth splitting M over)
# ----------------------------------------------------------------------------
@functools.lru_cache(maxsize=None)
def _has_two_tensorcores():
    try:
        kind = jax.devices()[0].device_kind.lower()
    except Exception:
        return False
    return ("v7" in kind) or ("tpu7" in kind)


# ----------------------------------------------------------------------------
# Tiled matmul + bias + activation (conv im2col hot path)
# ----------------------------------------------------------------------------
def _matmul_bias_act_kernel(x_ref, w_ref, b_ref, o_ref, *, act):
    y = jnp.dot(x_ref[...], w_ref[...],
                preferred_element_type=jnp.float32) + b_ref[...]
    if act == "relu":
        y = jnp.maximum(y, 0.0)
    o_ref[...] = y.astype(o_ref.dtype)


def matmul_bias_act(x, w, b, act="none", out_dtype=jnp.float32):
    M, K = x.shape
    N = w.shape[1]
    # M-split only pays off with 2 TensorCores (v7x) and a big-enough M;
    # on v5e/v6e the grid is a serial loop, so keep a single block.
    nb = 2 if (_has_two_tensorcores() and M >= 1024 and M % 16 == 0) else 1
    tm = M // nb
    kernel = functools.partial(_matmul_bias_act_kernel, act=act)
    return pl.pallas_call(
        kernel,
        out_shape=jax.ShapeDtypeStruct((M, N), out_dtype),
        grid=(nb,),
        in_specs=[
            pl.BlockSpec((tm, K), lambda i: (i, 0)),
            pl.BlockSpec((K, N), lambda i: (0, 0)),
            pl.BlockSpec((1, N), lambda i: (0, 0)),
        ],
        out_specs=pl.BlockSpec((tm, N), lambda i: (i, 0)),
        compiler_params=pltpu.CompilerParams(
            dimension_semantics=("parallel",) if nb > 1 else ("arbitrary",)),
    )(x, w, b.reshape(1, N))


# ----------------------------------------------------------------------------
# Visual backbone: 3x3 stride-2 conv via NHWC im2col (bf16 activations)
# ----------------------------------------------------------------------------
def conv3x3_s2_relu(x_nhwc, w_flat, b):
    # TODO(synk): patch flattening order must match the PyTorch conv weight
    # flattening if real SimREC (Darknet) weights are ever loaded.
    B = x_nhwc.shape[0]
    patches = lax.conv_general_dilated_patches(
        x_nhwc, filter_shape=(3, 3), window_strides=(2, 2), padding="SAME",
        dimension_numbers=("NHWC", "HWIO", "NHWC"))
    _, Ho, Wo, CK = patches.shape
    Kp = w_flat.shape[0]                       # contraction dim padded to %8
    p = patches.reshape(B * Ho * Wo, CK)       # bf16 patches (input is bf16)
    if Kp != CK:
        p = jnp.pad(p, ((0, 0), (0, Kp - CK)))
    y = matmul_bias_act(p, w_flat, b, act="relu", out_dtype=jnp.bfloat16)
    return y.reshape(B, Ho, Wo, w_flat.shape[1])


# ----------------------------------------------------------------------------
# One fused post-backbone kernel:
#   lang (mean-pool + tanh linear) -> fusion gates + 1x1 convs (scales 0, 2)
#   -> multi-scale merge (up = sublane broadcast, down = sublane mean)
#   -> bot proj + mask head (lane-dense (B, H0*W0) output)
#   -> top proj + attention + box head ((B, 4) output)
# ----------------------------------------------------------------------------
def _fused_post_kernel(f0g_ref, f2_ref, emb_ref,
                       lw_ref, lb_ref,
                       wg0_ref, bg0_ref, wc0_ref, bc0_ref,
                       wg2_ref, bg2_ref, wc2_ref, bc2_ref,
                       wbot_ref, bbot_ref, wtop_ref, btop_ref,
                       wkT_ref, wv_ref,
                       wbox_ref, bbox_ref, wm_ref, bm_ref,
                       box_ref, mask_ref, *, B, S2, P, scale):
    C = wc0_ref.shape[1]
    C0 = f0g_ref.shape[-1]
    C2 = f2_ref.shape[-1]

    # --- language encoder: mean-pool + tanh(linear) -> flat_lang_feat -------
    pooled = jnp.mean(emb_ref[...], axis=1)                         # (B, E)
    lang = jnp.tanh(jnp.dot(pooled, lw_ref[...],
                            preferred_element_type=jnp.float32) + lb_ref[...])

    # --- fusion gates (sigmoid in f32) --------------------------------------
    g0 = jax.nn.sigmoid(jnp.dot(lang, wg0_ref[...],
                                preferred_element_type=jnp.float32) + bg0_ref[...])
    g2 = jax.nn.sigmoid(jnp.dot(lang, wg2_ref[...],
                                preferred_element_type=jnp.float32) + bg2_ref[...])

    # --- fusion scale 0: cell-grouped (B, S2, P, C0), one (B*S2*P, C0) matmul
    f0 = f0g_ref[...]                                               # bf16
    gated0 = f0 * g0.astype(f0.dtype)[:, None, None, :]
    fused0 = jnp.dot(gated0.reshape(B * S2 * P, C0), wc0_ref[...],
                     preferred_element_type=jnp.float32) + bc0_ref[...]
    fused0 = jnp.maximum(fused0, 0.0).reshape(B, S2, P, C)          # f32

    # --- fusion scale 2: (B, S2, C2), one (B*S2, C2) matmul ------------------
    f2 = f2_ref[...]                                                # bf16
    gated2 = f2 * g2.astype(f2.dtype)[:, None, :]
    fused2 = jnp.dot(gated2.reshape(B * S2, C2), wc2_ref[...],
                     preferred_element_type=jnp.float32) + bc2_ref[...]
    fused2 = jnp.maximum(fused2, 0.0).reshape(B, S2, C)             # f32

    # --- multi-scale merge: nearest-up = sublane broadcast, avg-pool = mean -
    bot_in = fused0 + fused2[:, :, None, :]                         # (B,S2,P,C)
    down0 = jnp.mean(fused0, axis=2)                                # (B,S2,C)
    top_in = fused2 + down0                                         # (B,S2,C)

    # --- bot projection + mask head (lane-dense (B, S2*P) output) -----------
    bot = jnp.dot(bot_in.reshape(B * S2 * P, C).astype(jnp.bfloat16),
                  wbot_ref[...],
                  preferred_element_type=jnp.float32) + bbot_ref[...]
    bot = jnp.maximum(bot, 0.0).reshape(B, S2 * P, C)
    m = jnp.sum(bot * wm_ref[...], axis=-1) + bm_ref[...]           # (B, S2*P)
    mask_ref[...] = jax.nn.sigmoid(m)

    # --- top projection + attention + box head ------------------------------
    top = jnp.dot(top_in.reshape(B * S2, C).astype(jnp.bfloat16),
                  wtop_ref[...],
                  preferred_element_type=jnp.float32) + btop_ref[...]
    top = jnp.maximum(top, 0.0)                                     # (B*S2, C)
    top3 = top.reshape(B, S2, C)
    # Algebraic rewrite: kq = lang @ wk^T; score = <top, kq>.  The contraction
    # of the original q.k product is over the key/lang dim D, hence scale=1/sqrt(D).
    kq = jnp.dot(lang, wkT_ref[...], preferred_element_type=jnp.float32)  # (B,C)
    s = jnp.sum(top3 * kq[:, None, :], axis=-1, keepdims=True) * scale    # (B,S2,1)
    s_max = jnp.max(s, axis=1, keepdims=True)
    e = jnp.exp(s - s_max)
    p = e * pl.reciprocal(jnp.sum(e, axis=1, keepdims=True), approx=True)
    v = jnp.dot(top.astype(jnp.bfloat16), wv_ref[...],
                preferred_element_type=jnp.float32).reshape(B, S2, C)
    attended = top3 + v * p                                         # residual-modulated
    pooled_a = jnp.mean(attended, axis=1)                           # (B, C)
    box = jnp.dot(pooled_a, wbox_ref[...],
                  preferred_element_type=jnp.float32) + bbox_ref[...]
    box_ref[...] = jax.nn.sigmoid(box)                              # one (B,4) store


# ----------------------------------------------------------------------------
# Parameter init (deterministic, synthetic); MXU-facing weights stored in bf16
# ----------------------------------------------------------------------------
def init_params(key):
    ks = list(jax.random.split(key, 24))
    bf16 = jnp.bfloat16

    def w(k, shape, fan_in, dtype=jnp.float32):
        return (jax.random.normal(k, shape, jnp.float32) /
                jnp.sqrt(jnp.float32(fan_in))).astype(dtype)

    C_h, D_lang, E, vocab = 32, 32, 32, 100
    chans = [(3, 16), (16, 32), (32, 32)]
    p = {}
    ki = 0
    p["backbone"] = []
    for cin, cout in chans:
        ck = cin * 9
        ck_pad = ((ck + 7) // 8) * 8            # pad contraction dim to %8
        w_raw = w(ks[ki], (ck, cout), ck)       # real rows random ...
        w_pad = jnp.pad(w_raw, ((0, ck_pad - ck), (0, 0))).astype(bf16)  # ... pad rows zero
        p["backbone"].append((w_pad, jnp.zeros((cout,), jnp.float32)))
        ki += 1
    p["lang_emb"] = w(ks[ki], (vocab, E), E); ki += 1
    p["lang_w"] = w(ks[ki], (E, D_lang), E); ki += 1
    p["lang_b"] = jnp.zeros((D_lang,), jnp.float32)
    p["fusion"] = []
    for _, cout in chans:
        w_gate = w(ks[ki], (D_lang, cout), D_lang); ki += 1
        w_conv = w(ks[ki], (cout, C_h), cout, bf16); ki += 1
        p["fusion"].append((w_gate, jnp.zeros((cout,), jnp.float32),
                            w_conv, jnp.zeros((C_h,), jnp.float32)))
    p["ms_bot_w"] = w(ks[ki], (C_h, C_h), C_h, bf16); ki += 1
    p["ms_bot_b"] = jnp.zeros((C_h,), jnp.float32)
    p["ms_top_w"] = w(ks[ki], (C_h, C_h), C_h, bf16); ki += 1
    p["ms_top_b"] = jnp.zeros((C_h,), jnp.float32)
    p["attn_wk"] = w(ks[ki], (C_h, D_lang), C_h); ki += 1
    p["attn_wv"] = w(ks[ki], (C_h, C_h), C_h, bf16); ki += 1
    p["box_w"] = w(ks[ki], (C_h, 4), C_h); ki += 1
    p["box_b"] = jnp.zeros((4,), jnp.float32)
    p["mask_w"] = w(ks[ki], (C_h, 1), C_h); ki += 1
    p["mask_b"] = jnp.zeros((1,), jnp.float32)
    return p


# ----------------------------------------------------------------------------
# SimREC forward (eval mode): returns (box, mask)
# ----------------------------------------------------------------------------
def simrec_forward(params, x_nchw, tokens):
    # visual_encoder: NHWC throughout, bf16 activations end-to-end
    # TODO(synk): real SimREC backbone is CSPDarknet; simplified to 3 strided convs.
    x = jnp.transpose(x_nchw, (0, 2, 3, 1)).astype(jnp.bfloat16)
    feats = []
    for (w_c, b_c) in params["backbone"]:
        x = conv3x3_s2_relu(x, w_c, b_c)
        feats.append(x)

    # TODO(synk): middle-scale fusion is skipped by the simplified multi-scale
    # merge (only scales 0 and 2 feed the heads), so it is not computed at all.
    f0, _f1, f2 = feats
    B, H0, W0, C0 = f0.shape
    _, H2, W2, C2 = f2.shape
    r = H0 // H2
    S2, P = H2 * W2, r * r

    # Cell-grouped layout: (B, coarse_cell, r*r, C0).  Lets the kernel do the
    # nearest-upsample as a sublane broadcast and the avg-pool as a sublane
    # mean (no jnp.repeat / jnp.mean HBM round trips).  Tiny XLA permute.
    f0g = (f0.reshape(B, H2, r, W2, r, C0)
             .transpose(0, 1, 3, 2, 4, 5)
             .reshape(B, S2, P, C0))
    f2f = f2.reshape(B, S2, C2)

    # TODO(synk): real SimREC lang encoder is an LSTM; replaced by embedding
    # mean-pool + tanh(linear) producing flat_lang_feat (gather stays in XLA).
    emb = jnp.take(params["lang_emb"], tokens, axis=0)      # (B, T, E)

    C = params["ms_bot_w"].shape[1]
    D = params["lang_w"].shape[1]
    wg0, bg0, wc0, bc0 = params["fusion"][0]
    wg2, bg2, wc2, bc2 = params["fusion"][2]

    # TODO(synk): at real SimREC resolution (416x416, C up to 1024) this
    # whole-array no-grid call must get an HW-tiled grid axis and an explicit
    # vmem_limit_bytes sized against v7x's 64 MiB VMEM.
    kernel = functools.partial(_fused_post_kernel, B=B, S2=S2, P=P,
                               scale=1.0 / (D ** 0.5))
    box, mask_flat = pl.pallas_call(
        kernel,
        out_shape=(jax.ShapeDtypeStruct((B, 4), jnp.float32),
                   jax.ShapeDtypeStruct((B, S2 * P), jnp.float32)),
    )(f0g, f2f, emb,
      params["lang_w"], params["lang_b"].reshape(1, D),
      wg0, bg0.reshape(1, C0), wc0, bc0.reshape(1, C),
      wg2, bg2.reshape(1, C2), wc2, bc2.reshape(1, C),
      params["ms_bot_w"], params["ms_bot_b"].reshape(1, C),
      params["ms_top_w"], params["ms_top_b"].reshape(1, C),
      params["attn_wk"].T, params["attn_wv"],
      params["box_w"], params["box_b"].reshape(1, 4),
      params["mask_w"].reshape(1, C), params["mask_b"].reshape(1, 1))

    # Un-group the cell-grouped mask back to row-major (B, H0, W0).
    mask = (mask_flat.reshape(B, H2, W2, r, r)
                     .transpose(0, 1, 3, 2, 4)
                     .reshape(B, H0, W0))
    return box, mask


if __name__ == "__main__":
    key = jax.random.PRNGKey(0)
    k_img, k_tok, k_par = jax.random.split(key, 3)

    B, H, W, T = 2, 32, 32, 8
    x = jax.random.normal(k_img, (B, 3, H, W), jnp.float32)      # NCHW image
    y = jax.random.randint(k_tok, (B, T), 0, 100, jnp.int32)     # token ids

    params = init_params(k_par)
    fwd = jax.jit(simrec_forward)
    box, mask = fwd(params, x, y)
    jax.block_until_ready(box)
    jax.block_until_ready(mask)
    assert box.shape == (B, 4) and mask.shape == (B, H // 2, W // 2)
    print("KERNEL_OK")
</pallas_src>

<mosaic_0001>
module attributes {stable_mosaic.version = 11 : i64} {
  func.func @_matmul_bias_act_kernel(%arg0: i32, %arg1: memref<512x32xbf16, #tpu.memory_space<vmem>>, %arg2: memref<32x16xbf16, #tpu.memory_space<vmem>>, %arg3: memref<1x16xf32, #tpu.memory_space<vmem>>, %arg4: memref<512x16xbf16, #tpu.memory_space<vmem>>) attributes {dimension_semantics = [#tpu.dimension_semantics<arbitrary>], iteration_bounds = array<i64: 1>, scalar_prefetch = 0 : i64, scratch_operands = 0 : i64, tpu.core_type = #tpu.core_type<tc>, window_params = [{transform_indices = @transform_0, window_bounds = array<i64: 512, 32>}, {pipeline_mode = #tpu.pipeline_mode<synchronous>, transform_indices = @transform_1, window_bounds = array<i64: 32, 16>}, {pipeline_mode = #tpu.pipeline_mode<synchronous>, transform_indices = @transform_2, window_bounds = array<i64: 1, 16>}, {transform_indices = @transform_3, window_bounds = array<i64: 512, 16>}]} {
    %c0 = arith.constant 0 : index
    %c0_0 = arith.constant 0 : index
    %0 = vector.load %arg1[%c0, %c0_0] : memref<512x32xbf16, #tpu.memory_space<vmem>>, vector<512x32xbf16>
    %c0_1 = arith.constant 0 : index
    %c0_2 = arith.constant 0 : index
    %1 = vector.load %arg2[%c0_1, %c0_2] : memref<32x16xbf16, #tpu.memory_space<vmem>>, vector<32x16xbf16>
    %cst = arith.constant dense<0.000000e+00> : vector<512x16xf32>
    %2 = tpu.matmul %0, %1, %cst {dimension_numbers = #tpu.dot_dimension_numbers<[1], [0], [0], [1], [0, 0, 1, 1], [], []>} : vector<512x32xbf16>, vector<32x16xbf16>, vector<512x16xf32> -> vector<512x16xf32>
    %c0_3 = arith.constant 0 : index
    %c0_4 = arith.constant 0 : index
    %3 = vector.load %arg3[%c0_3, %c0_4] : memref<1x16xf32, #tpu.memory_space<vmem>>, vector<1x16xf32>
    %4 = vector.broadcast %3 : vector<1x16xf32> to vector<512x16xf32>
    %5 = arith.addf %2, %4 : vector<512x16xf32>
    %cst_5 = arith.constant 0.000000e+00 : f32
    %6 = vector.broadcast %cst_5 : f32 to vector<512x16xf32>
    %7 = arith.maximumf %5, %6 : vector<512x16xf32>
    %8 = arith.truncf %7 : vector<512x16xf32> to vector<512x16xbf16>
    %c0_6 = arith.constant 0 : index
    %c0_7 = arith.constant 0 : index
    %9 = vector.load %arg4[%c0_6, %c0_7] : memref<512x16xbf16, #tpu.memory_space<vmem>>, vector<512x16xbf16>
    tpu.vector_store %arg4[%c0_6, %c0_7], %8 {strides = array<i32>} : memref<512x16xbf16, #tpu.memory_space<vmem>>, vector<512x16xbf16>,
    return
  }
  func.func @transform_0(%arg0: i32) -> (i32, i32) {
    %c0_i32 = arith.constant 0 : i32
    %c0_i32_0 = arith.constant 0 : i32
    return %arg0, %c0_i32 : i32, i32
  }
  func.func @transform_1(%arg0: i32) -> (i32, i32) {
    %c0_i32 = arith.constant 0 : i32
    %c0_i32_0 = arith.constant 0 : i32
    %c0_i32_1 = arith.constant 0 : i32
    return %c0_i32, %c0_i32_0 : i32, i32
  }
  func.func @transform_2(%arg0: i32) -> (i32, i32) {
    %c0_i32 = arith.constant 0 : i32
    %c0_i32_0 = arith.constant 0 : i32
    %c0_i32_1 = arith.constant 0 : i32
    return %c0_i32, %c0_i32_0 : i32, i32
  }
  func.func @transform_3(%arg0: i32) -> (i32, i32) {
    %c0_i32 = arith.constant 0 : i32
    %c0_i32_0 = arith.constant 0 : i32
    return %arg0, %c0_i32 : i32, i32
  }
}

module attributes {stable_mosaic.version = 11 : i64} {
  func.func @_matmul_bias_act_kernel(%arg0: i32, %arg1: memref<128x144xbf16, #tpu.memory_space<vmem>>, %arg2: memref<144x32xbf16, #tpu.memory_space<vmem>>, %arg3: memref<1x32xf32, #tpu.memory_space<vmem>>, %arg4: memref<128x32xbf16, #tpu.memory_space<vmem>>) attributes {dimension_semantics = [#tpu.dimension_semantics<arbitrary>], iteration_bounds = array<i64: 1>, scalar_prefetch = 0 : i64, scratch_operands = 0 : i64, tpu.core_type = #tpu.core_type<tc>, window_params = [{transform_indices = @transform_0, window_bounds = array<i64: 128, 144>}, {pipeline_mode = #tpu.pipeline_mode<synchronous>, transform_indices = @transform_1, window_bounds = array<i64: 144, 32>}, {pipeline_mode = #tpu.pipeline_mode<synchronous>, transform_indices = @transform_2, window_bounds = array<i64: 1, 32>}, {transform_indices = @transform_3, window_bounds = array<i64: 128, 32>}]} {
    %c0 = arith.constant 0 : index
    %c0_0 = arith.constant 0 : index
    %0 = vector.load %arg1[%c0, %c0_0] : memref<128x144xbf16, #tpu.memory_space<vmem>>, vector<128x144xbf16>
    %c0_1 = arith.constant 0 : index
    %c0_2 = arith.constant 0 : index
    %1 = vector.load %arg2[%c0_1, %c0_2] : memref<144x32xbf16, #tpu.memory_space<vmem>>, vector<144x32xbf16>
    %cst = arith.constant dense<0.000000e+00> : vector<128x32xf32>
    %2 = tpu.matmul %0, %1, %cst {dimension_numbers = #tpu.dot_dimension_numbers<[1], [0], [0], [1], [0, 0, 1, 1], [], []>} : vector<128x144xbf16>, vector<144x32xbf16>, vector<128x32xf32> -> vector<128x32xf32>
    %c0_3 = arith.constant 0 : index
    %c0_4 = arith.constant 0 : index
    %3 = vector.load %arg3[%c0_3, %c0_4] : memref<1x32xf32, #tpu.memory_space<vmem>>, vector<1x32xf32>
    %4 = vector.broadcast %3 : vector<1x32xf32> to vector<128x32xf32>
    %5 = arith.addf %2, %4 : vector<128x32xf32>
    %cst_5 = arith.constant 0.000000e+00 : f32
    %6 = vector.broadcast %cst_5 : f32 to vector<128x32xf32>
    %7 = arith.maximumf %5, %6 : vector<128x32xf32>
    %8 = arith.truncf %7 : vector<128x32xf32> to vector<128x32xbf16>
    %c0_6 = arith.constant 0 : index
    %c0_7 = arith.constant 0 : index
    %9 = vector.load %arg4[%c0_6, %c0_7] : memref<128x32xbf16, #tpu.memory_space<vmem>>, vector<128x32xbf16>
    tpu.vector_store %arg4[%c0_6, %c0_7], %8 {strides = array<i32>} : memref<128x32xbf16, #tpu.memory_space<vmem>>, vector<128x32xbf16>,
    return
  }
  func.func @transform_0(%arg0: i32) -> (i32, i32) {
    %c0_i32 = arith.constant 0 : i32
    %c0_i32_0 = arith.constant 0 : i32
    return %arg0, %c0_i32 : i32, i32
  }
  func.func @transform_1(%arg0: i32) -> (i32, i32) {
    %c0_i32 = arith.constant 0 : i32
    %c0_i32_0 = arith.constant 0 : i32
    %c0_i32_1 = arith.constant 0 : i32
    return %c0_i32, %c0_i32_0 : i32, i32
  }
  func.func @transform_2(%arg0: i32) -> (i32, i32) {
    %c0_i32 = arith.constant 0 : i32
    %c0_i32_0 = arith.constant 0 : i32
    %c0_i32_1 = arith.constant 0 : i32
    return %c0_i32, %c0_i32_0 : i32, i32
  }
  func.func @transform_3(%arg0: i32) -> (i32, i32) {
    %c0_i32 = arith.constant 0 : i32
    %c0_i32_0 = arith.constant 0 : i32
    return %arg0, %c0_i32 : i32, i32
  }
}

module attributes {stable_mosaic.version = 11 : i64} {
  func.func @_matmul_bias_act_kernel(%arg0: i32, %arg1: memref<32x288xbf16, #tpu.memory_space<vmem>>, %arg2: memref<288x32xbf16, #tpu.memory_space<vmem>>, %arg3: memref<1x32xf32, #tpu.memory_space<vmem>>, %arg4: memref<32x32xbf16, #tpu.memory_space<vmem>>) attributes {dimension_semantics = [#tpu.dimension_semantics<arbitrary>], iteration_bounds = array<i64: 1>, scalar_prefetch = 0 : i64, scratch_operands = 0 : i64, tpu.core_type = #tpu.core_type<tc>, window_params = [{transform_indices = @transform_0, window_bounds = array<i64: 32, 288>}, {pipeline_mode = #tpu.pipeline_mode<synchronous>, transform_indices = @transform_1, window_bounds = array<i64: 288, 32>}, {pipeline_mode = #tpu.pipeline_mode<synchronous>, transform_indices = @transform_2, window_bounds = array<i64: 1, 32>}, {transform_indices = @transform_3, window_bounds = array<i64: 32, 32>}]} {
    %c0 = arith.constant 0 : index
    %c0_0 = arith.constant 0 : index
    %0 = vector.load %arg1[%c0, %c0_0] : memref<32x288xbf16, #tpu.memory_space<vmem>>, vector<32x288xbf16>
    %c0_1 = arith.constant 0 : index
    %c0_2 = arith.constant 0 : index
    %1 = vector.load %arg2[%c0_1, %c0_2] : memref<288x32xbf16, #tpu.memory_space<vmem>>, vector<288x32xbf16>
    %cst = arith.constant dense<0.000000e+00> : vector<32x32xf32>
    %2 = tpu.matmul %0, %1, %cst {dimension_numbers = #tpu.dot_dimension_numbers<[1], [0], [0], [1], [0, 0, 1, 1], [], []>} : vector<32x288xbf16>, vector<288x32xbf16>, vector<32x32xf32> -> vector<32x32xf32>
    %c0_3 = arith.constant 0 : index
    %c0_4 = arith.constant 0 : index
    %3 = vector.load %arg3[%c0_3, %c0_4] : memref<1x32xf32, #tpu.memory_space<vmem>>, vector<1x32xf32>
    %4 = vector.broadcast %3 : vector<1x32xf32> to vector<32x32xf32>
    %5 = arith.addf %2, %4 : vector<32x32xf32>
    %cst_5 = arith.constant 0.000000e+00 : f32
    %6 = vector.broadcast %cst_5 : f32 to vector<32x32xf32>
    %7 = arith.maximumf %5, %6 : vector<32x32xf32>
    %8 = arith.truncf %7 : vector<32x32xf32> to vector<32x32xbf16>
    %c0_6 = arith.constant 0 : index
    %c0_7 = arith.constant 0 : index
    %9 = vector.load %arg4[%c0_6, %c0_7] : memref<32x32xbf16, #tpu.memory_space<vmem>>, vector<32x32xbf16>
    tpu.vector_store %arg4[%c0_6, %c0_7], %8 {strides = array<i32>} : memref<32x32xbf16, #tpu.memory_space<vmem>>, vector<32x32xbf16>,
    return
  }
  func.func @transform_0(%arg0: i32) -> (i32, i32) {
    %c0_i32 = arith.constant 0 : i32
    %c0_i32_0 = arith.constant 0 : i32
    return %arg0, %c0_i32 : i32, i32
  }
  func.func @transform_1(%arg0: i32) -> (i32, i32) {
    %c0_i32 = arith.constant 0 : i32
    %c0_i32_0 = arith.constant 0 : i32
    %c0_i32_1 = arith.constant 0 : i32
    return %c0_i32, %c0_i32_0 : i32, i32
  }
  func.func @transform_2(%arg0: i32) -> (i32, i32) {
    %c0_i32 = arith.constant 0 : i32
    %c0_i32_0 = arith.constant 0 : i32
    %c0_i32_1 = arith.constant 0 : i32
    return %c0_i32, %c0_i32_0 : i32, i32
  }
  func.func @transform_3(%arg0: i32) -> (i32, i32) {
    %c0_i32 = arith.constant 0 : i32
    %c0_i32_0 = arith.constant 0 : i32
    return %arg0, %c0_i32 : i32, i32
  }
}

module attributes {stable_mosaic.version = 11 : i64} {
  func.func @_fused_post_kernel(%arg0: memref<2x16x16x16xbf16, #tpu.memory_space<vmem>>, %arg1: memref<2x16x32xbf16, #tpu.memory_space<vmem>>, %arg2: memref<2x8x32xf32, #tpu.memory_space<vmem>>, %arg3: memref<32x32xf32, #tpu.memory_space<vmem>>, %arg4: memref<1x32xf32, #tpu.memory_space<vmem>>, %arg5: memref<32x16xf32, #tpu.memory_space<vmem>>, %arg6: memref<1x16xf32, #tpu.memory_space<vmem>>, %arg7: memref<16x32xbf16, #tpu.memory_space<vmem>>, %arg8: memref<1x32xf32, #tpu.memory_space<vmem>>, %arg9: memref<32x32xf32, #tpu.memory_space<vmem>>, %arg10: memref<1x32xf32, #tpu.memory_space<vmem>>, %arg11: memref<32x32xbf16, #tpu.memory_space<vmem>>, %arg12: memref<1x32xf32, #tpu.memory_space<vmem>>, %arg13: memref<32x32xbf16, #tpu.memory_space<vmem>>, %arg14: memref<1x32xf32, #tpu.memory_space<vmem>>, %arg15: memref<32x32xbf16, #tpu.memory_space<vmem>>, %arg16: memref<1x32xf32, #tpu.memory_space<vmem>>, %arg17: memref<32x32xf32, #tpu.memory_space<vmem>>, %arg18: memref<32x32xbf16, #tpu.memory_space<vmem>>, %arg19: memref<32x4xf32, #tpu.memory_space<vmem>>, %arg20: memref<1x4xf32, #tpu.memory_space<vmem>>, %arg21: memref<1x32xf32, #tpu.memory_space<vmem>>, %arg22: memref<1x1xf32, #tpu.memory_space<vmem>>, %arg23: memref<2x4xf32, #tpu.memory_space<vmem>>, %arg24: memref<2x256xf32, #tpu.memory_space<vmem>>) attributes {dimension_semantics = [], scalar_prefetch = 0 : i64, scratch_operands = 0 : i64, tpu.core_type = #tpu.core_type<tc>} {
    %c0 = arith.constant 0 : index
    %c0_0 = arith.constant 0 : index
    %c0_1 = arith.constant 0 : index
    %0 = vector.load %arg2[%c0, %c0_0, %c0_1] : memref<2x8x32xf32, #tpu.memory_space<vmem>>, vector<2x8x32xf32>
    %cst = arith.constant dense<0.000000e+00> : vector<2x32xf32>
    %1 = vector.multi_reduction <add>, %0, %cst [1] : vector<2x8x32xf32> to vector<2x32xf32>
    %cst_2 = arith.constant 8.000000e+00 : f32
    %2 = vector.broadcast %cst_2 : f32 to vector<2x32xf32>
    %3 = arith.divf %1, %2 : vector<2x32xf32>
    %c0_3 = arith.constant 0 : index
    %c0_4 = arith.constant 0 : index
    %4 = vector.load %arg3[%c0_3, %c0_4] : memref<32x32xf32, #tpu.memory_space<vmem>>, vector<32x32xf32>
    %cst_5 = arith.constant dense<0.000000e+00> : vector<2x32xf32>
    %5 = tpu.matmul %3, %4, %cst_5 {dimension_numbers = #tpu.dot_dimension_numbers<[1], [0], [0], [1], [0, 0, 1, 1], [], []>} : vector<2x32xf32>, vector<32x32xf32>, vector<2x32xf32> -> vector<2x32xf32>
    %c0_6 = arith.constant 0 : index
    %c0_7 = arith.constant 0 : index
    %6 = vector.load %arg4[%c0_6, %c0_7] : memref<1x32xf32, #tpu.memory_space<vmem>>, vector<1x32xf32>
    %7 = vector.broadcast %6 : vector<1x32xf32> to vector<2x32xf32>
    %8 = arith.addf %5, %7 : vector<2x32xf32>
    %9 = math.tanh %8 : vector<2x32xf32>
    %c0_8 = arith.constant 0 : index
    %c0_9 = arith.constant 0 : index
    %10 = vector.load %arg5[%c0_8, %c0_9] : memref<32x16xf32, #tpu.memory_space<vmem>>, vector<32x16xf32>
    %cst_10 = arith.constant dense<0.000000e+00> : vector<2x16xf32>
    %11 = tpu.matmul %9, %10, %cst_10 {dimension_numbers = #tpu.dot_dimension_numbers<[1], [0], [0], [1], [0, 0, 1, 1], [], []>} : vector<2x32xf32>, vector<32x16xf32>, vector<2x16xf32> -> vector<2x16xf32>
    %c0_11 = arith.constant 0 : index
    %c0_12 = arith.constant 0 : index
    %12 = vector.load %arg6[%c0_11, %c0_12] : memref<1x16xf32, #tpu.memory_space<vmem>>, vector<1x16xf32>
    %13 = vector.broadcast %12 : vector<1x16xf32> to vector<2x16xf32>
    %14 = arith.addf %11, %13 : vector<2x16xf32>
    %15 = arith.negf %14 : vector<2x16xf32>
    %16 = math.exp %15 : vector<2x16xf32>
    %cst_13 = arith.constant 1.000000e+00 : f32
    %17 = vector.broadcast %cst_13 : f32 to vector<2x16xf32>
    %18 = arith.addf %17, %16 : vector<2x16xf32>
    %19 = arith.divf %17, %18 : vector<2x16xf32>
    %c0_14 = arith.constant 0 : index
    %c0_15 = arith.constant 0 : index
    %20 = vector.load %arg9[%c0_14, %c0_15] : memref<32x32xf32, #tpu.memory_space<vmem>>, vector<32x32xf32>
    %cst_16 = arith.constant dense<0.000000e+00> : vector<2x32xf32>
    %21 = tpu.matmul %9, %20, %cst_16 {dimension_numbers = #tpu.dot_dimension_numbers<[1], [0], [0], [1], [0, 0, 1, 1], [], []>} : vector<2x32xf32>, vector<32x32xf32>, vector<2x32xf32> -> vector<2x32xf32>
    %c0_17 = arith.constant 0 : index
    %c0_18 = arith.constant 0 : index
    %22 = vector.load %arg10[%c0_17, %c0_18] : memref<1x32xf32, #tpu.memory_space<vmem>>, vector<1x32xf32>
    %23 = vector.broadcast %22 : vector<1x32xf32> to vector<2x32xf32>
    %24 = arith.addf %21, %23 : vector<2x32xf32>
    %25 = arith.negf %24 : vector<2x32xf32>
    %26 = math.exp %25 : vector<2x32xf32>
    %cst_19 = arith.constant 1.000000e+00 : f32
    %27 = vector.broadcast %cst_19 : f32 to vector<2x32xf32>
    %28 = arith.addf %27, %26 : vector<2x32xf32>
    %29 = arith.divf %27, %28 : vector<2x32xf32>
    %c0_20 = arith.constant 0 : index
    %c0_21 = arith.constant 0 : index
    %c0_22 = arith.constant 0 : index
    %c0_23 = arith.constant 0 : index
    %30 = vector.load %arg0[%c0_20, %c0_21, %c0_22, %c0_23] : memref<2x16x16x16xbf16, #tpu.memory_space<vmem>>, vector<2x16x16x16xbf16>
    %31 = arith.truncf %19 : vector<2x16xf32> to vector<2x16xbf16>
    %32 = vector.shape_cast %31 : vector<2x16xbf16> to vector<2x1x1x16xbf16>
    %33 = vector.broadcast %32 : vector<2x1x1x16xbf16> to vector<2x16x16x16xbf16>
    %34 = arith.mulf %30, %33 : vector<2x16x16x16xbf16>
    %35 = vector.shape_cast %34 : vector<2x16x16x16xbf16> to vector<512x16xbf16>
    %c0_24 = arith.constant 0 : index
    %c0_25 = arith.constant 0 : index
    %36 = vector.load %arg7[%c0_24, %c0_25] : memref<16x32xbf16, #tpu.memory_space<vmem>>, vector<16x32xbf16>
    %cst_26 = arith.constant dense<0.000000e+00> : vector<512x32xf32>
    %37 = tpu.matmul %35, %36, %cst_26 {dimension_numbers = #tpu.dot_dimension_numbers<[1], [0], [0], [1], [0, 0, 1, 1], [], []>} : vector<512x16xbf16>, vector<16x32xbf16>, vector<512x32xf32> -> vector<512x32xf32>
    %c0_27 = arith.constant 0 : index
    %c0_28 = arith.constant 0 : index
    %38 = vector.load %arg8[%c0_27, %c0_28] : memref<1x32xf32, #tpu.memory_space<vmem>>, vector<1x32xf32>
    %39 = vector.broadcast %38 : vector<1x32xf32> to vector<512x32xf32>
    %40 = arith.addf %37, %39 : vector<512x32xf32>
    %cst_29 = arith.constant 0.000000e+00 : f32
    %41 = vector.broadcast %cst_29 : f32 to vector<512x32xf32>
    %42 = arith.maximumf %40, %41 : vector<512x32xf32>
    %43 = vector.shape_cast %42 : vector<512x32xf32> to vector<2x16x16x32xf32>
    %c0_30 = arith.constant 0 : index
    %c0_31 = arith.constant 0 : index
    %c0_32 = arith.constant 0 : index
    %44 = vector.load %arg1[%c0_30, %c0_31, %c0_32] : memref<2x16x32xbf16, #tpu.memory_space<vmem>>, vector<2x16x32xbf16>
    %45 = arith.truncf %29 : vector<2x32xf32> to vector<2x32xbf16>
    %46 = vector.shape_cast %45 : vector<2x32xbf16> to vector<2x1x32xbf16>
    %47 = vector.broadcast %46 : vector<2x1x32xbf16> to vector<2x16x32xbf16>
    %48 = arith.mulf %44, %47 : vector<2x16x32xbf16>
    %49 = vector.shape_cast %48 : vector<2x16x32xbf16> to vector<32x32xbf16>
    %c0_33 = arith.constant 0 : index
    %c0_34 = arith.constant 0 : index
    %50 = vector.load %arg11[%c0_33, %c0_34] : memref<32x32xbf16, #tpu.memory_space<vmem>>, vector<32x32xbf16>
    %cst_35 = arith.constant dense<0.000000e+00> : vector<32x32xf32>
    %51 = tpu.matmul %49, %50, %cst_35 {dimension_numbers = #tpu.dot_dimension_numbers<[1], [0], [0], [1], [0, 0, 1, 1], [], []>} : vector<32x32xbf16>, vector<32x32xbf16>, vector<32x32xf32> -> vector<32x32xf32>
    %c0_36 = arith.constant 0 : index
    %c0_37 = arith.constant 0 : index
    %52 = vector.load %arg12[%c0_36, %c0_37] : memref<1x32xf32, #tpu.memory_space<vmem>>, vector<1x32xf32>
    %53 = vector.broadcast %52 : vector<1x32xf32> to vector<32x32xf32>
    %54 = arith.addf %51, %53 : vector<32x32xf32>
    %cst_38 = arith.constant 0.000000e+00 : f32
    %55 = vector.broadcast %cst_38 : f32 to vector<32x32xf32>
    %56 = arith.maximumf %54, %55 : vector<32x32xf32>
    %57 = vector.shape_cast %56 : vector<32x32xf32> to vector<2x16x32xf32>
    %58 = vector.shape_cast %57 : vector<2x16x32xf32> to vector<2x16x1x32xf32>
    %59 = vector.broadcast %58 : vector<2x16x1x32xf32> to vector<2x16x16x32xf32>
    %60 = arith.addf %43, %59 : vector<2x16x16x32xf32>
    %cst_39 = arith.constant dense<0.000000e+00> : vector<2x16x32xf32>
    %61 = vector.multi_reduction <add>, %43, %cst_39 [2] : vector<2x16x16x32xf32> to vector<2x16x32xf32>
    %cst_40 = arith.constant 1.600000e+01 : f32
    %62 = vector.broadcast %cst_40 : f32 to vector<2x16x32xf32>
    %63 = arith.divf %61, %62 : vector<2x16x32xf32>
    %64 = arith.addf %57, %63 : vector<2x16x32xf32>
    %65 = vector.shape_cast %60 : vector<2x16x16x32xf32> to vector<512x32xf32>
    %66 = arith.truncf %65 : vector<512x32xf32> to vector<512x32xbf16>
    %c0_41 = arith.constant 0 : index
    %c0_42 = arith.constant 0 : index
    %67 = vector.load %arg13[%c0_41, %c0_42] : memref<32x32xbf16, #tpu.memory_space<vmem>>, vector<32x32xbf16>
    %cst_43 = arith.constant dense<0.000000e+00> : vector<512x32xf32>
    %68 = tpu.matmul %66, %67, %cst_43 {dimension_numbers = #tpu.dot_dimension_numbers<[1], [0], [0], [1], [0, 0, 1, 1], [], []>} : vector<512x32xbf16>, vector<32x32xbf16>, vector<512x32xf32> -> vector<512x32xf32>
    %c0_44 = arith.constant 0 : index
    %c0_45 = arith.constant 0 : index
    %69 = vector.load %arg14[%c0_44, %c0_45] : memref<1x32xf32, #tpu.memory_space<vmem>>, vector<1x32xf32>
    %70 = vector.broadcast %69 : vector<1x32xf32> to vector<512x32xf32>
    %71 = arith.addf %68, %70 : vector<512x32xf32>
    %cst_46 = arith.constant 0.000000e+00 : f32
    %72 = vector.broadcast %cst_46 : f32 to vector<512x32xf32>
    %73 = arith.maximumf %71, %72 : vector<512x32xf32>
    %74 = vector.shape_cast %73 : vector<512x32xf32> to vector<2x256x32xf32>
    %c0_47 = arith.constant 0 : index
    %c0_48 = arith.constant 0 : index
    %75 = vector.load %arg21[%c0_47, %c0_48] : memref<1x32xf32, #tpu.memory_space<vmem>>, vector<1x32xf32>
    %76 = vector.shape_cast %75 : vector<1x32xf32> to vector<1x1x32xf32>
    %77 = vector.broadcast %76 : vector<1x1x32xf32> to vector<2x256x32xf32>
    %78 = arith.mulf %74, %77 : vector<2x256x32xf32>
    %cst_49 = arith.constant dense<0.000000e+00> : vector<2x256xf32>
    %79 = vector.multi_reduction <add>, %78, %cst_49 [2] : vector<2x256x32xf32> to vector<2x256xf32>
    %c0_50 = arith.constant 0 : index
    %c0_51 = arith.constant 0 : index
    %80 = vector.load %arg22[%c0_50, %c0_51] : memref<1x1xf32, #tpu.memory_space<vmem>>, vector<1x1xf32>
    %81 = vector.broadcast %80 : vector<1x1xf32> to vector<2x256xf32>
    %82 = arith.addf %79, %81 : vector<2x256xf32>
    %83 = arith.negf %82 : vector<2x256xf32>
    %84 = math.exp %83 : vector<2x256xf32>
    %cst_52 = arith.constant 1.000000e+00 : f32
    %85 = vector.broadcast %cst_52 : f32 to vector<2x256xf32>
    %86 = arith.addf %85, %84 : vector<2x256xf32>
    %87 = arith.divf %85, %86 : vector<2x256xf32>
    %c0_53 = arith.constant 0 : index
    %c0_54 = arith.constant 0 : index
    %88 = vector.load %arg24[%c0_53, %c0_54] : memref<2x256xf32, #tpu.memory_space<vmem>>, vector<2x256xf32>
    tpu.vector_store %arg24[%c0_53, %c0_54], %87 {strides = array<i32>} : memref<2x256xf32, #tpu.memory_space<vmem>>, vector<2x256xf32>,
    %89 = vector.shape_cast %64 : vector<2x16x32xf32> to vector<32x32xf32>
    %90 = arith.truncf %89 : vector<32x32xf32> to vector<32x32xbf16>
    %c0_55 = arith.constant 0 : index
    %c0_56 = arith.constant 0 : index
    %91 = vector.load %arg15[%c0_55, %c0_56] : memref<32x32xbf16, #tpu.memory_space<vmem>>, vector<32x32xbf16>
    %cst_57 = arith.constant dense<0.000000e+00> : vector<32x32xf32>
    %92 = tpu.matmul %90, %91, %cst_57 {dimension_numbers = #tpu.dot_dimension_numbers<[1], [0], [0], [1], [0, 0, 1, 1], [], []>} : vector<32x32xbf16>, vector<32x32xbf16>, vector<32x32xf32> -> vector<32x32xf32>
    %c0_58 = arith.constant 0 : index
    %c0_59 = arith.constant 0 : index
    %93 = vector.load %arg16[%c0_58, %c0_59] : memref<1x32xf32, #tpu.memory_space<vmem>>, vector<1x32xf32>
    %94 = vector.broadcast %93 : vector<1x32xf32> to vector<32x32xf32>
    %95 = arith.addf %92, %94 : vector<32x32xf32>
    %cst_60 = arith.constant 0.000000e+00 : f32
    %96 = vector.broadcast %cst_60 : f32 to vector<32x32xf32>
    %97 = arith.maximumf %95, %96 : vector<32x32xf32>
    %98 = vector.shape_cast %97 : vector<32x32xf32> to vector<2x16x32xf32>
    %c0_61 = arith.constant 0 : index
    %c0_62 = arith.constant 0 : index
    %99 = vector.load %arg17[%c0_61, %c0_62] : memref<32x32xf32, #tpu.memory_space<vmem>>, vector<32x32xf32>
    %cst_63 = arith.constant dense<0.000000e+00> : vector<2x32xf32>
    %100 = tpu.matmul %9, %99, %cst_63 {dimension_numbers = #tpu.dot_dimension_numbers<[1], [0], [0], [1], [0, 0, 1, 1], [], []>} : vector<2x32xf32>, vector<32x32xf32>, vector<2x32xf32> -> vector<2x32xf32>
    %101 = vector.shape_cast %100 : vector<2x32xf32> to vector<2x1x32xf32>
    %102 = vector.broadcast %101 : vector<2x1x32xf32> to vector<2x16x32xf32>
    %103 = arith.mulf %98, %102 : vector<2x16x32xf32>
    %cst_64 = arith.constant dense<0.000000e+00> : vector<2x16xf32>
    %104 = vector.multi_reduction <add>, %103, %cst_64 [2] : vector<2x16x32xf32> to vector<2x16xf32>
    %105 = vector.shape_cast %104 : vector<2x16xf32> to vector<2x16x1xf32>
    %cst_65 = arith.constant 0.176776692 : f32
    %106 = vector.broadcast %cst_65 : f32 to vector<2x16x1xf32>
    %107 = arith.mulf %105, %106 : vector<2x16x1xf32>
    %cst_66 = arith.constant dense<0xFF800000> : vector<2x1xf32>
    %108 = vector.multi_reduction <maximumf>, %107, %cst_66 [1] : vector<2x16x1xf32> to vector<2x1xf32>
    %109 = vector.shape_cast %108 : vector<2x1xf32> to vector<2x1x1xf32>
    %110 = vector.broadcast %109 : vector<2x1x1xf32> to vector<2x16x1xf32>
    %111 = arith.subf %107, %110 : vector<2x16x1xf32>
    %112 = math.exp %111 : vector<2x16x1xf32>
    %cst_67 = arith.constant dense<0.000000e+00> : vector<2x1xf32>
    %113 = vector.multi_reduction <add>, %112, %cst_67 [1] : vector<2x16x1xf32> to vector<2x1xf32>
    %114 = vector.shape_cast %113 : vector<2x1xf32> to vector<2x1x1xf32>
    %115 = tpu.reciprocal %114 {approx = true} : vector<2x1x1xf32> -> vector<2x1x1xf32>
    %116 = vector.broadcast %115 : vector<2x1x1xf32> to vector<2x16x1xf32>
    %117 = arith.mulf %112, %116 : vector<2x16x1xf32>
    %118 = arith.truncf %97 : vector<32x32xf32> to vector<32x32xbf16>
    %c0_68 = arith.constant 0 : index
    %c0_69 = arith.constant 0 : index
    %119 = vector.load %arg18[%c0_68, %c0_69] : memref<32x32xbf16, #tpu.memory_space<vmem>>, vector<32x32xbf16>
    %cst_70 = arith.constant dense<0.000000e+00> : vector<32x32xf32>
    %120 = tpu.matmul %118, %119, %cst_70 {dimension_numbers = #tpu.dot_dimension_numbers<[1], [0], [0], [1], [0, 0, 1, 1], [], []>} : vector<32x32xbf16>, vector<32x32xbf16>, vector<32x32xf32> -> vector<32x32xf32>
    %121 = vector.shape_cast %120 : vector<32x32xf32> to vector<2x16x32xf32>
    %122 = vector.broadcast %117 : vector<2x16x1xf32> to vector<2x16x32xf32>
    %123 = arith.mulf %121, %122 : vector<2x16x32xf32>
    %124 = arith.addf %98, %123 : vector<2x16x32xf32>
    %cst_71 = arith.constant dense<0.000000e+00> : vector<2x32xf32>
    %125 = vector.multi_reduction <add>, %124, %cst_71 [1] : vector<2x16x32xf32> to vector<2x32xf32>
    %cst_72 = arith.constant 1.600000e+01 : f32
    %126 = vector.broadcast %cst_72 : f32 to vector<2x32xf32>
    %127 = arith.divf %125, %126 : vector<2x32xf32>
    %c0_73 = arith.constant 0 : index
    %c0_74 = arith.constant 0 : index
    %128 = vector.load %arg19[%c0_73, %c0_74] : memref<32x4xf32, #tpu.memory_space<vmem>>, vector<32x4xf32>
    %cst_75 = arith.constant dense<0.000000e+00> : vector<2x4xf32>
    %129 = tpu.matmul %127, %128, %cst_75 {dimension_numbers = #tpu.dot_dimension_numbers<[1], [0], [0], [1], [0, 0, 1, 1], [], []>} : vector<2x32xf32>, vector<32x4xf32>, vector<2x4xf32> -> vector<2x4xf32>
    %c0_76 = arith.constant 0 : index
    %c0_77 = arith.constant 0 : index
    %130 = vector.load %arg20[%c0_76, %c0_77] : memref<1x4xf32, #tpu.memory_space<vmem>>, vector<1x4xf32>
    %131 = vector.broadcast %130 : vector<1x4xf32> to vector<2x4xf32>
    %132 = arith.addf %129, %131 : vector<2x4xf32>
    %133 = arith.negf %132 : vector<2x4xf32>
    %134 = math.exp %133 : vector<2x4xf32>
    %cst_78 = arith.constant 1.000000e+00 : f32
    %135 = vector.broadcast %cst_78 : f32 to vector<2x4xf32>
    %136 = arith.addf %135, %134 : vector<2x4xf32>
    %137 = arith.divf %135, %136 : vector<2x4xf32>
    %c0_79 = arith.constant 0 : index
    %c0_80 = arith.constant 0 : index
    %138 = vector.load %arg23[%c0_79, %c0_80] : memref<2x4xf32, #tpu.memory_space<vmem>>, vector<2x4xf32>
    tpu.vector_store %arg23[%c0_79, %c0_80], %137 {strides = array<i32>} : memref<2x4xf32, #tpu.memory_space<vmem>>, vector<2x4xf32>,
    return
  }
}

</mosaic_0001>

<llo_original>
// kernel: simrec_forward.4
$region0: #{simrec_forward.4}
  #allocation0 [shape = 'u32[]', space=smem, size = 0x4, offset = 0x4, fixed_abs, tag = 'smem constant byte address 0x4 - core index']
  #allocation1 [shape = 'u32[144,128]{1,0:T(1,128)}', space=vmem, size = 0x12000, scoped, tag = 'internal scratch']
  %s0 = inlined_call_operand.vmem [shape: bf16[512,32], index: 0, kind: input, shape index: {}]
  %s1 = inlined_call_operand.vmem [shape: bf16[32,16], index: 1, kind: input, shape index: {}]
  %s2 = inlined_call_operand.vmem [shape: f32[1,16], index: 2, kind: input, shape index: {}]
  %s3 = inlined_call_operand.vmem [shape: bf16[512,16], index: 3, kind: output, shape index: {}]
  %s4 = sld [smem:[#allocation0]]
  $region22: #{simrec_forward.4} parent=0
    _
  %s6 = ssub.s32 1, %s4
  %s7 = scalar_select 0, %s6, %s4
  // Predicated region
  $region2: #{simrec_forward.4} parent=0 // pred_check
    _
  $region3: #{simrec_forward.4} parent=0 // pred_check_branch
    %9 = sbr.rel (0) target = $region5
  $region4: #{simrec_forward.4} parent=0 // pred_region
    _
  $region5: #{simrec_forward.4} parent=0 // pred_fallthru
    _
  // Predicated region
  $region6: #{simrec_forward.4} parent=0 // pred_check
    _
  $region7: #{simrec_forward.4} parent=0 // pred_check_branch
    %11 = sbr.rel (0) target = $region9
  $region8: #{simrec_forward.4} parent=0 // pred_region
    _
  $region9: #{simrec_forward.4} parent=0 // pred_fallthru
    _
  // Predicated region
  $region10: #{simrec_forward.4} parent=0 // pred_check
    _
  $region11: #{simrec_forward.4} parent=0 // pred_check_branch
    %13 = sbr.rel (0) target = $region13
  $region12: #{simrec_forward.4} parent=0 // pred_region
    _
  $region13: #{simrec_forward.4} parent=0 // pred_fallthru
    _
  %v15 = vld [vmem:[%s0] sm:$0xf]
  %v16 = vld [vmem:[%s0 + $0x4] sm:$0xf]
  %v17 = vld [vmem:[%s0 + $0x8] sm:$0xf]
  %v18 = vld [vmem:[%s0 + $0xc] sm:$0xf]
  %v19 = vld [vmem:[%s0 + $0x10] sm:$0xf]
  %v20 = vld [vmem:[%s0 + $0x14] sm:$0xf]
  %v21 = vld [vmem:[%s0 + $0x18] sm:$0xf]
  %v22 = vld [vmem:[%s0 + $0x1c] sm:$0xf]
  %v23 = vld [vmem:[%s0 + $0x20] sm:$0xf]
  %v24 = vld [vmem:[%s0 + $0x24] sm:$0xf]
  %v25 = vld [vmem:[%s0 + $0x28] sm:$0xf]
  %v26 = vld [vmem:[%s0 + $0x2c] sm:$0xf]
  %v27 = vld [vmem:[%s0 + $0x30] sm:$0xf]
  %v28 = vld [vmem:[%s0 + $0x34] sm:$0xf]
  %v29 = vld [vmem:[%s0 + $0x38] sm:$0xf]
  %v30 = vld [vmem:[%s0 + $0x3c] sm:$0xf]
  %v31 = vld [vmem:[%s0 + $0x40] sm:$0xf]
  %v32 = vld [vmem:[%s0 + $0x44] sm:$0xf]
  %v33 = vld [vmem:[%s0 + $0x48] sm:$0xf]
  %v34 = vld [vmem:[%s0 + $0x4c] sm:$0xf]
  %v35 = vld [vmem:[%s0 + $0x50] sm:$0xf]
  %v36 = vld [vmem:[%s0 + $0x54] sm:$0xf]
  %v37 = vld [vmem:[%s0 + $0x58] sm:$0xf]
  %v38 = vld [vmem:[%s0 + $0x5c] sm:$0xf]
  %v39 = vld [vmem:[%s0 + $0x60] sm:$0xf]
  %v40 = vld [vmem:[%s0 + $0x64] sm:$0xf]
  %v41 = vld [vmem:[%s0 + $0x68] sm:$0xf]
  %v42 = vld [vmem:[%s0 + $0x6c] sm:$0xf]
  %v43 = vld [vmem:[%s0 + $0x70] sm:$0xf]
  %v44 = vld [vmem:[%s0 + $0x74] sm:$0xf]
  %v45 = vld [vmem:[%s0 + $0x78] sm:$0xf]
  %v46 = vld [vmem:[%s0 + $0x7c] sm:$0xf]
  %v47 = vld [vmem:[%s0 + $0x80] sm:$0xf]
  %v48 = vld [vmem:[%s0 + $0x84] sm:$0xf]
  %v49 = vld [vmem:[%s0 + $0x88] sm:$0xf]
  %v50 = vld [vmem:[%s0 + $0x8c] sm:$0xf]
  %v51 = vld [vmem:[%s0 + $0x90] sm:$0xf]
  %v52 = vld [vmem:[%s0 + $0x94] sm:$0xf]
  %v53 = vld [vmem:[%s0 + $0x98] sm:$0xf]
  %v54 = vld [vmem:[%s0 + $0x9c] sm:$0xf]
  %v55 = vld [vmem:[%s0 + $0xa0] sm:$0xf]
  %v56 = vld [vmem:[%s0 + $0xa4] sm:$0xf]
  %v57 = vld [vmem:[%s0 + $0xa8] sm:$0xf]
  %v58 = vld [vmem:[%s0 + $0xac] sm:$0xf]
  %v59 = vld [vmem:[%s0 + $0xb0] sm:$0xf]
  %v60 = vld [vmem:[%s0 + $0xb4] sm:$0xf]
  %v61 = vld [vmem:[%s0 + $0xb8] sm:$0xf]
  %v62 = vld [vmem:[%s0 + $0xbc] sm:$0xf]
  %v63 = vld [vmem:[%s0 + $0xc0] sm:$0xf]
  %v64 = vld [vmem:[%s0 + $0xc4] sm:$0xf]
  %v65 = vld [vmem:[%s0 + $0xc8] sm:$0xf]
  %v66 = vld [vmem:[%s0 + $0xcc] sm:$0xf]
  %v67 = vld [vmem:[%s0 + $0xd0] sm:$0xf]
  %v68 = vld [vmem:[%s0 + $0xd4] sm:$0xf]
  %v69 = vld [vmem:[%s0 + $0xd8] sm:$0xf]
  %v70 = vld [vmem:[%s0 + $0xdc] sm:$0xf]
  %v71 = vld [vmem:[%s0 + $0xe0] sm:$0xf]
  %v72 = vld [vmem:[%s0 + $0xe4] sm:$0xf]
  %v73 = vld [vmem:[%s0 + $0xe8] sm:$0xf]
  %v74 = vld [vmem:[%s0 + $0xec] sm:$0xf]
  %v75 = vld [vmem:[%s0 + $0xf0] sm:$0xf]
  %v76 = vld [vmem:[%s0 + $0xf4] sm:$0xf]
  %v77 = vld [vmem:[%s0 + $0xf8] sm:$0xf]
  %v78 = vld [vmem:[%s0 + $0xfc] sm:$0xf]
  %v79 = vld [vmem:[%s1] sm:$0xf]
  %v80 = vld [vmem:[%s1 + $0x4] sm:$0xf]
  %v81 = vld [vmem:[%s1 + $0x8] sm:$0xf]
  %v82 = vld [vmem:[%s1 + $0xc] sm:$0xf]
  %v83 = vld [vmem:[%s2] sm:$0x1]
  %v85 = vlaneseq
  %v86 = vshrl.u32 %v85, 7
  %v87 = vsub.s32 0, %v86
  %v88 = vrot.slane %v83, %v87
  %v154 = vunpack.c.l.b16 %v15
  %v155 = vunpack.c.l.b16 %v16
  %v156 = vunpack.c.l.b16 %v17
  %v157 = vunpack.c.l.b16 %v18
  %v158 = vunpack.c.l.b16 %v19
  %v159 = vunpack.c.l.b16 %v20
  %v160 = vunpack.c.l.b16 %v21
  %v161 = vunpack.c.l.b16 %v22
  %v162 = vunpack.c.l.b16 %v23
  %v163 = vunpack.c.l.b16 %v24
  %v164 = vunpack.c.l.b16 %v25
  %v165 = vunpack.c.l.b16 %v26
  %v166 = vunpack.c.l.b16 %v27
  %v167 = vunpack.c.l.b16 %v28
  %v168 = vunpack.c.l.b16 %v29
  %v169 = vunpack.c.l.b16 %v30
  %v170 = vunpack.c.l.b16 %v31
  %v171 = vunpack.c.l.b16 %v32
  %v172 = vunpack.c.l.b16 %v33
  %v173 = vunpack.c.l.b16 %v34
  %v174 = vunpack.c.l.b16 %v35
  %v175 = vunpack.c.l.b16 %v36
  %v176 = vunpack.c.l.b16 %v37
  %v177 = vunpack.c.l.b16 %v38
  %v178 = vunpack.c.l.b16 %v39
  %v179 = vunpack.c.l.b16 %v40
  %v180 = vunpack.c.l.b16 %v41
  %v181 = vunpack.c.l.b16 %v42
  %v182 = vunpack.c.l.b16 %v43
  %v183 = vunpack.c.l.b16 %v44
  %v184 = vunpack.c.l.b16 %v45
  %v185 = vunpack.c.l.b16 %v46
  %v186 = vunpack.c.l.b16 %v47
  %v187 = vunpack.c.l.b16 %v48
  %v188 = vunpack.c.l.b16 %v49
  %v189 = vunpack.c.l.b16 %v50
  %v190 = vunpack.c.l.b16 %v51
  %v191 = vunpack.c.l.b16 %v52
  %v192 = vunpack.c.l.b16 %v53
  %v193 = vunpack.c.l.b16 %v54
  %v194 = vunpack.c.l.b16 %v55
  %v195 = vunpack.c.l.b16 %v56
  %v196 = vunpack.c.l.b16 %v57
  %v197 = vunpack.c.l.b16 %v58
  %v198 = vunpack.c.l.b16 %v59
  %v199 = vunpack.c.l.b16 %v60
  %v200 = vunpack.c.l.b16 %v61
  %v201 = vunpack.c.l.b16 %v62
  %v202 = vunpack.c.l.b16 %v63
  %v203 = vunpack.c.l.b16 %v64
  %v204 = vunpack.c.l.b16 %v65
  %v205 = vunpack.c.l.b16 %v66
  %v206 = vunpack.c.l.b16 %v67
  %v207 = vunpack.c.l.b16 %v68
  %v208 = vunpack.c.l.b16 %v69
  %v209 = vunpack.c.l.b16 %v70
  %v210 = vunpack.c.l.b16 %v71
  %v211 = vunpack.c.l.b16 %v72
  %v212 = vunpack.c.l.b16 %v73
  %v213 = vunpack.c.l.b16 %v74
  %v214 = vunpack.c.l.b16 %v75
  %v215 = vunpack.c.l.b16 %v76
  %v216 = vunpack.c.l.b16 %v77
  %v217 = vunpack.c.l.b16 %v78
  %v218 = vpack.c.b16 %v155, %v154
  %v219 = vpack.c.b16 %v157, %v156
  %v220 = vpack.c.b16 %v159, %v158
  %v221 = vpack.c.b16 %v161, %v160
  %v222 = vpack.c.b16 %v163, %v162
  %v223 = vpack.c.b16 %v165, %v164
  %v224 = vpack.c.b16 %v167, %v166
  %v225 = vpack.c.b16 %v169, %v168
  %v226 = vpack.c.b16 %v171, %v170
  %v227 = vpack.c.b16 %v173, %v172
  %v228 = vpack.c.b16 %v175, %v174
  %v229 = vpack.c.b16 %v177, %v176
  %v230 = vpack.c.b16 %v179, %v178
  %v231 = vpack.c.b16 %v181, %v180
  %v232 = vpack.c.b16 %v183, %v182
  %v233 = vpack.c.b16 %v185, %v184
  %v234 = vpack.c.b16 %v187, %v186
  %v235 = vpack.c.b16 %v189, %v188
  %v236 = vpack.c.b16 %v191, %v190
  %v237 = vpack.c.b16 %v193, %v192
  %v238 = vpack.c.b16 %v195, %v194
  %v239 = vpack.c.b16 %v197, %v196
  %v240 = vpack.c.b16 %v199, %v198
  %v241 = vpack.c.b16 %v201, %v200
  %v242 = vpack.c.b16 %v203, %v202
  %v243 = vpack.c.b16 %v205, %v204
  %v244 = vpack.c.b16 %v207, %v206
  %v245 = vpack.c.b16 %v209, %v208
  %v246 = vpack.c.b16 %v211, %v210
  %v247 = vpack.c.b16 %v213, %v212
  %v248 = vpack.c.b16 %v215, %v214
  %v249 = vpack.c.b16 %v217, %v216
  %v254 = vunpack.c.l.b16 %v79
  %v255 = vunpack.c.l.b16 %v80
  %v256 = vunpack.c.l.b16 %v81
  %v257 = vunpack.c.l.b16 %v82
  %v258 = vpack.c.b16 %v255, %v254
  %v259 = vpack.c.b16 %v257, %v256
  %vm262 = vcmask 261120
  %v264 = vsel %vm262, %v218, 0
  %v267 = vsel %vm262, %v219, 0
  %v270 = vsel %vm262, %v220, 0
  %v273 = vsel %vm262, %v221, 0
  %v276 = vsel %vm262, %v222, 0
  %v279 = vsel %vm262, %v223, 0
  %v282 = vsel %vm262, %v224, 0
  %v285 = vsel %vm262, %v225, 0
  %v288 = vsel %vm262, %v226, 0
  %v291 = vsel %vm262, %v227, 0
  %v294 = vsel %vm262, %v228, 0
  %v297 = vsel %vm262, %v229, 0
  %v300 = vsel %vm262, %v230, 0
  %v303 = vsel %vm262, %v231, 0
  %v306 = vsel %vm262, %v232, 0
  %v309 = vsel %vm262, %v233, 0
  %v312 = vsel %vm262, %v234, 0
  %v315 = vsel %vm262, %v235, 0
  %v318 = vsel %vm262, %v236, 0
  %v321 = vsel %vm262, %v237, 0
  %v324 = vsel %vm262, %v238, 0
  %v327 = vsel %vm262, %v239, 0
  %v330 = vsel %vm262, %v240, 0
  %v333 = vsel %vm262, %v241, 0
  %v336 = vsel %vm262, %v242, 0
  %v339 = vsel %vm262, %v243, 0
  %v342 = vsel %vm262, %v244, 0
  %v345 = vsel %vm262, %v245, 0
  %v348 = vsel %vm262, %v246, 0
  %v351 = vsel %vm262, %v247, 0
  %v354 = vsel %vm262, %v248, 0
  %v357 = vsel %vm262, %v249, 0
  %359 = vmatprep.subr.bf16.mxu0 0
  %360 = vmatpush1.bf16.msra.mxu0 %v258
  %361 = vmatprep.subr.bf16.mxu0 0
  %362 = vmatpush1.bf16.msra.mxu0 %v259
  %363 = vmatprep.subr.bf16.mxu0 0
  %364 = vmatpush1.bf16.msra.mxu0 0
  %365 = vmatprep.subr.bf16.mxu0 0
  %366 = vmatpush1.bf16.msra.mxu0 0
  %367 = vmatprep.subr.bf16.mxu0 0
  %368 = vmatpush1.bf16.msra.mxu0 0
  %369 = vmatprep.subr.bf16.mxu0 0
  %370 = vmatpush1.bf16.msra.mxu0 0
  %371 = vmatprep.subr.bf16.mxu0 0
  %372 = vmatpush1.bf16.msra.mxu0 0
  %373 = vmatprep.subr.bf16.mxu0 0
  %374 = vmatpush1.bf16.msra.mxu0 0
  %375 = vmatprep.subr.bf16.mxu0 0
  %376 = vmatpush1.bf16.msra.mxu0 0
  %377 = vmatprep.subr.bf16.mxu0 0
  %378 = vmatpush1.bf16.msra.mxu0 0
  %379 = vmatprep.subr.bf16.mxu0 0
  %380 = vmatpush1.bf16.msra.mxu0 0
  %381 = vmatprep.subr.bf16.mxu0 0
  %382 = vmatpush1.bf16.msra.mxu0 0
  %383 = vmatprep.subr.bf16.mxu0 0
  %384 = vmatpush1.bf16.msra.mxu0 0
  %385 = vmatprep.subr.bf16.mxu0 0
  %386 = vmatpush1.bf16.msra.mxu0 0
  %387 = vmatprep.subr.bf16.mxu0 0
  %388 = vmatpush1.bf16.msra.mxu0 0
  %389 = vmatprep.subr.bf16.mxu0 0
  %390 = vmatpush1.bf16.msra.mxu0 0
  %391 = vmatprep.mubr.bf16.mxu0 0
  %392 = vmatmul.mubr.bf16.gmra.mrb[0].mxu0 %v264
  %v393 = vpop.f32.mrb[0].mxu0
  %v394 = vadd.f32 %v88, %v393
  %v395 = vpop.f32.mrb[0].mxu0
  %v396 = vpop.f32.mrb[0].mxu0
  %v397 = vadd.f32 %v88, %v396
  %v398 = vpop.f32.mrb[0].mxu0
  %399 = vmatprep.mubr.bf16.mxu0 0
  %400 = vmatmul.mubr.bf16.gmra.mrb[0].mxu0 %v267
  %v401 = vpop.f32.mrb[0].mxu0
  %v402 = vadd.f32 %v88, %v401
  %v403 = vpop.f32.mrb[0].mxu0
  %v404 = vpop.f32.mrb[0].mxu0
  %v405 = vadd.f32 %v88, %v404
  %v406 = vpop.f32.mrb[0].mxu0
  %407 = vmatprep.mubr.bf16.mxu0 0
  %408 = vmatmul.mubr.bf16.gmra.mrb[0].mxu0 %v270
  %v409 = vpop.f32.mrb[0].mxu0
  %v410 = vadd.f32 %v88, %v409
  %v411 = vpop.f32.mrb[0].mxu0
  %v412 = vpop.f32.mrb[0].mxu0
  %v413 = vadd.f32 %v88, %v412
  %v414 = vpop.f32.mrb[0].mxu0
  %415 = vmatprep.mubr.bf16.mxu0 0
  %416 = vmatmul.mubr.bf16.gmra.mrb[0].mxu0 %v273
  %v417 = vpop.f32.mrb[0].mxu0
  %v418 = vadd.f32 %v88, %v417
  %v419 = vpop.f32.mrb[0].mxu0
  %v420 = vpop.f32.mrb[0].mxu0
  %v421 = vadd.f32 %v88, %v420
  %v422 = vpop.f32.mrb[0].mxu0
  %423 = vmatprep.mubr.bf16.mxu0 0
  %424 = vmatmul.mubr.bf16.gmra.mrb[0].mxu0 %v276
  %v425 = vpop.f32.mrb[0].mxu0
  %v426 = vadd.f32 %v88, %v425
  %v427 = vpop.f32.mrb[0].mxu0
  %v428 = vpop.f32.mrb[0].mxu0
  %v429 = vadd.f32 %v88, %v428
  %v430 = vpop.f32.mrb[0].mxu0
  %431 = vmatprep.mubr.bf16.mxu0 0
  %432 = vmatmul.mubr.bf16.gmra.mrb[0].mxu0 %v279
  %v433 = vpop.f32.mrb[0].mxu0
  %v434 = vadd.f32 %v88, %v433
  %v435 = vpop.f32.mrb[0].mxu0
  %v436 = vpop.f32.mrb[0].mxu0
  %v437 = vadd.f32 %v88, %v436
  %v438 = vpop.f32.mrb[0].mxu0
  %439 = vmatprep.mubr.bf16.mxu0 0
  %440 = vmatmul.mubr.bf16.gmra.mrb[0].mxu0 %v282
  %v441 = vpop.f32.mrb[0].mxu0
  %v442 = vadd.f32 %v88, %v441
  %v443 = vpop.f32.mrb[0].mxu0
  %v444 = vpop.f32.mrb[0].mxu0
  %v445 = vadd.f32 %v88, %v444
  %v446 = vpop.f32.mrb[0].mxu0
  %447 = vmatprep.mubr.bf16.mxu0 0
  %448 = vmatmul.mubr.bf16.gmra.mrb[0].mxu0 %v285
  %v449 = vpop.f32.mrb[0].mxu0
  %v450 = vadd.f32 %v88, %v449
  %v451 = vpop.f32.mrb[0].mxu0
  %v452 = vpop.f32.mrb[0].mxu0
  %v453 = vadd.f32 %v88, %v452
  %v454 = vpop.f32.mrb[0].mxu0
  %455 = vmatprep.mubr.bf16.mxu0 0
  %456 = vmatmul.mubr.bf16.gmra.mrb[0].mxu0 %v288
  %v457 = vpop.f32.mrb[0].mxu0
  %v458 = vadd.f32 %v88, %v457
  %v459 = vpop.f32.mrb[0].mxu0
  %v460 = vpop.f32.mrb[0].mxu0
  %v461 = vadd.f32 %v88, %v460
  %v462 = vpop.f32.mrb[0].mxu0
  %463 = vmatprep.mubr.bf16.mxu0 0
  %464 = vmatmul.mubr.bf16.gmra.mrb[0].mxu0 %v291
  %v465 = vpop.f32.mrb[0].mxu0
  %v466 = vadd.f32 %v88, %v465
  %v467 = vpop.f32.mrb[0].mxu0
  %v468 = vpop.f32.mrb[0].mxu0
  %v469 = vadd.f32 %v88, %v468
  %v470 = vpop.f32.mrb[0].mxu0
  %471 = vmatprep.mubr.bf16.mxu0 0
  %472 = vmatmul.mubr.bf16.gmra.mrb[0].mxu0 %v294
  %v473 = vpop.f32.mrb[0].mxu0
  %v474 = vadd.f32 %v88, %v473
  %v475 = vpop.f32.mrb[0].mxu0
  %v476 = vpop.f32.mrb[0].mxu0
  %v477 = vadd.f32 %v88, %v476
  %v478 = vpop.f32.mrb[0].mxu0
  %479 = vmatprep.mubr.bf16.mxu0 0
  %480 = vmatmul.mubr.bf16.gmra.mrb[0].mxu0 %v297
  %v481 = vpop.f32.mrb[0].mxu0
  %v482 = vadd.f32 %v88, %v481
  %v483 = vpop.f32.mrb[0].mxu0
  %v484 = vpop.f32.mrb[0].mxu0
  %v485 = vadd.f32 %v88, %v484
  %v486 = vpop.f32.mrb[0].mxu0
  %487 = vmatprep.mubr.bf16.mxu0 0
  %488 = vmatmul.mubr.bf16.gmra.mrb[0].mxu0 %v300
  %v489 = vpop.f32.mrb[0].mxu0
  %v490 = vadd.f32 %v88, %v489
  %v491 = vpop.f32.mrb[0].mxu0
  %v492 = vpop.f32.mrb[0].mxu0
  %v493 = vadd.f32 %v88, %v492
  %v494 = vpop.f32.mrb[0].mxu0
  %495 = vmatprep.mubr.bf16.mxu0 0
  %496 = vmatmul.mubr.bf16.gmra.mrb[0].mxu0 %v303
  %v497 = vpop.f32.mrb[0].mxu0
  %v498 = vadd.f32 %v88, %v497
  %v499 = vpop.f32.mrb[0].mxu0
  %v500 = vpop.f32.mrb[0].mxu0
  %v501 = vadd.f32 %v88, %v500
  %v502 = vpop.f32.mrb[0].mxu0
  %503 = vmatprep.mubr.bf16.mxu0 0
  %504 = vmatmul.mubr.bf16.gmra.mrb[0].mxu0 %v306
  %v505 = vpop.f32.mrb[0].mxu0
  %v506 = vadd.f32 %v88, %v505
  %v507 = vpop.f32.mrb[0].mxu0
  %v508 = vpop.f32.mrb[0].mxu0
  %v509 = vadd.f32 %v88, %v508
  %v510 = vpop.f32.mrb[0].mxu0
  %511 = vmatprep.mubr.bf16.mxu0 0
  %512 = vmatmul.mubr.bf16.gmra.mrb[0].mxu0 %v309
  %v513 = vpop.f32.mrb[0].mxu0
  %v514 = vadd.f32 %v88, %v513
  %v515 = vpop.f32.mrb[0].mxu0
  %v516 = vpop.f32.mrb[0].mxu0
  %v517 = vadd.f32 %v88, %v516
  %v518 = vpop.f32.mrb[0].mxu0
  %519 = vmatprep.mubr.bf16.mxu0 0
  %520 = vmatmul.mubr.bf16.gmra.mrb[0].mxu0 %v312
  %v521 = vpop.f32.mrb[0].mxu0
  %v522 = vadd.f32 %v88, %v521
  %v523 = vpop.f32.mrb[0].mxu0
  %v524 = vpop.f32.mrb[0].mxu0
  %v525 = vadd.f32 %v88, %v524
  %v526 = vpop.f32.mrb[0].mxu0
  %527 = vmatprep.mubr.bf16.mxu0 0
  %528 = vmatmul.mubr.bf16.gmra.mrb[0].mxu0 %v315
  %v529 = vpop.f32.mrb[0].mxu0
  %v530 = vadd.f32 %v88, %v529
  %v531 = vpop.f32.mrb[0].mxu0
  %v532 = vpop.f32.mrb[0].mxu0
  %v533 = vadd.f32 %v88, %v532
  %v534 = vpop.f32.mrb[0].mxu0
  %535 = vmatprep.mubr.bf16.mxu0 0
  %536 = vmatmul.mubr.bf16.gmra.mrb[0].mxu0 %v318
  %v537 = vpop.f32.mrb[0].mxu0
  %v538 = vadd.f32 %v88, %v537
  %v539 = vpop.f32.mrb[0].mxu0
  %v540 = vpop.f32.mrb[0].mxu0
  %v541 = vadd.f32 %v88, %v540
  %v542 = vpop.f32.mrb[0].mxu0
  %543 = vmatprep.mubr.bf16.mxu0 0
  %544 = vmatmul.mubr.bf16.gmra.mrb[0].mxu0 %v321
  %v545 = vpop.f32.mrb[0].mxu0
  %v546 = vadd.f32 %v88, %v545
  %v547 = vpop.f32.mrb[0].mxu0
  %v548 = vpop.f32.mrb[0].mxu0
  %v549 = vadd.f32 %v88, %v548
  %v550 = vpop.f32.mrb[0].mxu0
  %551 = vmatprep.mubr.bf16.mxu0 0
  %552 = vmatmul.mubr.bf16.gmra.mrb[0].mxu0 %v324
  %v553 = vpop.f32.mrb[0].mxu0
  %v554 = vadd.f32 %v88, %v553
  %v555 = vpop.f32.mrb[0].mxu0
  %v556 = vpop.f32.mrb[0].mxu0
  %v557 = vadd.f32 %v88, %v556
  %v558 = vpop.f32.mrb[0].mxu0
  %559 = vmatprep.mubr.bf16.mxu0 0
  %560 = vmatmul.mubr.bf16.gmra.mrb[0].mxu0 %v327
  %v561 = vpop.f32.mrb[0].mxu0
  %v562 = vadd.f32 %v88, %v561
  %v563 = vpop.f32.mrb[0].mxu0
  %v564 = vpop.f32.mrb[0].mxu0
  %v565 = vadd.f32 %v88, %v564
  %v566 = vpop.f32.mrb[0].mxu0
  %567 = vmatprep.mubr.bf16.mxu0 0
  %568 = vmatmul.mubr.bf16.gmra.mrb[0].mxu0 %v330
  %v569 = vpop.f32.mrb[0].mxu0
  %v570 = vadd.f32 %v88, %v569
  %v571 = vpop.f32.mrb[0].mxu0
  %v572 = vpop.f32.mrb[0].mxu0
  %v573 = vadd.f32 %v88, %v572
  %v574 = vpop.f32.mrb[0].mxu0
  %575 = vmatprep.mubr.bf16.mxu0 0
  %576 = vmatmul.mubr.bf16.gmra.mrb[0].mxu0 %v333
  %v577 = vpop.f32.mrb[0].mxu0
  %v578 = vadd.f32 %v88, %v577
  %v579 = vpop.f32.mrb[0].mxu0
  %v580 = vpop.f32.mrb[0].mxu0
  %v581 = vadd.f32 %v88, %v580
  %v582 = vpop.f32.mrb[0].mxu0
  %583 = vmatprep.mubr.bf16.mxu0 0
  %584 = vmatmul.mubr.bf16.gmra.mrb[0].mxu0 %v336
  %v585 = vpop.f32.mrb[0].mxu0
  %v586 = vadd.f32 %v88, %v585
  %v587 = vpop.f32.mrb[0].mxu0
  %v588 = vpop.f32.mrb[0].mxu0
  %v589 = vadd.f32 %v88, %v588
  %v590 = vpop.f32.mrb[0].mxu0
  %591 = vmatprep.mubr.bf16.mxu0 0
  %592 = vmatmul.mubr.bf16.gmra.mrb[0].mxu0 %v339
  %v593 = vpop.f32.mrb[0].mxu0
  %v594 = vadd.f32 %v88, %v593
  %v595 = vpop.f32.mrb[0].mxu0
  %v596 = vpop.f32.mrb[0].mxu0
  %v597 = vadd.f32 %v88, %v596
  %v598 = vpop.f32.mrb[0].mxu0
  %599 = vmatprep.mubr.bf16.mxu0 0
  %600 = vmatmul.mubr.bf16.gmra.mrb[0].mxu0 %v342
  %v601 = vpop.f32.mrb[0].mxu0
  %v602 = vadd.f32 %v88, %v601
  %v603 = vpop.f32.mrb[0].mxu0
  %v604 = vpop.f32.mrb[0].mxu0
  %v605 = vadd.f32 %v88, %v604
  %v606 = vpop.f32.mrb[0].mxu0
  %607 = vmatprep.mubr.bf16.mxu0 0
  %608 = vmatmul.mubr.bf16.gmra.mrb[0].mxu0 %v345
  %v609 = vpop.f32.mrb[0].mxu0
  %v610 = vadd.f32 %v88, %v609
  %v611 = vpop.f32.mrb[0].mxu0
  %v612 = vpop.f32.mrb[0].mxu0
  %v613 = vadd.f32 %v88, %v612
  %v614 = vpop.f32.mrb[0].mxu0
  %615 = vmatprep.mubr.bf16.mxu0 0
  %616 = vmatmul.mubr.bf16.gmra.mrb[0].mxu0 %v348
  %v617 = vpop.f32.mrb[0].mxu0
  %v618 = vadd.f32 %v88, %v617
  %v619 = vpop.f32.mrb[0].mxu0
  %v620 = vpop.f32.mrb[0].mxu0
  %v621 = vadd.f32 %v88, %v620
  %v622 = vpop.f32.mrb[0].mxu0
  %623 = vmatprep.mubr.bf16.mxu0 0
  %624 = vmatmul.mubr.bf16.gmra.mrb[0].mxu0 %v351
  %v625 = vpop.f32.mrb[0].mxu0
  %v626 = vadd.f32 %v88, %v625
  %v627 = vpop.f32.mrb[0].mxu0
  %v628 = vpop.f32.mrb[0].mxu0
  %v629 = vadd.f32 %v88, %v628
  %v630 = vpop.f32.mrb[0].mxu0
  %631 = vmatprep.mubr.bf16.mxu0 0
  %632 = vmatmul.mubr.bf16.gmra.mrb[0].mxu0 %v354
  %v633 = vpop.f32.mrb[0].mxu0
  %v634 = vadd.f32 %v88, %v633
  %v635 = vpop.f32.mrb[0].mxu0
  %v636 = vpop.f32.mrb[0].mxu0
  %v637 = vadd.f32 %v88, %v636
  %v638 = vpop.f32.mrb[0].mxu0
  %639 = vmatprep.mubr.bf16.mxu0 0
  %640 = vmatmul.mubr.bf16.gmra.mrb[0].mxu0 %v357
  %v641 = vpop.f32.mrb[0].mxu0
  %v642 = vadd.f32 %v88, %v641
  %v643 = vpop.f32.mrb[0].mxu0
  %v644 = vpop.f32.mrb[0].mxu0
  %v645 = vadd.f32 %v88, %v644
  %v646 = vpop.f32.mrb[0].mxu0
  %647 = vdwg.mxu0
  %v648 = vmax.f32 %v394, 0.0
  %v649 = vmax.f32 %v397, 0.0
  %v650 = vmax.f32 %v402, 0.0
  %v651 = vmax.f32 %v405, 0.0
  %v652 = vmax.f32 %v410, 0.0
  %v653 = vmax.f32 %v413, 0.0
  %v654 = vmax.f32 %v418, 0.0
  %v655 = vmax.f32 %v421, 0.0
  %v656 = vmax.f32 %v426, 0.0
  %v657 = vmax.f32 %v429, 0.0
  %v658 = vmax.f32 %v434, 0.0
  %v659 = vmax.f32 %v437, 0.0
  %v660 = vmax.f32 %v442, 0.0
  %v661 = vmax.f32 %v445, 0.0
  %v662 = vmax.f32 %v450, 0.0
  %v663 = vmax.f32 %v453, 0.0
  %v664 = vmax.f32 %v458, 0.0
  %v665 = vmax.f32 %v461, 0.0
  %v666 = vmax.f32 %v466, 0.0
  %v667 = vmax.f32 %v469, 0.0
  %v668 = vmax.f32 %v474, 0.0
  %v669 = vmax.f32 %v477, 0.0
  %v670 = vmax.f32 %v482, 0.0
  %v671 = vmax.f32 %v485, 0.0
  %v672 = vmax.f32 %v490, 0.0
  %v673 = vmax.f32 %v493, 0.0
  %v674 = vmax.f32 %v498, 0.0
  %v675 = vmax.f32 %v501, 0.0
  %v676 = vmax.f32 %v506, 0.0
  %v677 = vmax.f32 %v509, 0.0
  %v678 = vmax.f32 %v514, 0.0
  %v679 = vmax.f32 %v517, 0.0
  %v680 = vmax.f32 %v522, 0.0
  %v681 = vmax.f32 %v525, 0.0
  %v682 = vmax.f32 %v530, 0.0
  %v683 = vmax.f32 %v533, 0.0
  %v684 = vmax.f32 %v538, 0.0
  %v685 = vmax.f32 %v541, 0.0
  %v686 = vmax.f32 %v546, 0.0
  %v687 = vmax.f32 %v549, 0.0
  %v688 = vmax.f32 %v554, 0.0
  %v689 = vmax.f32 %v557, 0.0
  %v690 = vmax.f32 %v562, 0.0
  %v691 = vmax.f32 %v565, 0.0
  %v692 = vmax.f32 %v570, 0.0
  %v693 = vmax.f32 %v573, 0.0
  %v694 = vmax.f32 %v578, 0.0
  %v695 = vmax.f32 %v581, 0.0
  %v696 = vmax.f32 %v586, 0.0
  %v697 = vmax.f32 %v589, 0.0
  %v698 = vmax.f32 %v594, 0.0
  %v699 = vmax.f32 %v597, 0.0
  %v700 = vmax.f32 %v602, 0.0
  %v701 = vmax.f32 %v605, 0.0
  %v702 = vmax.f32 %v610, 0.0
  %v703 = vmax.f32 %v613, 0.0
  %v704 = vmax.f32 %v618, 0.0
  %v705 = vmax.f32 %v621, 0.0
  %v706 = vmax.f32 %v626, 0.0
  %v707 = vmax.f32 %v629, 0.0
  %v708 = vmax.f32 %v634, 0.0
  %v709 = vmax.f32 %v637, 0.0
  %v710 = vmax.f32 %v642, 0.0
  %v711 = vmax.f32 %v645, 0.0
  %v712 = vpack.c.bf16 %v649, %v648
  %v713 = vpack.c.bf16 %v651, %v650
  %v714 = vpack.c.bf16 %v653, %v652
  %v715 = vpack.c.bf16 %v655, %v654
  %v716 = vpack.c.bf16 %v657, %v656
  %v717 = vpack.c.bf16 %v659, %v658
  %v718 = vpack.c.bf16 %v661, %v660
  %v719 = vpack.c.bf16 %v663, %v662
  %v720 = vpack.c.bf16 %v665, %v664
  %v721 = vpack.c.bf16 %v667, %v666
  %v722 = vpack.c.bf16 %v669, %v668
  %v723 = vpack.c.bf16 %v671, %v670
  %v724 = vpack.c.bf16 %v673, %v672
  %v725 = vpack.c.bf16 %v675, %v674
  %v726 = vpack.c.bf16 %v677, %v676
  %v727 = vpack.c.bf16 %v679, %v678
  %v728 = vpack.c.bf16 %v681, %v680
  %v729 = vpack.c.bf16 %v683, %v682
  %v730 = vpack.c.bf16 %v685, %v684
  %v731 = vpack.c.bf16 %v687, %v686
  %v732 = vpack.c.bf16 %v689, %v688
  %v733 = vpack.c.bf16 %v691, %v690
  %v734 = vpack.c.bf16 %v693, %v692
  %v735 = vpack.c.bf16 %v695, %v694
  %v736 = vpack.c.bf16 %v697, %v696
  %v737 = vpack.c.bf16 %v699, %v698
  %v738 = vpack.c.bf16 %v701, %v700
  %v739 = vpack.c.bf16 %v703, %v702
  %v740 = vpack.c.bf16 %v705, %v704
  %v741 = vpack.c.bf16 %v707, %v706
  %v742 = vpack.c.bf16 %v709, %v708
  %v743 = vpack.c.bf16 %v711, %v710
  %v776 = vunpack.c.l.b16 %v712
  %v777 = vunpack.c.h.b16 %v712
  %v778 = vunpack.c.l.b16 %v713
  %v779 = vunpack.c.h.b16 %v713
  %v780 = vunpack.c.l.b16 %v714
  %v781 = vunpack.c.h.b16 %v714
  %v782 = vunpack.c.l.b16 %v715
  %v783 = vunpack.c.h.b16 %v715
  %v784 = vunpack.c.l.b16 %v716
  %v785 = vunpack.c.h.b16 %v716
  %v786 = vunpack.c.l.b16 %v717
  %v787 = vunpack.c.h.b16 %v717
  %v788 = vunpack.c.l.b16 %v718
  %v789 = vunpack.c.h.b16 %v718
  %v790 = vunpack.c.l.b16 %v719
  %v791 = vunpack.c.h.b16 %v719
  %v792 = vunpack.c.l.b16 %v720
  %v793 = vunpack.c.h.b16 %v720
  %v794 = vunpack.c.l.b16 %v721
  %v795 = vunpack.c.h.b16 %v721
  %v796 = vunpack.c.l.b16 %v722
  %v797 = vunpack.c.h.b16 %v722
  %v798 = vunpack.c.l.b16 %v723
  %v799 = vunpack.c.h.b16 %v723
  %v800 = vunpack.c.l.b16 %v724
  %v801 = vunpack.c.h.b16 %v724
  %v802 = vunpack.c.l.b16 %v725
  %v803 = vunpack.c.h.b16 %v725
  %v804 = vunpack.c.l.b16 %v726
  %v805 = vunpack.c.h.b16 %v726
  %v806 = vunpack.c.l.b16 %v727
  %v807 = vunpack.c.h.b16 %v727
  %v808 = vunpack.c.l.b16 %v728
  %v809 = vunpack.c.h.b16 %v728
  %v810 = vunpack.c.l.b16 %v729
  %v811 = vunpack.c.h.b16 %v729
  %v812 = vunpack.c.l.b16 %v730
  %v813 = vunpack.c.h.b16 %v730
  %v814 = vunpack.c.l.b16 %v731
  %v815 = vunpack.c.h.b16 %v731
  %v816 = vunpack.c.l.b16 %v732
  %v817 = vunpack.c.h.b16 %v732
  %v818 = vunpack.c.l.b16 %v733
  %v819 = vunpack.c.h.b16 %v733
  %v820 = vunpack.c.l.b16 %v734
  %v821 = vunpack.c.h.b16 %v734
  %v822 = vunpack.c.l.b16 %v735
  %v823 = vunpack.c.h.b16 %v735
  %v824 = vunpack.c.l.b16 %v736
  %v825 = vunpack.c.h.b16 %v736
  %v826 = vunpack.c.l.b16 %v737
  %v827 = vunpack.c.h.b16 %v737
  %v828 = vunpack.c.l.b16 %v738
  %v829 = vunpack.c.h.b16 %v738
  %v830 = vunpack.c.l.b16 %v739
  %v831 = vunpack.c.h.b16 %v739
  %v832 = vunpack.c.l.b16 %v740
  %v833 = vunpack.c.h.b16 %v740
  %v834 = vunpack.c.l.b16 %v741
  %v835 = vunpack.c.h.b16 %v741
  %v836 = vunpack.c.l.b16 %v742
  %v837 = vunpack.c.h.b16 %v742
  %v838 = vunpack.c.l.b16 %v743
  %v839 = vunpack.c.h.b16 %v743
  %v840 = vpack.c.b16 %v776, %v776
  %v841 = vpack.c.b16 %v777, %v777
  %v842 = vpack.c.b16 %v778, %v778
  %v843 = vpack.c.b16 %v779, %v779
  %v844 = vpack.c.b16 %v780, %v780
  %v845 = vpack.c.b16 %v781, %v781
  %v846 = vpack.c.b16 %v782, %v782
  %v847 = vpack.c.b16 %v783, %v783
  %v848 = vpack.c.b16 %v784, %v784
  %v849 = vpack.c.b16 %v785, %v785
  %v850 = vpack.c.b16 %v786, %v786
  %v851 = vpack.c.b16 %v787, %v787
  %v852 = vpack.c.b16 %v788, %v788
  %v853 = vpack.c.b16 %v789, %v789
  %v854 = vpack.c.b16 %v790, %v790
  %v855 = vpack.c.b16 %v791, %v791
  %v856 = vpack.c.b16 %v792, %v792
  %v857 = vpack.c.b16 %v793, %v793
  %v858 = vpack.c.b16 %v794, %v794
  %v859 = vpack.c.b16 %v795, %v795
  %v860 = vpack.c.b16 %v796, %v796
  %v861 = vpack.c.b16 %v797, %v797
  %v862 = vpack.c.b16 %v798, %v798
  %v863 = vpack.c.b16 %v799, %v799
  %v864 = vpack.c.b16 %v800, %v800
  %v865 = vpack.c.b16 %v801, %v801
  %v866 = vpack.c.b16 %v802, %v802
  %v867 = vpack.c.b16 %v803, %v803
  %v868 = vpack.c.b16 %v804, %v804
  %v869 = vpack.c.b16 %v805, %v805
  %v870 = vpack.c.b16 %v806, %v806
  %v871 = vpack.c.b16 %v807, %v807
  %v872 = vpack.c.b16 %v808, %v808
  %v873 = vpack.c.b16 %v809, %v809
  %v874 = vpack.c.b16 %v810, %v810
  %v875 = vpack.c.b16 %v811, %v811
  %v876 = vpack.c.b16 %v812, %v812
  %v877 = vpack.c.b16 %v813, %v813
  %v878 = vpack.c.b16 %v814, %v814
  %v879 = vpack.c.b16 %v815, %v815
  %v880 = vpack.c.b16 %v816, %v816
  %v881 = vpack.c.b16 %v817, %v817
  %v882 = vpack.c.b16 %v818, %v818
  %v883 = vpack.c.b16 %v819, %v819
  %v884 = vpack.c.b16 %v820, %v820
  %v885 = vpack.c.b16 %v821, %v821
  %v886 = vpack.c.b16 %v822, %v822
  %v887 = vpack.c.b16 %v823, %v823
  %v888 = vpack.c.b16 %v824, %v824
  %v889 = vpack.c.b16 %v825, %v825
  %v890 = vpack.c.b16 %v826, %v826
  %v891 = vpack.c.b16 %v827, %v827
  %v892 = vpack.c.b16 %v828, %v828
  %v893 = vpack.c.b16 %v829, %v829
  %v894 = vpack.c.b16 %v830, %v830
  %v895 = vpack.c.b16 %v831, %v831
  %v896 = vpack.c.b16 %v832, %v832
  %v897 = vpack.c.b16 %v833, %v833
  %v898 = vpack.c.b16 %v834, %v834
  %v899 = vpack.c.b16 %v835, %v835
  %v900 = vpack.c.b16 %v836, %v836
  %v901 = vpack.c.b16 %v837, %v837
  %v902 = vpack.c.b16 %v838, %v838
  %v903 = vpack.c.b16 %v839, %v839
  %vm968 = vcmask 125952
  %969 = vst.msk [vmem:[%s3] sm:$0xf] %vm968, %v840
  %970 = vst.msk [vmem:[%s3 + $0x4] sm:$0xf] %vm968, %v841
  %971 = vst.msk [vmem:[%s3 + $0x8] sm:$0xf] %vm968, %v842
  %972 = vst.msk [vmem:[%s3 + $0xc] sm:$0xf] %vm968, %v843
  %973 = vst.msk [vmem:[%s3 + $0x10] sm:$0xf] %vm968, %v844
  %974 = vst.msk [vmem:[%s3 + $0x14] sm:$0xf] %vm968, %v845
  %975 = vst.msk [vmem:[%s3 + $0x18] sm:$0xf] %vm968, %v846
  %976 = vst.msk [vmem:[%s3 + $0x1c] sm:$0xf] %vm968, %v847
  %977 = vst.msk [vmem:[%s3 + $0x20] sm:$0xf] %vm968, %v848
  %978 = vst.msk [vmem:[%s3 + $0x24] sm:$0xf] %vm968, %v849
  %979 = vst.msk [vmem:[%s3 + $0x28] sm:$0xf] %vm968, %v850
  %980 = vst.msk [vmem:[%s3 + $0x2c] sm:$0xf] %vm968, %v851
  %981 = vst.msk [vmem:[%s3 + $0x30] sm:$0xf] %vm968, %v852
  %982 = vst.msk [vmem:[%s3 + $0x34] sm:$0xf] %vm968, %v853
  %983 = vst.msk [vmem:[%s3 + $0x38] sm:$0xf] %vm968, %v854
  %984 = vst.msk [vmem:[%s3 + $0x3c] sm:$0xf] %vm968, %v855
  %985 = vst.msk [vmem:[%s3 + $0x40] sm:$0xf] %vm968, %v856
  %986 = vst.msk [vmem:[%s3 + $0x44] sm:$0xf] %vm968, %v857
  %987 = vst.msk [vmem:[%s3 + $0x48] sm:$0xf] %vm968, %v858
  %988 = vst.msk [vmem:[%s3 + $0x4c] sm:$0xf] %vm968, %v859
  %989 = vst.msk [vmem:[%s3 + $0x50] sm:$0xf] %vm968, %v860
  %990 = vst.msk [vmem:[%s3 + $0x54] sm:$0xf] %vm968, %v861
  %991 = vst.msk [vmem:[%s3 + $0x58] sm:$0xf] %vm968, %v862
  %992 = vst.msk [vmem:[%s3 + $0x5c] sm:$0xf] %vm968, %v863
  %993 = vst.msk [vmem:[%s3 + $0x60] sm:$0xf] %vm968, %v864
  %994 = vst.msk [vmem:[%s3 + $0x64] sm:$0xf] %vm968, %v865
  %995 = vst.msk [vmem:[%s3 + $0x68] sm:$0xf] %vm968, %v866
  %996 = vst.msk [vmem:[%s3 + $0x6c] sm:$0xf] %vm968, %v867
  %997 = vst.msk [vmem:[%s3 + $0x70] sm:$0xf] %vm968, %v868
  %998 = vst.msk [vmem:[%s3 + $0x74] sm:$0xf] %vm968, %v869
  %999 = vst.msk [vmem:[%s3 + $0x78] sm:$0xf] %vm968, %v870
  %1000 = vst.msk [vmem:[%s3 + $0x7c] sm:$0xf] %vm968, %v871
  %1001 = vst.msk [vmem:[%s3 + $0x80] sm:$0xf] %vm968, %v872
  %1002 = vst.msk [vmem:[%s3 + $0x84] sm:$0xf] %vm968, %v873
  %1003 = vst.msk [vmem:[%s3 + $0x88] sm:$0xf] %vm968, %v874
  %1004 = vst.msk [vmem:[%s3 + $0x8c] sm:$0xf] %vm968, %v875
  %1005 = vst.msk [vmem:[%s3 + $0x90] sm:$0xf] %vm968, %v876
  %1006 = vst.msk [vmem:[%s3 + $0x94] sm:$0xf] %vm968, %v877
  %1007 = vst.msk [vmem:[%s3 + $0x98] sm:$0xf] %vm968, %v878
  %1008 = vst.msk [vmem:[%s3 + $0x9c] sm:$0xf] %vm968, %v879
  %1009 = vst.msk [vmem:[%s3 + $0xa0] sm:$0xf] %vm968, %v880
  %1010 = vst.msk [vmem:[%s3 + $0xa4] sm:$0xf] %vm968, %v881
  %1011 = vst.msk [vmem:[%s3 + $0xa8] sm:$0xf] %vm968, %v882
  %1012 = vst.msk [vmem:[%s3 + $0xac] sm:$0xf] %vm968, %v883
  %1013 = vst.msk [vmem:[%s3 + $0xb0] sm:$0xf] %vm968, %v884
  %1014 = vst.msk [vmem:[%s3 + $0xb4] sm:$0xf] %vm968, %v885
  %1015 = vst.msk [vmem:[%s3 + $0xb8] sm:$0xf] %vm968, %v886
  %1016 = vst.msk [vmem:[%s3 + $0xbc] sm:$0xf] %vm968, %v887
  %1017 = vst.msk [vmem:[%s3 + $0xc0] sm:$0xf] %vm968, %v888
  %1018 = vst.msk [vmem:[%s3 + $0xc4] sm:$0xf] %vm968, %v889
  %1019 = vst.msk [vmem:[%s3 + $0xc8] sm:$0xf] %vm968, %v890
  %1020 = vst.msk [vmem:[%s3 + $0xcc] sm:$0xf] %vm968, %v891
  %1021 = vst.msk [vmem:[%s3 + $0xd0] sm:$0xf] %vm968, %v892
  %1022 = vst.msk [vmem:[%s3 + $0xd4] sm:$0xf] %vm968, %v893
  %1023 = vst.msk [vmem:[%s3 + $0xd8] sm:$0xf] %vm968, %v894
  %1024 = vst.msk [vmem:[%s3 + $0xdc] sm:$0xf] %vm968, %v895
  %1025 = vst.msk [vmem:[%s3 + $0xe0] sm:$0xf] %vm968, %v896
  %1026 = vst.msk [vmem:[%s3 + $0xe4] sm:$0xf] %vm968, %v897
  %1027 = vst.msk [vmem:[%s3 + $0xe8] sm:$0xf] %vm968, %v898
  %1028 = vst.msk [vmem:[%s3 + $0xec] sm:$0xf] %vm968, %v899
  %1029 = vst.msk [vmem:[%s3 + $0xf0] sm:$0xf] %vm968, %v900
  %1030 = vst.msk [vmem:[%s3 + $0xf4] sm:$0xf] %vm968, %v901
  %1031 = vst.msk [vmem:[%s3 + $0xf8] sm:$0xf] %vm968, %v902
  %1032 = vst.msk [vmem:[%s3 + $0xfc] sm:$0xf] %vm968, %v903
  // Predicated region
  $region14: #{simrec_forward.4} parent=0 // pred_check
    _
  $region15: #{simrec_forward.4} parent=0 // pred_check_branch
    %1034 = sbr.rel (0) target = $region17
  $region16: #{simrec_forward.4} parent=0 // pred_region
    _
  $region17: #{simrec_forward.4} parent=0 // pred_fallthru
    _
  // Predicated region
  $region18: #{simrec_forward.4} parent=0 // pred_check
    _
  $region19: #{simrec_forward.4} parent=0 // pred_check_branch
    %1036 = sbr.rel (0) target = $region21
  $region20: #{simrec_forward.4} parent=0 // pred_region
    _
  $region21: #{simrec_forward.4} parent=0 // pred_fallthru
    _

// kernel: simrec_forward.5
$region0: #{simrec_forward.5}
  #allocation0 [shape = 'u32[]', space=smem, size = 0x4, offset = 0x4, fixed_abs, tag = 'smem constant byte address 0x4 - core index']
  #allocation1 [shape = 'u32[144,128]{1,0:T(1,128)}', space=vmem, size = 0x12000, scoped, tag = 'internal scratch']
  %s0 = inlined_call_operand.vmem [shape: bf16[128,144], index: 0, kind: input, shape index: {}]
  %s1 = inlined_call_operand.vmem [shape: bf16[144,32], index: 1, kind: input, shape index: {}]
  %s2 = inlined_call_operand.vmem [shape: f32[1,32], index: 2, kind: input, shape index: {}]
  %s3 = inlined_call_operand.vmem [shape: bf16[128,32], index: 3, kind: output, shape index: {}]
  %s4 = sld [smem:[#allocation0]]
  $region22: #{simrec_forward.5} parent=0
    _
  %s6 = ssub.s32 1, %s4
  %s7 = scalar_select 0, %s6, %s4
  // Predicated region
  $region2: #{simrec_forward.5} parent=0 // pred_check
    _
  $region3: #{simrec_forward.5} parent=0 // pred_check_branch
    %9 = sbr.rel (0) target = $region5
  $region4: #{simrec_forward.5} parent=0 // pred_region
    _
  $region5: #{simrec_forward.5} parent=0 // pred_fallthru
    _
  // Predicated region
  $region6: #{simrec_forward.5} parent=0 // pred_check
    _
  $region7: #{simrec_forward.5} parent=0 // pred_check_branch
    %11 = sbr.rel (0) target = $region9
  $region8: #{simrec_forward.5} parent=0 // pred_region
    _
  $region9: #{simrec_forward.5} parent=0 // pred_fallthru
    _
  // Predicated region
  $region10: #{simrec_forward.5} parent=0 // pred_check
    _
  $region11: #{simrec_forward.5} parent=0 // pred_check_branch
    %13 = sbr.rel (0) target = $region13
  $region12: #{simrec_forward.5} parent=0 // pred_region
    _
  $region13: #{simrec_forward.5} parent=0 // pred_fallthru
    _
  %v15 = vld [vmem:[%s0] sm:$0xff]
  %v16 = vld [vmem:[%s0 + $0x8] sm:$0xff]
  %v17 = vld [vmem:[%s0 + $0x10] sm:$0xff]
  %v18 = vld [vmem:[%s0 + $0x18] sm:$0xff]
  %v19 = vld [vmem:[%s0 + $0x20] sm:$0xff]
  %v20 = vld [vmem:[%s0 + $0x28] sm:$0xff]
  %v21 = vld [vmem:[%s0 + $0x30] sm:$0xff]
  %v22 = vld [vmem:[%s0 + $0x38] sm:$0xff]
  %v23 = vld [vmem:[%s0 + $0x40] sm:$0xff]
  %v24 = vld [vmem:[%s0 + $0x48] sm:$0xff]
  %v25 = vld [vmem:[%s0 + $0x50] sm:$0xff]
  %v26 = vld [vmem:[%s0 + $0x58] sm:$0xff]
  %v27 = vld [vmem:[%s0 + $0x60] sm:$0xff]
  %v28 = vld [vmem:[%s0 + $0x68] sm:$0xff]
  %v29 = vld [vmem:[%s0 + $0x70] sm:$0xff]
  %v30 = vld [vmem:[%s0 + $0x78] sm:$0xff]
  %v31 = vld [vmem:[%s1] sm:$0xf]
  %v32 = vld [vmem:[%s1 + $0x4] sm:$0xf]
  %v33 = vld [vmem:[%s1 + $0x8] sm:$0xf]
  %v34 = vld [vmem:[%s1 + $0xc] sm:$0xf]
  %v35 = vld [vmem:[%s1 + $0x10] sm:$0xf]
  %v36 = vld [vmem:[%s1 + $0x14] sm:$0xf]
  %v37 = vld [vmem:[%s1 + $0x18] sm:$0xf]
  %v38 = vld [vmem:[%s1 + $0x1c] sm:$0xf]
  %v39 = vld [vmem:[%s1 + $0x20] sm:$0xf]
  %v40 = vld [vmem:[%s1 + $0x24] sm:$0xf]
  %v41 = vld [vmem:[%s1 + $0x28] sm:$0xf]
  %v42 = vld [vmem:[%s1 + $0x2c] sm:$0xf]
  %v43 = vld [vmem:[%s1 + $0x30] sm:$0xf]
  %v44 = vld [vmem:[%s1 + $0x34] sm:$0xf]
  %v45 = vld [vmem:[%s1 + $0x38] sm:$0xf]
  %v46 = vld [vmem:[%s1 + $0x3c] sm:$0xf]
  %v47 = vld [vmem:[%s1 + $0x40] sm:$0xf]
  %v48 = vld [vmem:[%s1 + $0x44] sm:$0xf]
  %v49 = vld [vmem:[%s2] sm:$0x1]
  %v51 = vlaneseq
  %v52 = vshrl.u32 %v51, 7
  %v53 = vsub.s32 0, %v52
  %v54 = vrot.slane %v49, %v53
  %v72 = vunpack.c.l.b16 %v15
  %v73 = vunpack.c.h.b16 %v15
  %v74 = vunpack.c.l.b16 %v16
  %v75 = vunpack.c.h.b16 %v16
  %v76 = vunpack.c.l.b16 %v17
  %v77 = vunpack.c.h.b16 %v17
  %v78 = vunpack.c.l.b16 %v18
  %v79 = vunpack.c.h.b16 %v18
  %v80 = vunpack.c.l.b16 %v19
  %v81 = vunpack.c.h.b16 %v19
  %v82 = vunpack.c.l.b16 %v20
  %v83 = vunpack.c.h.b16 %v20
  %v84 = vunpack.c.l.b16 %v21
  %v85 = vunpack.c.h.b16 %v21
  %v86 = vunpack.c.l.b16 %v22
  %v87 = vunpack.c.h.b16 %v22
  %v88 = vunpack.c.l.b16 %v23
  %v89 = vunpack.c.h.b16 %v23
  %v90 = vunpack.c.l.b16 %v24
  %v91 = vunpack.c.h.b16 %v24
  %v92 = vunpack.c.l.b16 %v25
  %v93 = vunpack.c.h.b16 %v25
  %v94 = vunpack.c.l.b16 %v26
  %v95 = vunpack.c.h.b16 %v26
  %v96 = vunpack.c.l.b16 %v27
  %v97 = vunpack.c.h.b16 %v27
  %v98 = vunpack.c.l.b16 %v28
  %v99 = vunpack.c.h.b16 %v28
  %v100 = vunpack.c.l.b16 %v29
  %v101 = vunpack.c.h.b16 %v29
  %v102 = vunpack.c.l.b16 %v30
  %v103 = vunpack.c.h.b16 %v30
  %v104 = vpack.c.b16 %v74, %v72
  %v105 = vpack.c.b16 %v75, %v73
  %v106 = vpack.c.b16 %v78, %v76
  %v107 = vpack.c.b16 %v79, %v77
  %v108 = vpack.c.b16 %v82, %v80
  %v109 = vpack.c.b16 %v83, %v81
  %v110 = vpack.c.b16 %v86, %v84
  %v111 = vpack.c.b16 %v87, %v85
  %v112 = vpack.c.b16 %v90, %v88
  %v113 = vpack.c.b16 %v91, %v89
  %v114 = vpack.c.b16 %v94, %v92
  %v115 = vpack.c.b16 %v95, %v93
  %v116 = vpack.c.b16 %v98, %v96
  %v117 = vpack.c.b16 %v99, %v97
  %v118 = vpack.c.b16 %v102, %v100
  %v119 = vpack.c.b16 %v103, %v101
  %v146 = vunpack.c.l.b16 %v31
  %v147 = vunpack.c.l.b16 %v32
  %v148 = vunpack.c.l.b16 %v33
  %v149 = vunpack.c.l.b16 %v34
  %v150 = vunpack.c.l.b16 %v35
  %v151 = vunpack.c.l.b16 %v36
  %v152 = vunpack.c.l.b16 %v37
  %v153 = vunpack.c.l.b16 %v38
  %v154 = vunpack.c.l.b16 %v39
  %v155 = vunpack.c.l.b16 %v40
  %v156 = vunpack.c.l.b16 %v41
  %v157 = vunpack.c.l.b16 %v42
  %v158 = vunpack.c.l.b16 %v43
  %v159 = vunpack.c.l.b16 %v44
  %v160 = vunpack.c.l.b16 %v45
  %v161 = vunpack.c.l.b16 %v46
  %v162 = vunpack.c.l.b16 %v47
  %v163 = vunpack.c.l.b16 %v48
  %v164 = vpack.c.b16 %v147, %v146
  %v165 = vpack.c.b16 %v149, %v148
  %v166 = vpack.c.b16 %v151, %v150
  %v167 = vpack.c.b16 %v153, %v152
  %v168 = vpack.c.b16 %v155, %v154
  %v169 = vpack.c.b16 %v157, %v156
  %v170 = vpack.c.b16 %v159, %v158
  %v171 = vpack.c.b16 %v161, %v160
  %v172 = vpack.c.b16 %v163, %v162
  %vm182 = vcmask 130048
  %v184 = vsel %vm182, %v105, 0
  %v187 = vsel %vm182, %v107, 0
  %v190 = vsel %vm182, %v109, 0
  %v193 = vsel %vm182, %v111, 0
  %v196 = vsel %vm182, %v113, 0
  %v199 = vsel %vm182, %v115, 0
  %v202 = vsel %vm182, %v117, 0
  %v205 = vsel %vm182, %v119, 0
  %207 = vmatprep.subr.bf16.mxu0 0
  %208 = vmatpush1.bf16.msra.mxu0 %v164
  %209 = vmatprep.subr.bf16.mxu0 0
  %210 = vmatpush1.bf16.msra.mxu0 %v165
  %211 = vmatprep.subr.bf16.mxu0 0
  %212 = vmatpush1.bf16.msra.mxu0 %v166
  %213 = vmatprep.subr.bf16.mxu0 0
  %214 = vmatpush1.bf16.msra.mxu0 %v167
  %215 = vmatprep.subr.bf16.mxu0 0
  %216 = vmatpush1.bf16.msra.mxu0 %v168
  %217 = vmatprep.subr.bf16.mxu0 0
  %218 = vmatpush1.bf16.msra.mxu0 %v169
  %219 = vmatprep.subr.bf16.mxu0 0
  %220 = vmatpush1.bf16.msra.mxu0 %v170
  %221 = vmatprep.subr.bf16.mxu0 0
  %222 = vmatpush1.bf16.msra.mxu0 %v171
  %223 = vmatprep.subr.bf16.mxu0 0
  %224 = vmatpush1.bf16.msra.mxu0 %v172
  %225 = vmatprep.subr.bf16.mxu0 0
  %226 = vmatpush1.bf16.msra.mxu0 0
  %227 = vmatprep.subr.bf16.mxu0 0
  %228 = vmatpush1.bf16.msra.mxu0 0
  %229 = vmatprep.subr.bf16.mxu0 0
  %230 = vmatpush1.bf16.msra.mxu0 0
  %231 = vmatprep.subr.bf16.mxu0 0
  %232 = vmatpush1.bf16.msra.mxu0 0
  %233 = vmatprep.subr.bf16.mxu0 0
  %234 = vmatpush1.bf16.msra.mxu0 0
  %235 = vmatprep.subr.bf16.mxu0 0
  %236 = vmatpush1.bf16.msra.mxu0 0
  %237 = vmatprep.subr.bf16.mxu0 0
  %238 = vmatpush1.bf16.msra.mxu0 0
  %239 = vmatprep.mubr.bf16.mxu0 %v184
  %240 = vmatmul.mubr.bf16.gmra.mrb[0].mxu0 %v104
  %v241 = vpop.f32.mrb[0].mxu0
  %v242 = vadd.f32 %v54, %v241
  %v243 = vpop.f32.mrb[0].mxu0
  %v244 = vpop.f32.mrb[0].mxu0
  %v245 = vadd.f32 %v54, %v244
  %v246 = vpop.f32.mrb[0].mxu0
  %247 = vmatprep.mubr.bf16.mxu0 %v187
  %248 = vmatmul.mubr.bf16.gmra.mrb[0].mxu0 %v106
  %v249 = vpop.f32.mrb[0].mxu0
  %v250 = vadd.f32 %v54, %v249
  %v251 = vpop.f32.mrb[0].mxu0
  %v252 = vpop.f32.mrb[0].mxu0
  %v253 = vadd.f32 %v54, %v252
  %v254 = vpop.f32.mrb[0].mxu0
  %255 = vmatprep.mubr.bf16.mxu0 %v190
  %256 = vmatmul.mubr.bf16.gmra.mrb[0].mxu0 %v108
  %v257 = vpop.f32.mrb[0].mxu0
  %v258 = vadd.f32 %v54, %v257
  %v259 = vpop.f32.mrb[0].mxu0
  %v260 = vpop.f32.mrb[0].mxu0
  %v261 = vadd.f32 %v54, %v260
  %v262 = vpop.f32.mrb[0].mxu0
  %263 = vmatprep.mubr.bf16.mxu0 %v193
  %264 = vmatmul.mubr.bf16.gmra.mrb[0].mxu0 %v110
  %v265 = vpop.f32.mrb[0].mxu0
  %v266 = vadd.f32 %v54, %v265
  %v267 = vpop.f32.mrb[0].mxu0
  %v268 = vpop.f32.mrb[0].mxu0
  %v269 = vadd.f32 %v54, %v268
  %v270 = vpop.f32.mrb[0].mxu0
  %271 = vmatprep.mubr.bf16.mxu0 %v196
  %272 = vmatmul.mubr.bf16.gmra.mrb[0].mxu0 %v112
  %v273 = vpop.f32.mrb[0].mxu0
  %v274 = vadd.f32 %v54, %v273
  %v275 = vpop.f32.mrb[0].mxu0
  %v276 = vpop.f32.mrb[0].mxu0
  %v277 = vadd.f32 %v54, %v276
  %v278 = vpop.f32.mrb[0].mxu0
  %279 = vmatprep.mubr.bf16.mxu0 %v199
  %280 = vmatmul.mubr.bf16.gmra.mrb[0].mxu0 %v114
  %v281 = vpop.f32.mrb[0].mxu0
  %v282 = vadd.f32 %v54, %v281
  %v283 = vpop.f32.mrb[0].mxu0
  %v284 = vpop.f32.mrb[0].mxu0
  %v285 = vadd.f32 %v54, %v284
  %v286 = vpop.f32.mrb[0].mxu0
  %287 = vmatprep.mubr.bf16.mxu0 %v202
  %288 = vmatmul.mubr.bf16.gmra.mrb[0].mxu0 %v116
  %v289 = vpop.f32.mrb[0].mxu0
  %v290 = vadd.f32 %v54, %v289
  %v291 = vpop.f32.mrb[0].mxu0
  %v292 = vpop.f32.mrb[0].mxu0
  %v293 = vadd.f32 %v54, %v292
  %v294 = vpop.f32.mrb[0].mxu0
  %295 = vmatprep.mubr.bf16.mxu0 %v205
  %296 = vmatmul.mubr.bf16.gmra.mrb[0].mxu0 %v118
  %v297 = vpop.f32.mrb[0].mxu0
  %v298 = vadd.f32 %v54, %v297
  %v299 = vpop.f32.mrb[0].mxu0
  %v300 = vpop.f32.mrb[0].mxu0
  %v301 = vadd.f32 %v54, %v300
  %v302 = vpop.f32.mrb[0].mxu0
  %303 = vdwg.mxu0
  %v304 = vmax.f32 %v242, 0.0
  %v305 = vmax.f32 %v245, 0.0
  %v306 = vmax.f32 %v250, 0.0
  %v307 = vmax.f32 %v253, 0.0
  %v308 = vmax.f32 %v258, 0.0
  %v309 = vmax.f32 %v261, 0.0
  %v310 = vmax.f32 %v266, 0.0
  %v311 = vmax.f32 %v269, 0.0
  %v312 = vmax.f32 %v274, 0.0
  %v313 = vmax.f32 %v277, 0.0
  %v314 = vmax.f32 %v282, 0.0
  %v315 = vmax.f32 %v285, 0.0
  %v316 = vmax.f32 %v290, 0.0
  %v317 = vmax.f32 %v293, 0.0
  %v318 = vmax.f32 %v298, 0.0
  %v319 = vmax.f32 %v301, 0.0
  %v320 = vpack.c.bf16 %v305, %v304
  %v321 = vpack.c.bf16 %v307, %v306
  %v322 = vpack.c.bf16 %v309, %v308
  %v323 = vpack.c.bf16 %v311, %v310
  %v324 = vpack.c.bf16 %v313, %v312
  %v325 = vpack.c.bf16 %v315, %v314
  %v326 = vpack.c.bf16 %v317, %v316
  %v327 = vpack.c.bf16 %v319, %v318
  %v336 = vunpack.c.l.b16 %v320
  %v337 = vunpack.c.h.b16 %v320
  %v338 = vunpack.c.l.b16 %v321
  %v339 = vunpack.c.h.b16 %v321
  %v340 = vunpack.c.l.b16 %v322
  %v341 = vunpack.c.h.b16 %v322
  %v342 = vunpack.c.l.b16 %v323
  %v343 = vunpack.c.h.b16 %v323
  %v344 = vunpack.c.l.b16 %v324
  %v345 = vunpack.c.h.b16 %v324
  %v346 = vunpack.c.l.b16 %v325
  %v347 = vunpack.c.h.b16 %v325
  %v348 = vunpack.c.l.b16 %v326
  %v349 = vunpack.c.h.b16 %v326
  %v350 = vunpack.c.l.b16 %v327
  %v351 = vunpack.c.h.b16 %v327
  %v352 = vpack.c.b16 %v336, %v336
  %v353 = vpack.c.b16 %v337, %v337
  %v354 = vpack.c.b16 %v338, %v338
  %v355 = vpack.c.b16 %v339, %v339
  %v356 = vpack.c.b16 %v340, %v340
  %v357 = vpack.c.b16 %v341, %v341
  %v358 = vpack.c.b16 %v342, %v342
  %v359 = vpack.c.b16 %v343, %v343
  %v360 = vpack.c.b16 %v344, %v344
  %v361 = vpack.c.b16 %v345, %v345
  %v362 = vpack.c.b16 %v346, %v346
  %v363 = vpack.c.b16 %v347, %v347
  %v364 = vpack.c.b16 %v348, %v348
  %v365 = vpack.c.b16 %v349, %v349
  %v366 = vpack.c.b16 %v350, %v350
  %v367 = vpack.c.b16 %v351, %v351
  %vm384 = vcmask 257024
  %385 = vst.msk [vmem:[%s3] sm:$0xf] %vm384, %v352
  %386 = vst.msk [vmem:[%s3 + $0x4] sm:$0xf] %vm384, %v353
  %387 = vst.msk [vmem:[%s3 + $0x8] sm:$0xf] %vm384, %v354
  %388 = vst.msk [vmem:[%s3 + $0xc] sm:$0xf] %vm384, %v355
  %389 = vst.msk [vmem:[%s3 + $0x10] sm:$0xf] %vm384, %v356
  %390 = vst.msk [vmem:[%s3 + $0x14] sm:$0xf] %vm384, %v357
  %391 = vst.msk [vmem:[%s3 + $0x18] sm:$0xf] %vm384, %v358
  %392 = vst.msk [vmem:[%s3 + $0x1c] sm:$0xf] %vm384, %v359
  %393 = vst.msk [vmem:[%s3 + $0x20] sm:$0xf] %vm384, %v360
  %394 = vst.msk [vmem:[%s3 + $0x24] sm:$0xf] %vm384, %v361
  %395 = vst.msk [vmem:[%s3 + $0x28] sm:$0xf] %vm384, %v362
  %396 = vst.msk [vmem:[%s3 + $0x2c] sm:$0xf] %vm384, %v363
  %397 = vst.msk [vmem:[%s3 + $0x30] sm:$0xf] %vm384, %v364
  %398 = vst.msk [vmem:[%s3 + $0x34] sm:$0xf] %vm384, %v365
  %399 = vst.msk [vmem:[%s3 + $0x38] sm:$0xf] %vm384, %v366
  %400 = vst.msk [vmem:[%s3 + $0x3c] sm:$0xf] %vm384, %v367
  // Predicated region
  $region14: #{simrec_forward.5} parent=0 // pred_check
    _
  $region15: #{simrec_forward.5} parent=0 // pred_check_branch
    %402 = sbr.rel (0) target = $region17
  $region16: #{simrec_forward.5} parent=0 // pred_region
    _
  $region17: #{simrec_forward.5} parent=0 // pred_fallthru
    _
  // Predicated region
  $region18: #{simrec_forward.5} parent=0 // pred_check
    _
  $region19: #{simrec_forward.5} parent=0 // pred_check_branch
    %404 = sbr.rel (0) target = $region21
  $region20: #{simrec_forward.5} parent=0 // pred_region
    _
  $region21: #{simrec_forward.5} parent=0 // pred_fallthru
    _

// kernel: simrec_forward.6
$region0: #{simrec_forward.6}
  #allocation0 [shape = 'u32[]', space=smem, size = 0x4, offset = 0x4, fixed_abs, tag = 'smem constant byte address 0x4 - core index']
  #allocation1 [shape = 'u32[144,128]{1,0:T(1,128)}', space=vmem, size = 0x12000, scoped, tag = 'internal scratch']
  %s0 = inlined_call_operand.vmem [shape: bf16[32,288], index: 0, kind: input, shape index: {}]
  %s1 = inlined_call_operand.vmem [shape: bf16[288,32], index: 1, kind: input, shape index: {}]
  %s2 = inlined_call_operand.vmem [shape: f32[1,32], index: 2, kind: input, shape index: {}]
  %s3 = inlined_call_operand.vmem [shape: bf16[32,32], index: 3, kind: output, shape index: {}]
  %s4 = sld [smem:[#allocation0]]
  $region22: #{simrec_forward.6} parent=0
    _
  %s6 = ssub.s32 1, %s4
  %s7 = scalar_select 0, %s6, %s4
  // Predicated region
  $region2: #{simrec_forward.6} parent=0 // pred_check
    _
  $region3: #{simrec_forward.6} parent=0 // pred_check_branch
    %9 = sbr.rel (0) target = $region5
  $region4: #{simrec_forward.6} parent=0 // pred_region
    _
  $region5: #{simrec_forward.6} parent=0 // pred_fallthru
    _
  // Predicated region
  $region6: #{simrec_forward.6} parent=0 // pred_check
    _
  $region7: #{simrec_forward.6} parent=0 // pred_check_branch
    %11 = sbr.rel (0) target = $region9
  $region8: #{simrec_forward.6} parent=0 // pred_region
    _
  $region9: #{simrec_forward.6} parent=0 // pred_fallthru
    _
  // Predicated region
  $region10: #{simrec_forward.6} parent=0 // pred_check
    _
  $region11: #{simrec_forward.6} parent=0 // pred_check_branch
    %13 = sbr.rel (0) target = $region13
  $region12: #{simrec_forward.6} parent=0 // pred_region
    _
  $region13: #{simrec_forward.6} parent=0 // pred_fallthru
    _
  %v15 = vld [vmem:[%s0] sm:$0xff]
  %v16 = vld [vmem:[%s0 + $0x8] sm:$0xf]
  %v17 = vld [vmem:[%s0 + $0xc] sm:$0xff]
  %v18 = vld [vmem:[%s0 + $0x14] sm:$0xf]
  %v19 = vld [vmem:[%s0 + $0x18] sm:$0xff]
  %v20 = vld [vmem:[%s0 + $0x20] sm:$0xf]
  %v21 = vld [vmem:[%s0 + $0x24] sm:$0xff]
  %v22 = vld [vmem:[%s0 + $0x2c] sm:$0xf]
  %v23 = vld [vmem:[%s1] sm:$0xf]
  %v24 = vld [vmem:[%s1 + $0x4] sm:$0xf]
  %v25 = vld [vmem:[%s1 + $0x8] sm:$0xf]
  %v26 = vld [vmem:[%s1 + $0xc] sm:$0xf]
  %v27 = vld [vmem:[%s1 + $0x10] sm:$0xf]
  %v28 = vld [vmem:[%s1 + $0x14] sm:$0xf]
  %v29 = vld [vmem:[%s1 + $0x18] sm:$0xf]
  %v30 = vld [vmem:[%s1 + $0x1c] sm:$0xf]
  %v31 = vld [vmem:[%s1 + $0x20] sm:$0xf]
  %v32 = vld [vmem:[%s1 + $0x24] sm:$0xf]
  %v33 = vld [vmem:[%s1 + $0x28] sm:$0xf]
  %v34 = vld [vmem:[%s1 + $0x2c] sm:$0xf]
  %v35 = vld [vmem:[%s1 + $0x30] sm:$0xf]
  %v36 = vld [vmem:[%s1 + $0x34] sm:$0xf]
  %v37 = vld [vmem:[%s1 + $0x38] sm:$0xf]
  %v38 = vld [vmem:[%s1 + $0x3c] sm:$0xf]
  %v39 = vld [vmem:[%s1 + $0x40] sm:$0xf]
  %v40 = vld [vmem:[%s1 + $0x44] sm:$0xf]
  %v41 = vld [vmem:[%s1 + $0x48] sm:$0xf]
  %v42 = vld [vmem:[%s1 + $0x4c] sm:$0xf]
  %v43 = vld [vmem:[%s1 + $0x50] sm:$0xf]
  %v44 = vld [vmem:[%s1 + $0x54] sm:$0xf]
  %v45 = vld [vmem:[%s1 + $0x58] sm:$0xf]
  %v46 = vld [vmem:[%s1 + $0x5c] sm:$0xf]
  %v47 = vld [vmem:[%s1 + $0x60] sm:$0xf]
  %v48 = vld [vmem:[%s1 + $0x64] sm:$0xf]
  %v49 = vld [vmem:[%s1 + $0x68] sm:$0xf]
  %v50 = vld [vmem:[%s1 + $0x6c] sm:$0xf]
  %v51 = vld [vmem:[%s1 + $0x70] sm:$0xf]
  %v52 = vld [vmem:[%s1 + $0x74] sm:$0xf]
  %v53 = vld [vmem:[%s1 + $0x78] sm:$0xf]
  %v54 = vld [vmem:[%s1 + $0x7c] sm:$0xf]
  %v55 = vld [vmem:[%s1 + $0x80] sm:$0xf]
  %v56 = vld [vmem:[%s1 + $0x84] sm:$0xf]
  %v57 = vld [vmem:[%s1 + $0x88] sm:$0xf]
  %v58 = vld [vmem:[%s1 + $0x8c] sm:$0xf]
  %v59 = vld [vmem:[%s2] sm:$0x1]
  %v61 = vlaneseq
  %v62 = vshrl.u32 %v61, 7
  %v63 = vsub.s32 0, %v62
  %v64 = vrot.slane %v59, %v63
  %v74 = vunpack.c.l.b16 %v15
  %v75 = vunpack.c.h.b16 %v15
  %v76 = vunpack.c.l.b16 %v16
  %v77 = vunpack.c.l.b16 %v17
  %v78 = vunpack.c.h.b16 %v17
  %v79 = vunpack.c.l.b16 %v18
  %v80 = vunpack.c.l.b16 %v19
  %v81 = vunpack.c.h.b16 %v19
  %v82 = vunpack.c.l.b16 %v20
  %v83 = vunpack.c.l.b16 %v21
  %v84 = vunpack.c.h.b16 %v21
  %v85 = vunpack.c.l.b16 %v22
  %v86 = vpack.c.b16 %v77, %v74
  %v87 = vpack.c.b16 %v78, %v75
  %v88 = vpack.c.b16 %v79, %v76
  %v89 = vpack.c.b16 %v83, %v80
  %v90 = vpack.c.b16 %v84, %v81
  %v91 = vpack.c.b16 %v85, %v82
  %v132 = vunpack.c.l.b16 %v23
  %v133 = vunpack.c.l.b16 %v24
  %v134 = vunpack.c.l.b16 %v25
  %v135 = vunpack.c.l.b16 %v26
  %v136 = vunpack.c.l.b16 %v27
  %v137 = vunpack.c.l.b16 %v28
  %v138 = vunpack.c.l.b16 %v29
  %v139 = vunpack.c.l.b16 %v30
  %v140 = vunpack.c.l.b16 %v31
  %v141 = vunpack.c.l.b16 %v32
  %v142 = vunpack.c.l.b16 %v33
  %v143 = vunpack.c.l.b16 %v34
  %v144 = vunpack.c.l.b16 %v35
  %v145 = vunpack.c.l.b16 %v36
  %v146 = vunpack.c.l.b16 %v37
  %v147 = vunpack.c.l.b16 %v38
  %v148 = vunpack.c.l.b16 %v39
  %v149 = vunpack.c.l.b16 %v40
  %v150 = vunpack.c.l.b16 %v41
  %v151 = vunpack.c.l.b16 %v42
  %v152 = vunpack.c.l.b16 %v43
  %v153 = vunpack.c.l.b16 %v44
  %v154 = vunpack.c.l.b16 %v45
  %v155 = vunpack.c.l.b16 %v46
  %v156 = vunpack.c.l.b16 %v47
  %v157 = vunpack.c.l.b16 %v48
  %v158 = vunpack.c.l.b16 %v49
  %v159 = vunpack.c.l.b16 %v50
  %v160 = vunpack.c.l.b16 %v51
  %v161 = vunpack.c.l.b16 %v52
  %v162 = vunpack.c.l.b16 %v53
  %v163 = vunpack.c.l.b16 %v54
  %v164 = vunpack.c.l.b16 %v55
  %v165 = vunpack.c.l.b16 %v56
  %v166 = vunpack.c.l.b16 %v57
  %v167 = vunpack.c.l.b16 %v58
  %v168 = vpack.c.b16 %v133, %v132
  %v169 = vpack.c.b16 %v135, %v134
  %v170 = vpack.c.b16 %v137, %v136
  %v171 = vpack.c.b16 %v139, %v138
  %v172 = vpack.c.b16 %v141, %v140
  %v173 = vpack.c.b16 %v143, %v142
  %v174 = vpack.c.b16 %v145, %v144
  %v175 = vpack.c.b16 %v147, %v146
  %v176 = vpack.c.b16 %v149, %v148
  %v177 = vpack.c.b16 %v151, %v150
  %v178 = vpack.c.b16 %v153, %v152
  %v179 = vpack.c.b16 %v155, %v154
  %v180 = vpack.c.b16 %v157, %v156
  %v181 = vpack.c.b16 %v159, %v158
  %v182 = vpack.c.b16 %v161, %v160
  %v183 = vpack.c.b16 %v163, %v162
  %v184 = vpack.c.b16 %v165, %v164
  %v185 = vpack.c.b16 %v167, %v166
  %vm204 = vcmask 261120
  %v206 = vsel %vm204, %v88, 0
  %v209 = vsel %vm204, %v91, 0
  %211 = vmatprep.subr.bf16.mxu0 0
  %212 = vmatpush1.bf16.msra.mxu0 %v168
  %213 = vmatprep.subr.bf16.mxu0 0
  %214 = vmatpush1.bf16.msra.mxu0 %v169
  %215 = vmatprep.subr.bf16.mxu0 0
  %216 = vmatpush1.bf16.msra.mxu0 %v170
  %217 = vmatprep.subr.bf16.mxu0 0
  %218 = vmatpush1.bf16.msra.mxu0 %v171
  %219 = vmatprep.subr.bf16.mxu0 0
  %220 = vmatpush1.bf16.msra.mxu0 %v172
  %221 = vmatprep.subr.bf16.mxu0 0
  %222 = vmatpush1.bf16.msra.mxu0 %v173
  %223 = vmatprep.subr.bf16.mxu0 0
  %224 = vmatpush1.bf16.msra.mxu0 %v174
  %225 = vmatprep.subr.bf16.mxu0 0
  %226 = vmatpush1.bf16.msra.mxu0 %v175
  %227 = vmatprep.subr.bf16.mxu0 0
  %228 = vmatpush1.bf16.msra.mxu0 %v176
  %229 = vmatprep.subr.bf16.mxu0 0
  %230 = vmatpush1.bf16.msra.mxu0 %v177
  %231 = vmatprep.subr.bf16.mxu0 0
  %232 = vmatpush1.bf16.msra.mxu0 %v178
  %233 = vmatprep.subr.bf16.mxu0 0
  %234 = vmatpush1.bf16.msra.mxu0 %v179
  %235 = vmatprep.subr.bf16.mxu0 0
  %236 = vmatpush1.bf16.msra.mxu0 %v180
  %237 = vmatprep.subr.bf16.mxu0 0
  %238 = vmatpush1.bf16.msra.mxu0 %v181
  %239 = vmatprep.subr.bf16.mxu0 0
  %240 = vmatpush1.bf16.msra.mxu0 %v182
  %241 = vmatprep.subr.bf16.mxu0 0
  %242 = vmatpush1.bf16.msra.mxu0 %v183
  %243 = vmatprep.mubr.bf16.mxu0 %v87
  %244 = vmatmul.mubr.bf16.gmra.mrb[0].mxu0 %v86
  %v245 = vpop.f32.mrb[0].mxu0
  %v246 = vadd.f32 %v64, %v245
  %v247 = vpop.f32.mrb[0].mxu0
  %v248 = vpop.f32.mrb[0].mxu0
  %v249 = vadd.f32 %v64, %v248
  %v250 = vpop.f32.mrb[0].mxu0
  %251 = vmatprep.mubr.bf16.mxu0 %v90
  %252 = vmatmul.mubr.bf16.gmra.mrb[0].mxu0 %v89
  %v253 = vpop.f32.mrb[0].mxu0
  %v254 = vadd.f32 %v64, %v253
  %v255 = vpop.f32.mrb[0].mxu0
  %v256 = vpop.f32.mrb[0].mxu0
  %v257 = vadd.f32 %v64, %v256
  %v258 = vpop.f32.mrb[0].mxu0
  %259 = vdwg.mxu0
  %260 = vmatprep.subr.bf16.mxu0 0
  %261 = vmatpush1.bf16.msra.mxu0 %v184
  %262 = vmatprep.subr.bf16.mxu0 0
  %263 = vmatpush1.bf16.msra.mxu0 %v185
  %264 = vmatprep.subr.bf16.mxu0 0
  %265 = vmatpush1.bf16.msra.mxu0 0
  %266 = vmatprep.subr.bf16.mxu0 0
  %267 = vmatpush1.bf16.msra.mxu0 0
  %268 = vmatprep.subr.bf16.mxu0 0
  %269 = vmatpush1.bf16.msra.mxu0 0
  %270 = vmatprep.subr.bf16.mxu0 0
  %271 = vmatpush1.bf16.msra.mxu0 0
  %272 = vmatprep.subr.bf16.mxu0 0
  %273 = vmatpush1.bf16.msra.mxu0 0
  %274 = vmatprep.subr.bf16.mxu0 0
  %275 = vmatpush1.bf16.msra.mxu0 0
  %276 = vmatprep.subr.bf16.mxu0 0
  %277 = vmatpush1.bf16.msra.mxu0 0
  %278 = vmatprep.subr.bf16.mxu0 0
  %279 = vmatpush1.bf16.msra.mxu0 0
  %280 = vmatprep.subr.bf16.mxu0 0
  %281 = vmatpush1.bf16.msra.mxu0 0
  %282 = vmatprep.subr.bf16.mxu0 0
  %283 = vmatpush1.bf16.msra.mxu0 0
  %284 = vmatprep.subr.bf16.mxu0 0
  %285 = vmatpush1.bf16.msra.mxu0 0
  %286 = vmatprep.subr.bf16.mxu0 0
  %287 = vmatpush1.bf16.msra.mxu0 0
  %288 = vmatprep.subr.bf16.mxu0 0
  %289 = vmatpush1.bf16.msra.mxu0 0
  %290 = vmatprep.subr.bf16.mxu0 0
  %291 = vmatpush1.bf16.msra.mxu0 0
  %292 = vmatprep.mubr.bf16.mxu0 0
  %293 = vmatmul.mubr.bf16.gmra.mrb[0].mxu0 %v206
  %v294 = vpop.f32.mrb[0].mxu0
  %v295 = vadd.f32 %v246, %v294
  %v296 = vpop.f32.mrb[0].mxu0
  %v297 = vpop.f32.mrb[0].mxu0
  %v298 = vadd.f32 %v249, %v297
  %v299 = vpop.f32.mrb[0].mxu0
  %300 = vmatprep.mubr.bf16.mxu0 0
  %301 = vmatmul.mubr.bf16.gmra.mrb[0].mxu0 %v209
  %v302 = vpop.f32.mrb[0].mxu0
  %v303 = vadd.f32 %v254, %v302
  %v304 = vpop.f32.mrb[0].mxu0
  %v305 = vpop.f32.mrb[0].mxu0
  %v306 = vadd.f32 %v257, %v305
  %v307 = vpop.f32.mrb[0].mxu0
  %308 = vdwg.mxu0
  %v309 = vmax.f32 %v295, 0.0
  %v310 = vmax.f32 %v298, 0.0
  %v311 = vmax.f32 %v303, 0.0
  %v312 = vmax.f32 %v306, 0.0
  %v313 = vpack.c.bf16 %v310, %v309
  %v314 = vpack.c.bf16 %v312, %v311
  %v317 = vunpack.c.l.b16 %v313
  %v318 = vunpack.c.h.b16 %v313
  %v319 = vunpack.c.l.b16 %v314
  %v320 = vunpack.c.h.b16 %v314
  %v321 = vpack.c.b16 %v317, %v317
  %v322 = vpack.c.b16 %v318, %v318
  %v323 = vpack.c.b16 %v319, %v319
  %v324 = vpack.c.b16 %v320, %v320
  %vm329 = vcmask 257024
  %330 = vst.msk [vmem:[%s3] sm:$0xf] %vm329, %v321
  %331 = vst.msk [vmem:[%s3 + $0x4] sm:$0xf] %vm329, %v322
  %332 = vst.msk [vmem:[%s3 + $0x8] sm:$0xf] %vm329, %v323
  %333 = vst.msk [vmem:[%s3 + $0xc] sm:$0xf] %vm329, %v324
  // Predicated region
  $region14: #{simrec_forward.6} parent=0 // pred_check
    _
  $region15: #{simrec_forward.6} parent=0 // pred_check_branch
    %335 = sbr.rel (0) target = $region17
  $region16: #{simrec_forward.6} parent=0 // pred_region
    _
  $region17: #{simrec_forward.6} parent=0 // pred_fallthru
    _
  // Predicated region
  $region18: #{simrec_forward.6} parent=0 // pred_check
    _
  $region19: #{simrec_forward.6} parent=0 // pred_check_branch
    %337 = sbr.rel (0) target = $region21
  $region20: #{simrec_forward.6} parent=0 // pred_region
    _
  $region21: #{simrec_forward.6} parent=0 // pred_fallthru
    _

// kernel: simrec_forward.7
$region0: #{simrec_forward.7}
  #allocation0 [shape = 'u32[]', space=smem, size = 0x4, offset = 0x4, fixed_abs, tag = 'smem constant byte address 0x4 - core index']
  #allocation1 [shape = 'u32[144,128]{1,0:T(1,128)}', space=vmem, size = 0x12000, scoped, tag = 'internal scratch']
  #allocation2 [shape = 'f32[1,1]{1,0:T(1,128)S(1)}', space=vmem, size = 0x200, scoped, tag = 'scoped memory for simrec_forward.7']
  %s0 = inlined_call_operand.vmem [shape: bf16[2,16,16,16], index: 0, kind: input, shape index: {}]
  %s1 = inlined_call_operand.vmem [shape: bf16[2,16,32], index: 1, kind: input, shape index: {}]
  %s2 = inlined_call_operand.vmem [shape: f32[2,8,32], index: 2, kind: input, shape index: {}]
  %s3 = inlined_call_operand.vmem [shape: f32[32,32], index: 3, kind: input, shape index: {}]
  %s4 = inlined_call_operand.vmem [shape: f32[1,32], index: 4, kind: input, shape index: {}]
  %s5 = inlined_call_operand.vmem [shape: f32[32,16], index: 5, kind: input, shape index: {}]
  %s6 = inlined_call_operand.vmem [shape: f32[1,16], index: 6, kind: input, shape index: {}]
  %s7 = inlined_call_operand.vmem [shape: bf16[16,32], index: 7, kind: input, shape index: {}]
  %s8 = inlined_call_operand.vmem [shape: f32[1,32], index: 8, kind: input, shape index: {}]
  %s9 = inlined_call_operand.vmem [shape: f32[32,32], index: 9, kind: input, shape index: {}]
  %s10 = inlined_call_operand.vmem [shape: f32[1,32], index: 10, kind: input, shape index: {}]
  %s11 = inlined_call_operand.vmem [shape: bf16[32,32], index: 11, kind: input, shape index: {}]
  %s12 = inlined_call_operand.vmem [shape: f32[1,32], index: 12, kind: input, shape index: {}]
  %s13 = inlined_call_operand.vmem [shape: bf16[32,32], index: 13, kind: input, shape index: {}]
  %s14 = inlined_call_operand.vmem [shape: f32[1,32], index: 14, kind: input, shape index: {}]
  %s15 = inlined_call_operand.vmem [shape: bf16[32,32], index: 15, kind: input, shape index: {}]
  %s16 = inlined_call_operand.vmem [shape: f32[1,32], index: 16, kind: input, shape index: {}]
  %s17 = inlined_call_operand.vmem [shape: f32[32,32], index: 17, kind: input, shape index: {}]
  %s18 = inlined_call_operand.vmem [shape: bf16[32,32], index: 18, kind: input, shape index: {}]
  %s19 = inlined_call_operand.vmem [shape: f32[32,4], index: 19, kind: input, shape index: {}]
  %s20 = inlined_call_operand.vmem [shape: f32[1,4], index: 20, kind: input, shape index: {}]
  %s21 = inlined_call_operand.vmem [shape: f32[1,32], index: 21, kind: input, shape index: {}]
  %s22 = inlined_call_operand.<no memory space> [shape: f32[1,1], index: 22, kind: input, shape index: {}]
  %s23 = inlined_call_operand.hbm [shape: f32[2,4], index: 23, kind: output, shape index: {0}]
  %s24 = inlined_call_operand.vmem [shape: f32[2,256], index: 24, kind: output, shape index: {1}]
  %25 = xla_tuple %s23, %s24
  %s26 = sld [smem:[#allocation0]]
  $region110: #{simrec_forward.7} parent=0
    _
  %s28 = ssub.s32 1, %s26
  %s29 = scalar_select 0, %s28, %s26
  %v30 = vstv %s22
  %31 = vst [vmem:[#allocation2] sm:$0x1] %v30
  $region1: #{simrec_forward.7} parent=0
    #allocation3 [shape = 'u8[1024]{0}', space=vmem, size = 0x400, scoped, tag = 'output window, operand 0, single buffered']
    #allocation4 [shape = 's32[1]{0}', space=sflag, size = 0x4, scoped, tag = 'scoped memory for simrec_forward.7']
    %32 = vsyncpa [#allocation4], 0
    // Predicated region
    $region2: #{simrec_forward.7} parent=1 // pred_check
      _
    $region3: #{simrec_forward.7} parent=1 // pred_check_branch
      %34 = sbr.rel (0) target = $region5
    $region4: #{simrec_forward.7} parent=1 // pred_region
      _
    $region5: #{simrec_forward.7} parent=1 // pred_fallthru
      _
    // Predicated region
    $region6: #{simrec_forward.7} parent=1 // pred_check
      _
    $region7: #{simrec_forward.7} parent=1 // pred_check_branch
      %36 = sbr.rel (0) target = $region9
    $region8: #{simrec_forward.7} parent=1 // pred_region
      _
    $region9: #{simrec_forward.7} parent=1 // pred_fallthru
      _
    // Predicated region
    $region10: #{simrec_forward.7} parent=1 // pred_check
      _
    $region11: #{simrec_forward.7} parent=1 // pred_check_branch
      %38 = sbr.rel (0) target = $region13
    $region12: #{simrec_forward.7} parent=1 // pred_region
      _
    $region13: #{simrec_forward.7} parent=1 // pred_fallthru
      _
    // Predicated region
    $region14: #{simrec_forward.7} parent=1 // pred_check
      _
    $region15: #{simrec_forward.7} parent=1 // pred_check_branch
      %40 = sbr.rel (0) target = $region17
    $region16: #{simrec_forward.7} parent=1 // pred_region
      _
    $region17: #{simrec_forward.7} parent=1 // pred_fallthru
      _
    // Predicated region
    $region18: #{simrec_forward.7} parent=1 // pred_check
      _
    $region19: #{simrec_forward.7} parent=1 // pred_check_branch
      %42 = sbr.rel (0) target = $region21
    $region20: #{simrec_forward.7} parent=1 // pred_region
      _
    $region21: #{simrec_forward.7} parent=1 // pred_fallthru
      _
    // Predicated region
    $region22: #{simrec_forward.7} parent=1 // pred_check
      _
    $region23: #{simrec_forward.7} parent=1 // pred_check_branch
      %44 = sbr.rel (0) target = $region25
    $region24: #{simrec_forward.7} parent=1 // pred_region
      _
    $region25: #{simrec_forward.7} parent=1 // pred_fallthru
      _
    // Predicated region
    $region26: #{simrec_forward.7} parent=1 // pred_check
      _
    $region27: #{simrec_forward.7} parent=1 // pred_check_branch
      %46 = sbr.rel (0) target = $region29
    $region28: #{simrec_forward.7} parent=1 // pred_region
      _
    $region29: #{simrec_forward.7} parent=1 // pred_fallthru
      _
    // Predicated region
    $region30: #{simrec_forward.7} parent=1 // pred_check
      _
    $region31: #{simrec_forward.7} parent=1 // pred_check_branch
      %48 = sbr.rel (0) target = $region33
    $region32: #{simrec_forward.7} parent=1 // pred_region
      _
    $region33: #{simrec_forward.7} parent=1 // pred_fallthru
      _
    // Predicated region
    $region34: #{simrec_forward.7} parent=1 // pred_check
      _
    $region35: #{simrec_forward.7} parent=1 // pred_check_branch
      %50 = sbr.rel (0) target = $region37
    $region36: #{simrec_forward.7} parent=1 // pred_region
      _
    $region37: #{simrec_forward.7} parent=1 // pred_fallthru
      _
    // Predicated region
    $region38: #{simrec_forward.7} parent=1 // pred_check
      _
    $region39: #{simrec_forward.7} parent=1 // pred_check_branch
      %52 = sbr.rel (0) target = $region41
    $region40: #{simrec_forward.7} parent=1 // pred_region
      _
    $region41: #{simrec_forward.7} parent=1 // pred_fallthru
      _
    // Predicated region
    $region42: #{simrec_forward.7} parent=1 // pred_check
      _
    $region43: #{simrec_forward.7} parent=1 // pred_check_branch
      %54 = sbr.rel (0) target = $region45
    $region44: #{simrec_forward.7} parent=1 // pred_region
      _
    $region45: #{simrec_forward.7} parent=1 // pred_fallthru
      _
    // Predicated region
    $region46: #{simrec_forward.7} parent=1 // pred_check
      _
    $region47: #{simrec_forward.7} parent=1 // pred_check_branch
      %56 = sbr.rel (0) target = $region49
    $region48: #{simrec_forward.7} parent=1 // pred_region
      _
    $region49: #{simrec_forward.7} parent=1 // pred_fallthru
      _
    // Predicated region
    $region50: #{simrec_forward.7} parent=1 // pred_check
      _
    $region51: #{simrec_forward.7} parent=1 // pred_check_branch
      %58 = sbr.rel (0) target = $region53
    $region52: #{simrec_forward.7} parent=1 // pred_region
      _
    $region53: #{simrec_forward.7} parent=1 // pred_fallthru
      _
    // Predicated region
    $region54: #{simrec_forward.7} parent=1 // pred_check
      _
    $region55: #{simrec_forward.7} parent=1 // pred_check_branch
      %60 = sbr.rel (0) target = $region57
    $region56: #{simrec_forward.7} parent=1 // pred_region
      _
    $region57: #{simrec_forward.7} parent=1 // pred_fallthru
      _
    // Predicated region
    $region58: #{simrec_forward.7} parent=1 // pred_check
      _
    $region59: #{simrec_forward.7} parent=1 // pred_check_branch
      %62 = sbr.rel (0) target = $region61
    $region60: #{simrec_forward.7} parent=1 // pred_region
      _
    $region61: #{simrec_forward.7} parent=1 // pred_fallthru
      _
    // Predicated region
    $region62: #{simrec_forward.7} parent=1 // pred_check
      _
    $region63: #{simrec_forward.7} parent=1 // pred_check_branch
      %64 = sbr.rel (0) target = $region65
    $region64: #{simrec_forward.7} parent=1 // pred_region
      _
    $region65: #{simrec_forward.7} parent=1 // pred_fallthru
      _
    // Predicated region
    $region66: #{simrec_forward.7} parent=1 // pred_check
      _
    $region67: #{simrec_forward.7} parent=1 // pred_check_branch
      %66 = sbr.rel (0) target = $region69
    $region68: #{simrec_forward.7} parent=1 // pred_region
      _
    $region69: #{simrec_forward.7} parent=1 // pred_fallthru
      _
    // Predicated region
    $region70: #{simrec_forward.7} parent=1 // pred_check
      _
    $region71: #{simrec_forward.7} parent=1 // pred_check_branch
      %68 = sbr.rel (0) target = $region73
    $region72: #{simrec_forward.7} parent=1 // pred_region
      _
    $region73: #{simrec_forward.7} parent=1 // pred_fallthru
      _
    // Predicated region
    $region74: #{simrec_forward.7} parent=1 // pred_check
      _
    $region75: #{simrec_forward.7} parent=1 // pred_check_branch
      %70 = sbr.rel (0) target = $region77
    $region76: #{simrec_forward.7} parent=1 // pred_region
      _
    $region77: #{simrec_forward.7} parent=1 // pred_fallthru
      _
    // Predicated region
    $region78: #{simrec_forward.7} parent=1 // pred_check
      _
    $region79: #{simrec_forward.7} parent=1 // pred_check_branch
      %72 = sbr.rel (0) target = $region81
    $region80: #{simrec_forward.7} parent=1 // pred_region
      _
    $region81: #{simrec_forward.7} parent=1 // pred_fallthru
      _
    // Predicated region
    $region82: #{simrec_forward.7} parent=1 // pred_check
      _
    $region83: #{simrec_forward.7} parent=1 // pred_check_branch
      %74 = sbr.rel (0) target = $region85
    $region84: #{simrec_forward.7} parent=1 // pred_region
      _
    $region85: #{simrec_forward.7} parent=1 // pred_fallthru
      _
    // Predicated region
    $region86: #{simrec_forward.7} parent=1 // pred_check
      _
    $region87: #{simrec_forward.7} parent=1 // pred_check_branch
      %76 = sbr.rel (0) target = $region89
    $region88: #{simrec_forward.7} parent=1 // pred_region
      _
    $region89: #{simrec_forward.7} parent=1 // pred_fallthru
      _
    // Predicated region
    $region90: #{simrec_forward.7} parent=1 // pred_check
      _
    $region91: #{simrec_forward.7} parent=1 // pred_check_branch
      %78 = sbr.rel (0) target = $region93
    $region92: #{simrec_forward.7} parent=1 // pred_region
      _
    $region93: #{simrec_forward.7} parent=1 // pred_fallthru
      _
    %v80 = vld [vmem:[%s2] sm:$0xff]
    %v81 = vld [vmem:[%s2 + $0x8] sm:$0xff]
    %vm82 = vcmask 261120
    %v83 = vsel %vm82, %v80, 0.0
    %v84 = vrot.slane %v83, 4
    %v85 = vadd.f32 %v83, %v84
    %v86 = vrot.slane %v85, 2
    %v87 = vadd.f32 %v85, %v86
    %v88 = vrot.slane %v87, 1
    %v89 = vadd.f32 %v87, %v88
    %v90 = vsel %vm82, %v81, 0.0
    %v91 = vrot.slane %v90, 4
    %v92 = vadd.f32 %v90, %v91
    %v93 = vrot.slane %v92, 2
    %v94 = vadd.f32 %v92, %v93
    %v95 = vrot.slane %v94, 1
    %v96 = vadd.f32 %v94, %v95
    %v97 = vrcp.pop 8.0
    %v98 = vmul.f32 %v89, %v97
    %v99 = vmul.f32 %v96, %v97
    %v100 = vld [vmem:[%s3] sm:$0xff]
    %v101 = vld [vmem:[%s3 + $0x8] sm:$0xff]
    %v102 = vld [vmem:[%s3 + $0x10] sm:$0xff]
    %v103 = vld [vmem:[%s3 + $0x18] sm:$0xff]
    %v104 = vld [vmem:[%s4] sm:$0x1]
    %v106 = vlaneseq
    %v107 = vshrl.u32 %v106, 7
    %v108 = vsub.s32 0, %v107
    %v109 = vrot.slane %v104, %v108
    %vm113 = vcmask 1041409
    %v114 = vsel %vm113, %v99, %v98
    %v115 = vsel %vm82, %v114, 0
    %117 = vmatprep.subr.mxu0 0.0
    %118 = vmatpush1.msra.mxu0 %v100
    %119 = vmatprep.subr.mxu0 0.0
    %120 = vmatpush1.msra.mxu0 %v101
    %121 = vmatprep.subr.mxu0 0.0
    %122 = vmatpush1.msra.mxu0 %v102
    %123 = vmatprep.subr.mxu0 0.0
    %124 = vmatpush1.msra.mxu0 %v103
    %125 = vmatprep.subr.mxu0 0.0
    %126 = vmatpush1.msra.mxu0 0.0
    %127 = vmatprep.subr.mxu0 0.0
    %128 = vmatpush1.msra.mxu0 0.0
    %129 = vmatprep.subr.mxu0 0.0
    %130 = vmatpush1.msra.mxu0 0.0
    %131 = vmatprep.subr.mxu0 0.0
    %132 = vmatpush1.msra.mxu0 0.0
    %133 = vmatprep.subr.mxu0 0.0
    %134 = vmatpush1.msra.mxu0 0.0
    %135 = vmatprep.subr.mxu0 0.0
    %136 = vmatpush1.msra.mxu0 0.0
    %137 = vmatprep.subr.mxu0 0.0
    %138 = vmatpush1.msra.mxu0 0.0
    %139 = vmatprep.subr.mxu0 0.0
    %140 = vmatpush1.msra.mxu0 0.0
    %141 = vmatprep.subr.mxu0 0.0
    %142 = vmatpush1.msra.mxu0 0.0
    %143 = vmatprep.subr.mxu0 0.0
    %144 = vmatpush1.msra.mxu0 0.0
    %145 = vmatprep.subr.mxu0 0.0
    %146 = vmatpush1.msra.mxu0 0.0
    %147 = vmatprep.subr.mxu0 0.0
    %148 = vmatpush1.msra.mxu0 0.0
    %149 = vmatprep.subr.mxu0 0.0
    %150 = vmatpush1.msra.mxu0 0.0
    %151 = vmatprep.subr.mxu0 0.0
    %152 = vmatpush1.msra.mxu0 0.0
    %153 = vmatprep.subr.mxu0 0.0
    %154 = vmatpush1.msra.mxu0 0.0
    %155 = vmatprep.subr.mxu0 0.0
    %156 = vmatpush1.msra.mxu0 0.0
    %157 = vmatprep.subr.mxu0 0.0
    %158 = vmatpush1.msra.mxu0 0.0
    %159 = vmatprep.subr.mxu0 0.0
    %160 = vmatpush1.msra.mxu0 0.0
    %161 = vmatprep.subr.mxu0 0.0
    %162 = vmatpush1.msra.mxu0 0.0
    %163 = vmatprep.subr.mxu0 0.0
    %164 = vmatpush1.msra.mxu0 0.0
    %165 = vmatprep.subr.mxu0 0.0
    %166 = vmatpush1.msra.mxu0 0.0
    %167 = vmatprep.subr.mxu0 0.0
    %168 = vmatpush1.msra.mxu0 0.0
    %169 = vmatprep.subr.mxu0 0.0
    %170 = vmatpush1.msra.mxu0 0.0
    %171 = vmatprep.subr.mxu0 0.0
    %172 = vmatpush1.msra.mxu0 0.0
    %173 = vmatprep.subr.mxu0 0.0
    %174 = vmatpush1.msra.mxu0 0.0
    %175 = vmatprep.subr.mxu0 0.0
    %176 = vmatpush1.msra.mxu0 0.0
    %177 = vmatprep.subr.mxu0 0.0
    %178 = vmatpush1.msra.mxu0 0.0
    %179 = vmatprep.subr.mxu0 0.0
    %180 = vmatpush1.msra.mxu0 0.0
    %181 = vmatprep.mubr.f32.mxu0 0.0
    %182 = vmatmul.mubr.f32.gmra.mrb[0].mxu0 %v115
    %v183 = vpop.f32.mrb[0].mxu0
    %v184 = vadd.f32 %v109, %v183
    %v185 = vpop.f32.mrb[0].mxu0
    %186 = vdwg.mxu0
    %v187 = vtanh.pop %v184
    %v188 = vld [vmem:[%s5] sm:$0xff]
    %v189 = vld [vmem:[%s5 + $0x8] sm:$0xff]
    %v190 = vld [vmem:[%s5 + $0x10] sm:$0xff]
    %v191 = vld [vmem:[%s5 + $0x18] sm:$0xff]
    %v192 = vld [vmem:[%s6] sm:$0x1]
    %v194 = vlaneseq
    %v195 = vshrl.u32 %v194, 7
    %v196 = vsub.s32 0, %v195
    %v197 = vrot.slane %v192, %v196
    %v200 = vsel %vm82, %v187, 0
    %202 = vmatprep.subr.mxu0 0.0
    %203 = vmatpush1.msra.mxu0 %v188
    %204 = vmatprep.subr.mxu0 0.0
    %205 = vmatpush1.msra.mxu0 %v189
    %206 = vmatprep.subr.mxu0 0.0
    %207 = vmatpush1.msra.mxu0 %v190
    %208 = vmatprep.subr.mxu0 0.0
    %209 = vmatpush1.msra.mxu0 %v191
    %210 = vmatprep.subr.mxu0 0.0
    %211 = vmatpush1.msra.mxu0 0.0
    %212 = vmatprep.subr.mxu0 0.0
    %213 = vmatpush1.msra.mxu0 0.0
    %214 = vmatprep.subr.mxu0 0.0
    %215 = vmatpush1.msra.mxu0 0.0
    %216 = vmatprep.subr.mxu0 0.0
    %217 = vmatpush1.msra.mxu0 0.0
    %218 = vmatprep.subr.mxu0 0.0
    %219 = vmatpush1.msra.mxu0 0.0
    %220 = vmatprep.subr.mxu0 0.0
    %221 = vmatpush1.msra.mxu0 0.0
    %222 = vmatprep.subr.mxu0 0.0
    %223 = vmatpush1.msra.mxu0 0.0
    %224 = vmatprep.subr.mxu0 0.0
    %225 = vmatpush1.msra.mxu0 0.0
    %226 = vmatprep.subr.mxu0 0.0
    %227 = vmatpush1.msra.mxu0 0.0
    %228 = vmatprep.subr.mxu0 0.0
    %229 = vmatpush1.msra.mxu0 0.0
    %230 = vmatprep.subr.mxu0 0.0
    %231 = vmatpush1.msra.mxu0 0.0
    %232 = vmatprep.subr.mxu0 0.0
    %233 = vmatpush1.msra.mxu0 0.0
    %234 = vmatprep.subr.mxu0 0.0
    %235 = vmatpush1.msra.mxu0 0.0
    %236 = vmatprep.subr.mxu0 0.0
    %237 = vmatpush1.msra.mxu0 0.0
    %238 = vmatprep.subr.mxu0 0.0
    %239 = vmatpush1.msra.mxu0 0.0
    %240 = vmatprep.subr.mxu0 0.0
    %241 = vmatpush1.msra.mxu0 0.0
    %242 = vmatprep.subr.mxu0 0.0
    %243 = vmatpush1.msra.mxu0 0.0
    %244 = vmatprep.subr.mxu0 0.0
    %245 = vmatpush1.msra.mxu0 0.0
    %246 = vmatprep.subr.mxu0 0.0
    %247 = vmatpush1.msra.mxu0 0.0
    %248 = vmatprep.subr.mxu0 0.0
    %249 = vmatpush1.msra.mxu0 0.0
    %250 = vmatprep.subr.mxu0 0.0
    %251 = vmatpush1.msra.mxu0 0.0
    %252 = vmatprep.subr.mxu0 0.0
    %253 = vmatpush1.msra.mxu0 0.0
    %254 = vmatprep.subr.mxu0 0.0
    %255 = vmatpush1.msra.mxu0 0.0
    %256 = vmatprep.subr.mxu0 0.0
    %257 = vmatpush1.msra.mxu0 0.0
    %258 = vmatprep.subr.mxu0 0.0
    %259 = vmatpush1.msra.mxu0 0.0
    %260 = vmatprep.subr.mxu0 0.0
    %261 = vmatpush1.msra.mxu0 0.0
    %262 = vmatprep.subr.mxu0 0.0
    %263 = vmatpush1.msra.mxu0 0.0
    %264 = vmatprep.subr.mxu0 0.0
    %265 = vmatpush1.msra.mxu0 0.0
    %266 = vmatprep.mubr.f32.mxu0 0.0
    %267 = vmatmul.mubr.f32.gmra.mrb[0].mxu0 %v200
    %v268 = vpop.f32.mrb[0].mxu0
    %v269 = vadd.f32 %v197, %v268
    %v270 = vpop.f32.mrb[0].mxu0
    %271 = vdwg.mxu0
    %v272 = vxor.u32 %v269, 2147483648
    %v273 = vmul.f32 %v272, 1.442695
    %v274 = vpow.pop %v273
    %v275 = vadd.f32 %v274, 1.0
    %v276 = vrcp.pop %v275
    %v277 = vmul.f32 1.0, %v276
    %v278 = vld [vmem:[%s9] sm:$0xff]
    %v279 = vld [vmem:[%s9 + $0x8] sm:$0xff]
    %v280 = vld [vmem:[%s9 + $0x10] sm:$0xff]
    %v281 = vld [vmem:[%s9 + $0x18] sm:$0xff]
    %v282 = vld [vmem:[%s10] sm:$0x1]
    %v284 = vlaneseq
    %v285 = vshrl.u32 %v284, 7
    %v286 = vsub.s32 0, %v285
    %v287 = vrot.slane %v282, %v286
    %289 = vmatprep.subr.mxu0 0.0
    %290 = vmatpush1.msra.mxu0 %v278
    %291 = vmatprep.subr.mxu0 0.0
    %292 = vmatpush1.msra.mxu0 %v279
    %293 = vmatprep.subr.mxu0 0.0
    %294 = vmatpush1.msra.mxu0 %v280
    %295 = vmatprep.subr.mxu0 0.0
    %296 = vmatpush1.msra.mxu0 %v281
    %297 = vmatprep.subr.mxu0 0.0
    %298 = vmatpush1.msra.mxu0 0.0
    %299 = vmatprep.subr.mxu0 0.0
    %300 = vmatpush1.msra.mxu0 0.0
    %301 = vmatprep.subr.mxu0 0.0
    %302 = vmatpush1.msra.mxu0 0.0
    %303 = vmatprep.subr.mxu0 0.0
    %304 = vmatpush1.msra.mxu0 0.0
    %305 = vmatprep.subr.mxu0 0.0
    %306 = vmatpush1.msra.mxu0 0.0
    %307 = vmatprep.subr.mxu0 0.0
    %308 = vmatpush1.msra.mxu0 0.0
    %309 = vmatprep.subr.mxu0 0.0
    %310 = vmatpush1.msra.mxu0 0.0
    %311 = vmatprep.subr.mxu0 0.0
    %312 = vmatpush1.msra.mxu0 0.0
    %313 = vmatprep.subr.mxu0 0.0
    %314 = vmatpush1.msra.mxu0 0.0
    %315 = vmatprep.subr.mxu0 0.0
    %316 = vmatpush1.msra.mxu0 0.0
    %317 = vmatprep.subr.mxu0 0.0
    %318 = vmatpush1.msra.mxu0 0.0
    %319 = vmatprep.subr.mxu0 0.0
    %320 = vmatpush1.msra.mxu0 0.0
    %321 = vmatprep.subr.mxu0 0.0
    %322 = vmatpush1.msra.mxu0 0.0
    %323 = vmatprep.subr.mxu0 0.0
    %324 = vmatpush1.msra.mxu0 0.0
    %325 = vmatprep.subr.mxu0 0.0
    %326 = vmatpush1.msra.mxu0 0.0
    %327 = vmatprep.subr.mxu0 0.0
    %328 = vmatpush1.msra.mxu0 0.0
    %329 = vmatprep.subr.mxu0 0.0
    %330 = vmatpush1.msra.mxu0 0.0
    %331 = vmatprep.subr.mxu0 0.0
    %332 = vmatpush1.msra.mxu0 0.0
    %333 = vmatprep.subr.mxu0 0.0
    %334 = vmatpush1.msra.mxu0 0.0
    %335 = vmatprep.subr.mxu0 0.0
    %336 = vmatpush1.msra.mxu0 0.0
    %337 = vmatprep.subr.mxu0 0.0
    %338 = vmatpush1.msra.mxu0 0.0
    %339 = vmatprep.subr.mxu0 0.0
    %340 = vmatpush1.msra.mxu0 0.0
    %341 = vmatprep.subr.mxu0 0.0
    %342 = vmatpush1.msra.mxu0 0.0
    %343 = vmatprep.subr.mxu0 0.0
    %344 = vmatpush1.msra.mxu0 0.0
    %345 = vmatprep.subr.mxu0 0.0
    %346 = vmatpush1.msra.mxu0 0.0
    %347 = vmatprep.subr.mxu0 0.0
    %348 = vmatpush1.msra.mxu0 0.0
    %349 = vmatprep.subr.mxu0 0.0
    %350 = vmatpush1.msra.mxu0 0.0
    %351 = vmatprep.subr.mxu0 0.0
    %352 = vmatpush1.msra.mxu0 0.0
    %353 = vmatprep.mubr.f32.mxu0 0.0
    %354 = vmatmul.mubr.f32.gmra.mrb[0].mxu0 %v200
    %v355 = vpop.f32.mrb[0].mxu0
    %v356 = vadd.f32 %v287, %v355
    %v357 = vpop.f32.mrb[0].mxu0
    %358 = vdwg.mxu0
    %v359 = vxor.u32 %v356, 2147483648
    %v360 = vmul.f32 %v359, 1.442695
    %v361 = vpow.pop %v360
    %v362 = vadd.f32 %v361, 1.0
    %v363 = vrcp.pop %v362
    %v364 = vmul.f32 1.0, %v363
    %v365 = vld [vmem:[%s0] sm:$0xf]
    %v366 = vld [vmem:[%s0 + $0x4] sm:$0xf]
    %v367 = vld [vmem:[%s0 + $0x8] sm:$0xf]
    %v368 = vld [vmem:[%s0 + $0xc] sm:$0xf]
    %v369 = vld [vmem:[%s0 + $0x10] sm:$0xf]
    %v370 = vld [vmem:[%s0 + $0x14] sm:$0xf]
    %v371 = vld [vmem:[%s0 + $0x18] sm:$0xf]
    %v372 = vld [vmem:[%s0 + $0x1c] sm:$0xf]
    %v373 = vld [vmem:[%s0 + $0x20] sm:$0xf]
    %v374 = vld [vmem:[%s0 + $0x24] sm:$0xf]
    %v375 = vld [vmem:[%s0 + $0x28] sm:$0xf]
    %v376 = vld [vmem:[%s0 + $0x2c] sm:$0xf]
    %v377 = vld [vmem:[%s0 + $0x30] sm:$0xf]
    %v378 = vld [vmem:[%s0 + $0x34] sm:$0xf]
    %v379 = vld [vmem:[%s0 + $0x38] sm:$0xf]
    %v380 = vld [vmem:[%s0 + $0x3c] sm:$0xf]
    %v381 = vld [vmem:[%s0 + $0x40] sm:$0xf]
    %v382 = vld [vmem:[%s0 + $0x44] sm:$0xf]
    %v383 = vld [vmem:[%s0 + $0x48] sm:$0xf]
    %v384 = vld [vmem:[%s0 + $0x4c] sm:$0xf]
    %v385 = vld [vmem:[%s0 + $0x50] sm:$0xf]
    %v386 = vld [vmem:[%s0 + $0x54] sm:$0xf]
    %v387 = vld [vmem:[%s0 + $0x58] sm:$0xf]
    %v388 = vld [vmem:[%s0 + $0x5c] sm:$0xf]
    %v389 = vld [vmem:[%s0 + $0x60] sm:$0xf]
    %v390 = vld [vmem:[%s0 + $0x64] sm:$0xf]
    %v391 = vld [vmem:[%s0 + $0x68] sm:$0xf]
    %v392 = vld [vmem:[%s0 + $0x6c] sm:$0xf]
    %v393 = vld [vmem:[%s0 + $0x70] sm:$0xf]
    %v394 = vld [vmem:[%s0 + $0x74] sm:$0xf]
    %v395 = vld [vmem:[%s0 + $0x78] sm:$0xf]
    %v396 = vld [vmem:[%s0 + $0x7c] sm:$0xf]
    %v397 = vld [vmem:[%s0 + $0x80] sm:$0xf]
    %v398 = vld [vmem:[%s0 + $0x84] sm:$0xf]
    %v399 = vld [vmem:[%s0 + $0x88] sm:$0xf]
    %v400 = vld [vmem:[%s0 + $0x8c] sm:$0xf]
    %v401 = vld [vmem:[%s0 + $0x90] sm:$0xf]
    %v402 = vld [vmem:[%s0 + $0x94] sm:$0xf]
    %v403 = vld [vmem:[%s0 + $0x98] sm:$0xf]
    %v404 = vld [vmem:[%s0 + $0x9c] sm:$0xf]
    %v405 = vld [vmem:[%s0 + $0xa0] sm:$0xf]
    %v406 = vld [vmem:[%s0 + $0xa4] sm:$0xf]
    %v407 = vld [vmem:[%s0 + $0xa8] sm:$0xf]
    %v408 = vld [vmem:[%s0 + $0xac] sm:$0xf]
    %v409 = vld [vmem:[%s0 + $0xb0] sm:$0xf]
    %v410 = vld [vmem:[%s0 + $0xb4] sm:$0xf]
    %v411 = vld [vmem:[%s0 + $0xb8] sm:$0xf]
    %v412 = vld [vmem:[%s0 + $0xbc] sm:$0xf]
    %v413 = vld [vmem:[%s0 + $0xc0] sm:$0xf]
    %v414 = vld [vmem:[%s0 + $0xc4] sm:$0xf]
    %v415 = vld [vmem:[%s0 + $0xc8] sm:$0xf]
    %v416 = vld [vmem:[%s0 + $0xcc] sm:$0xf]
    %v417 = vld [vmem:[%s0 + $0xd0] sm:$0xf]
    %v418 = vld [vmem:[%s0 + $0xd4] sm:$0xf]
    %v419 = vld [vmem:[%s0 + $0xd8] sm:$0xf]
    %v420 = vld [vmem:[%s0 + $0xdc] sm:$0xf]
    %v421 = vld [vmem:[%s0 + $0xe0] sm:$0xf]
    %v422 = vld [vmem:[%s0 + $0xe4] sm:$0xf]
    %v423 = vld [vmem:[%s0 + $0xe8] sm:$0xf]
    %v424 = vld [vmem:[%s0 + $0xec] sm:$0xf]
    %v425 = vld [vmem:[%s0 + $0xf0] sm:$0xf]
    %v426 = vld [vmem:[%s0 + $0xf4] sm:$0xf]
    %v427 = vld [vmem:[%s0 + $0xf8] sm:$0xf]
    %v428 = vld [vmem:[%s0 + $0xfc] sm:$0xf]
    %v429 = vpack.c.bf16 %v277, %v277
    %v432 = vunpack.c.l.s4 1966171168
    %v433 = vunpack.c.0.s8 %v432
    %v434 = vlaneseq
    %v435 = vshrl.u32 %v434, 7
    %v436 = vsub.s32 %v433, %v435
    %v437 = vrot.slane %v429, %v436
    %v439 = vunpack.c.l.s4 1966171168
    %v440 = vunpack.c.0.s8 %v439
    %v441 = vlaneseq
    %v442 = vshrl.u32 %v441, 7
    %v443 = vsub.s32 %v440, %v442
    %v444 = vrot.slane %v437, %v443
    %v445 = vunpack.i.l.s16 %v444
    %v446 = vunpack.i.h.s16 %v444
    %v447 = vpack.i.b16 %v445, %v445
    %v448 = vpack.i.b16 %v446, %v446
    %v449 = vlaneseq
    %v450 = vshrl.u32 %v449, 7
    %v451 = vsub.s32 0, %v450
    %v452 = vrot.slane %v447, %v451
    %v453 = vlaneseq
    %v454 = vshrl.u32 %v453, 7
    %v455 = vsub.s32 0, %v454
    %v456 = vrot.slane %v448, %v455
    %v458 = vpack.i.b16 %v452, %v452
    %v460 = vlaneseq
    %v461 = vshrl.u32 %v460, 7
    %v462 = vsub.s32 0, %v461
    %v463 = vrot.slane %v458, %v462
    %v465 = vpack.i.b16 %v456, %v456
    %v467 = vlaneseq
    %v468 = vshrl.u32 %v467, 7
    %v469 = vsub.s32 0, %v468
    %v470 = vrot.slane %v465, %v469
    %v473 = vunpack.c.l.b16 %v463
    %v474 = vunpack.c.l.b16 %v470
    %v475 = vpack.c.b16 %v473, %v473
    %v476 = vpack.c.b16 %v474, %v474
    %v479 = vmul.bf16 %v365, %v475
    %v480 = vmul.bf16 %v366, %v475
    %v481 = vmul.bf16 %v367, %v475
    %v482 = vmul.bf16 %v368, %v475
    %v483 = vmul.bf16 %v369, %v475
    %v484 = vmul.bf16 %v370, %v475
    %v485 = vmul.bf16 %v371, %v475
    %v486 = vmul.bf16 %v372, %v475
    %v487 = vmul.bf16 %v373, %v475
    %v488 = vmul.bf16 %v374, %v475
    %v489 = vmul.bf16 %v375, %v475
    %v490 = vmul.bf16 %v376, %v475
    %v491 = vmul.bf16 %v377, %v475
    %v492 = vmul.bf16 %v378, %v475
    %v493 = vmul.bf16 %v379, %v475
    %v494 = vmul.bf16 %v380, %v475
    %v495 = vmul.bf16 %v381, %v475
    %v496 = vmul.bf16 %v382, %v475
    %v497 = vmul.bf16 %v383, %v475
    %v498 = vmul.bf16 %v384, %v475
    %v499 = vmul.bf16 %v385, %v475
    %v500 = vmul.bf16 %v386, %v475
    %v501 = vmul.bf16 %v387, %v475
    %v502 = vmul.bf16 %v388, %v475
    %v503 = vmul.bf16 %v389, %v475
    %v504 = vmul.bf16 %v390, %v475
    %v505 = vmul.bf16 %v391, %v475
    %v506 = vmul.bf16 %v392, %v475
    %v507 = vmul.bf16 %v393, %v475
    %v508 = vmul.bf16 %v394, %v475
    %v509 = vmul.bf16 %v395, %v475
    %v510 = vmul.bf16 %v396, %v475
    %v511 = vmul.bf16 %v397, %v476
    %v512 = vmul.bf16 %v398, %v476
    %v513 = vmul.bf16 %v399, %v476
    %v514 = vmul.bf16 %v400, %v476
    %v515 = vmul.bf16 %v401, %v476
    %v516 = vmul.bf16 %v402, %v476
    %v517 = vmul.bf16 %v403, %v476
    %v518 = vmul.bf16 %v404, %v476
    %v519 = vmul.bf16 %v405, %v476
    %v520 = vmul.bf16 %v406, %v476
    %v521 = vmul.bf16 %v407, %v476
    %v522 = vmul.bf16 %v408, %v476
    %v523 = vmul.bf16 %v409, %v476
    %v524 = vmul.bf16 %v410, %v476
    %v525 = vmul.bf16 %v411, %v476
    %v526 = vmul.bf16 %v412, %v476
    %v527 = vmul.bf16 %v413, %v476
    %v528 = vmul.bf16 %v414, %v476
    %v529 = vmul.bf16 %v415, %v476
    %v530 = vmul.bf16 %v416, %v476
    %v531 = vmul.bf16 %v417, %v476
    %v532 = vmul.bf16 %v418, %v476
    %v533 = vmul.bf16 %v419, %v476
    %v534 = vmul.bf16 %v420, %v476
    %v535 = vmul.bf16 %v421, %v476
    %v536 = vmul.bf16 %v422, %v476
    %v537 = vmul.bf16 %v423, %v476
    %v538 = vmul.bf16 %v424, %v476
    %v539 = vmul.bf16 %v425, %v476
    %v540 = vmul.bf16 %v426, %v476
    %v541 = vmul.bf16 %v427, %v476
    %v542 = vmul.bf16 %v428, %v476
    %v543 = vld [vmem:[%s7] sm:$0xf]
    %v544 = vld [vmem:[%s7 + $0x4] sm:$0xf]
    %v545 = vld [vmem:[%s8] sm:$0x1]
    %v547 = vlaneseq
    %v548 = vshrl.u32 %v547, 7
    %v549 = vsub.s32 0, %v548
    %v550 = vrot.slane %v545, %v549
    %v616 = vunpack.c.l.b16 %v479
    %v617 = vunpack.c.l.b16 %v480
    %v618 = vunpack.c.l.b16 %v481
    %v619 = vunpack.c.l.b16 %v482
    %v620 = vunpack.c.l.b16 %v483
    %v621 = vunpack.c.l.b16 %v484
    %v622 = vunpack.c.l.b16 %v485
    %v623 = vunpack.c.l.b16 %v486
    %v624 = vunpack.c.l.b16 %v487
    %v625 = vunpack.c.l.b16 %v488
    %v626 = vunpack.c.l.b16 %v489
    %v627 = vunpack.c.l.b16 %v490
    %v628 = vunpack.c.l.b16 %v491
    %v629 = vunpack.c.l.b16 %v492
    %v630 = vunpack.c.l.b16 %v493
    %v631 = vunpack.c.l.b16 %v494
    %v632 = vunpack.c.l.b16 %v495
    %v633 = vunpack.c.l.b16 %v496
    %v634 = vunpack.c.l.b16 %v497
    %v635 = vunpack.c.l.b16 %v498
    %v636 = vunpack.c.l.b16 %v499
    %v637 = vunpack.c.l.b16 %v500
    %v638 = vunpack.c.l.b16 %v501
    %v639 = vunpack.c.l.b16 %v502
    %v640 = vunpack.c.l.b16 %v503
    %v641 = vunpack.c.l.b16 %v504
    %v642 = vunpack.c.l.b16 %v505
    %v643 = vunpack.c.l.b16 %v506
    %v644 = vunpack.c.l.b16 %v507
    %v645 = vunpack.c.l.b16 %v508
    %v646 = vunpack.c.l.b16 %v509
    %v647 = vunpack.c.l.b16 %v510
    %v648 = vunpack.c.l.b16 %v511
    %v649 = vunpack.c.l.b16 %v512
    %v650 = vunpack.c.l.b16 %v513
    %v651 = vunpack.c.l.b16 %v514
    %v652 = vunpack.c.l.b16 %v515
    %v653 = vunpack.c.l.b16 %v516
    %v654 = vunpack.c.l.b16 %v517
    %v655 = vunpack.c.l.b16 %v518
    %v656 = vunpack.c.l.b16 %v519
    %v657 = vunpack.c.l.b16 %v520
    %v658 = vunpack.c.l.b16 %v521
    %v659 = vunpack.c.l.b16 %v522
    %v660 = vunpack.c.l.b16 %v523
    %v661 = vunpack.c.l.b16 %v524
    %v662 = vunpack.c.l.b16 %v525
    %v663 = vunpack.c.l.b16 %v526
    %v664 = vunpack.c.l.b16 %v527
    %v665 = vunpack.c.l.b16 %v528
    %v666 = vunpack.c.l.b16 %v529
    %v667 = vunpack.c.l.b16 %v530
    %v668 = vunpack.c.l.b16 %v531
    %v669 = vunpack.c.l.b16 %v532
    %v670 = vunpack.c.l.b16 %v533
    %v671 = vunpack.c.l.b16 %v534
    %v672 = vunpack.c.l.b16 %v535
    %v673 = vunpack.c.l.b16 %v536
    %v674 = vunpack.c.l.b16 %v537
    %v675 = vunpack.c.l.b16 %v538
    %v676 = vunpack.c.l.b16 %v539
    %v677 = vunpack.c.l.b16 %v540
    %v678 = vunpack.c.l.b16 %v541
    %v679 = vunpack.c.l.b16 %v542
    %v680 = vpack.c.b16 %v617, %v616
    %v681 = vpack.c.b16 %v619, %v618
    %v682 = vpack.c.b16 %v621, %v620
    %v683 = vpack.c.b16 %v623, %v622
    %v684 = vpack.c.b16 %v625, %v624
    %v685 = vpack.c.b16 %v627, %v626
    %v686 = vpack.c.b16 %v629, %v628
    %v687 = vpack.c.b16 %v631, %v630
    %v688 = vpack.c.b16 %v633, %v632
    %v689 = vpack.c.b16 %v635, %v634
    %v690 = vpack.c.b16 %v637, %v636
    %v691 = vpack.c.b16 %v639, %v638
    %v692 = vpack.c.b16 %v641, %v640
    %v693 = vpack.c.b16 %v643, %v642
    %v694 = vpack.c.b16 %v645, %v644
    %v695 = vpack.c.b16 %v647, %v646
    %v696 = vpack.c.b16 %v649, %v648
    %v697 = vpack.c.b16 %v651, %v650
    %v698 = vpack.c.b16 %v653, %v652
    %v699 = vpack.c.b16 %v655, %v654
    %v700 = vpack.c.b16 %v657, %v656
    %v701 = vpack.c.b16 %v659, %v658
    %v702 = vpack.c.b16 %v661, %v660
    %v703 = vpack.c.b16 %v663, %v662
    %v704 = vpack.c.b16 %v665, %v664
    %v705 = vpack.c.b16 %v667, %v666
    %v706 = vpack.c.b16 %v669, %v668
    %v707 = vpack.c.b16 %v671, %v670
    %v708 = vpack.c.b16 %v673, %v672
    %v709 = vpack.c.b16 %v675, %v674
    %v710 = vpack.c.b16 %v677, %v676
    %v711 = vpack.c.b16 %v679, %v678
    %v714 = vunpack.c.l.b16 %v543
    %v715 = vunpack.c.l.b16 %v544
    %v716 = vpack.c.b16 %v715, %v714
    %vm718 = vcmask 130048
    %v720 = vsel %vm718, %v680, 0
    %v723 = vsel %vm718, %v681, 0
    %v726 = vsel %vm718, %v682, 0
    %v729 = vsel %vm718, %v683, 0
    %v732 = vsel %vm718, %v684, 0
    %v735 = vsel %vm718, %v685, 0
    %v738 = vsel %vm718, %v686, 0
    %v741 = vsel %vm718, %v687, 0
    %v744 = vsel %vm718, %v688, 0
    %v747 = vsel %vm718, %v689, 0
    %v750 = vsel %vm718, %v690, 0
    %v753 = vsel %vm718, %v691, 0
    %v756 = vsel %vm718, %v692, 0
    %v759 = vsel %vm718, %v693, 0
    %v762 = vsel %vm718, %v694, 0
    %v765 = vsel %vm718, %v695, 0
    %v768 = vsel %vm718, %v696, 0
    %v771 = vsel %vm718, %v697, 0
    %v774 = vsel %vm718, %v698, 0
    %v777 = vsel %vm718, %v699, 0
    %v780 = vsel %vm718, %v700, 0
    %v783 = vsel %vm718, %v701, 0
    %v786 = vsel %vm718, %v702, 0
    %v789 = vsel %vm718, %v703, 0
    %v792 = vsel %vm718, %v704, 0
    %v795 = vsel %vm718, %v705, 0
    %v798 = vsel %vm718, %v706, 0
    %v801 = vsel %vm718, %v707, 0
    %v804 = vsel %vm718, %v708, 0
    %v807 = vsel %vm718, %v709, 0
    %v810 = vsel %vm718, %v710, 0
    %v813 = vsel %vm718, %v711, 0
    %815 = vmatprep.subr.bf16.mxu0 0
    %816 = vmatpush1.bf16.msra.mxu0 %v716
    %817 = vmatprep.subr.bf16.mxu0 0
    %818 = vmatpush1.bf16.msra.mxu0 0
    %819 = vmatprep.subr.bf16.mxu0 0
    %820 = vmatpush1.bf16.msra.mxu0 0
    %821 = vmatprep.subr.bf16.mxu0 0
    %822 = vmatpush1.bf16.msra.mxu0 0
    %823 = vmatprep.subr.bf16.mxu0 0
    %824 = vmatpush1.bf16.msra.mxu0 0
    %825 = vmatprep.subr.bf16.mxu0 0
    %826 = vmatpush1.bf16.msra.mxu0 0
    %827 = vmatprep.subr.bf16.mxu0 0
    %828 = vmatpush1.bf16.msra.mxu0 0
    %829 = vmatprep.subr.bf16.mxu0 0
    %830 = vmatpush1.bf16.msra.mxu0 0
    %831 = vmatprep.subr.bf16.mxu0 0
    %832 = vmatpush1.bf16.msra.mxu0 0
    %833 = vmatprep.subr.bf16.mxu0 0
    %834 = vmatpush1.bf16.msra.mxu0 0
    %835 = vmatprep.subr.bf16.mxu0 0
    %836 = vmatpush1.bf16.msra.mxu0 0
    %837 = vmatprep.subr.bf16.mxu0 0
    %838 = vmatpush1.bf16.msra.mxu0 0
    %839 = vmatprep.subr.bf16.mxu0 0
    %840 = vmatpush1.bf16.msra.mxu0 0
    %841 = vmatprep.subr.bf16.mxu0 0
    %842 = vmatpush1.bf16.msra.mxu0 0
    %843 = vmatprep.subr.bf16.mxu0 0
    %844 = vmatpush1.bf16.msra.mxu0 0
    %845 = vmatprep.subr.bf16.mxu0 0
    %846 = vmatpush1.bf16.msra.mxu0 0
    %847 = vmatprep.mubr.bf16.mxu0 0
    %848 = vmatmul.mubr.bf16.gmra.mrb[0].mxu0 %v720
    %v849 = vpop.f32.mrb[0].mxu0
    %v850 = vadd.f32 %v550, %v849
    %v851 = vpop.f32.mrb[0].mxu0
    %v852 = vpop.f32.mrb[0].mxu0
    %v853 = vadd.f32 %v550, %v852
    %v854 = vpop.f32.mrb[0].mxu0
    %855 = vmatprep.mubr.bf16.mxu0 0
    %856 = vmatmul.mubr.bf16.gmra.mrb[0].mxu0 %v723
    %v857 = vpop.f32.mrb[0].mxu0
    %v858 = vadd.f32 %v550, %v857
    %v859 = vpop.f32.mrb[0].mxu0
    %v860 = vpop.f32.mrb[0].mxu0
    %v861 = vadd.f32 %v550, %v860
    %v862 = vpop.f32.mrb[0].mxu0
    %863 = vmatprep.mubr.bf16.mxu0 0
    %864 = vmatmul.mubr.bf16.gmra.mrb[0].mxu0 %v726
    %v865 = vpop.f32.mrb[0].mxu0
    %v866 = vadd.f32 %v550, %v865
    %v867 = vpop.f32.mrb[0].mxu0
    %v868 = vpop.f32.mrb[0].mxu0
    %v869 = vadd.f32 %v550, %v868
    %v870 = vpop.f32.mrb[0].mxu0
    %871 = vmatprep.mubr.bf16.mxu0 0
    %872 = vmatmul.mubr.bf16.gmra.mrb[0].mxu0 %v729
    %v873 = vpop.f32.mrb[0].mxu0
    %v874 = vadd.f32 %v550, %v873
    %v875 = vpop.f32.mrb[0].mxu0
    %v876 = vpop.f32.mrb[0].mxu0
    %v877 = vadd.f32 %v550, %v876
    %v878 = vpop.f32.mrb[0].mxu0
    %879 = vmatprep.mubr.bf16.mxu0 0
    %880 = vmatmul.mubr.bf16.gmra.mrb[0].mxu0 %v732
    %v881 = vpop.f32.mrb[0].mxu0
    %v882 = vadd.f32 %v550, %v881
    %v883 = vpop.f32.mrb[0].mxu0
    %v884 = vpop.f32.mrb[0].mxu0
    %v885 = vadd.f32 %v550, %v884
    %v886 = vpop.f32.mrb[0].mxu0
    %887 = vmatprep.mubr.bf16.mxu0 0
    %888 = vmatmul.mubr.bf16.gmra.mrb[0].mxu0 %v735
    %v889 = vpop.f32.mrb[0].mxu0
    %v890 = vadd.f32 %v550, %v889
    %v891 = vpop.f32.mrb[0].mxu0
    %v892 = vpop.f32.mrb[0].mxu0
    %v893 = vadd.f32 %v550, %v892
    %v894 = vpop.f32.mrb[0].mxu0
    %895 = vmatprep.mubr.bf16.mxu0 0
    %896 = vmatmul.mubr.bf16.gmra.mrb[0].mxu0 %v738
    %v897 = vpop.f32.mrb[0].mxu0
    %v898 = vadd.f32 %v550, %v897
    %v899 = vpop.f32.mrb[0].mxu0
    %v900 = vpop.f32.mrb[0].mxu0
    %v901 = vadd.f32 %v550, %v900
    %v902 = vpop.f32.mrb[0].mxu0
    %903 = vmatprep.mubr.bf16.mxu0 0
    %904 = vmatmul.mubr.bf16.gmra.mrb[0].mxu0 %v741
    %v905 = vpop.f32.mrb[0].mxu0
    %v906 = vadd.f32 %v550, %v905
    %v907 = vpop.f32.mrb[0].mxu0
    %v908 = vpop.f32.mrb[0].mxu0
    %v909 = vadd.f32 %v550, %v908
    %v910 = vpop.f32.mrb[0].mxu0
    %911 = vmatprep.mubr.bf16.mxu0 0
    %912 = vmatmul.mubr.bf16.gmra.mrb[0].mxu0 %v744
    %v913 = vpop.f32.mrb[0].mxu0
    %v914 = vadd.f32 %v550, %v913
    %v915 = vpop.f32.mrb[0].mxu0
    %v916 = vpop.f32.mrb[0].mxu0
    %v917 = vadd.f32 %v550, %v916
    %v918 = vpop.f32.mrb[0].mxu0
    %919 = vmatprep.mubr.bf16.mxu0 0
    %920 = vmatmul.mubr.bf16.gmra.mrb[0].mxu0 %v747
    %v921 = vpop.f32.mrb[0].mxu0
    %v922 = vadd.f32 %v550, %v921
    %v923 = vpop.f32.mrb[0].mxu0
    %v924 = vpop.f32.mrb[0].mxu0
    %v925 = vadd.f32 %v550, %v924
    %v926 = vpop.f32.mrb[0].mxu0
    %927 = vmatprep.mubr.bf16.mxu0 0
    %928 = vmatmul.mubr.bf16.gmra.mrb[0].mxu0 %v750
    %v929 = vpop.f32.mrb[0].mxu0
    %v930 = vadd.f32 %v550, %v929
    %v931 = vpop.f32.mrb[0].mxu0
    %v932 = vpop.f32.mrb[0].mxu0
    %v933 = vadd.f32 %v550, %v932
    %v934 = vpop.f32.mrb[0].mxu0
    %935 = vmatprep.mubr.bf16.mxu0 0
    %936 = vmatmul.mubr.bf16.gmra.mrb[0].mxu0 %v753
    %v937 = vpop.f32.mrb[0].mxu0
    %v938 = vadd.f32 %v550, %v937
    %v939 = vpop.f32.mrb[0].mxu0
    %v940 = vpop.f32.mrb[0].mxu0
    %v941 = vadd.f32 %v550, %v940
    %v942 = vpop.f32.mrb[0].mxu0
    %943 = vmatprep.mubr.bf16.mxu0 0
    %944 = vmatmul.mubr.bf16.gmra.mrb[0].mxu0 %v756
    %v945 = vpop.f32.mrb[0].mxu0
    %v946 = vadd.f32 %v550, %v945
    %v947 = vpop.f32.mrb[0].mxu0
    %v948 = vpop.f32.mrb[0].mxu0
    %v949 = vadd.f32 %v550, %v948
    %v950 = vpop.f32.mrb[0].mxu0
    %951 = vmatprep.mubr.bf16.mxu0 0
    %952 = vmatmul.mubr.bf16.gmra.mrb[0].mxu0 %v759
    %v953 = vpop.f32.mrb[0].mxu0
    %v954 = vadd.f32 %v550, %v953
    %v955 = vpop.f32.mrb[0].mxu0
    %v956 = vpop.f32.mrb[0].mxu0
    %v957 = vadd.f32 %v550, %v956
    %v958 = vpop.f32.mrb[0].mxu0
    %959 = vmatprep.mubr.bf16.mxu0 0
    %960 = vmatmul.mubr.bf16.gmra.mrb[0].mxu0 %v762
    %v961 = vpop.f32.mrb[0].mxu0
    %v962 = vadd.f32 %v550, %v961
    %v963 = vpop.f32.mrb[0].mxu0
    %v964 = vpop.f32.mrb[0].mxu0
    %v965 = vadd.f32 %v550, %v964
    %v966 = vpop.f32.mrb[0].mxu0
    %967 = vmatprep.mubr.bf16.mxu0 0
    %968 = vmatmul.mubr.bf16.gmra.mrb[0].mxu0 %v765
    %v969 = vpop.f32.mrb[0].mxu0
    %v970 = vadd.f32 %v550, %v969
    %v971 = vpop.f32.mrb[0].mxu0
    %v972 = vpop.f32.mrb[0].mxu0
    %v973 = vadd.f32 %v550, %v972
    %v974 = vpop.f32.mrb[0].mxu0
    %975 = vmatprep.mubr.bf16.mxu0 0
    %976 = vmatmul.mubr.bf16.gmra.mrb[0].mxu0 %v768
    %v977 = vpop.f32.mrb[0].mxu0
    %v978 = vadd.f32 %v550, %v977
    %v979 = vpop.f32.mrb[0].mxu0
    %v980 = vpop.f32.mrb[0].mxu0
    %v981 = vadd.f32 %v550, %v980
    %v982 = vpop.f32.mrb[0].mxu0
    %983 = vmatprep.mubr.bf16.mxu0 0
    %984 = vmatmul.mubr.bf16.gmra.mrb[0].mxu0 %v771
    %v985 = vpop.f32.mrb[0].mxu0
    %v986 = vadd.f32 %v550, %v985
    %v987 = vpop.f32.mrb[0].mxu0
    %v988 = vpop.f32.mrb[0].mxu0
    %v989 = vadd.f32 %v550, %v988
    %v990 = vpop.f32.mrb[0].mxu0
    %991 = vmatprep.mubr.bf16.mxu0 0
    %992 = vmatmul.mubr.bf16.gmra.mrb[0].mxu0 %v774
    %v993 = vpop.f32.mrb[0].mxu0
    %v994 = vadd.f32 %v550, %v993
    %v995 = vpop.f32.mrb[0].mxu0
    %v996 = vpop.f32.mrb[0].mxu0
    %v997 = vadd.f32 %v550, %v996
    %v998 = vpop.f32.mrb[0].mxu0
    %999 = vmatprep.mubr.bf16.mxu0 0
    %1000 = vmatmul.mubr.bf16.gmra.mrb[0].mxu0 %v777
    %v1001 = vpop.f32.mrb[0].mxu0
    %v1002 = vadd.f32 %v550, %v1001
    %v1003 = vpop.f32.mrb[0].mxu0
    %v1004 = vpop.f32.mrb[0].mxu0
    %v1005 = vadd.f32 %v550, %v1004
    %v1006 = vpop.f32.mrb[0].mxu0
    %1007 = vmatprep.mubr.bf16.mxu0 0
    %1008 = vmatmul.mubr.bf16.gmra.mrb[0].mxu0 %v780
    %v1009 = vpop.f32.mrb[0].mxu0
    %v1010 = vadd.f32 %v550, %v1009
    %v1011 = vpop.f32.mrb[0].mxu0
    %v1012 = vpop.f32.mrb[0].mxu0
    %v1013 = vadd.f32 %v550, %v1012
    %v1014 = vpop.f32.mrb[0].mxu0
    %1015 = vmatprep.mubr.bf16.mxu0 0
    %1016 = vmatmul.mubr.bf16.gmra.mrb[0].mxu0 %v783
    %v1017 = vpop.f32.mrb[0].mxu0
    %v1018 = vadd.f32 %v550, %v1017
    %v1019 = vpop.f32.mrb[0].mxu0
    %v1020 = vpop.f32.mrb[0].mxu0
    %v1021 = vadd.f32 %v550, %v1020
    %v1022 = vpop.f32.mrb[0].mxu0
    %1023 = vmatprep.mubr.bf16.mxu0 0
    %1024 = vmatmul.mubr.bf16.gmra.mrb[0].mxu0 %v786
    %v1025 = vpop.f32.mrb[0].mxu0
    %v1026 = vadd.f32 %v550, %v1025
    %v1027 = vpop.f32.mrb[0].mxu0
    %v1028 = vpop.f32.mrb[0].mxu0
    %v1029 = vadd.f32 %v550, %v1028
    %v1030 = vpop.f32.mrb[0].mxu0
    %1031 = vmatprep.mubr.bf16.mxu0 0
    %1032 = vmatmul.mubr.bf16.gmra.mrb[0].mxu0 %v789
    %v1033 = vpop.f32.mrb[0].mxu0
    %v1034 = vadd.f32 %v550, %v1033
    %v1035 = vpop.f32.mrb[0].mxu0
    %v1036 = vpop.f32.mrb[0].mxu0
    %v1037 = vadd.f32 %v550, %v1036
    %v1038 = vpop.f32.mrb[0].mxu0
    %1039 = vmatprep.mubr.bf16.mxu0 0
    %1040 = vmatmul.mubr.bf16.gmra.mrb[0].mxu0 %v792
    %v1041 = vpop.f32.mrb[0].mxu0
    %v1042 = vadd.f32 %v550, %v1041
    %v1043 = vpop.f32.mrb[0].mxu0
    %v1044 = vpop.f32.mrb[0].mxu0
    %v1045 = vadd.f32 %v550, %v1044
    %v1046 = vpop.f32.mrb[0].mxu0
    %1047 = vmatprep.mubr.bf16.mxu0 0
    %1048 = vmatmul.mubr.bf16.gmra.mrb[0].mxu0 %v795
    %v1049 = vpop.f32.mrb[0].mxu0
    %v1050 = vadd.f32 %v550, %v1049
    %v1051 = vpop.f32.mrb[0].mxu0
    %v1052 = vpop.f32.mrb[0].mxu0
    %v1053 = vadd.f32 %v550, %v1052
    %v1054 = vpop.f32.mrb[0].mxu0
    %1055 = vmatprep.mubr.bf16.mxu0 0
    %1056 = vmatmul.mubr.bf16.gmra.mrb[0].mxu0 %v798
    %v1057 = vpop.f32.mrb[0].mxu0
    %v1058 = vadd.f32 %v550, %v1057
    %v1059 = vpop.f32.mrb[0].mxu0
    %v1060 = vpop.f32.mrb[0].mxu0
    %v1061 = vadd.f32 %v550, %v1060
    %v1062 = vpop.f32.mrb[0].mxu0
    %1063 = vmatprep.mubr.bf16.mxu0 0
    %1064 = vmatmul.mubr.bf16.gmra.mrb[0].mxu0 %v801
    %v1065 = vpop.f32.mrb[0].mxu0
    %v1066 = vadd.f32 %v550, %v1065
    %v1067 = vpop.f32.mrb[0].mxu0
    %v1068 = vpop.f32.mrb[0].mxu0
    %v1069 = vadd.f32 %v550, %v1068
    %v1070 = vpop.f32.mrb[0].mxu0
    %1071 = vmatprep.mubr.bf16.mxu0 0
    %1072 = vmatmul.mubr.bf16.gmra.mrb[0].mxu0 %v804
    %v1073 = vpop.f32.mrb[0].mxu0
    %v1074 = vadd.f32 %v550, %v1073
    %v1075 = vpop.f32.mrb[0].mxu0
    %v1076 = vpop.f32.mrb[0].mxu0
    %v1077 = vadd.f32 %v550, %v1076
    %v1078 = vpop.f32.mrb[0].mxu0
    %1079 = vmatprep.mubr.bf16.mxu0 0
    %1080 = vmatmul.mubr.bf16.gmra.mrb[0].mxu0 %v807
    %v1081 = vpop.f32.mrb[0].mxu0
    %v1082 = vadd.f32 %v550, %v1081
    %v1083 = vpop.f32.mrb[0].mxu0
    %v1084 = vpop.f32.mrb[0].mxu0
    %v1085 = vadd.f32 %v550, %v1084
    %v1086 = vpop.f32.mrb[0].mxu0
    %1087 = vmatprep.mubr.bf16.mxu0 0
    %1088 = vmatmul.mubr.bf16.gmra.mrb[0].mxu0 %v810
    %v1089 = vpop.f32.mrb[0].mxu0
    %v1090 = vadd.f32 %v550, %v1089
    %v1091 = vpop.f32.mrb[0].mxu0
    %v1092 = vpop.f32.mrb[0].mxu0
    %v1093 = vadd.f32 %v550, %v1092
    %v1094 = vpop.f32.mrb[0].mxu0
    %1095 = vmatprep.mubr.bf16.mxu0 0
    %1096 = vmatmul.mubr.bf16.gmra.mrb[0].mxu0 %v813
    %v1097 = vpop.f32.mrb[0].mxu0
    %v1098 = vadd.f32 %v550, %v1097
    %v1099 = vpop.f32.mrb[0].mxu0
    %v1100 = vpop.f32.mrb[0].mxu0
    %v1101 = vadd.f32 %v550, %v1100
    %v1102 = vpop.f32.mrb[0].mxu0
    %1103 = vdwg.mxu0
    %v1104 = vmax.f32 %v850, 0.0
    %v1105 = vmax.f32 %v853, 0.0
    %v1106 = vmax.f32 %v858, 0.0
    %v1107 = vmax.f32 %v861, 0.0
    %v1108 = vmax.f32 %v866, 0.0
    %v1109 = vmax.f32 %v869, 0.0
    %v1110 = vmax.f32 %v874, 0.0
    %v1111 = vmax.f32 %v877, 0.0
    %v1112 = vmax.f32 %v882, 0.0
    %v1113 = vmax.f32 %v885, 0.0
    %v1114 = vmax.f32 %v890, 0.0
    %v1115 = vmax.f32 %v893, 0.0
    %v1116 = vmax.f32 %v898, 0.0
    %v1117 = vmax.f32 %v901, 0.0
    %v1118 = vmax.f32 %v906, 0.0
    %v1119 = vmax.f32 %v909, 0.0
    %v1120 = vmax.f32 %v914, 0.0
    %v1121 = vmax.f32 %v917, 0.0
    %v1122 = vmax.f32 %v922, 0.0
    %v1123 = vmax.f32 %v925, 0.0
    %v1124 = vmax.f32 %v930, 0.0
    %v1125 = vmax.f32 %v933, 0.0
    %v1126 = vmax.f32 %v938, 0.0
    %v1127 = vmax.f32 %v941, 0.0
    %v1128 = vmax.f32 %v946, 0.0
    %v1129 = vmax.f32 %v949, 0.0
    %v1130 = vmax.f32 %v954, 0.0
    %v1131 = vmax.f32 %v957, 0.0
    %v1132 = vmax.f32 %v962, 0.0
    %v1133 = vmax.f32 %v965, 0.0
    %v1134 = vmax.f32 %v970, 0.0
    %v1135 = vmax.f32 %v973, 0.0
    %v1136 = vmax.f32 %v978, 0.0
    %v1137 = vmax.f32 %v981, 0.0
    %v1138 = vmax.f32 %v986, 0.0
    %v1139 = vmax.f32 %v989, 0.0
    %v1140 = vmax.f32 %v994, 0.0
    %v1141 = vmax.f32 %v997, 0.0
    %v1142 = vmax.f32 %v1002, 0.0
    %v1143 = vmax.f32 %v1005, 0.0
    %v1144 = vmax.f32 %v1010, 0.0
    %v1145 = vmax.f32 %v1013, 0.0
    %v1146 = vmax.f32 %v1018, 0.0
    %v1147 = vmax.f32 %v1021, 0.0
    %v1148 = vmax.f32 %v1026, 0.0
    %v1149 = vmax.f32 %v1029, 0.0
    %v1150 = vmax.f32 %v1034, 0.0
    %v1151 = vmax.f32 %v1037, 0.0
    %v1152 = vmax.f32 %v1042, 0.0
    %v1153 = vmax.f32 %v1045, 0.0
    %v1154 = vmax.f32 %v1050, 0.0
    %v1155 = vmax.f32 %v1053, 0.0
    %v1156 = vmax.f32 %v1058, 0.0
    %v1157 = vmax.f32 %v1061, 0.0
    %v1158 = vmax.f32 %v1066, 0.0
    %v1159 = vmax.f32 %v1069, 0.0
    %v1160 = vmax.f32 %v1074, 0.0
    %v1161 = vmax.f32 %v1077, 0.0
    %v1162 = vmax.f32 %v1082, 0.0
    %v1163 = vmax.f32 %v1085, 0.0
    %v1164 = vmax.f32 %v1090, 0.0
    %v1165 = vmax.f32 %v1093, 0.0
    %v1166 = vmax.f32 %v1098, 0.0
    %v1167 = vmax.f32 %v1101, 0.0
    %v1168 = vld [vmem:[%s1] sm:$0xf]
    %v1169 = vld [vmem:[%s1 + $0x4] sm:$0xf]
    %v1170 = vld [vmem:[%s1 + $0x8] sm:$0xf]
    %v1171 = vld [vmem:[%s1 + $0xc] sm:$0xf]
    %v1172 = vpack.c.bf16 %v364, %v364
    %v1175 = vunpack.c.l.s4 1966171168
    %v1176 = vunpack.c.0.s8 %v1175
    %v1177 = vlaneseq
    %v1178 = vshrl.u32 %v1177, 7
    %v1179 = vsub.s32 %v1176, %v1178
    %v1180 = vrot.slane %v1172, %v1179
    %v1182 = vunpack.c.l.s4 1966171168
    %v1183 = vunpack.c.0.s8 %v1182
    %v1184 = vlaneseq
    %v1185 = vshrl.u32 %v1184, 7
    %v1186 = vsub.s32 %v1183, %v1185
    %v1187 = vrot.slane %v1180, %v1186
    %v1188 = vunpack.i.l.s16 %v1187
    %v1189 = vunpack.i.h.s16 %v1187
    %v1190 = vpack.i.b16 %v1188, %v1188
    %v1191 = vpack.i.b16 %v1189, %v1189
    %v1192 = vlaneseq
    %v1193 = vshrl.u32 %v1192, 7
    %v1194 = vsub.s32 0, %v1193
    %v1195 = vrot.slane %v1190, %v1194
    %v1196 = vlaneseq
    %v1197 = vshrl.u32 %v1196, 7
    %v1198 = vsub.s32 0, %v1197
    %v1199 = vrot.slane %v1191, %v1198
    %v1201 = vpack.i.b16 %v1195, %v1195
    %v1203 = vlaneseq
    %v1204 = vshrl.u32 %v1203, 7
    %v1205 = vsub.s32 0, %v1204
    %v1206 = vrot.slane %v1201, %v1205
    %v1208 = vpack.i.b16 %v1199, %v1199
    %v1210 = vlaneseq
    %v1211 = vshrl.u32 %v1210, 7
    %v1212 = vsub.s32 0, %v1211
    %v1213 = vrot.slane %v1208, %v1212
    %v1216 = vunpack.c.l.b16 %v1206
    %v1217 = vunpack.c.l.b16 %v1213
    %v1218 = vpack.c.b16 %v1216, %v1216
    %v1219 = vpack.c.b16 %v1217, %v1217
    %v1222 = vmul.bf16 %v1168, %v1218
    %v1223 = vmul.bf16 %v1169, %v1218
    %v1224 = vmul.bf16 %v1170, %v1219
    %v1225 = vmul.bf16 %v1171, %v1219
    %v1226 = vld [vmem:[%s11] sm:$0xf]
    %v1227 = vld [vmem:[%s11 + $0x4] sm:$0xf]
    %v1228 = vld [vmem:[%s11 + $0x8] sm:$0xf]
    %v1229 = vld [vmem:[%s11 + $0xc] sm:$0xf]
    %v1230 = vld [vmem:[%s12] sm:$0x1]
    %v1232 = vlaneseq
    %v1233 = vshrl.u32 %v1232, 7
    %v1234 = vsub.s32 0, %v1233
    %v1235 = vrot.slane %v1230, %v1234
    %v1241 = vunpack.c.l.b16 %v1222
    %v1242 = vunpack.c.l.b16 %v1223
    %v1243 = vunpack.c.l.b16 %v1224
    %v1244 = vunpack.c.l.b16 %v1225
    %v1245 = vpack.c.b16 %v1242, %v1241
    %v1246 = vpack.c.b16 %v1244, %v1243
    %v1251 = vunpack.c.l.b16 %v1226
    %v1252 = vunpack.c.l.b16 %v1227
    %v1253 = vunpack.c.l.b16 %v1228
    %v1254 = vunpack.c.l.b16 %v1229
    %v1255 = vpack.c.b16 %v1252, %v1251
    %v1256 = vpack.c.b16 %v1254, %v1253
    %v1260 = vsel %vm82, %v1245, 0
    %v1263 = vsel %vm82, %v1246, 0
    %1265 = vmatprep.subr.bf16.mxu0 0
    %1266 = vmatpush1.bf16.msra.mxu0 %v1255
    %1267 = vmatprep.subr.bf16.mxu0 0
    %1268 = vmatpush1.bf16.msra.mxu0 %v1256
    %1269 = vmatprep.subr.bf16.mxu0 0
    %1270 = vmatpush1.bf16.msra.mxu0 0
    %1271 = vmatprep.subr.bf16.mxu0 0
    %1272 = vmatpush1.bf16.msra.mxu0 0
    %1273 = vmatprep.subr.bf16.mxu0 0
    %1274 = vmatpush1.bf16.msra.mxu0 0
    %1275 = vmatprep.subr.bf16.mxu0 0
    %1276 = vmatpush1.bf16.msra.mxu0 0
    %1277 = vmatprep.subr.bf16.mxu0 0
    %1278 = vmatpush1.bf16.msra.mxu0 0
    %1279 = vmatprep.subr.bf16.mxu0 0
    %1280 = vmatpush1.bf16.msra.mxu0 0
    %1281 = vmatprep.subr.bf16.mxu0 0
    %1282 = vmatpush1.bf16.msra.mxu0 0
    %1283 = vmatprep.subr.bf16.mxu0 0
    %1284 = vmatpush1.bf16.msra.mxu0 0
    %1285 = vmatprep.subr.bf16.mxu0 0
    %1286 = vmatpush1.bf16.msra.mxu0 0
    %1287 = vmatprep.subr.bf16.mxu0 0
    %1288 = vmatpush1.bf16.msra.mxu0 0
    %1289 = vmatprep.subr.bf16.mxu0 0
    %1290 = vmatpush1.bf16.msra.mxu0 0
    %1291 = vmatprep.subr.bf16.mxu0 0
    %1292 = vmatpush1.bf16.msra.mxu0 0
    %1293 = vmatprep.subr.bf16.mxu0 0
    %1294 = vmatpush1.bf16.msra.mxu0 0
    %1295 = vmatprep.subr.bf16.mxu0 0
    %1296 = vmatpush1.bf16.msra.mxu0 0
    %1297 = vmatprep.mubr.bf16.mxu0 0
    %1298 = vmatmul.mubr.bf16.gmra.mrb[0].mxu0 %v1260
    %v1299 = vpop.f32.mrb[0].mxu0
    %v1300 = vadd.f32 %v1235, %v1299
    %v1301 = vpop.f32.mrb[0].mxu0
    %v1302 = vpop.f32.mrb[0].mxu0
    %v1303 = vadd.f32 %v1235, %v1302
    %v1304 = vpop.f32.mrb[0].mxu0
    %1305 = vmatprep.mubr.bf16.mxu0 0
    %1306 = vmatmul.mubr.bf16.gmra.mrb[0].mxu0 %v1263
    %v1307 = vpop.f32.mrb[0].mxu0
    %v1308 = vadd.f32 %v1235, %v1307
    %v1309 = vpop.f32.mrb[0].mxu0
    %v1310 = vpop.f32.mrb[0].mxu0
    %v1311 = vadd.f32 %v1235, %v1310
    %v1312 = vpop.f32.mrb[0].mxu0
    %1313 = vdwg.mxu0
    %v1314 = vmax.f32 %v1300, 0.0
    %v1315 = vmax.f32 %v1303, 0.0
    %v1316 = vmax.f32 %v1308, 0.0
    %v1317 = vmax.f32 %v1311, 0.0
    %v1322 = vcombine.high %v1314, %v1314
    %v1324 = vunpack.c.l.s4 1966171168
    %v1325 = vunpack.c.0.s8 %v1324
    %v1326 = vlaneseq
    %v1327 = vshrl.u32 %v1326, 7
    %v1328 = vsub.s32 %v1325, %v1327
    %v1329 = vrot.slane %v1314, %v1328
    %v1331 = vunpack.c.l.s4 1966171168
    %v1332 = vunpack.c.0.s8 %v1331
    %v1333 = vlaneseq
    %v1334 = vshrl.u32 %v1333, 7
    %v1335 = vsub.s32 %v1332, %v1334
    %v1336 = vrot.slane %v1322, %v1335
    %v1337 = vcombine.high %v1329, %v1329
    %v1338 = vcombine.high %v1336, %v1336
    %v1340 = vunpack.c.l.s4 1966171168
    %v1341 = vunpack.c.0.s8 %v1340
    %v1342 = vlaneseq
    %v1343 = vshrl.u32 %v1342, 7
    %v1344 = vsub.s32 %v1341, %v1343
    %v1345 = vrot.slane %v1329, %v1344
    %v1347 = vunpack.c.l.s4 1966171168
    %v1348 = vunpack.c.0.s8 %v1347
    %v1349 = vlaneseq
    %v1350 = vshrl.u32 %v1349, 7
    %v1351 = vsub.s32 %v1348, %v1350
    %v1352 = vrot.slane %v1336, %v1351
    %v1354 = vunpack.c.l.s4 1966171168
    %v1355 = vunpack.c.0.s8 %v1354
    %v1356 = vlaneseq
    %v1357 = vshrl.u32 %v1356, 7
    %v1358 = vsub.s32 %v1355, %v1357
    %v1359 = vrot.slane %v1337, %v1358
    %v1361 = vunpack.c.l.s4 1966171168
    %v1362 = vunpack.c.0.s8 %v1361
    %v1363 = vlaneseq
    %v1364 = vshrl.u32 %v1363, 7
    %v1365 = vsub.s32 %v1362, %v1364
    %v1366 = vrot.slane %v1338, %v1365
    %v1367 = vcombine.high %v1345, %v1345
    %v1368 = vcombine.high %v1352, %v1352
    %v1369 = vcombine.high %v1359, %v1359
    %v1370 = vcombine.high %v1366, %v1366
    %v1371 = vcombine.high %v1315, %v1315
    %v1373 = vunpack.c.l.s4 1966171168
    %v1374 = vunpack.c.0.s8 %v1373
    %v1375 = vlaneseq
    %v1376 = vshrl.u32 %v1375, 7
    %v1377 = vsub.s32 %v1374, %v1376
    %v1378 = vrot.slane %v1315, %v1377
    %v1380 = vunpack.c.l.s4 1966171168
    %v1381 = vunpack.c.0.s8 %v1380
    %v1382 = vlaneseq
    %v1383 = vshrl.u32 %v1382, 7
    %v1384 = vsub.s32 %v1381, %v1383
    %v1385 = vrot.slane %v1371, %v1384
    %v1386 = vcombine.high %v1378, %v1378
    %v1387 = vcombine.high %v1385, %v1385
    %v1389 = vunpack.c.l.s4 1966171168
    %v1390 = vunpack.c.0.s8 %v1389
    %v1391 = vlaneseq
    %v1392 = vshrl.u32 %v1391, 7
    %v1393 = vsub.s32 %v1390, %v1392
    %v1394 = vrot.slane %v1378, %v1393
    %v1396 = vunpack.c.l.s4 1966171168
    %v1397 = vunpack.c.0.s8 %v1396
    %v1398 = vlaneseq
    %v1399 = vshrl.u32 %v1398, 7
    %v1400 = vsub.s32 %v1397, %v1399
    %v1401 = vrot.slane %v1385, %v1400
    %v1403 = vunpack.c.l.s4 1966171168
    %v1404 = vunpack.c.0.s8 %v1403
    %v1405 = vlaneseq
    %v1406 = vshrl.u32 %v1405, 7
    %v1407 = vsub.s32 %v1404, %v1406
    %v1408 = vrot.slane %v1386, %v1407
    %v1410 = vunpack.c.l.s4 1966171168
    %v1411 = vunpack.c.0.s8 %v1410
    %v1412 = vlaneseq
    %v1413 = vshrl.u32 %v1412, 7
    %v1414 = vsub.s32 %v1411, %v1413
    %v1415 = vrot.slane %v1387, %v1414
    %v1416 = vcombine.high %v1394, %v1394
    %v1417 = vcombine.high %v1401, %v1401
    %v1418 = vcombine.high %v1408, %v1408
    %v1419 = vcombine.high %v1415, %v1415
    %v1420 = vcombine.high %v1316, %v1316
    %v1422 = vunpack.c.l.s4 1966171168
    %v1423 = vunpack.c.0.s8 %v1422
    %v1424 = vlaneseq
    %v1425 = vshrl.u32 %v1424, 7
    %v1426 = vsub.s32 %v1423, %v1425
    %v1427 = vrot.slane %v1316, %v1426
    %v1429 = vunpack.c.l.s4 1966171168
    %v1430 = vunpack.c.0.s8 %v1429
    %v1431 = vlaneseq
    %v1432 = vshrl.u32 %v1431, 7
    %v1433 = vsub.s32 %v1430, %v1432
    %v1434 = vrot.slane %v1420, %v1433
    %v1435 = vcombine.high %v1427, %v1427
    %v1436 = vcombine.high %v1434, %v1434
    %v1438 = vunpack.c.l.s4 1966171168
    %v1439 = vunpack.c.0.s8 %v1438
    %v1440 = vlaneseq
    %v1441 = vshrl.u32 %v1440, 7
    %v1442 = vsub.s32 %v1439, %v1441
    %v1443 = vrot.slane %v1427, %v1442
    %v1445 = vunpack.c.l.s4 1966171168
    %v1446 = vunpack.c.0.s8 %v1445
    %v1447 = vlaneseq
    %v1448 = vshrl.u32 %v1447, 7
    %v1449 = vsub.s32 %v1446, %v1448
    %v1450 = vrot.slane %v1434, %v1449
    %v1452 = vunpack.c.l.s4 1966171168
    %v1453 = vunpack.c.0.s8 %v1452
    %v1454 = vlaneseq
    %v1455 = vshrl.u32 %v1454, 7
    %v1456 = vsub.s32 %v1453, %v1455
    %v1457 = vrot.slane %v1435, %v1456
    %v1459 = vunpack.c.l.s4 1966171168
    %v1460 = vunpack.c.0.s8 %v1459
    %v1461 = vlaneseq
    %v1462 = vshrl.u32 %v1461, 7
    %v1463 = vsub.s32 %v1460, %v1462
    %v1464 = vrot.slane %v1436, %v1463
    %v1465 = vcombine.high %v1443, %v1443
    %v1466 = vcombine.high %v1450, %v1450
    %v1467 = vcombine.high %v1457, %v1457
    %v1468 = vcombine.high %v1464, %v1464
    %v1469 = vcombine.high %v1317, %v1317
    %v1471 = vunpack.c.l.s4 1966171168
    %v1472 = vunpack.c.0.s8 %v1471
    %v1473 = vlaneseq
    %v1474 = vshrl.u32 %v1473, 7
    %v1475 = vsub.s32 %v1472, %v1474
    %v1476 = vrot.slane %v1317, %v1475
    %v1478 = vunpack.c.l.s4 1966171168
    %v1479 = vunpack.c.0.s8 %v1478
    %v1480 = vlaneseq
    %v1481 = vshrl.u32 %v1480, 7
    %v1482 = vsub.s32 %v1479, %v1481
    %v1483 = vrot.slane %v1469, %v1482
    %v1484 = vcombine.high %v1476, %v1476
    %v1485 = vcombine.high %v1483, %v1483
    %v1487 = vunpack.c.l.s4 1966171168
    %v1488 = vunpack.c.0.s8 %v1487
    %v1489 = vlaneseq
    %v1490 = vshrl.u32 %v1489, 7
    %v1491 = vsub.s32 %v1488, %v1490
    %v1492 = vrot.slane %v1476, %v1491
    %v1494 = vunpack.c.l.s4 1966171168
    %v1495 = vunpack.c.0.s8 %v1494
    %v1496 = vlaneseq
    %v1497 = vshrl.u32 %v1496, 7
    %v1498 = vsub.s32 %v1495, %v1497
    %v1499 = vrot.slane %v1483, %v1498
    %v1501 = vunpack.c.l.s4 1966171168
    %v1502 = vunpack.c.0.s8 %v1501
    %v1503 = vlaneseq
    %v1504 = vshrl.u32 %v1503, 7
    %v1505 = vsub.s32 %v1502, %v1504
    %v1506 = vrot.slane %v1484, %v1505
    %v1508 = vunpack.c.l.s4 1966171168
    %v1509 = vunpack.c.0.s8 %v1508
    %v1510 = vlaneseq
    %v1511 = vshrl.u32 %v1510, 7
    %v1512 = vsub.s32 %v1509, %v1511
    %v1513 = vrot.slane %v1485, %v1512
    %v1514 = vcombine.high %v1492, %v1492
    %v1515 = vcombine.high %v1499, %v1499
    %v1516 = vcombine.high %v1506, %v1506
    %v1517 = vcombine.high %v1513, %v1513
    %v1518 = vlaneseq
    %v1519 = vshrl.u32 %v1518, 7
    %v1520 = vsub.s32 0, %v1519
    %v1521 = vrot.slane %v1345, %v1520
    %v1522 = vlaneseq
    %v1523 = vshrl.u32 %v1522, 7
    %v1524 = vsub.s32 0, %v1523
    %v1525 = vrot.slane %v1359, %v1524
    %v1526 = vlaneseq
    %v1527 = vshrl.u32 %v1526, 7
    %v1528 = vsub.s32 0, %v1527
    %v1529 = vrot.slane %v1367, %v1528
    %v1530 = vlaneseq
    %v1531 = vshrl.u32 %v1530, 7
    %v1532 = vsub.s32 0, %v1531
    %v1533 = vrot.slane %v1369, %v1532
    %v1534 = vlaneseq
    %v1535 = vshrl.u32 %v1534, 7
    %v1536 = vsub.s32 0, %v1535
    %v1537 = vrot.slane %v1352, %v1536
    %v1538 = vlaneseq
    %v1539 = vshrl.u32 %v1538, 7
    %v1540 = vsub.s32 0, %v1539
    %v1541 = vrot.slane %v1366, %v1540
    %v1542 = vlaneseq
    %v1543 = vshrl.u32 %v1542, 7
    %v1544 = vsub.s32 0, %v1543
    %v1545 = vrot.slane %v1368, %v1544
    %v1546 = vlaneseq
    %v1547 = vshrl.u32 %v1546, 7
    %v1548 = vsub.s32 0, %v1547
    %v1549 = vrot.slane %v1370, %v1548
    %v1550 = vlaneseq
    %v1551 = vshrl.u32 %v1550, 7
    %v1552 = vsub.s32 0, %v1551
    %v1553 = vrot.slane %v1394, %v1552
    %v1554 = vlaneseq
    %v1555 = vshrl.u32 %v1554, 7
    %v1556 = vsub.s32 0, %v1555
    %v1557 = vrot.slane %v1408, %v1556
    %v1558 = vlaneseq
    %v1559 = vshrl.u32 %v1558, 7
    %v1560 = vsub.s32 0, %v1559
    %v1561 = vrot.slane %v1416, %v1560
    %v1562 = vlaneseq
    %v1563 = vshrl.u32 %v1562, 7
    %v1564 = vsub.s32 0, %v1563
    %v1565 = vrot.slane %v1418, %v1564
    %v1566 = vlaneseq
    %v1567 = vshrl.u32 %v1566, 7
    %v1568 = vsub.s32 0, %v1567
    %v1569 = vrot.slane %v1401, %v1568
    %v1570 = vlaneseq
    %v1571 = vshrl.u32 %v1570, 7
    %v1572 = vsub.s32 0, %v1571
    %v1573 = vrot.slane %v1415, %v1572
    %v1574 = vlaneseq
    %v1575 = vshrl.u32 %v1574, 7
    %v1576 = vsub.s32 0, %v1575
    %v1577 = vrot.slane %v1417, %v1576
    %v1578 = vlaneseq
    %v1579 = vshrl.u32 %v1578, 7
    %v1580 = vsub.s32 0, %v1579
    %v1581 = vrot.slane %v1419, %v1580
    %v1582 = vlaneseq
    %v1583 = vshrl.u32 %v1582, 7
    %v1584 = vsub.s32 0, %v1583
    %v1585 = vrot.slane %v1443, %v1584
    %v1586 = vlaneseq
    %v1587 = vshrl.u32 %v1586, 7
    %v1588 = vsub.s32 0, %v1587
    %v1589 = vrot.slane %v1457, %v1588
    %v1590 = vlaneseq
    %v1591 = vshrl.u32 %v1590, 7
    %v1592 = vsub.s32 0, %v1591
    %v1593 = vrot.slane %v1465, %v1592
    %v1594 = vlaneseq
    %v1595 = vshrl.u32 %v1594, 7
    %v1596 = vsub.s32 0, %v1595
    %v1597 = vrot.slane %v1467, %v1596
    %v1598 = vlaneseq
    %v1599 = vshrl.u32 %v1598, 7
    %v1600 = vsub.s32 0, %v1599
    %v1601 = vrot.slane %v1450, %v1600
    %v1602 = vlaneseq
    %v1603 = vshrl.u32 %v1602, 7
    %v1604 = vsub.s32 0, %v1603
    %v1605 = vrot.slane %v1464, %v1604
    %v1606 = vlaneseq
    %v1607 = vshrl.u32 %v1606, 7
    %v1608 = vsub.s32 0, %v1607
    %v1609 = vrot.slane %v1466, %v1608
    %v1610 = vlaneseq
    %v1611 = vshrl.u32 %v1610, 7
    %v1612 = vsub.s32 0, %v1611
    %v1613 = vrot.slane %v1468, %v1612
    %v1614 = vlaneseq
    %v1615 = vshrl.u32 %v1614, 7
    %v1616 = vsub.s32 0, %v1615
    %v1617 = vrot.slane %v1492, %v1616
    %v1618 = vlaneseq
    %v1619 = vshrl.u32 %v1618, 7
    %v1620 = vsub.s32 0, %v1619
    %v1621 = vrot.slane %v1506, %v1620
    %v1622 = vlaneseq
    %v1623 = vshrl.u32 %v1622, 7
    %v1624 = vsub.s32 0, %v1623
    %v1625 = vrot.slane %v1514, %v1624
    %v1626 = vlaneseq
    %v1627 = vshrl.u32 %v1626, 7
    %v1628 = vsub.s32 0, %v1627
    %v1629 = vrot.slane %v1516, %v1628
    %v1630 = vlaneseq
    %v1631 = vshrl.u32 %v1630, 7
    %v1632 = vsub.s32 0, %v1631
    %v1633 = vrot.slane %v1499, %v1632
    %v1634 = vlaneseq
    %v1635 = vshrl.u32 %v1634, 7
    %v1636 = vsub.s32 0, %v1635
    %v1637 = vrot.slane %v1513, %v1636
    %v1638 = vlaneseq
    %v1639 = vshrl.u32 %v1638, 7
    %v1640 = vsub.s32 0, %v1639
    %v1641 = vrot.slane %v1515, %v1640
    %v1642 = vlaneseq
    %v1643 = vshrl.u32 %v1642, 7
    %v1644 = vsub.s32 0, %v1643
    %v1645 = vrot.slane %v1517, %v1644
    %v1678 = vadd.f32 %v1104, %v1521
    %v1679 = vadd.f32 %v1105, %v1521
    %v1680 = vadd.f32 %v1106, %v1525
    %v1681 = vadd.f32 %v1107, %v1525
    %v1682 = vadd.f32 %v1108, %v1529
    %v1683 = vadd.f32 %v1109, %v1529
    %v1684 = vadd.f32 %v1110, %v1533
    %v1685 = vadd.f32 %v1111, %v1533
    %v1686 = vadd.f32 %v1112, %v1537
    %v1687 = vadd.f32 %v1113, %v1537
    %v1688 = vadd.f32 %v1114, %v1541
    %v1689 = vadd.f32 %v1115, %v1541
    %v1690 = vadd.f32 %v1116, %v1545
    %v1691 = vadd.f32 %v1117, %v1545
    %v1692 = vadd.f32 %v1118, %v1549
    %v1693 = vadd.f32 %v1119, %v1549
    %v1694 = vadd.f32 %v1120, %v1553
    %v1695 = vadd.f32 %v1121, %v1553
    %v1696 = vadd.f32 %v1122, %v1557
    %v1697 = vadd.f32 %v1123, %v1557
    %v1698 = vadd.f32 %v1124, %v1561
    %v1699 = vadd.f32 %v1125, %v1561
    %v1700 = vadd.f32 %v1126, %v1565
    %v1701 = vadd.f32 %v1127, %v1565
    %v1702 = vadd.f32 %v1128, %v1569
    %v1703 = vadd.f32 %v1129, %v1569
    %v1704 = vadd.f32 %v1130, %v1573
    %v1705 = vadd.f32 %v1131, %v1573
    %v1706 = vadd.f32 %v1132, %v1577
    %v1707 = vadd.f32 %v1133, %v1577
    %v1708 = vadd.f32 %v1134, %v1581
    %v1709 = vadd.f32 %v1135, %v1581
    %v1710 = vadd.f32 %v1136, %v1585
    %v1711 = vadd.f32 %v1137, %v1585
    %v1712 = vadd.f32 %v1138, %v1589
    %v1713 = vadd.f32 %v1139, %v1589
    %v1714 = vadd.f32 %v1140, %v1593
    %v1715 = vadd.f32 %v1141, %v1593
    %v1716 = vadd.f32 %v1142, %v1597
    %v1717 = vadd.f32 %v1143, %v1597
    %v1718 = vadd.f32 %v1144, %v1601
    %v1719 = vadd.f32 %v1145, %v1601
    %v1720 = vadd.f32 %v1146, %v1605
    %v1721 = vadd.f32 %v1147, %v1605
    %v1722 = vadd.f32 %v1148, %v1609
    %v1723 = vadd.f32 %v1149, %v1609
    %v1724 = vadd.f32 %v1150, %v1613
    %v1725 = vadd.f32 %v1151, %v1613
    %v1726 = vadd.f32 %v1152, %v1617
    %v1727 = vadd.f32 %v1153, %v1617
    %v1728 = vadd.f32 %v1154, %v1621
    %v1729 = vadd.f32 %v1155, %v1621
    %v1730 = vadd.f32 %v1156, %v1625
    %v1731 = vadd.f32 %v1157, %v1625
    %v1732 = vadd.f32 %v1158, %v1629
    %v1733 = vadd.f32 %v1159, %v1629
    %v1734 = vadd.f32 %v1160, %v1633
    %v1735 = vadd.f32 %v1161, %v1633
    %v1736 = vadd.f32 %v1162, %v1637
    %v1737 = vadd.f32 %v1163, %v1637
    %v1738 = vadd.f32 %v1164, %v1641
    %v1739 = vadd.f32 %v1165, %v1641
    %v1740 = vadd.f32 %v1166, %v1645
    %v1741 = vadd.f32 %v1167, %v1645
    %v1742 = vsel %vm82, %v1104, 0.0
    %v1743 = vsel %vm82, %v1105, 0.0
    %v1744 = vadd.f32 %v1742, %v1743
    %v1745 = vrot.slane %v1744, 4
    %v1746 = vadd.f32 %v1744, %v1745
    %v1747 = vrot.slane %v1746, 2
    %v1748 = vadd.f32 %v1746, %v1747
    %v1749 = vrot.slane %v1748, 1
    %v1750 = vadd.f32 %v1748, %v1749
    %v1751 = vsel %vm82, %v1106, 0.0
    %v1752 = vsel %vm82, %v1107, 0.0
    %v1753 = vadd.f32 %v1751, %v1752
    %v1754 = vrot.slane %v1753, 4
    %v1755 = vadd.f32 %v1753, %v1754
    %v1756 = vrot.slane %v1755, 2
    %v1757 = vadd.f32 %v1755, %v1756
    %v1758 = vrot.slane %v1757, 1
    %v1759 = vadd.f32 %v1757, %v1758
    %v1760 = vsel %vm82, %v1108, 0.0
    %v1761 = vsel %vm82, %v1109, 0.0
    %v1762 = vadd.f32 %v1760, %v1761
    %v1763 = vrot.slane %v1762, 4
    %v1764 = vadd.f32 %v1762, %v1763
    %v1765 = vrot.slane %v1764, 2
    %v1766 = vadd.f32 %v1764, %v1765
    %v1767 = vrot.slane %v1766, 1
    %v1768 = vadd.f32 %v1766, %v1767
    %v1769 = vsel %vm82, %v1110, 0.0
    %v1770 = vsel %vm82, %v1111, 0.0
    %v1771 = vadd.f32 %v1769, %v1770
    %v1772 = vrot.slane %v1771, 4
    %v1773 = vadd.f32 %v1771, %v1772
    %v1774 = vrot.slane %v1773, 2
    %v1775 = vadd.f32 %v1773, %v1774
    %v1776 = vrot.slane %v1775, 1
    %v1777 = vadd.f32 %v1775, %v1776
    %v1778 = vsel %vm82, %v1112, 0.0
    %v1779 = vsel %vm82, %v1113, 0.0
    %v1780 = vadd.f32 %v1778, %v1779
    %v1781 = vrot.slane %v1780, 4
    %v1782 = vadd.f32 %v1780, %v1781
    %v1783 = vrot.slane %v1782, 2
    %v1784 = vadd.f32 %v1782, %v1783
    %v1785 = vrot.slane %v1784, 1
    %v1786 = vadd.f32 %v1784, %v1785
    %v1787 = vsel %vm82, %v1114, 0.0
    %v1788 = vsel %vm82, %v1115, 0.0
    %v1789 = vadd.f32 %v1787, %v1788
    %v1790 = vrot.slane %v1789, 4
    %v1791 = vadd.f32 %v1789, %v1790
    %v1792 = vrot.slane %v1791, 2
    %v1793 = vadd.f32 %v1791, %v1792
    %v1794 = vrot.slane %v1793, 1
    %v1795 = vadd.f32 %v1793, %v1794
    %v1796 = vsel %vm82, %v1116, 0.0
    %v1797 = vsel %vm82, %v1117, 0.0
    %v1798 = vadd.f32 %v1796, %v1797
    %v1799 = vrot.slane %v1798, 4
    %v1800 = vadd.f32 %v1798, %v1799
    %v1801 = vrot.slane %v1800, 2
    %v1802 = vadd.f32 %v1800, %v1801
    %v1803 = vrot.slane %v1802, 1
    %v1804 = vadd.f32 %v1802, %v1803
    %v1805 = vsel %vm82, %v1118, 0.0
    %v1806 = vsel %vm82, %v1119, 0.0
    %v1807 = vadd.f32 %v1805, %v1806
    %v1808 = vrot.slane %v1807, 4
    %v1809 = vadd.f32 %v1807, %v1808
    %v1810 = vrot.slane %v1809, 2
    %v1811 = vadd.f32 %v1809, %v1810
    %v1812 = vrot.slane %v1811, 1
    %v1813 = vadd.f32 %v1811, %v1812
    %v1814 = vsel %vm82, %v1120, 0.0
    %v1815 = vsel %vm82, %v1121, 0.0
    %v1816 = vadd.f32 %v1814, %v1815
    %v1817 = vrot.slane %v1816, 4
    %v1818 = vadd.f32 %v1816, %v1817
    %v1819 = vrot.slane %v1818, 2
    %v1820 = vadd.f32 %v1818, %v1819
    %v1821 = vrot.slane %v1820, 1
    %v1822 = vadd.f32 %v1820, %v1821
    %v1823 = vsel %vm82, %v1122, 0.0
    %v1824 = vsel %vm82, %v1123, 0.0
    %v1825 = vadd.f32 %v1823, %v1824
    %v1826 = vrot.slane %v1825, 4
    %v1827 = vadd.f32 %v1825, %v1826
    %v1828 = vrot.slane %v1827, 2
    %v1829 = vadd.f32 %v1827, %v1828
    %v1830 = vrot.slane %v1829, 1
    %v1831 = vadd.f32 %v1829, %v1830
    %v1832 = vsel %vm82, %v1124, 0.0
    %v1833 = vsel %vm82, %v1125, 0.0
    %v1834 = vadd.f32 %v1832, %v1833
    %v1835 = vrot.slane %v1834, 4
    %v1836 = vadd.f32 %v1834, %v1835
    %v1837 = vrot.slane %v1836, 2
    %v1838 = vadd.f32 %v1836, %v1837
    %v1839 = vrot.slane %v1838, 1
    %v1840 = vadd.f32 %v1838, %v1839
    %v1841 = vsel %vm82, %v1126, 0.0
    %v1842 = vsel %vm82, %v1127, 0.0
    %v1843 = vadd.f32 %v1841, %v1842
    %v1844 = vrot.slane %v1843, 4
    %v1845 = vadd.f32 %v1843, %v1844
    %v1846 = vrot.slane %v1845, 2
    %v1847 = vadd.f32 %v1845, %v1846
    %v1848 = vrot.slane %v1847, 1
    %v1849 = vadd.f32 %v1847, %v1848
    %v1850 = vsel %vm82, %v1128, 0.0
    %v1851 = vsel %vm82, %v1129, 0.0
    %v1852 = vadd.f32 %v1850, %v1851
    %v1853 = vrot.slane %v1852, 4
    %v1854 = vadd.f32 %v1852, %v1853
    %v1855 = vrot.slane %v1854, 2
    %v1856 = vadd.f32 %v1854, %v1855
    %v1857 = vrot.slane %v1856, 1
    %v1858 = vadd.f32 %v1856, %v1857
    %v1859 = vsel %vm82, %v1130, 0.0
    %v1860 = vsel %vm82, %v1131, 0.0
    %v1861 = vadd.f32 %v1859, %v1860
    %v1862 = vrot.slane %v1861, 4
    %v1863 = vadd.f32 %v1861, %v1862
    %v1864 = vrot.slane %v1863, 2
    %v1865 = vadd.f32 %v1863, %v1864
    %v1866 = vrot.slane %v1865, 1
    %v1867 = vadd.f32 %v1865, %v1866
    %v1868 = vsel %vm82, %v1132, 0.0
    %v1869 = vsel %vm82, %v1133, 0.0
    %v1870 = vadd.f32 %v1868, %v1869
    %v1871 = vrot.slane %v1870, 4
    %v1872 = vadd.f32 %v1870, %v1871
    %v1873 = vrot.slane %v1872, 2
    %v1874 = vadd.f32 %v1872, %v1873
    %v1875 = vrot.slane %v1874, 1
    %v1876 = vadd.f32 %v1874, %v1875
    %v1877 = vsel %vm82, %v1134, 0.0
    %v1878 = vsel %vm82, %v1135, 0.0
    %v1879 = vadd.f32 %v1877, %v1878
    %v1880 = vrot.slane %v1879, 4
    %v1881 = vadd.f32 %v1879, %v1880
    %v1882 = vrot.slane %v1881, 2
    %v1883 = vadd.f32 %v1881, %v1882
    %v1884 = vrot.slane %v1883, 1
    %v1885 = vadd.f32 %v1883, %v1884
    %v1886 = vsel %vm82, %v1136, 0.0
    %v1887 = vsel %vm82, %v1137, 0.0
    %v1888 = vadd.f32 %v1886, %v1887
    %v1889 = vrot.slane %v1888, 4
    %v1890 = vadd.f32 %v1888, %v1889
    %v1891 = vrot.slane %v1890, 2
    %v1892 = vadd.f32 %v1890, %v1891
    %v1893 = vrot.slane %v1892, 1
    %v1894 = vadd.f32 %v1892, %v1893
    %v1895 = vsel %vm82, %v1138, 0.0
    %v1896 = vsel %vm82, %v1139, 0.0
    %v1897 = vadd.f32 %v1895, %v1896
    %v1898 = vrot.slane %v1897, 4
    %v1899 = vadd.f32 %v1897, %v1898
    %v1900 = vrot.slane %v1899, 2
    %v1901 = vadd.f32 %v1899, %v1900
    %v1902 = vrot.slane %v1901, 1
    %v1903 = vadd.f32 %v1901, %v1902
    %v1904 = vsel %vm82, %v1140, 0.0
    %v1905 = vsel %vm82, %v1141, 0.0
    %v1906 = vadd.f32 %v1904, %v1905
    %v1907 = vrot.slane %v1906, 4
    %v1908 = vadd.f32 %v1906, %v1907
    %v1909 = vrot.slane %v1908, 2
    %v1910 = vadd.f32 %v1908, %v1909
    %v1911 = vrot.slane %v1910, 1
    %v1912 = vadd.f32 %v1910, %v1911
    %v1913 = vsel %vm82, %v1142, 0.0
    %v1914 = vsel %vm82, %v1143, 0.0
    %v1915 = vadd.f32 %v1913, %v1914
    %v1916 = vrot.slane %v1915, 4
    %v1917 = vadd.f32 %v1915, %v1916
    %v1918 = vrot.slane %v1917, 2
    %v1919 = vadd.f32 %v1917, %v1918
    %v1920 = vrot.slane %v1919, 1
    %v1921 = vadd.f32 %v1919, %v1920
    %v1922 = vsel %vm82, %v1144, 0.0
    %v1923 = vsel %vm82, %v1145, 0.0
    %v1924 = vadd.f32 %v1922, %v1923
    %v1925 = vrot.slane %v1924, 4
    %v1926 = vadd.f32 %v1924, %v1925
    %v1927 = vrot.slane %v1926, 2
    %v1928 = vadd.f32 %v1926, %v1927
    %v1929 = vrot.slane %v1928, 1
    %v1930 = vadd.f32 %v1928, %v1929
    %v1931 = vsel %vm82, %v1146, 0.0
    %v1932 = vsel %vm82, %v1147, 0.0
    %v1933 = vadd.f32 %v1931, %v1932
    %v1934 = vrot.slane %v1933, 4
    %v1935 = vadd.f32 %v1933, %v1934
    %v1936 = vrot.slane %v1935, 2
    %v1937 = vadd.f32 %v1935, %v1936
    %v1938 = vrot.slane %v1937, 1
    %v1939 = vadd.f32 %v1937, %v1938
    %v1940 = vsel %vm82, %v1148, 0.0
    %v1941 = vsel %vm82, %v1149, 0.0
    %v1942 = vadd.f32 %v1940, %v1941
    %v1943 = vrot.slane %v1942, 4
    %v1944 = vadd.f32 %v1942, %v1943
    %v1945 = vrot.slane %v1944, 2
    %v1946 = vadd.f32 %v1944, %v1945
    %v1947 = vrot.slane %v1946, 1
    %v1948 = vadd.f32 %v1946, %v1947
    %v1949 = vsel %vm82, %v1150, 0.0
    %v1950 = vsel %vm82, %v1151, 0.0
    %v1951 = vadd.f32 %v1949, %v1950
    %v1952 = vrot.slane %v1951, 4
    %v1953 = vadd.f32 %v1951, %v1952
    %v1954 = vrot.slane %v1953, 2
    %v1955 = vadd.f32 %v1953, %v1954
    %v1956 = vrot.slane %v1955, 1
    %v1957 = vadd.f32 %v1955, %v1956
    %v1958 = vsel %vm82, %v1152, 0.0
    %v1959 = vsel %vm82, %v1153, 0.0
    %v1960 = vadd.f32 %v1958, %v1959
    %v1961 = vrot.slane %v1960, 4
    %v1962 = vadd.f32 %v1960, %v1961
    %v1963 = vrot.slane %v1962, 2
    %v1964 = vadd.f32 %v1962, %v1963
    %v1965 = vrot.slane %v1964, 1
    %v1966 = vadd.f32 %v1964, %v1965
    %v1967 = vsel %vm82, %v1154, 0.0
    %v1968 = vsel %vm82, %v1155, 0.0
    %v1969 = vadd.f32 %v1967, %v1968
    %v1970 = vrot.slane %v1969, 4
    %v1971 = vadd.f32 %v1969, %v1970
    %v1972 = vrot.slane %v1971, 2
    %v1973 = vadd.f32 %v1971, %v1972
    %v1974 = vrot.slane %v1973, 1
    %v1975 = vadd.f32 %v1973, %v1974
    %v1976 = vsel %vm82, %v1156, 0.0
    %v1977 = vsel %vm82, %v1157, 0.0
    %v1978 = vadd.f32 %v1976, %v1977
    %v1979 = vrot.slane %v1978, 4
    %v1980 = vadd.f32 %v1978, %v1979
    %v1981 = vrot.slane %v1980, 2
    %v1982 = vadd.f32 %v1980, %v1981
    %v1983 = vrot.slane %v1982, 1
    %v1984 = vadd.f32 %v1982, %v1983
    %v1985 = vsel %vm82, %v1158, 0.0
    %v1986 = vsel %vm82, %v1159, 0.0
    %v1987 = vadd.f32 %v1985, %v1986
    %v1988 = vrot.slane %v1987, 4
    %v1989 = vadd.f32 %v1987, %v1988
    %v1990 = vrot.slane %v1989, 2
    %v1991 = vadd.f32 %v1989, %v1990
    %v1992 = vrot.slane %v1991, 1
    %v1993 = vadd.f32 %v1991, %v1992
    %v1994 = vsel %vm82, %v1160, 0.0
    %v1995 = vsel %vm82, %v1161, 0.0
    %v1996 = vadd.f32 %v1994, %v1995
    %v1997 = vrot.slane %v1996, 4
    %v1998 = vadd.f32 %v1996, %v1997
    %v1999 = vrot.slane %v1998, 2
    %v2000 = vadd.f32 %v1998, %v1999
    %v2001 = vrot.slane %v2000, 1
    %v2002 = vadd.f32 %v2000, %v2001
    %v2003 = vsel %vm82, %v1162, 0.0
    %v2004 = vsel %vm82, %v1163, 0.0
    %v2005 = vadd.f32 %v2003, %v2004
    %v2006 = vrot.slane %v2005, 4
    %v2007 = vadd.f32 %v2005, %v2006
    %v2008 = vrot.slane %v2007, 2
    %v2009 = vadd.f32 %v2007, %v2008
    %v2010 = vrot.slane %v2009, 1
    %v2011 = vadd.f32 %v2009, %v2010
    %v2012 = vsel %vm82, %v1164, 0.0
    %v2013 = vsel %vm82, %v1165, 0.0
    %v2014 = vadd.f32 %v2012, %v2013
    %v2015 = vrot.slane %v2014, 4
    %v2016 = vadd.f32 %v2014, %v2015
    %v2017 = vrot.slane %v2016, 2
    %v2018 = vadd.f32 %v2016, %v2017
    %v2019 = vrot.slane %v2018, 1
    %v2020 = vadd.f32 %v2018, %v2019
    %v2021 = vsel %vm82, %v1166, 0.0
    %v2022 = vsel %vm82, %v1167, 0.0
    %v2023 = vadd.f32 %v2021, %v2022
    %v2024 = vrot.slane %v2023, 4
    %v2025 = vadd.f32 %v2023, %v2024
    %v2026 = vrot.slane %v2025, 2
    %v2027 = vadd.f32 %v2025, %v2026
    %v2028 = vrot.slane %v2027, 1
    %v2029 = vadd.f32 %v2027, %v2028
    %v2030 = vrcp.pop 16.0
    %v2031 = vmul.f32 %v1750, %v2030
    %v2032 = vmul.f32 %v1759, %v2030
    %v2033 = vmul.f32 %v1768, %v2030
    %v2034 = vmul.f32 %v1777, %v2030
    %v2035 = vmul.f32 %v1786, %v2030
    %v2036 = vmul.f32 %v1795, %v2030
    %v2037 = vmul.f32 %v1804, %v2030
    %v2038 = vmul.f32 %v1813, %v2030
    %v2039 = vmul.f32 %v1822, %v2030
    %v2040 = vmul.f32 %v1831, %v2030
    %v2041 = vmul.f32 %v1840, %v2030
    %v2042 = vmul.f32 %v1849, %v2030
    %v2043 = vmul.f32 %v1858, %v2030
    %v2044 = vmul.f32 %v1867, %v2030
    %v2045 = vmul.f32 %v1876, %v2030
    %v2046 = vmul.f32 %v1885, %v2030
    %v2047 = vmul.f32 %v1894, %v2030
    %v2048 = vmul.f32 %v1903, %v2030
    %v2049 = vmul.f32 %v1912, %v2030
    %v2050 = vmul.f32 %v1921, %v2030
    %v2051 = vmul.f32 %v1930, %v2030
    %v2052 = vmul.f32 %v1939, %v2030
    %v2053 = vmul.f32 %v1948, %v2030
    %v2054 = vmul.f32 %v1957, %v2030
    %v2055 = vmul.f32 %v1966, %v2030
    %v2056 = vmul.f32 %v1975, %v2030
    %v2057 = vmul.f32 %v1984, %v2030
    %v2058 = vmul.f32 %v1993, %v2030
    %v2059 = vmul.f32 %v2002, %v2030
    %v2060 = vmul.f32 %v2011, %v2030
    %v2061 = vmul.f32 %v2020, %v2030
    %v2062 = vmul.f32 %v2029, %v2030
    %v2095 = vsel %vm113, %v2032, %v2031
    %vm2096 = vcmask 1042434
    %v2097 = vsel %vm2096, %v2033, %v2095
    %vm2098 = vcmask 1043459
    %v2099 = vsel %vm2098, %v2034, %v2097
    %vm2100 = vcmask 1044484
    %v2101 = vsel %vm2100, %v2035, %v2099
    %vm2102 = vcmask 1045509
    %v2103 = vsel %vm2102, %v2036, %v2101
    %vm2104 = vcmask 1046534
    %v2105 = vsel %vm2104, %v2037, %v2103
    %vm2106 = vcmask 1047559
    %v2107 = vsel %vm2106, %v2038, %v2105
    %v2108 = vsel %vm113, %v2040, %v2039
    %v2109 = vsel %vm2096, %v2041, %v2108
    %v2110 = vsel %vm2098, %v2042, %v2109
    %v2111 = vsel %vm2100, %v2043, %v2110
    %v2112 = vsel %vm2102, %v2044, %v2111
    %v2113 = vsel %vm2104, %v2045, %v2112
    %v2114 = vsel %vm2106, %v2046, %v2113
    %v2115 = vsel %vm113, %v2048, %v2047
    %v2116 = vsel %vm2096, %v2049, %v2115
    %v2117 = vsel %vm2098, %v2050, %v2116
    %v2118 = vsel %vm2100, %v2051, %v2117
    %v2119 = vsel %vm2102, %v2052, %v2118
    %v2120 = vsel %vm2104, %v2053, %v2119
    %v2121 = vsel %vm2106, %v2054, %v2120
    %v2122 = vsel %vm113, %v2056, %v2055
    %v2123 = vsel %vm2096, %v2057, %v2122
    %v2124 = vsel %vm2098, %v2058, %v2123
    %v2125 = vsel %vm2100, %v2059, %v2124
    %v2126 = vsel %vm2102, %v2060, %v2125
    %v2127 = vsel %vm2104, %v2061, %v2126
    %v2128 = vsel %vm2106, %v2062, %v2127
    %v2133 = vadd.f32 %v1314, %v2107
    %v2134 = vadd.f32 %v1315, %v2114
    %v2135 = vadd.f32 %v1316, %v2121
    %v2136 = vadd.f32 %v1317, %v2128
    %v2137 = vpack.c.bf16 %v1679, %v1678
    %v2138 = vpack.c.bf16 %v1681, %v1680
    %v2139 = vpack.c.bf16 %v1683, %v1682
    %v2140 = vpack.c.bf16 %v1685, %v1684
    %v2141 = vpack.c.bf16 %v1687, %v1686
    %v2142 = vpack.c.bf16 %v1689, %v1688
    %v2143 = vpack.c.bf16 %v1691, %v1690
    %v2144 = vpack.c.bf16 %v1693, %v1692
    %v2145 = vpack.c.bf16 %v1695, %v1694
    %v2146 = vpack.c.bf16 %v1697, %v1696
    %v2147 = vpack.c.bf16 %v1699, %v1698
    %v2148 = vpack.c.bf16 %v1701, %v1700
    %v2149 = vpack.c.bf16 %v1703, %v1702
    %v2150 = vpack.c.bf16 %v1705, %v1704
    %v2151 = vpack.c.bf16 %v1707, %v1706
    %v2152 = vpack.c.bf16 %v1709, %v1708
    %v2153 = vpack.c.bf16 %v1711, %v1710
    %v2154 = vpack.c.bf16 %v1713, %v1712
    %v2155 = vpack.c.bf16 %v1715, %v1714
    %v2156 = vpack.c.bf16 %v1717, %v1716
    %v2157 = vpack.c.bf16 %v1719, %v1718
    %v2158 = vpack.c.bf16 %v1721, %v1720
    %v2159 = vpack.c.bf16 %v1723, %v1722
    %v2160 = vpack.c.bf16 %v1725, %v1724
    %v2161 = vpack.c.bf16 %v1727, %v1726
    %v2162 = vpack.c.bf16 %v1729, %v1728
    %v2163 = vpack.c.bf16 %v1731, %v1730
    %v2164 = vpack.c.bf16 %v1733, %v1732
    %v2165 = vpack.c.bf16 %v1735, %v1734
    %v2166 = vpack.c.bf16 %v1737, %v1736
    %v2167 = vpack.c.bf16 %v1739, %v1738
    %v2168 = vpack.c.bf16 %v1741, %v1740
    %v2169 = vld [vmem:[%s13] sm:$0xf]
    %v2170 = vld [vmem:[%s13 + $0x4] sm:$0xf]
    %v2171 = vld [vmem:[%s13 + $0x8] sm:$0xf]
    %v2172 = vld [vmem:[%s13 + $0xc] sm:$0xf]
    %v2173 = vld [vmem:[%s14] sm:$0x1]
    %v2175 = vlaneseq
    %v2176 = vshrl.u32 %v2175, 7
    %v2177 = vsub.s32 0, %v2176
    %v2178 = vrot.slane %v2173, %v2177
    %v2184 = vunpack.c.l.b16 %v2169
    %v2185 = vunpack.c.l.b16 %v2170
    %v2186 = vunpack.c.l.b16 %v2171
    %v2187 = vunpack.c.l.b16 %v2172
    %v2188 = vpack.c.b16 %v2185, %v2184
    %v2189 = vpack.c.b16 %v2187, %v2186
    %v2193 = vsel %vm82, %v2137, 0
    %v2196 = vsel %vm82, %v2138, 0
    %v2199 = vsel %vm82, %v2139, 0
    %v2202 = vsel %vm82, %v2140, 0
    %v2205 = vsel %vm82, %v2141, 0
    %v2208 = vsel %vm82, %v2142, 0
    %v2211 = vsel %vm82, %v2143, 0
    %v2214 = vsel %vm82, %v2144, 0
    %v2217 = vsel %vm82, %v2145, 0
    %v2220 = vsel %vm82, %v2146, 0
    %v2223 = vsel %vm82, %v2147, 0
    %v2226 = vsel %vm82, %v2148, 0
    %v2229 = vsel %vm82, %v2149, 0
    %v2232 = vsel %vm82, %v2150, 0
    %v2235 = vsel %vm82, %v2151, 0
    %v2238 = vsel %vm82, %v2152, 0
    %v2241 = vsel %vm82, %v2153, 0
    %v2244 = vsel %vm82, %v2154, 0
    %v2247 = vsel %vm82, %v2155, 0
    %v2250 = vsel %vm82, %v2156, 0
    %v2253 = vsel %vm82, %v2157, 0
    %v2256 = vsel %vm82, %v2158, 0
    %v2259 = vsel %vm82, %v2159, 0
    %v2262 = vsel %vm82, %v2160, 0
    %v2265 = vsel %vm82, %v2161, 0
    %v2268 = vsel %vm82, %v2162, 0
    %v2271 = vsel %vm82, %v2163, 0
    %v2274 = vsel %vm82, %v2164, 0
    %v2277 = vsel %vm82, %v2165, 0
    %v2280 = vsel %vm82, %v2166, 0
    %v2283 = vsel %vm82, %v2167, 0
    %v2286 = vsel %vm82, %v2168, 0
    %2288 = vmatprep.subr.bf16.mxu0 0
    %2289 = vmatpush1.bf16.msra.mxu0 %v2188
    %2290 = vmatprep.subr.bf16.mxu0 0
    %2291 = vmatpush1.bf16.msra.mxu0 %v2189
    %2292 = vmatprep.subr.bf16.mxu0 0
    %2293 = vmatpush1.bf16.msra.mxu0 0
    %2294 = vmatprep.subr.bf16.mxu0 0
    %2295 = vmatpush1.bf16.msra.mxu0 0
    %2296 = vmatprep.subr.bf16.mxu0 0
    %2297 = vmatpush1.bf16.msra.mxu0 0
    %2298 = vmatprep.subr.bf16.mxu0 0
    %2299 = vmatpush1.bf16.msra.mxu0 0
    %2300 = vmatprep.subr.bf16.mxu0 0
    %2301 = vmatpush1.bf16.msra.mxu0 0
    %2302 = vmatprep.subr.bf16.mxu0 0
    %2303 = vmatpush1.bf16.msra.mxu0 0
    %2304 = vmatprep.subr.bf16.mxu0 0
    %2305 = vmatpush1.bf16.msra.mxu0 0
    %2306 = vmatprep.subr.bf16.mxu0 0
    %2307 = vmatpush1.bf16.msra.mxu0 0
    %2308 = vmatprep.subr.bf16.mxu0 0
    %2309 = vmatpush1.bf16.msra.mxu0 0
    %2310 = vmatprep.subr.bf16.mxu0 0
    %2311 = vmatpush1.bf16.msra.mxu0 0
    %2312 = vmatprep.subr.bf16.mxu0 0
    %2313 = vmatpush1.bf16.msra.mxu0 0
    %2314 = vmatprep.subr.bf16.mxu0 0
    %2315 = vmatpush1.bf16.msra.mxu0 0
    %2316 = vmatprep.subr.bf16.mxu0 0
    %2317 = vmatpush1.bf16.msra.mxu0 0
    %2318 = vmatprep.subr.bf16.mxu0 0
    %2319 = vmatpush1.bf16.msra.mxu0 0
    %2320 = vmatprep.mubr.bf16.mxu0 0
    %2321 = vmatmul.mubr.bf16.gmra.mrb[0].mxu0 %v2193
    %v2322 = vpop.f32.mrb[0].mxu0
    %v2323 = vadd.f32 %v2178, %v2322
    %v2324 = vpop.f32.mrb[0].mxu0
    %v2325 = vpop.f32.mrb[0].mxu0
    %v2326 = vadd.f32 %v2178, %v2325
    %v2327 = vpop.f32.mrb[0].mxu0
    %2328 = vmatprep.mubr.bf16.mxu0 0
    %2329 = vmatmul.mubr.bf16.gmra.mrb[0].mxu0 %v2196
    %v2330 = vpop.f32.mrb[0].mxu0
    %v2331 = vadd.f32 %v2178, %v2330
    %v2332 = vpop.f32.mrb[0].mxu0
    %v2333 = vpop.f32.mrb[0].mxu0
    %v2334 = vadd.f32 %v2178, %v2333
    %v2335 = vpop.f32.mrb[0].mxu0
    %2336 = vmatprep.mubr.bf16.mxu0 0
    %2337 = vmatmul.mubr.bf16.gmra.mrb[0].mxu0 %v2199
    %v2338 = vpop.f32.mrb[0].mxu0
    %v2339 = vadd.f32 %v2178, %v2338
    %v2340 = vpop.f32.mrb[0].mxu0
    %v2341 = vpop.f32.mrb[0].mxu0
    %v2342 = vadd.f32 %v2178, %v2341
    %v2343 = vpop.f32.mrb[0].mxu0
    %2344 = vmatprep.mubr.bf16.mxu0 0
    %2345 = vmatmul.mubr.bf16.gmra.mrb[0].mxu0 %v2202
    %v2346 = vpop.f32.mrb[0].mxu0
    %v2347 = vadd.f32 %v2178, %v2346
    %v2348 = vpop.f32.mrb[0].mxu0
    %v2349 = vpop.f32.mrb[0].mxu0
    %v2350 = vadd.f32 %v2178, %v2349
    %v2351 = vpop.f32.mrb[0].mxu0
    %2352 = vmatprep.mubr.bf16.mxu0 0
    %2353 = vmatmul.mubr.bf16.gmra.mrb[0].mxu0 %v2205
    %v2354 = vpop.f32.mrb[0].mxu0
    %v2355 = vadd.f32 %v2178, %v2354
    %v2356 = vpop.f32.mrb[0].mxu0
    %v2357 = vpop.f32.mrb[0].mxu0
    %v2358 = vadd.f32 %v2178, %v2357
    %v2359 = vpop.f32.mrb[0].mxu0
    %2360 = vmatprep.mubr.bf16.mxu0 0
    %2361 = vmatmul.mubr.bf16.gmra.mrb[0].mxu0 %v2208
    %v2362 = vpop.f32.mrb[0].mxu0
    %v2363 = vadd.f32 %v2178, %v2362
    %v2364 = vpop.f32.mrb[0].mxu0
    %v2365 = vpop.f32.mrb[0].mxu0
    %v2366 = vadd.f32 %v2178, %v2365
    %v2367 = vpop.f32.mrb[0].mxu0
    %2368 = vmatprep.mubr.bf16.mxu0 0
    %2369 = vmatmul.mubr.bf16.gmra.mrb[0].mxu0 %v2211
    %v2370 = vpop.f32.mrb[0].mxu0
    %v2371 = vadd.f32 %v2178, %v2370
    %v2372 = vpop.f32.mrb[0].mxu0
    %v2373 = vpop.f32.mrb[0].mxu0
    %v2374 = vadd.f32 %v2178, %v2373
    %v2375 = vpop.f32.mrb[0].mxu0
    %2376 = vmatprep.mubr.bf16.mxu0 0
    %2377 = vmatmul.mubr.bf16.gmra.mrb[0].mxu0 %v2214
    %v2378 = vpop.f32.mrb[0].mxu0
    %v2379 = vadd.f32 %v2178, %v2378
    %v2380 = vpop.f32.mrb[0].mxu0
    %v2381 = vpop.f32.mrb[0].mxu0
    %v2382 = vadd.f32 %v2178, %v2381
    %v2383 = vpop.f32.mrb[0].mxu0
    %2384 = vmatprep.mubr.bf16.mxu0 0
    %2385 = vmatmul.mubr.bf16.gmra.mrb[0].mxu0 %v2217
    %v2386 = vpop.f32.mrb[0].mxu0
    %v2387 = vadd.f32 %v2178, %v2386
    %v2388 = vpop.f32.mrb[0].mxu0
    %v2389 = vpop.f32.mrb[0].mxu0
    %v2390 = vadd.f32 %v2178, %v2389
    %v2391 = vpop.f32.mrb[0].mxu0
    %2392 = vmatprep.mubr.bf16.mxu0 0
    %2393 = vmatmul.mubr.bf16.gmra.mrb[0].mxu0 %v2220
    %v2394 = vpop.f32.mrb[0].mxu0
    %v2395 = vadd.f32 %v2178, %v2394
    %v2396 = vpop.f32.mrb[0].mxu0
    %v2397 = vpop.f32.mrb[0].mxu0
    %v2398 = vadd.f32 %v2178, %v2397
    %v2399 = vpop.f32.mrb[0].mxu0
    %2400 = vmatprep.mubr.bf16.mxu0 0
    %2401 = vmatmul.mubr.bf16.gmra.mrb[0].mxu0 %v2223
    %v2402 = vpop.f32.mrb[0].mxu0
    %v2403 = vadd.f32 %v2178, %v2402
    %v2404 = vpop.f32.mrb[0].mxu0
    %v2405 = vpop.f32.mrb[0].mxu0
    %v2406 = vadd.f32 %v2178, %v2405
    %v2407 = vpop.f32.mrb[0].mxu0
    %2408 = vmatprep.mubr.bf16.mxu0 0
    %2409 = vmatmul.mubr.bf16.gmra.mrb[0].mxu0 %v2226
    %v2410 = vpop.f32.mrb[0].mxu0
    %v2411 = vadd.f32 %v2178, %v2410
    %v2412 = vpop.f32.mrb[0].mxu0
    %v2413 = vpop.f32.mrb[0].mxu0
    %v2414 = vadd.f32 %v2178, %v2413
    %v2415 = vpop.f32.mrb[0].mxu0
    %2416 = vmatprep.mubr.bf16.mxu0 0
    %2417 = vmatmul.mubr.bf16.gmra.mrb[0].mxu0 %v2229
    %v2418 = vpop.f32.mrb[0].mxu0
    %v2419 = vadd.f32 %v2178, %v2418
    %v2420 = vpop.f32.mrb[0].mxu0
    %v2421 = vpop.f32.mrb[0].mxu0
    %v2422 = vadd.f32 %v2178, %v2421
    %v2423 = vpop.f32.mrb[0].mxu0
    %2424 = vmatprep.mubr.bf16.mxu0 0
    %2425 = vmatmul.mubr.bf16.gmra.mrb[0].mxu0 %v2232
    %v2426 = vpop.f32.mrb[0].mxu0
    %v2427 = vadd.f32 %v2178, %v2426
    %v2428 = vpop.f32.mrb[0].mxu0
    %v2429 = vpop.f32.mrb[0].mxu0
    %v2430 = vadd.f32 %v2178, %v2429
    %v2431 = vpop.f32.mrb[0].mxu0
    %2432 = vmatprep.mubr.bf16.mxu0 0
    %2433 = vmatmul.mubr.bf16.gmra.mrb[0].mxu0 %v2235
    %v2434 = vpop.f32.mrb[0].mxu0
    %v2435 = vadd.f32 %v2178, %v2434
    %v2436 = vpop.f32.mrb[0].mxu0
    %v2437 = vpop.f32.mrb[0].mxu0
    %v2438 = vadd.f32 %v2178, %v2437
    %v2439 = vpop.f32.mrb[0].mxu0
    %2440 = vmatprep.mubr.bf16.mxu0 0
    %2441 = vmatmul.mubr.bf16.gmra.mrb[0].mxu0 %v2238
    %v2442 = vpop.f32.mrb[0].mxu0
    %v2443 = vadd.f32 %v2178, %v2442
    %v2444 = vpop.f32.mrb[0].mxu0
    %v2445 = vpop.f32.mrb[0].mxu0
    %v2446 = vadd.f32 %v2178, %v2445
    %v2447 = vpop.f32.mrb[0].mxu0
    %2448 = vmatprep.mubr.bf16.mxu0 0
    %2449 = vmatmul.mubr.bf16.gmra.mrb[0].mxu0 %v2241
    %v2450 = vpop.f32.mrb[0].mxu0
    %v2451 = vadd.f32 %v2178, %v2450
    %v2452 = vpop.f32.mrb[0].mxu0
    %v2453 = vpop.f32.mrb[0].mxu0
    %v2454 = vadd.f32 %v2178, %v2453
    %v2455 = vpop.f32.mrb[0].mxu0
    %2456 = vmatprep.mubr.bf16.mxu0 0
    %2457 = vmatmul.mubr.bf16.gmra.mrb[0].mxu0 %v2244
    %v2458 = vpop.f32.mrb[0].mxu0
    %v2459 = vadd.f32 %v2178, %v2458
    %v2460 = vpop.f32.mrb[0].mxu0
    %v2461 = vpop.f32.mrb[0].mxu0
    %v2462 = vadd.f32 %v2178, %v2461
    %v2463 = vpop.f32.mrb[0].mxu0
    %2464 = vmatprep.mubr.bf16.mxu0 0
    %2465 = vmatmul.mubr.bf16.gmra.mrb[0].mxu0 %v2247
    %v2466 = vpop.f32.mrb[0].mxu0
    %v2467 = vadd.f32 %v2178, %v2466
    %v2468 = vpop.f32.mrb[0].mxu0
    %v2469 = vpop.f32.mrb[0].mxu0
    %v2470 = vadd.f32 %v2178, %v2469
    %v2471 = vpop.f32.mrb[0].mxu0
    %2472 = vmatprep.mubr.bf16.mxu0 0
    %2473 = vmatmul.mubr.bf16.gmra.mrb[0].mxu0 %v2250
    %v2474 = vpop.f32.mrb[0].mxu0
    %v2475 = vadd.f32 %v2178, %v2474
    %v2476 = vpop.f32.mrb[0].mxu0
    %v2477 = vpop.f32.mrb[0].mxu0
    %v2478 = vadd.f32 %v2178, %v2477
    %v2479 = vpop.f32.mrb[0].mxu0
    %2480 = vmatprep.mubr.bf16.mxu0 0
    %2481 = vmatmul.mubr.bf16.gmra.mrb[0].mxu0 %v2253
    %v2482 = vpop.f32.mrb[0].mxu0
    %v2483 = vadd.f32 %v2178, %v2482
    %v2484 = vpop.f32.mrb[0].mxu0
    %v2485 = vpop.f32.mrb[0].mxu0
    %v2486 = vadd.f32 %v2178, %v2485
    %v2487 = vpop.f32.mrb[0].mxu0
    %2488 = vmatprep.mubr.bf16.mxu0 0
    %2489 = vmatmul.mubr.bf16.gmra.mrb[0].mxu0 %v2256
    %v2490 = vpop.f32.mrb[0].mxu0
    %v2491 = vadd.f32 %v2178, %v2490
    %v2492 = vpop.f32.mrb[0].mxu0
    %v2493 = vpop.f32.mrb[0].mxu0
    %v2494 = vadd.f32 %v2178, %v2493
    %v2495 = vpop.f32.mrb[0].mxu0
    %2496 = vmatprep.mubr.bf16.mxu0 0
    %2497 = vmatmul.mubr.bf16.gmra.mrb[0].mxu0 %v2259
    %v2498 = vpop.f32.mrb[0].mxu0
    %v2499 = vadd.f32 %v2178, %v2498
    %v2500 = vpop.f32.mrb[0].mxu0
    %v2501 = vpop.f32.mrb[0].mxu0
    %v2502 = vadd.f32 %v2178, %v2501
    %v2503 = vpop.f32.mrb[0].mxu0
    %2504 = vmatprep.mubr.bf16.mxu0 0
    %2505 = vmatmul.mubr.bf16.gmra.mrb[0].mxu0 %v2262
    %v2506 = vpop.f32.mrb[0].mxu0
    %v2507 = vadd.f32 %v2178, %v2506
    %v2508 = vpop.f32.mrb[0].mxu0
    %v2509 = vpop.f32.mrb[0].mxu0
    %v2510 = vadd.f32 %v2178, %v2509
    %v2511 = vpop.f32.mrb[0].mxu0
    %2512 = vmatprep.mubr.bf16.mxu0 0
    %2513 = vmatmul.mubr.bf16.gmra.mrb[0].mxu0 %v2265
    %v2514 = vpop.f32.mrb[0].mxu0
    %v2515 = vadd.f32 %v2178, %v2514
    %v2516 = vpop.f32.mrb[0].mxu0
    %v2517 = vpop.f32.mrb[0].mxu0
    %v2518 = vadd.f32 %v2178, %v2517
    %v2519 = vpop.f32.mrb[0].mxu0
    %2520 = vmatprep.mubr.bf16.mxu0 0
    %2521 = vmatmul.mubr.bf16.gmra.mrb[0].mxu0 %v2268
    %v2522 = vpop.f32.mrb[0].mxu0
    %v2523 = vadd.f32 %v2178, %v2522
    %v2524 = vpop.f32.mrb[0].mxu0
    %v2525 = vpop.f32.mrb[0].mxu0
    %v2526 = vadd.f32 %v2178, %v2525
    %v2527 = vpop.f32.mrb[0].mxu0
    %2528 = vmatprep.mubr.bf16.mxu0 0
    %2529 = vmatmul.mubr.bf16.gmra.mrb[0].mxu0 %v2271
    %v2530 = vpop.f32.mrb[0].mxu0
    %v2531 = vadd.f32 %v2178, %v2530
    %v2532 = vpop.f32.mrb[0].mxu0
    %v2533 = vpop.f32.mrb[0].mxu0
    %v2534 = vadd.f32 %v2178, %v2533
    %v2535 = vpop.f32.mrb[0].mxu0
    %2536 = vmatprep.mubr.bf16.mxu0 0
    %2537 = vmatmul.mubr.bf16.gmra.mrb[0].mxu0 %v2274
    %v2538 = vpop.f32.mrb[0].mxu0
    %v2539 = vadd.f32 %v2178, %v2538
    %v2540 = vpop.f32.mrb[0].mxu0
    %v2541 = vpop.f32.mrb[0].mxu0
    %v2542 = vadd.f32 %v2178, %v2541
    %v2543 = vpop.f32.mrb[0].mxu0
    %2544 = vmatprep.mubr.bf16.mxu0 0
    %2545 = vmatmul.mubr.bf16.gmra.mrb[0].mxu0 %v2277
    %v2546 = vpop.f32.mrb[0].mxu0
    %v2547 = vadd.f32 %v2178, %v2546
    %v2548 = vpop.f32.mrb[0].mxu0
    %v2549 = vpop.f32.mrb[0].mxu0
    %v2550 = vadd.f32 %v2178, %v2549
    %v2551 = vpop.f32.mrb[0].mxu0
    %2552 = vmatprep.mubr.bf16.mxu0 0
    %2553 = vmatmul.mubr.bf16.gmra.mrb[0].mxu0 %v2280
    %v2554 = vpop.f32.mrb[0].mxu0
    %v2555 = vadd.f32 %v2178, %v2554
    %v2556 = vpop.f32.mrb[0].mxu0
    %v2557 = vpop.f32.mrb[0].mxu0
    %v2558 = vadd.f32 %v2178, %v2557
    %v2559 = vpop.f32.mrb[0].mxu0
    %2560 = vmatprep.mubr.bf16.mxu0 0
    %2561 = vmatmul.mubr.bf16.gmra.mrb[0].mxu0 %v2283
    %v2562 = vpop.f32.mrb[0].mxu0
    %v2563 = vadd.f32 %v2178, %v2562
    %v2564 = vpop.f32.mrb[0].mxu0
    %v2565 = vpop.f32.mrb[0].mxu0
    %v2566 = vadd.f32 %v2178, %v2565
    %v2567 = vpop.f32.mrb[0].mxu0
    %2568 = vmatprep.mubr.bf16.mxu0 0
    %2569 = vmatmul.mubr.bf16.gmra.mrb[0].mxu0 %v2286
    %v2570 = vpop.f32.mrb[0].mxu0
    %v2571 = vadd.f32 %v2178, %v2570
    %v2572 = vpop.f32.mrb[0].mxu0
    %v2573 = vpop.f32.mrb[0].mxu0
    %v2574 = vadd.f32 %v2178, %v2573
    %v2575 = vpop.f32.mrb[0].mxu0
    %2576 = vdwg.mxu0
    %v2577 = vmax.f32 %v2323, 0.0
    %v2578 = vmax.f32 %v2326, 0.0
    %v2579 = vmax.f32 %v2331, 0.0
    %v2580 = vmax.f32 %v2334, 0.0
    %v2581 = vmax.f32 %v2339, 0.0
    %v2582 = vmax.f32 %v2342, 0.0
    %v2583 = vmax.f32 %v2347, 0.0
    %v2584 = vmax.f32 %v2350, 0.0
    %v2585 = vmax.f32 %v2355, 0.0
    %v2586 = vmax.f32 %v2358, 0.0
    %v2587 = vmax.f32 %v2363, 0.0
    %v2588 = vmax.f32 %v2366, 0.0
    %v2589 = vmax.f32 %v2371, 0.0
    %v2590 = vmax.f32 %v2374, 0.0
    %v2591 = vmax.f32 %v2379, 0.0
    %v2592 = vmax.f32 %v2382, 0.0
    %v2593 = vmax.f32 %v2387, 0.0
    %v2594 = vmax.f32 %v2390, 0.0
    %v2595 = vmax.f32 %v2395, 0.0
    %v2596 = vmax.f32 %v2398, 0.0
    %v2597 = vmax.f32 %v2403, 0.0
    %v2598 = vmax.f32 %v2406, 0.0
    %v2599 = vmax.f32 %v2411, 0.0
    %v2600 = vmax.f32 %v2414, 0.0
    %v2601 = vmax.f32 %v2419, 0.0
    %v2602 = vmax.f32 %v2422, 0.0
    %v2603 = vmax.f32 %v2427, 0.0
    %v2604 = vmax.f32 %v2430, 0.0
    %v2605 = vmax.f32 %v2435, 0.0
    %v2606 = vmax.f32 %v2438, 0.0
    %v2607 = vmax.f32 %v2443, 0.0
    %v2608 = vmax.f32 %v2446, 0.0
    %v2609 = vmax.f32 %v2451, 0.0
    %v2610 = vmax.f32 %v2454, 0.0
    %v2611 = vmax.f32 %v2459, 0.0
    %v2612 = vmax.f32 %v2462, 0.0
    %v2613 = vmax.f32 %v2467, 0.0
    %v2614 = vmax.f32 %v2470, 0.0
    %v2615 = vmax.f32 %v2475, 0.0
    %v2616 = vmax.f32 %v2478, 0.0
    %v2617 = vmax.f32 %v2483, 0.0
    %v2618 = vmax.f32 %v2486, 0.0
    %v2619 = vmax.f32 %v2491, 0.0
    %v2620 = vmax.f32 %v2494, 0.0
    %v2621 = vmax.f32 %v2499, 0.0
    %v2622 = vmax.f32 %v2502, 0.0
    %v2623 = vmax.f32 %v2507, 0.0
    %v2624 = vmax.f32 %v2510, 0.0
    %v2625 = vmax.f32 %v2515, 0.0
    %v2626 = vmax.f32 %v2518, 0.0
    %v2627 = vmax.f32 %v2523, 0.0
    %v2628 = vmax.f32 %v2526, 0.0
    %v2629 = vmax.f32 %v2531, 0.0
    %v2630 = vmax.f32 %v2534, 0.0
    %v2631 = vmax.f32 %v2539, 0.0
    %v2632 = vmax.f32 %v2542, 0.0
    %v2633 = vmax.f32 %v2547, 0.0
    %v2634 = vmax.f32 %v2550, 0.0
    %v2635 = vmax.f32 %v2555, 0.0
    %v2636 = vmax.f32 %v2558, 0.0
    %v2637 = vmax.f32 %v2563, 0.0
    %v2638 = vmax.f32 %v2566, 0.0
    %v2639 = vmax.f32 %v2571, 0.0
    %v2640 = vmax.f32 %v2574, 0.0
    %v2641 = vld [vmem:[%s21] sm:$0x1]
    %v2643 = vlaneseq
    %v2644 = vshrl.u32 %v2643, 7
    %v2645 = vsub.s32 0, %v2644
    %v2646 = vrot.slane %v2641, %v2645
    %v2648 = vmul.f32 %v2577, %v2646
    %v2649 = vmul.f32 %v2578, %v2646
    %v2650 = vmul.f32 %v2579, %v2646
    %v2651 = vmul.f32 %v2580, %v2646
    %v2652 = vmul.f32 %v2581, %v2646
    %v2653 = vmul.f32 %v2582, %v2646
    %v2654 = vmul.f32 %v2583, %v2646
    %v2655 = vmul.f32 %v2584, %v2646
    %v2656 = vmul.f32 %v2585, %v2646
    %v2657 = vmul.f32 %v2586, %v2646
    %v2658 = vmul.f32 %v2587, %v2646
    %v2659 = vmul.f32 %v2588, %v2646
    %v2660 = vmul.f32 %v2589, %v2646
    %v2661 = vmul.f32 %v2590, %v2646
    %v2662 = vmul.f32 %v2591, %v2646
    %v2663 = vmul.f32 %v2592, %v2646
    %v2664 = vmul.f32 %v2593, %v2646
    %v2665 = vmul.f32 %v2594, %v2646
    %v2666 = vmul.f32 %v2595, %v2646
    %v2667 = vmul.f32 %v2596, %v2646
    %v2668 = vmul.f32 %v2597, %v2646
    %v2669 = vmul.f32 %v2598, %v2646
    %v2670 = vmul.f32 %v2599, %v2646
    %v2671 = vmul.f32 %v2600, %v2646
    %v2672 = vmul.f32 %v2601, %v2646
    %v2673 = vmul.f32 %v2602, %v2646
    %v2674 = vmul.f32 %v2603, %v2646
    %v2675 = vmul.f32 %v2604, %v2646
    %v2676 = vmul.f32 %v2605, %v2646
    %v2677 = vmul.f32 %v2606, %v2646
    %v2678 = vmul.f32 %v2607, %v2646
    %v2679 = vmul.f32 %v2608, %v2646
    %v2680 = vmul.f32 %v2609, %v2646
    %v2681 = vmul.f32 %v2610, %v2646
    %v2682 = vmul.f32 %v2611, %v2646
    %v2683 = vmul.f32 %v2612, %v2646
    %v2684 = vmul.f32 %v2613, %v2646
    %v2685 = vmul.f32 %v2614, %v2646
    %v2686 = vmul.f32 %v2615, %v2646
    %v2687 = vmul.f32 %v2616, %v2646
    %v2688 = vmul.f32 %v2617, %v2646
    %v2689 = vmul.f32 %v2618, %v2646
    %v2690 = vmul.f32 %v2619, %v2646
    %v2691 = vmul.f32 %v2620, %v2646
    %v2692 = vmul.f32 %v2621, %v2646
    %v2693 = vmul.f32 %v2622, %v2646
    %v2694 = vmul.f32 %v2623, %v2646
    %v2695 = vmul.f32 %v2624, %v2646
    %v2696 = vmul.f32 %v2625, %v2646
    %v2697 = vmul.f32 %v2626, %v2646
    %v2698 = vmul.f32 %v2627, %v2646
    %v2699 = vmul.f32 %v2628, %v2646
    %v2700 = vmul.f32 %v2629, %v2646
    %v2701 = vmul.f32 %v2630, %v2646
    %v2702 = vmul.f32 %v2631, %v2646
    %v2703 = vmul.f32 %v2632, %v2646
    %v2704 = vmul.f32 %v2633, %v2646
    %v2705 = vmul.f32 %v2634, %v2646
    %v2706 = vmul.f32 %v2635, %v2646
    %v2707 = vmul.f32 %v2636, %v2646
    %v2708 = vmul.f32 %v2637, %v2646
    %v2709 = vmul.f32 %v2638, %v2646
    %v2710 = vmul.f32 %v2639, %v2646
    %v2711 = vmul.f32 %v2640, %v2646
    %v2712 = vsel %vm82, %v2648, 0.0
    %2713 = vadd.xlane.f32.xlu0 %v2712
    %v2714 = vpop.xlane.xlu0 %2713
    %v2715 = vsel %vm82, %v2649, 0.0
    %2716 = vadd.xlane.f32.xlu0 %v2715
    %v2717 = vpop.xlane.xlu0 %2716
    %v2718 = vsel %vm82, %v2650, 0.0
    %2719 = vadd.xlane.f32.xlu0 %v2718
    %v2720 = vpop.xlane.xlu0 %2719
    %v2721 = vsel %vm82, %v2651, 0.0
    %2722 = vadd.xlane.f32.xlu0 %v2721
    %v2723 = vpop.xlane.xlu0 %2722
    %v2724 = vsel %vm82, %v2652, 0.0
    %2725 = vadd.xlane.f32.xlu0 %v2724
    %v2726 = vpop.xlane.xlu0 %2725
    %v2727 = vsel %vm82, %v2653, 0.0
    %2728 = vadd.xlane.f32.xlu0 %v2727
    %v2729 = vpop.xlane.xlu0 %2728
    %v2730 = vsel %vm82, %v2654, 0.0
    %2731 = vadd.xlane.f32.xlu0 %v2730
    %v2732 = vpop.xlane.xlu0 %2731
    %v2733 = vsel %vm82, %v2655, 0.0
    %2734 = vadd.xlane.f32.xlu0 %v2733
    %v2735 = vpop.xlane.xlu0 %2734
    %v2736 = vsel %vm82, %v2656, 0.0
    %2737 = vadd.xlane.f32.xlu0 %v2736
    %v2738 = vpop.xlane.xlu0 %2737
    %v2739 = vsel %vm82, %v2657, 0.0
    %2740 = vadd.xlane.f32.xlu0 %v2739
    %v2741 = vpop.xlane.xlu0 %2740
    %v2742 = vsel %vm82, %v2658, 0.0
    %2743 = vadd.xlane.f32.xlu0 %v2742
    %v2744 = vpop.xlane.xlu0 %2743
    %v2745 = vsel %vm82, %v2659, 0.0
    %2746 = vadd.xlane.f32.xlu0 %v2745
    %v2747 = vpop.xlane.xlu0 %2746
    %v2748 = vsel %vm82, %v2660, 0.0
    %2749 = vadd.xlane.f32.xlu0 %v2748
    %v2750 = vpop.xlane.xlu0 %2749
    %v2751 = vsel %vm82, %v2661, 0.0
    %2752 = vadd.xlane.f32.xlu0 %v2751
    %v2753 = vpop.xlane.xlu0 %2752
    %v2754 = vsel %vm82, %v2662, 0.0
    %2755 = vadd.xlane.f32.xlu0 %v2754
    %v2756 = vpop.xlane.xlu0 %2755
    %v2757 = vsel %vm82, %v2663, 0.0
    %2758 = vadd.xlane.f32.xlu0 %v2757
    %v2759 = vpop.xlane.xlu0 %2758
    %v2760 = vsel %vm82, %v2664, 0.0
    %2761 = vadd.xlane.f32.xlu0 %v2760
    %v2762 = vpop.xlane.xlu0 %2761
    %v2763 = vsel %vm82, %v2665, 0.0
    %2764 = vadd.xlane.f32.xlu0 %v2763
    %v2765 = vpop.xlane.xlu0 %2764
    %v2766 = vsel %vm82, %v2666, 0.0
    %2767 = vadd.xlane.f32.xlu0 %v2766
    %v2768 = vpop.xlane.xlu0 %2767
    %v2769 = vsel %vm82, %v2667, 0.0
    %2770 = vadd.xlane.f32.xlu0 %v2769
    %v2771 = vpop.xlane.xlu0 %2770
    %v2772 = vsel %vm82, %v2668, 0.0
    %2773 = vadd.xlane.f32.xlu0 %v2772
    %v2774 = vpop.xlane.xlu0 %2773
    %v2775 = vsel %vm82, %v2669, 0.0
    %2776 = vadd.xlane.f32.xlu0 %v2775
    %v2777 = vpop.xlane.xlu0 %2776
    %v2778 = vsel %vm82, %v2670, 0.0
    %2779 = vadd.xlane.f32.xlu0 %v2778
    %v2780 = vpop.xlane.xlu0 %2779
    %v2781 = vsel %vm82, %v2671, 0.0
    %2782 = vadd.xlane.f32.xlu0 %v2781
    %v2783 = vpop.xlane.xlu0 %2782
    %v2784 = vsel %vm82, %v2672, 0.0
    %2785 = vadd.xlane.f32.xlu0 %v2784
    %v2786 = vpop.xlane.xlu0 %2785
    %v2787 = vsel %vm82, %v2673, 0.0
    %2788 = vadd.xlane.f32.xlu0 %v2787
    %v2789 = vpop.xlane.xlu0 %2788
    %v2790 = vsel %vm82, %v2674, 0.0
    %2791 = vadd.xlane.f32.xlu0 %v2790
    %v2792 = vpop.xlane.xlu0 %2791
    %v2793 = vsel %vm82, %v2675, 0.0
    %2794 = vadd.xlane.f32.xlu0 %v2793
    %v2795 = vpop.xlane.xlu0 %2794
    %v2796 = vsel %vm82, %v2676, 0.0
    %2797 = vadd.xlane.f32.xlu0 %v2796
    %v2798 = vpop.xlane.xlu0 %2797
    %v2799 = vsel %vm82, %v2677, 0.0
    %2800 = vadd.xlane.f32.xlu0 %v2799
    %v2801 = vpop.xlane.xlu0 %2800
    %v2802 = vsel %vm82, %v2678, 0.0
    %2803 = vadd.xlane.f32.xlu0 %v2802
    %v2804 = vpop.xlane.xlu0 %2803
    %v2805 = vsel %vm82, %v2679, 0.0
    %2806 = vadd.xlane.f32.xlu0 %v2805
    %v2807 = vpop.xlane.xlu0 %2806
    %v2808 = vsel %vm82, %v2680, 0.0
    %2809 = vadd.xlane.f32.xlu0 %v2808
    %v2810 = vpop.xlane.xlu0 %2809
    %v2811 = vsel %vm82, %v2681, 0.0
    %2812 = vadd.xlane.f32.xlu0 %v2811
    %v2813 = vpop.xlane.xlu0 %2812
    %v2814 = vsel %vm82, %v2682, 0.0
    %2815 = vadd.xlane.f32.xlu0 %v2814
    %v2816 = vpop.xlane.xlu0 %2815
    %v2817 = vsel %vm82, %v2683, 0.0
    %2818 = vadd.xlane.f32.xlu0 %v2817
    %v2819 = vpop.xlane.xlu0 %2818
    %v2820 = vsel %vm82, %v2684, 0.0
    %2821 = vadd.xlane.f32.xlu0 %v2820
    %v2822 = vpop.xlane.xlu0 %2821
    %v2823 = vsel %vm82, %v2685, 0.0
    %2824 = vadd.xlane.f32.xlu0 %v2823
    %v2825 = vpop.xlane.xlu0 %2824
    %v2826 = vsel %vm82, %v2686, 0.0
    %2827 = vadd.xlane.f32.xlu0 %v2826
    %v2828 = vpop.xlane.xlu0 %2827
    %v2829 = vsel %vm82, %v2687, 0.0
    %2830 = vadd.xlane.f32.xlu0 %v2829
    %v2831 = vpop.xlane.xlu0 %2830
    %v2832 = vsel %vm82, %v2688, 0.0
    %2833 = vadd.xlane.f32.xlu0 %v2832
    %v2834 = vpop.xlane.xlu0 %2833
    %v2835 = vsel %vm82, %v2689, 0.0
    %2836 = vadd.xlane.f32.xlu0 %v2835
    %v2837 = vpop.xlane.xlu0 %2836
    %v2838 = vsel %vm82, %v2690, 0.0
    %2839 = vadd.xlane.f32.xlu0 %v2838
    %v2840 = vpop.xlane.xlu0 %2839
    %v2841 = vsel %vm82, %v2691, 0.0
    %2842 = vadd.xlane.f32.xlu0 %v2841
    %v2843 = vpop.xlane.xlu0 %2842
    %v2844 = vsel %vm82, %v2692, 0.0
    %2845 = vadd.xlane.f32.xlu0 %v2844
    %v2846 = vpop.xlane.xlu0 %2845
    %v2847 = vsel %vm82, %v2693, 0.0
    %2848 = vadd.xlane.f32.xlu0 %v2847
    %v2849 = vpop.xlane.xlu0 %2848
    %v2850 = vsel %vm82, %v2694, 0.0
    %2851 = vadd.xlane.f32.xlu0 %v2850
    %v2852 = vpop.xlane.xlu0 %2851
    %v2853 = vsel %vm82, %v2695, 0.0
    %2854 = vadd.xlane.f32.xlu0 %v2853
    %v2855 = vpop.xlane.xlu0 %2854
    %v2856 = vsel %vm82, %v2696, 0.0
    %2857 = vadd.xlane.f32.xlu0 %v2856
    %v2858 = vpop.xlane.xlu0 %2857
    %v2859 = vsel %vm82, %v2697, 0.0
    %2860 = vadd.xlane.f32.xlu0 %v2859
    %v2861 = vpop.xlane.xlu0 %2860
    %v2862 = vsel %vm82, %v2698, 0.0
    %2863 = vadd.xlane.f32.xlu0 %v2862
    %v2864 = vpop.xlane.xlu0 %2863
    %v2865 = vsel %vm82, %v2699, 0.0
    %2866 = vadd.xlane.f32.xlu0 %v2865
    %v2867 = vpop.xlane.xlu0 %2866
    %v2868 = vsel %vm82, %v2700, 0.0
    %2869 = vadd.xlane.f32.xlu0 %v2868
    %v2870 = vpop.xlane.xlu0 %2869
    %v2871 = vsel %vm82, %v2701, 0.0
    %2872 = vadd.xlane.f32.xlu0 %v2871
    %v2873 = vpop.xlane.xlu0 %2872
    %v2874 = vsel %vm82, %v2702, 0.0
    %2875 = vadd.xlane.f32.xlu0 %v2874
    %v2876 = vpop.xlane.xlu0 %2875
    %v2877 = vsel %vm82, %v2703, 0.0
    %2878 = vadd.xlane.f32.xlu0 %v2877
    %v2879 = vpop.xlane.xlu0 %2878
    %v2880 = vsel %vm82, %v2704, 0.0
    %2881 = vadd.xlane.f32.xlu0 %v2880
    %v2882 = vpop.xlane.xlu0 %2881
    %v2883 = vsel %vm82, %v2705, 0.0
    %2884 = vadd.xlane.f32.xlu0 %v2883
    %v2885 = vpop.xlane.xlu0 %2884
    %v2886 = vsel %vm82, %v2706, 0.0
    %2887 = vadd.xlane.f32.xlu0 %v2886
    %v2888 = vpop.xlane.xlu0 %2887
    %v2889 = vsel %vm82, %v2707, 0.0
    %2890 = vadd.xlane.f32.xlu0 %v2889
    %v2891 = vpop.xlane.xlu0 %2890
    %v2892 = vsel %vm82, %v2708, 0.0
    %2893 = vadd.xlane.f32.xlu0 %v2892
    %v2894 = vpop.xlane.xlu0 %2893
    %v2895 = vsel %vm82, %v2709, 0.0
    %2896 = vadd.xlane.f32.xlu0 %v2895
    %v2897 = vpop.xlane.xlu0 %2896
    %v2898 = vsel %vm82, %v2710, 0.0
    %2899 = vadd.xlane.f32.xlu0 %v2898
    %v2900 = vpop.xlane.xlu0 %2899
    %v2901 = vsel %vm82, %v2711, 0.0
    %2902 = vadd.xlane.f32.xlu0 %v2901
    %v2903 = vpop.xlane.xlu0 %2902
    %v2904 = vld [vmem:[#allocation2] sm:$0x1]
    %v2906 = vlaneseq
    %v2907 = vshrl.u32 %v2906, 7
    %v2908 = vsub.s32 0, %v2907
    %v2909 = vrot.slane %v2904, %v2908
    %2910 = vset.pattern.permute.xlu0 0
    %2911 = vperm.xlu0 %2910, %v2909
    %v2912 = vpop.permute.xlu0 %2911
    %v2914 = vadd.f32 %v2714, %v2912
    %v2915 = vadd.f32 %v2717, %v2912
    %v2916 = vadd.f32 %v2720, %v2912
    %v2917 = vadd.f32 %v2723, %v2912
    %v2918 = vadd.f32 %v2726, %v2912
    %v2919 = vadd.f32 %v2729, %v2912
    %v2920 = vadd.f32 %v2732, %v2912
    %v2921 = vadd.f32 %v2735, %v2912
    %v2922 = vadd.f32 %v2738, %v2912
    %v2923 = vadd.f32 %v2741, %v2912
    %v2924 = vadd.f32 %v2744, %v2912
    %v2925 = vadd.f32 %v2747, %v2912
    %v2926 = vadd.f32 %v2750, %v2912
    %v2927 = vadd.f32 %v2753, %v2912
    %v2928 = vadd.f32 %v2756, %v2912
    %v2929 = vadd.f32 %v2759, %v2912
    %v2930 = vadd.f32 %v2762, %v2912
    %v2931 = vadd.f32 %v2765, %v2912
    %v2932 = vadd.f32 %v2768, %v2912
    %v2933 = vadd.f32 %v2771, %v2912
    %v2934 = vadd.f32 %v2774, %v2912
    %v2935 = vadd.f32 %v2777, %v2912
    %v2936 = vadd.f32 %v2780, %v2912
    %v2937 = vadd.f32 %v2783, %v2912
    %v2938 = vadd.f32 %v2786, %v2912
    %v2939 = vadd.f32 %v2789, %v2912
    %v2940 = vadd.f32 %v2792, %v2912
    %v2941 = vadd.f32 %v2795, %v2912
    %v2942 = vadd.f32 %v2798, %v2912
    %v2943 = vadd.f32 %v2801, %v2912
    %v2944 = vadd.f32 %v2804, %v2912
    %v2945 = vadd.f32 %v2807, %v2912
    %v2946 = vadd.f32 %v2810, %v2912
    %v2947 = vadd.f32 %v2813, %v2912
    %v2948 = vadd.f32 %v2816, %v2912
    %v2949 = vadd.f32 %v2819, %v2912
    %v2950 = vadd.f32 %v2822, %v2912
    %v2951 = vadd.f32 %v2825, %v2912
    %v2952 = vadd.f32 %v2828, %v2912
    %v2953 = vadd.f32 %v2831, %v2912
    %v2954 = vadd.f32 %v2834, %v2912
    %v2955 = vadd.f32 %v2837, %v2912
    %v2956 = vadd.f32 %v2840, %v2912
    %v2957 = vadd.f32 %v2843, %v2912
    %v2958 = vadd.f32 %v2846, %v2912
    %v2959 = vadd.f32 %v2849, %v2912
    %v2960 = vadd.f32 %v2852, %v2912
    %v2961 = vadd.f32 %v2855, %v2912
    %v2962 = vadd.f32 %v2858, %v2912
    %v2963 = vadd.f32 %v2861, %v2912
    %v2964 = vadd.f32 %v2864, %v2912
    %v2965 = vadd.f32 %v2867, %v2912
    %v2966 = vadd.f32 %v2870, %v2912
    %v2967 = vadd.f32 %v2873, %v2912
    %v2968 = vadd.f32 %v2876, %v2912
    %v2969 = vadd.f32 %v2879, %v2912
    %v2970 = vadd.f32 %v2882, %v2912
    %v2971 = vadd.f32 %v2885, %v2912
    %v2972 = vadd.f32 %v2888, %v2912
    %v2973 = vadd.f32 %v2891, %v2912
    %v2974 = vadd.f32 %v2894, %v2912
    %v2975 = vadd.f32 %v2897, %v2912
    %v2976 = vadd.f32 %v2900, %v2912
    %v2977 = vadd.f32 %v2903, %v2912
    %v2978 = vxor.u32 %v2914, 2147483648
    %v2979 = vxor.u32 %v2915, 2147483648
    %v2980 = vxor.u32 %v2916, 2147483648
    %v2981 = vxor.u32 %v2917, 2147483648
    %v2982 = vxor.u32 %v2918, 2147483648
    %v2983 = vxor.u32 %v2919, 2147483648
    %v2984 = vxor.u32 %v2920, 2147483648
    %v2985 = vxor.u32 %v2921, 2147483648
    %v2986 = vxor.u32 %v2922, 2147483648
    %v2987 = vxor.u32 %v2923, 2147483648
    %v2988 = vxor.u32 %v2924, 2147483648
    %v2989 = vxor.u32 %v2925, 2147483648
    %v2990 = vxor.u32 %v2926, 2147483648
    %v2991 = vxor.u32 %v2927, 2147483648
    %v2992 = vxor.u32 %v2928, 2147483648
    %v2993 = vxor.u32 %v2929, 2147483648
    %v2994 = vxor.u32 %v2930, 2147483648
    %v2995 = vxor.u32 %v2931, 2147483648
    %v2996 = vxor.u32 %v2932, 2147483648
    %v2997 = vxor.u32 %v2933, 2147483648
    %v2998 = vxor.u32 %v2934, 2147483648
    %v2999 = vxor.u32 %v2935, 2147483648
    %v3000 = vxor.u32 %v2936, 2147483648
    %v3001 = vxor.u32 %v2937, 2147483648
    %v3002 = vxor.u32 %v2938, 2147483648
    %v3003 = vxor.u32 %v2939, 2147483648
    %v3004 = vxor.u32 %v2940, 2147483648
    %v3005 = vxor.u32 %v2941, 2147483648
    %v3006 = vxor.u32 %v2942, 2147483648
    %v3007 = vxor.u32 %v2943, 2147483648
    %v3008 = vxor.u32 %v2944, 2147483648
    %v3009 = vxor.u32 %v2945, 2147483648
    %v3010 = vxor.u32 %v2946, 2147483648
    %v3011 = vxor.u32 %v2947, 2147483648
    %v3012 = vxor.u32 %v2948, 2147483648
    %v3013 = vxor.u32 %v2949, 2147483648
    %v3014 = vxor.u32 %v2950, 2147483648
    %v3015 = vxor.u32 %v2951, 2147483648
    %v3016 = vxor.u32 %v2952, 2147483648
    %v3017 = vxor.u32 %v2953, 2147483648
    %v3018 = vxor.u32 %v2954, 2147483648
    %v3019 = vxor.u32 %v2955, 2147483648
    %v3020 = vxor.u32 %v2956, 2147483648
    %v3021 = vxor.u32 %v2957, 2147483648
    %v3022 = vxor.u32 %v2958, 2147483648
    %v3023 = vxor.u32 %v2959, 2147483648
    %v3024 = vxor.u32 %v2960, 2147483648
    %v3025 = vxor.u32 %v2961, 2147483648
    %v3026 = vxor.u32 %v2962, 2147483648
    %v3027 = vxor.u32 %v2963, 2147483648
    %v3028 = vxor.u32 %v2964, 2147483648
    %v3029 = vxor.u32 %v2965, 2147483648
    %v3030 = vxor.u32 %v2966, 2147483648
    %v3031 = vxor.u32 %v2967, 2147483648
    %v3032 = vxor.u32 %v2968, 2147483648
    %v3033 = vxor.u32 %v2969, 2147483648
    %v3034 = vxor.u32 %v2970, 2147483648
    %v3035 = vxor.u32 %v2971, 2147483648
    %v3036 = vxor.u32 %v2972, 2147483648
    %v3037 = vxor.u32 %v2973, 2147483648
    %v3038 = vxor.u32 %v2974, 2147483648
    %v3039 = vxor.u32 %v2975, 2147483648
    %v3040 = vxor.u32 %v2976, 2147483648
    %v3041 = vxor.u32 %v2977, 2147483648
    %v3042 = vmul.f32 %v2978, 1.442695
    %v3043 = vpow.pop %v3042
    %v3044 = vmul.f32 %v2979, 1.442695
    %v3045 = vpow.pop %v3044
    %v3046 = vmul.f32 %v2980, 1.442695
    %v3047 = vpow.pop %v3046
    %v3048 = vmul.f32 %v2981, 1.442695
    %v3049 = vpow.pop %v3048
    %v3050 = vmul.f32 %v2982, 1.442695
    %v3051 = vpow.pop %v3050
    %v3052 = vmul.f32 %v2983, 1.442695
    %v3053 = vpow.pop %v3052
    %v3054 = vmul.f32 %v2984, 1.442695
    %v3055 = vpow.pop %v3054
    %v3056 = vmul.f32 %v2985, 1.442695
    %v3057 = vpow.pop %v3056
    %v3058 = vmul.f32 %v2986, 1.442695
    %v3059 = vpow.pop %v3058
    %v3060 = vmul.f32 %v2987, 1.442695
    %v3061 = vpow.pop %v3060
    %v3062 = vmul.f32 %v2988, 1.442695
    %v3063 = vpow.pop %v3062
    %v3064 = vmul.f32 %v2989, 1.442695
    %v3065 = vpow.pop %v3064
    %v3066 = vmul.f32 %v2990, 1.442695
    %v3067 = vpow.pop %v3066
    %v3068 = vmul.f32 %v2991, 1.442695
    %v3069 = vpow.pop %v3068
    %v3070 = vmul.f32 %v2992, 1.442695
    %v3071 = vpow.pop %v3070
    %v3072 = vmul.f32 %v2993, 1.442695
    %v3073 = vpow.pop %v3072
    %v3074 = vmul.f32 %v2994, 1.442695
    %v3075 = vpow.pop %v3074
    %v3076 = vmul.f32 %v2995, 1.442695
    %v3077 = vpow.pop %v3076
    %v3078 = vmul.f32 %v2996, 1.442695
    %v3079 = vpow.pop %v3078
    %v3080 = vmul.f32 %v2997, 1.442695
    %v3081 = vpow.pop %v3080
    %v3082 = vmul.f32 %v2998, 1.442695
    %v3083 = vpow.pop %v3082
    %v3084 = vmul.f32 %v2999, 1.442695
    %v3085 = vpow.pop %v3084
    %v3086 = vmul.f32 %v3000, 1.442695
    %v3087 = vpow.pop %v3086
    %v3088 = vmul.f32 %v3001, 1.442695
    %v3089 = vpow.pop %v3088
    %v3090 = vmul.f32 %v3002, 1.442695
    %v3091 = vpow.pop %v3090
    %v3092 = vmul.f32 %v3003, 1.442695
    %v3093 = vpow.pop %v3092
    %v3094 = vmul.f32 %v3004, 1.442695
    %v3095 = vpow.pop %v3094
    %v3096 = vmul.f32 %v3005, 1.442695
    %v3097 = vpow.pop %v3096
    %v3098 = vmul.f32 %v3006, 1.442695
    %v3099 = vpow.pop %v3098
    %v3100 = vmul.f32 %v3007, 1.442695
    %v3101 = vpow.pop %v3100
    %v3102 = vmul.f32 %v3008, 1.442695
    %v3103 = vpow.pop %v3102
    %v3104 = vmul.f32 %v3009, 1.442695
    %v3105 = vpow.pop %v3104
    %v3106 = vmul.f32 %v3010, 1.442695
    %v3107 = vpow.pop %v3106
    %v3108 = vmul.f32 %v3011, 1.442695
    %v3109 = vpow.pop %v3108
    %v3110 = vmul.f32 %v3012, 1.442695
    %v3111 = vpow.pop %v3110
    %v3112 = vmul.f32 %v3013, 1.442695
    %v3113 = vpow.pop %v3112
    %v3114 = vmul.f32 %v3014, 1.442695
    %v3115 = vpow.pop %v3114
    %v3116 = vmul.f32 %v3015, 1.442695
    %v3117 = vpow.pop %v3116
    %v3118 = vmul.f32 %v3016, 1.442695
    %v3119 = vpow.pop %v3118
    %v3120 = vmul.f32 %v3017, 1.442695
    %v3121 = vpow.pop %v3120
    %v3122 = vmul.f32 %v3018, 1.442695
    %v3123 = vpow.pop %v3122
    %v3124 = vmul.f32 %v3019, 1.442695
    %v3125 = vpow.pop %v3124
    %v3126 = vmul.f32 %v3020, 1.442695
    %v3127 = vpow.pop %v3126
    %v3128 = vmul.f32 %v3021, 1.442695
    %v3129 = vpow.pop %v3128
    %v3130 = vmul.f32 %v3022, 1.442695
    %v3131 = vpow.pop %v3130
    %v3132 = vmul.f32 %v3023, 1.442695
    %v3133 = vpow.pop %v3132
    %v3134 = vmul.f32 %v3024, 1.442695
    %v3135 = vpow.pop %v3134
    %v3136 = vmul.f32 %v3025, 1.442695
    %v3137 = vpow.pop %v3136
    %v3138 = vmul.f32 %v3026, 1.442695
    %v3139 = vpow.pop %v3138
    %v3140 = vmul.f32 %v3027, 1.442695
    %v3141 = vpow.pop %v3140
    %v3142 = vmul.f32 %v3028, 1.442695
    %v3143 = vpow.pop %v3142
    %v3144 = vmul.f32 %v3029, 1.442695
    %v3145 = vpow.pop %v3144
    %v3146 = vmul.f32 %v3030, 1.442695
    %v3147 = vpow.pop %v3146
    %v3148 = vmul.f32 %v3031, 1.442695
    %v3149 = vpow.pop %v3148
    %v3150 = vmul.f32 %v3032, 1.442695
    %v3151 = vpow.pop %v3150
    %v3152 = vmul.f32 %v3033, 1.442695
    %v3153 = vpow.pop %v3152
    %v3154 = vmul.f32 %v3034, 1.442695
    %v3155 = vpow.pop %v3154
    %v3156 = vmul.f32 %v3035, 1.442695
    %v3157 = vpow.pop %v3156
    %v3158 = vmul.f32 %v3036, 1.442695
    %v3159 = vpow.pop %v3158
    %v3160 = vmul.f32 %v3037, 1.442695
    %v3161 = vpow.pop %v3160
    %v3162 = vmul.f32 %v3038, 1.442695
    %v3163 = vpow.pop %v3162
    %v3164 = vmul.f32 %v3039, 1.442695
    %v3165 = vpow.pop %v3164
    %v3166 = vmul.f32 %v3040, 1.442695
    %v3167 = vpow.pop %v3166
    %v3168 = vmul.f32 %v3041, 1.442695
    %v3169 = vpow.pop %v3168
    %v3170 = vadd.f32 %v3043, 1.0
    %v3171 = vadd.f32 %v3045, 1.0
    %v3172 = vadd.f32 %v3047, 1.0
    %v3173 = vadd.f32 %v3049, 1.0
    %v3174 = vadd.f32 %v3051, 1.0
    %v3175 = vadd.f32 %v3053, 1.0
    %v3176 = vadd.f32 %v3055, 1.0
    %v3177 = vadd.f32 %v3057, 1.0
    %v3178 = vadd.f32 %v3059, 1.0
    %v3179 = vadd.f32 %v3061, 1.0
    %v3180 = vadd.f32 %v3063, 1.0
    %v3181 = vadd.f32 %v3065, 1.0
    %v3182 = vadd.f32 %v3067, 1.0
    %v3183 = vadd.f32 %v3069, 1.0
    %v3184 = vadd.f32 %v3071, 1.0
    %v3185 = vadd.f32 %v3073, 1.0
    %v3186 = vadd.f32 %v3075, 1.0
    %v3187 = vadd.f32 %v3077, 1.0
    %v3188 = vadd.f32 %v3079, 1.0
    %v3189 = vadd.f32 %v3081, 1.0
    %v3190 = vadd.f32 %v3083, 1.0
    %v3191 = vadd.f32 %v3085, 1.0
    %v3192 = vadd.f32 %v3087, 1.0
    %v3193 = vadd.f32 %v3089, 1.0
    %v3194 = vadd.f32 %v3091, 1.0
    %v3195 = vadd.f32 %v3093, 1.0
    %v3196 = vadd.f32 %v3095, 1.0
    %v3197 = vadd.f32 %v3097, 1.0
    %v3198 = vadd.f32 %v3099, 1.0
    %v3199 = vadd.f32 %v3101, 1.0
    %v3200 = vadd.f32 %v3103, 1.0
    %v3201 = vadd.f32 %v3105, 1.0
    %v3202 = vadd.f32 %v3107, 1.0
    %v3203 = vadd.f32 %v3109, 1.0
    %v3204 = vadd.f32 %v3111, 1.0
    %v3205 = vadd.f32 %v3113, 1.0
    %v3206 = vadd.f32 %v3115, 1.0
    %v3207 = vadd.f32 %v3117, 1.0
    %v3208 = vadd.f32 %v3119, 1.0
    %v3209 = vadd.f32 %v3121, 1.0
    %v3210 = vadd.f32 %v3123, 1.0
    %v3211 = vadd.f32 %v3125, 1.0
    %v3212 = vadd.f32 %v3127, 1.0
    %v3213 = vadd.f32 %v3129, 1.0
    %v3214 = vadd.f32 %v3131, 1.0
    %v3215 = vadd.f32 %v3133, 1.0
    %v3216 = vadd.f32 %v3135, 1.0
    %v3217 = vadd.f32 %v3137, 1.0
    %v3218 = vadd.f32 %v3139, 1.0
    %v3219 = vadd.f32 %v3141, 1.0
    %v3220 = vadd.f32 %v3143, 1.0
    %v3221 = vadd.f32 %v3145, 1.0
    %v3222 = vadd.f32 %v3147, 1.0
    %v3223 = vadd.f32 %v3149, 1.0
    %v3224 = vadd.f32 %v3151, 1.0
    %v3225 = vadd.f32 %v3153, 1.0
    %v3226 = vadd.f32 %v3155, 1.0
    %v3227 = vadd.f32 %v3157, 1.0
    %v3228 = vadd.f32 %v3159, 1.0
    %v3229 = vadd.f32 %v3161, 1.0
    %v3230 = vadd.f32 %v3163, 1.0
    %v3231 = vadd.f32 %v3165, 1.0
    %v3232 = vadd.f32 %v3167, 1.0
    %v3233 = vadd.f32 %v3169, 1.0
    %v3234 = vrcp.pop %v3170
    %v3235 = vmul.f32 1.0, %v3234
    %v3236 = vrcp.pop %v3171
    %v3237 = vmul.f32 1.0, %v3236
    %v3238 = vrcp.pop %v3172
    %v3239 = vmul.f32 1.0, %v3238
    %v3240 = vrcp.pop %v3173
    %v3241 = vmul.f32 1.0, %v3240
    %v3242 = vrcp.pop %v3174
    %v3243 = vmul.f32 1.0, %v3242
    %v3244 = vrcp.pop %v3175
    %v3245 = vmul.f32 1.0, %v3244
    %v3246 = vrcp.pop %v3176
    %v3247 = vmul.f32 1.0, %v3246
    %v3248 = vrcp.pop %v3177
    %v3249 = vmul.f32 1.0, %v3248
    %v3250 = vrcp.pop %v3178
    %v3251 = vmul.f32 1.0, %v3250
    %v3252 = vrcp.pop %v3179
    %v3253 = vmul.f32 1.0, %v3252
    %v3254 = vrcp.pop %v3180
    %v3255 = vmul.f32 1.0, %v3254
    %v3256 = vrcp.pop %v3181
    %v3257 = vmul.f32 1.0, %v3256
    %v3258 = vrcp.pop %v3182
    %v3259 = vmul.f32 1.0, %v3258
    %v3260 = vrcp.pop %v3183
    %v3261 = vmul.f32 1.0, %v3260
    %v3262 = vrcp.pop %v3184
    %v3263 = vmul.f32 1.0, %v3262
    %v3264 = vrcp.pop %v3185
    %v3265 = vmul.f32 1.0, %v3264
    %v3266 = vrcp.pop %v3186
    %v3267 = vmul.f32 1.0, %v3266
    %v3268 = vrcp.pop %v3187
    %v3269 = vmul.f32 1.0, %v3268
    %v3270 = vrcp.pop %v3188
    %v3271 = vmul.f32 1.0, %v3270
    %v3272 = vrcp.pop %v3189
    %v3273 = vmul.f32 1.0, %v3272
    %v3274 = vrcp.pop %v3190
    %v3275 = vmul.f32 1.0, %v3274
    %v3276 = vrcp.pop %v3191
    %v3277 = vmul.f32 1.0, %v3276
    %v3278 = vrcp.pop %v3192
    %v3279 = vmul.f32 1.0, %v3278
    %v3280 = vrcp.pop %v3193
    %v3281 = vmul.f32 1.0, %v3280
    %v3282 = vrcp.pop %v3194
    %v3283 = vmul.f32 1.0, %v3282
    %v3284 = vrcp.pop %v3195
    %v3285 = vmul.f32 1.0, %v3284
    %v3286 = vrcp.pop %v3196
    %v3287 = vmul.f32 1.0, %v3286
    %v3288 = vrcp.pop %v3197
    %v3289 = vmul.f32 1.0, %v3288
    %v3290 = vrcp.pop %v3198
    %v3291 = vmul.f32 1.0, %v3290
    %v3292 = vrcp.pop %v3199
    %v3293 = vmul.f32 1.0, %v3292
    %v3294 = vrcp.pop %v3200
    %v3295 = vmul.f32 1.0, %v3294
    %v3296 = vrcp.pop %v3201
    %v3297 = vmul.f32 1.0, %v3296
    %v3298 = vrcp.pop %v3202
    %v3299 = vmul.f32 1.0, %v3298
    %v3300 = vrcp.pop %v3203
    %v3301 = vmul.f32 1.0, %v3300
    %v3302 = vrcp.pop %v3204
    %v3303 = vmul.f32 1.0, %v3302
    %v3304 = vrcp.pop %v3205
    %v3305 = vmul.f32 1.0, %v3304
    %v3306 = vrcp.pop %v3206
    %v3307 = vmul.f32 1.0, %v3306
    %v3308 = vrcp.pop %v3207
    %v3309 = vmul.f32 1.0, %v3308
    %v3310 = vrcp.pop %v3208
    %v3311 = vmul.f32 1.0, %v3310
    %v3312 = vrcp.pop %v3209
    %v3313 = vmul.f32 1.0, %v3312
    %v3314 = vrcp.pop %v3210
    %v3315 = vmul.f32 1.0, %v3314
    %v3316 = vrcp.pop %v3211
    %v3317 = vmul.f32 1.0, %v3316
    %v3318 = vrcp.pop %v3212
    %v3319 = vmul.f32 1.0, %v3318
    %v3320 = vrcp.pop %v3213
    %v3321 = vmul.f32 1.0, %v3320
    %v3322 = vrcp.pop %v3214
    %v3323 = vmul.f32 1.0, %v3322
    %v3324 = vrcp.pop %v3215
    %v3325 = vmul.f32 1.0, %v3324
    %v3326 = vrcp.pop %v3216
    %v3327 = vmul.f32 1.0, %v3326
    %v3328 = vrcp.pop %v3217
    %v3329 = vmul.f32 1.0, %v3328
    %v3330 = vrcp.pop %v3218
    %v3331 = vmul.f32 1.0, %v3330
    %v3332 = vrcp.pop %v3219
    %v3333 = vmul.f32 1.0, %v3332
    %v3334 = vrcp.pop %v3220
    %v3335 = vmul.f32 1.0, %v3334
    %v3336 = vrcp.pop %v3221
    %v3337 = vmul.f32 1.0, %v3336
    %v3338 = vrcp.pop %v3222
    %v3339 = vmul.f32 1.0, %v3338
    %v3340 = vrcp.pop %v3223
    %v3341 = vmul.f32 1.0, %v3340
    %v3342 = vrcp.pop %v3224
    %v3343 = vmul.f32 1.0, %v3342
    %v3344 = vrcp.pop %v3225
    %v3345 = vmul.f32 1.0, %v3344
    %v3346 = vrcp.pop %v3226
    %v3347 = vmul.f32 1.0, %v3346
    %v3348 = vrcp.pop %v3227
    %v3349 = vmul.f32 1.0, %v3348
    %v3350 = vrcp.pop %v3228
    %v3351 = vmul.f32 1.0, %v3350
    %v3352 = vrcp.pop %v3229
    %v3353 = vmul.f32 1.0, %v3352
    %v3354 = vrcp.pop %v3230
    %v3355 = vmul.f32 1.0, %v3354
    %v3356 = vrcp.pop %v3231
    %v3357 = vmul.f32 1.0, %v3356
    %v3358 = vrcp.pop %v3232
    %v3359 = vmul.f32 1.0, %v3358
    %v3360 = vrcp.pop %v3233
    %v3361 = vmul.f32 1.0, %v3360
    %v3427 = vunpack.c.l.s4 269488144
    %v3428 = vunpack.c.0.s8 %v3427
    %v3429 = vlaneseq
    %v3430 = vshrl.u32 %v3429, 7
    %v3431 = vsub.s32 %v3428, %v3430
    %v3432 = vrot.slane %v3235, %v3431
    %v3434 = vunpack.c.l.s4 842150450
    %v3435 = vunpack.c.0.s8 %v3434
    %v3436 = vlaneseq
    %v3437 = vshrl.u32 %v3436, 7
    %v3438 = vsub.s32 %v3435, %v3437
    %v3439 = vrot.slane %v3235, %v3438
    %v3441 = vunpack.c.l.s4 1414812756
    %v3442 = vunpack.c.0.s8 %v3441
    %v3443 = vlaneseq
    %v3444 = vshrl.u32 %v3443, 7
    %v3445 = vsub.s32 %v3442, %v3444
    %v3446 = vrot.slane %v3235, %v3445
    %v3448 = vunpack.c.l.s4 1987475062
    %v3449 = vunpack.c.0.s8 %v3448
    %v3450 = vlaneseq
    %v3451 = vshrl.u32 %v3450, 7
    %v3452 = vsub.s32 %v3449, %v3451
    %v3453 = vrot.slane %v3235, %v3452
    %v3455 = vunpack.c.l.s4 269488144
    %v3456 = vunpack.c.0.s8 %v3455
    %v3457 = vlaneseq
    %v3458 = vshrl.u32 %v3457, 7
    %v3459 = vsub.s32 %v3456, %v3458
    %v3460 = vrot.slane %v3237, %v3459
    %v3462 = vunpack.c.l.s4 842150450
    %v3463 = vunpack.c.0.s8 %v3462
    %v3464 = vlaneseq
    %v3465 = vshrl.u32 %v3464, 7
    %v3466 = vsub.s32 %v3463, %v3465
    %v3467 = vrot.slane %v3237, %v3466
    %v3469 = vunpack.c.l.s4 1414812756
    %v3470 = vunpack.c.0.s8 %v3469
    %v3471 = vlaneseq
    %v3472 = vshrl.u32 %v3471, 7
    %v3473 = vsub.s32 %v3470, %v3472
    %v3474 = vrot.slane %v3237, %v3473
    %v3476 = vunpack.c.l.s4 1987475062
    %v3477 = vunpack.c.0.s8 %v3476
    %v3478 = vlaneseq
    %v3479 = vshrl.u32 %v3478, 7
    %v3480 = vsub.s32 %v3477, %v3479
    %v3481 = vrot.slane %v3237, %v3480
    %v3483 = vunpack.c.l.s4 269488144
    %v3484 = vunpack.c.0.s8 %v3483
    %v3485 = vlaneseq
    %v3486 = vshrl.u32 %v3485, 7
    %v3487 = vsub.s32 %v3484, %v3486
    %v3488 = vrot.slane %v3239, %v3487
    %v3490 = vunpack.c.l.s4 842150450
    %v3491 = vunpack.c.0.s8 %v3490
    %v3492 = vlaneseq
    %v3493 = vshrl.u32 %v3492, 7
    %v3494 = vsub.s32 %v3491, %v3493
    %v3495 = vrot.slane %v3239, %v3494
    %v3497 = vunpack.c.l.s4 1414812756
    %v3498 = vunpack.c.0.s8 %v3497
    %v3499 = vlaneseq
    %v3500 = vshrl.u32 %v3499, 7
    %v3501 = vsub.s32 %v3498, %v3500
    %v3502 = vrot.slane %v3239, %v3501
    %v3504 = vunpack.c.l.s4 1987475062
    %v3505 = vunpack.c.0.s8 %v3504
    %v3506 = vlaneseq
    %v3507 = vshrl.u32 %v3506, 7
    %v3508 = vsub.s32 %v3505, %v3507
    %v3509 = vrot.slane %v3239, %v3508
    %v3511 = vunpack.c.l.s4 269488144
    %v3512 = vunpack.c.0.s8 %v3511
    %v3513 = vlaneseq
    %v3514 = vshrl.u32 %v3513, 7
    %v3515 = vsub.s32 %v3512, %v3514
    %v3516 = vrot.slane %v3241, %v3515
    %v3518 = vunpack.c.l.s4 842150450
    %v3519 = vunpack.c.0.s8 %v3518
    %v3520 = vlaneseq
    %v3521 = vshrl.u32 %v3520, 7
    %v3522 = vsub.s32 %v3519, %v3521
    %v3523 = vrot.slane %v3241, %v3522
    %v3525 = vunpack.c.l.s4 1414812756
    %v3526 = vunpack.c.0.s8 %v3525
    %v3527 = vlaneseq
    %v3528 = vshrl.u32 %v3527, 7
    %v3529 = vsub.s32 %v3526, %v3528
    %v3530 = vrot.slane %v3241, %v3529
    %v3532 = vunpack.c.l.s4 1987475062
    %v3533 = vunpack.c.0.s8 %v3532
    %v3534 = vlaneseq
    %v3535 = vshrl.u32 %v3534, 7
    %v3536 = vsub.s32 %v3533, %v3535
    %v3537 = vrot.slane %v3241, %v3536
    %v3539 = vunpack.c.l.s4 269488144
    %v3540 = vunpack.c.0.s8 %v3539
    %v3541 = vlaneseq
    %v3542 = vshrl.u32 %v3541, 7
    %v3543 = vsub.s32 %v3540, %v3542
    %v3544 = vrot.slane %v3243, %v3543
    %v3546 = vunpack.c.l.s4 842150450
    %v3547 = vunpack.c.0.s8 %v3546
    %v3548 = vlaneseq
    %v3549 = vshrl.u32 %v3548, 7
    %v3550 = vsub.s32 %v3547, %v3549
    %v3551 = vrot.slane %v3243, %v3550
    %v3553 = vunpack.c.l.s4 1414812756
    %v3554 = vunpack.c.0.s8 %v3553
    %v3555 = vlaneseq
    %v3556 = vshrl.u32 %v3555, 7
    %v3557 = vsub.s32 %v3554, %v3556
    %v3558 = vrot.slane %v3243, %v3557
    %v3560 = vunpack.c.l.s4 1987475062
    %v3561 = vunpack.c.0.s8 %v3560
    %v3562 = vlaneseq
    %v3563 = vshrl.u32 %v3562, 7
    %v3564 = vsub.s32 %v3561, %v3563
    %v3565 = vrot.slane %v3243, %v3564
    %v3567 = vunpack.c.l.s4 269488144
    %v3568 = vunpack.c.0.s8 %v3567
    %v3569 = vlaneseq
    %v3570 = vshrl.u32 %v3569, 7
    %v3571 = vsub.s32 %v3568, %v3570
    %v3572 = vrot.slane %v3245, %v3571
    %v3574 = vunpack.c.l.s4 842150450
    %v3575 = vunpack.c.0.s8 %v3574
    %v3576 = vlaneseq
    %v3577 = vshrl.u32 %v3576, 7
    %v3578 = vsub.s32 %v3575, %v3577
    %v3579 = vrot.slane %v3245, %v3578
    %v3581 = vunpack.c.l.s4 1414812756
    %v3582 = vunpack.c.0.s8 %v3581
    %v3583 = vlaneseq
    %v3584 = vshrl.u32 %v3583, 7
    %v3585 = vsub.s32 %v3582, %v3584
    %v3586 = vrot.slane %v3245, %v3585
    %v3588 = vunpack.c.l.s4 1987475062
    %v3589 = vunpack.c.0.s8 %v3588
    %v3590 = vlaneseq
    %v3591 = vshrl.u32 %v3590, 7
    %v3592 = vsub.s32 %v3589, %v3591
    %v3593 = vrot.slane %v3245, %v3592
    %v3595 = vunpack.c.l.s4 269488144
    %v3596 = vunpack.c.0.s8 %v3595
    %v3597 = vlaneseq
    %v3598 = vshrl.u32 %v3597, 7
    %v3599 = vsub.s32 %v3596, %v3598
    %v3600 = vrot.slane %v3247, %v3599
    %v3602 = vunpack.c.l.s4 842150450
    %v3603 = vunpack.c.0.s8 %v3602
    %v3604 = vlaneseq
    %v3605 = vshrl.u32 %v3604, 7
    %v3606 = vsub.s32 %v3603, %v3605
    %v3607 = vrot.slane %v3247, %v3606
    %v3609 = vunpack.c.l.s4 1414812756
    %v3610 = vunpack.c.0.s8 %v3609
    %v3611 = vlaneseq
    %v3612 = vshrl.u32 %v3611, 7
    %v3613 = vsub.s32 %v3610, %v3612
    %v3614 = vrot.slane %v3247, %v3613
    %v3616 = vunpack.c.l.s4 1987475062
    %v3617 = vunpack.c.0.s8 %v3616
    %v3618 = vlaneseq
    %v3619 = vshrl.u32 %v3618, 7
    %v3620 = vsub.s32 %v3617, %v3619
    %v3621 = vrot.slane %v3247, %v3620
    %v3623 = vunpack.c.l.s4 269488144
    %v3624 = vunpack.c.0.s8 %v3623
    %v3625 = vlaneseq
    %v3626 = vshrl.u32 %v3625, 7
    %v3627 = vsub.s32 %v3624, %v3626
    %v3628 = vrot.slane %v3249, %v3627
    %v3630 = vunpack.c.l.s4 842150450
    %v3631 = vunpack.c.0.s8 %v3630
    %v3632 = vlaneseq
    %v3633 = vshrl.u32 %v3632, 7
    %v3634 = vsub.s32 %v3631, %v3633
    %v3635 = vrot.slane %v3249, %v3634
    %v3637 = vunpack.c.l.s4 1414812756
    %v3638 = vunpack.c.0.s8 %v3637
    %v3639 = vlaneseq
    %v3640 = vshrl.u32 %v3639, 7
    %v3641 = vsub.s32 %v3638, %v3640
    %v3642 = vrot.slane %v3249, %v3641
    %v3644 = vunpack.c.l.s4 1987475062
    %v3645 = vunpack.c.0.s8 %v3644
    %v3646 = vlaneseq
    %v3647 = vshrl.u32 %v3646, 7
    %v3648 = vsub.s32 %v3645, %v3647
    %v3649 = vrot.slane %v3249, %v3648
    %v3651 = vunpack.c.l.s4 269488144
    %v3652 = vunpack.c.0.s8 %v3651
    %v3653 = vlaneseq
    %v3654 = vshrl.u32 %v3653, 7
    %v3655 = vsub.s32 %v3652, %v3654
    %v3656 = vrot.slane %v3251, %v3655
    %v3658 = vunpack.c.l.s4 842150450
    %v3659 = vunpack.c.0.s8 %v3658
    %v3660 = vlaneseq
    %v3661 = vshrl.u32 %v3660, 7
    %v3662 = vsub.s32 %v3659, %v3661
    %v3663 = vrot.slane %v3251, %v3662
    %v3665 = vunpack.c.l.s4 1414812756
    %v3666 = vunpack.c.0.s8 %v3665
    %v3667 = vlaneseq
    %v3668 = vshrl.u32 %v3667, 7
    %v3669 = vsub.s32 %v3666, %v3668
    %v3670 = vrot.slane %v3251, %v3669
    %v3672 = vunpack.c.l.s4 1987475062
    %v3673 = vunpack.c.0.s8 %v3672
    %v3674 = vlaneseq
    %v3675 = vshrl.u32 %v3674, 7
    %v3676 = vsub.s32 %v3673, %v3675
    %v3677 = vrot.slane %v3251, %v3676
    %v3679 = vunpack.c.l.s4 269488144
    %v3680 = vunpack.c.0.s8 %v3679
    %v3681 = vlaneseq
    %v3682 = vshrl.u32 %v3681, 7
    %v3683 = vsub.s32 %v3680, %v3682
    %v3684 = vrot.slane %v3253, %v3683
    %v3686 = vunpack.c.l.s4 842150450
    %v3687 = vunpack.c.0.s8 %v3686
    %v3688 = vlaneseq
    %v3689 = vshrl.u32 %v3688, 7
    %v3690 = vsub.s32 %v3687, %v3689
    %v3691 = vrot.slane %v3253, %v3690
    %v3693 = vunpack.c.l.s4 1414812756
    %v3694 = vunpack.c.0.s8 %v3693
    %v3695 = vlaneseq
    %v3696 = vshrl.u32 %v3695, 7
    %v3697 = vsub.s32 %v3694, %v3696
    %v3698 = vrot.slane %v3253, %v3697
    %v3700 = vunpack.c.l.s4 1987475062
    %v3701 = vunpack.c.0.s8 %v3700
    %v3702 = vlaneseq
    %v3703 = vshrl.u32 %v3702, 7
    %v3704 = vsub.s32 %v3701, %v3703
    %v3705 = vrot.slane %v3253, %v3704
    %v3707 = vunpack.c.l.s4 269488144
    %v3708 = vunpack.c.0.s8 %v3707
    %v3709 = vlaneseq
    %v3710 = vshrl.u32 %v3709, 7
    %v3711 = vsub.s32 %v3708, %v3710
    %v3712 = vrot.slane %v3255, %v3711
    %v3714 = vunpack.c.l.s4 842150450
    %v3715 = vunpack.c.0.s8 %v3714
    %v3716 = vlaneseq
    %v3717 = vshrl.u32 %v3716, 7
    %v3718 = vsub.s32 %v3715, %v3717
    %v3719 = vrot.slane %v3255, %v3718
    %v3721 = vunpack.c.l.s4 1414812756
    %v3722 = vunpack.c.0.s8 %v3721
    %v3723 = vlaneseq
    %v3724 = vshrl.u32 %v3723, 7
    %v3725 = vsub.s32 %v3722, %v3724
    %v3726 = vrot.slane %v3255, %v3725
    %v3728 = vunpack.c.l.s4 1987475062
    %v3729 = vunpack.c.0.s8 %v3728
    %v3730 = vlaneseq
    %v3731 = vshrl.u32 %v3730, 7
    %v3732 = vsub.s32 %v3729, %v3731
    %v3733 = vrot.slane %v3255, %v3732
    %v3735 = vunpack.c.l.s4 269488144
    %v3736 = vunpack.c.0.s8 %v3735
    %v3737 = vlaneseq
    %v3738 = vshrl.u32 %v3737, 7
    %v3739 = vsub.s32 %v3736, %v3738
    %v3740 = vrot.slane %v3257, %v3739
    %v3742 = vunpack.c.l.s4 842150450
    %v3743 = vunpack.c.0.s8 %v3742
    %v3744 = vlaneseq
    %v3745 = vshrl.u32 %v3744, 7
    %v3746 = vsub.s32 %v3743, %v3745
    %v3747 = vrot.slane %v3257, %v3746
    %v3749 = vunpack.c.l.s4 1414812756
    %v3750 = vunpack.c.0.s8 %v3749
    %v3751 = vlaneseq
    %v3752 = vshrl.u32 %v3751, 7
    %v3753 = vsub.s32 %v3750, %v3752
    %v3754 = vrot.slane %v3257, %v3753
    %v3756 = vunpack.c.l.s4 1987475062
    %v3757 = vunpack.c.0.s8 %v3756
    %v3758 = vlaneseq
    %v3759 = vshrl.u32 %v3758, 7
    %v3760 = vsub.s32 %v3757, %v3759
    %v3761 = vrot.slane %v3257, %v3760
    %v3763 = vunpack.c.l.s4 269488144
    %v3764 = vunpack.c.0.s8 %v3763
    %v3765 = vlaneseq
    %v3766 = vshrl.u32 %v3765, 7
    %v3767 = vsub.s32 %v3764, %v3766
    %v3768 = vrot.slane %v3259, %v3767
    %v3770 = vunpack.c.l.s4 842150450
    %v3771 = vunpack.c.0.s8 %v3770
    %v3772 = vlaneseq
    %v3773 = vshrl.u32 %v3772, 7
    %v3774 = vsub.s32 %v3771, %v3773
    %v3775 = vrot.slane %v3259, %v3774
    %v3777 = vunpack.c.l.s4 1414812756
    %v3778 = vunpack.c.0.s8 %v3777
    %v3779 = vlaneseq
    %v3780 = vshrl.u32 %v3779, 7
    %v3781 = vsub.s32 %v3778, %v3780
    %v3782 = vrot.slane %v3259, %v3781
    %v3784 = vunpack.c.l.s4 1987475062
    %v3785 = vunpack.c.0.s8 %v3784
    %v3786 = vlaneseq
    %v3787 = vshrl.u32 %v3786, 7
    %v3788 = vsub.s32 %v3785, %v3787
    %v3789 = vrot.slane %v3259, %v3788
    %v3791 = vunpack.c.l.s4 269488144
    %v3792 = vunpack.c.0.s8 %v3791
    %v3793 = vlaneseq
    %v3794 = vshrl.u32 %v3793, 7
    %v3795 = vsub.s32 %v3792, %v3794
    %v3796 = vrot.slane %v3261, %v3795
    %v3798 = vunpack.c.l.s4 842150450
    %v3799 = vunpack.c.0.s8 %v3798
    %v3800 = vlaneseq
    %v3801 = vshrl.u32 %v3800, 7
    %v3802 = vsub.s32 %v3799, %v3801
    %v3803 = vrot.slane %v3261, %v3802
    %v3805 = vunpack.c.l.s4 1414812756
    %v3806 = vunpack.c.0.s8 %v3805
    %v3807 = vlaneseq
    %v3808 = vshrl.u32 %v3807, 7
    %v3809 = vsub.s32 %v3806, %v3808
    %v3810 = vrot.slane %v3261, %v3809
    %v3812 = vunpack.c.l.s4 1987475062
    %v3813 = vunpack.c.0.s8 %v3812
    %v3814 = vlaneseq
    %v3815 = vshrl.u32 %v3814, 7
    %v3816 = vsub.s32 %v3813, %v3815
    %v3817 = vrot.slane %v3261, %v3816
    %v3819 = vunpack.c.l.s4 269488144
    %v3820 = vunpack.c.0.s8 %v3819
    %v3821 = vlaneseq
    %v3822 = vshrl.u32 %v3821, 7
    %v3823 = vsub.s32 %v3820, %v3822
    %v3824 = vrot.slane %v3263, %v3823
    %v3826 = vunpack.c.l.s4 842150450
    %v3827 = vunpack.c.0.s8 %v3826
    %v3828 = vlaneseq
    %v3829 = vshrl.u32 %v3828, 7
    %v3830 = vsub.s32 %v3827, %v3829
    %v3831 = vrot.slane %v3263, %v3830
    %v3833 = vunpack.c.l.s4 1414812756
    %v3834 = vunpack.c.0.s8 %v3833
    %v3835 = vlaneseq
    %v3836 = vshrl.u32 %v3835, 7
    %v3837 = vsub.s32 %v3834, %v3836
    %v3838 = vrot.slane %v3263, %v3837
    %v3840 = vunpack.c.l.s4 1987475062
    %v3841 = vunpack.c.0.s8 %v3840
    %v3842 = vlaneseq
    %v3843 = vshrl.u32 %v3842, 7
    %v3844 = vsub.s32 %v3841, %v3843
    %v3845 = vrot.slane %v3263, %v3844
    %v3847 = vunpack.c.l.s4 269488144
    %v3848 = vunpack.c.0.s8 %v3847
    %v3849 = vlaneseq
    %v3850 = vshrl.u32 %v3849, 7
    %v3851 = vsub.s32 %v3848, %v3850
    %v3852 = vrot.slane %v3265, %v3851
    %v3854 = vunpack.c.l.s4 842150450
    %v3855 = vunpack.c.0.s8 %v3854
    %v3856 = vlaneseq
    %v3857 = vshrl.u32 %v3856, 7
    %v3858 = vsub.s32 %v3855, %v3857
    %v3859 = vrot.slane %v3265, %v3858
    %v3861 = vunpack.c.l.s4 1414812756
    %v3862 = vunpack.c.0.s8 %v3861
    %v3863 = vlaneseq
    %v3864 = vshrl.u32 %v3863, 7
    %v3865 = vsub.s32 %v3862, %v3864
    %v3866 = vrot.slane %v3265, %v3865
    %v3868 = vunpack.c.l.s4 1987475062
    %v3869 = vunpack.c.0.s8 %v3868
    %v3870 = vlaneseq
    %v3871 = vshrl.u32 %v3870, 7
    %v3872 = vsub.s32 %v3869, %v3871
    %v3873 = vrot.slane %v3265, %v3872
    %v3875 = vunpack.c.l.s4 269488144
    %v3876 = vunpack.c.0.s8 %v3875
    %v3877 = vlaneseq
    %v3878 = vshrl.u32 %v3877, 7
    %v3879 = vsub.s32 %v3876, %v3878
    %v3880 = vrot.slane %v3267, %v3879
    %v3882 = vunpack.c.l.s4 842150450
    %v3883 = vunpack.c.0.s8 %v3882
    %v3884 = vlaneseq
    %v3885 = vshrl.u32 %v3884, 7
    %v3886 = vsub.s32 %v3883, %v3885
    %v3887 = vrot.slane %v3267, %v3886
    %v3889 = vunpack.c.l.s4 1414812756
    %v3890 = vunpack.c.0.s8 %v3889
    %v3891 = vlaneseq
    %v3892 = vshrl.u32 %v3891, 7
    %v3893 = vsub.s32 %v3890, %v3892
    %v3894 = vrot.slane %v3267, %v3893
    %v3896 = vunpack.c.l.s4 1987475062
    %v3897 = vunpack.c.0.s8 %v3896
    %v3898 = vlaneseq
    %v3899 = vshrl.u32 %v3898, 7
    %v3900 = vsub.s32 %v3897, %v3899
    %v3901 = vrot.slane %v3267, %v3900
    %v3903 = vunpack.c.l.s4 269488144
    %v3904 = vunpack.c.0.s8 %v3903
    %v3905 = vlaneseq
    %v3906 = vshrl.u32 %v3905, 7
    %v3907 = vsub.s32 %v3904, %v3906
    %v3908 = vrot.slane %v3269, %v3907
    %v3910 = vunpack.c.l.s4 842150450
    %v3911 = vunpack.c.0.s8 %v3910
    %v3912 = vlaneseq
    %v3913 = vshrl.u32 %v3912, 7
    %v3914 = vsub.s32 %v3911, %v3913
    %v3915 = vrot.slane %v3269, %v3914
    %v3917 = vunpack.c.l.s4 1414812756
    %v3918 = vunpack.c.0.s8 %v3917
    %v3919 = vlaneseq
    %v3920 = vshrl.u32 %v3919, 7
    %v3921 = vsub.s32 %v3918, %v3920
    %v3922 = vrot.slane %v3269, %v3921
    %v3924 = vunpack.c.l.s4 1987475062
    %v3925 = vunpack.c.0.s8 %v3924
    %v3926 = vlaneseq
    %v3927 = vshrl.u32 %v3926, 7
    %v3928 = vsub.s32 %v3925, %v3927
    %v3929 = vrot.slane %v3269, %v3928
    %v3931 = vunpack.c.l.s4 269488144
    %v3932 = vunpack.c.0.s8 %v3931
    %v3933 = vlaneseq
    %v3934 = vshrl.u32 %v3933, 7
    %v3935 = vsub.s32 %v3932, %v3934
    %v3936 = vrot.slane %v3271, %v3935
    %v3938 = vunpack.c.l.s4 842150450
    %v3939 = vunpack.c.0.s8 %v3938
    %v3940 = vlaneseq
    %v3941 = vshrl.u32 %v3940, 7
    %v3942 = vsub.s32 %v3939, %v3941
    %v3943 = vrot.slane %v3271, %v3942
    %v3945 = vunpack.c.l.s4 1414812756
    %v3946 = vunpack.c.0.s8 %v3945
    %v3947 = vlaneseq
    %v3948 = vshrl.u32 %v3947, 7
    %v3949 = vsub.s32 %v3946, %v3948
    %v3950 = vrot.slane %v3271, %v3949
    %v3952 = vunpack.c.l.s4 1987475062
    %v3953 = vunpack.c.0.s8 %v3952
    %v3954 = vlaneseq
    %v3955 = vshrl.u32 %v3954, 7
    %v3956 = vsub.s32 %v3953, %v3955
    %v3957 = vrot.slane %v3271, %v3956
    %v3959 = vunpack.c.l.s4 269488144
    %v3960 = vunpack.c.0.s8 %v3959
    %v3961 = vlaneseq
    %v3962 = vshrl.u32 %v3961, 7
    %v3963 = vsub.s32 %v3960, %v3962
    %v3964 = vrot.slane %v3273, %v3963
    %v3966 = vunpack.c.l.s4 842150450
    %v3967 = vunpack.c.0.s8 %v3966
    %v3968 = vlaneseq
    %v3969 = vshrl.u32 %v3968, 7
    %v3970 = vsub.s32 %v3967, %v3969
    %v3971 = vrot.slane %v3273, %v3970
    %v3973 = vunpack.c.l.s4 1414812756
    %v3974 = vunpack.c.0.s8 %v3973
    %v3975 = vlaneseq
    %v3976 = vshrl.u32 %v3975, 7
    %v3977 = vsub.s32 %v3974, %v3976
    %v3978 = vrot.slane %v3273, %v3977
    %v3980 = vunpack.c.l.s4 1987475062
    %v3981 = vunpack.c.0.s8 %v3980
    %v3982 = vlaneseq
    %v3983 = vshrl.u32 %v3982, 7
    %v3984 = vsub.s32 %v3981, %v3983
    %v3985 = vrot.slane %v3273, %v3984
    %v3987 = vunpack.c.l.s4 269488144
    %v3988 = vunpack.c.0.s8 %v3987
    %v3989 = vlaneseq
    %v3990 = vshrl.u32 %v3989, 7
    %v3991 = vsub.s32 %v3988, %v3990
    %v3992 = vrot.slane %v3275, %v3991
    %v3994 = vunpack.c.l.s4 842150450
    %v3995 = vunpack.c.0.s8 %v3994
    %v3996 = vlaneseq
    %v3997 = vshrl.u32 %v3996, 7
    %v3998 = vsub.s32 %v3995, %v3997
    %v3999 = vrot.slane %v3275, %v3998
    %v4001 = vunpack.c.l.s4 1414812756
    %v4002 = vunpack.c.0.s8 %v4001
    %v4003 = vlaneseq
    %v4004 = vshrl.u32 %v4003, 7
    %v4005 = vsub.s32 %v4002, %v4004
    %v4006 = vrot.slane %v3275, %v4005
    %v4008 = vunpack.c.l.s4 1987475062
    %v4009 = vunpack.c.0.s8 %v4008
    %v4010 = vlaneseq
    %v4011 = vshrl.u32 %v4010, 7
    %v4012 = vsub.s32 %v4009, %v4011
    %v4013 = vrot.slane %v3275, %v4012
    %v4015 = vunpack.c.l.s4 269488144
    %v4016 = vunpack.c.0.s8 %v4015
    %v4017 = vlaneseq
    %v4018 = vshrl.u32 %v4017, 7
    %v4019 = vsub.s32 %v4016, %v4018
    %v4020 = vrot.slane %v3277, %v4019
    %v4022 = vunpack.c.l.s4 842150450
    %v4023 = vunpack.c.0.s8 %v4022
    %v4024 = vlaneseq
    %v4025 = vshrl.u32 %v4024, 7
    %v4026 = vsub.s32 %v4023, %v4025
    %v4027 = vrot.slane %v3277, %v4026
    %v4029 = vunpack.c.l.s4 1414812756
    %v4030 = vunpack.c.0.s8 %v4029
    %v4031 = vlaneseq
    %v4032 = vshrl.u32 %v4031, 7
    %v4033 = vsub.s32 %v4030, %v4032
    %v4034 = vrot.slane %v3277, %v4033
    %v4036 = vunpack.c.l.s4 1987475062
    %v4037 = vunpack.c.0.s8 %v4036
    %v4038 = vlaneseq
    %v4039 = vshrl.u32 %v4038, 7
    %v4040 = vsub.s32 %v4037, %v4039
    %v4041 = vrot.slane %v3277, %v4040
    %v4043 = vunpack.c.l.s4 269488144
    %v4044 = vunpack.c.0.s8 %v4043
    %v4045 = vlaneseq
    %v4046 = vshrl.u32 %v4045, 7
    %v4047 = vsub.s32 %v4044, %v4046
    %v4048 = vrot.slane %v3279, %v4047
    %v4050 = vunpack.c.l.s4 842150450
    %v4051 = vunpack.c.0.s8 %v4050
    %v4052 = vlaneseq
    %v4053 = vshrl.u32 %v4052, 7
    %v4054 = vsub.s32 %v4051, %v4053
    %v4055 = vrot.slane %v3279, %v4054
    %v4057 = vunpack.c.l.s4 1414812756
    %v4058 = vunpack.c.0.s8 %v4057
    %v4059 = vlaneseq
    %v4060 = vshrl.u32 %v4059, 7
    %v4061 = vsub.s32 %v4058, %v4060
    %v4062 = vrot.slane %v3279, %v4061
    %v4064 = vunpack.c.l.s4 1987475062
    %v4065 = vunpack.c.0.s8 %v4064
    %v4066 = vlaneseq
    %v4067 = vshrl.u32 %v4066, 7
    %v4068 = vsub.s32 %v4065, %v4067
    %v4069 = vrot.slane %v3279, %v4068
    %v4071 = vunpack.c.l.s4 269488144
    %v4072 = vunpack.c.0.s8 %v4071
    %v4073 = vlaneseq
    %v4074 = vshrl.u32 %v4073, 7
    %v4075 = vsub.s32 %v4072, %v4074
    %v4076 = vrot.slane %v3281, %v4075
    %v4078 = vunpack.c.l.s4 842150450
    %v4079 = vunpack.c.0.s8 %v4078
    %v4080 = vlaneseq
    %v4081 = vshrl.u32 %v4080, 7
    %v4082 = vsub.s32 %v4079, %v4081
    %v4083 = vrot.slane %v3281, %v4082
    %v4085 = vunpack.c.l.s4 1414812756
    %v4086 = vunpack.c.0.s8 %v4085
    %v4087 = vlaneseq
    %v4088 = vshrl.u32 %v4087, 7
    %v4089 = vsub.s32 %v4086, %v4088
    %v4090 = vrot.slane %v3281, %v4089
    %v4092 = vunpack.c.l.s4 1987475062
    %v4093 = vunpack.c.0.s8 %v4092
    %v4094 = vlaneseq
    %v4095 = vshrl.u32 %v4094, 7
    %v4096 = vsub.s32 %v4093, %v4095
    %v4097 = vrot.slane %v3281, %v4096
    %v4099 = vunpack.c.l.s4 269488144
    %v4100 = vunpack.c.0.s8 %v4099
    %v4101 = vlaneseq
    %v4102 = vshrl.u32 %v4101, 7
    %v4103 = vsub.s32 %v4100, %v4102
    %v4104 = vrot.slane %v3283, %v4103
    %v4106 = vunpack.c.l.s4 842150450
    %v4107 = vunpack.c.0.s8 %v4106
    %v4108 = vlaneseq
    %v4109 = vshrl.u32 %v4108, 7
    %v4110 = vsub.s32 %v4107, %v4109
    %v4111 = vrot.slane %v3283, %v4110
    %v4113 = vunpack.c.l.s4 1414812756
    %v4114 = vunpack.c.0.s8 %v4113
    %v4115 = vlaneseq
    %v4116 = vshrl.u32 %v4115, 7
    %v4117 = vsub.s32 %v4114, %v4116
    %v4118 = vrot.slane %v3283, %v4117
    %v4120 = vunpack.c.l.s4 1987475062
    %v4121 = vunpack.c.0.s8 %v4120
    %v4122 = vlaneseq
    %v4123 = vshrl.u32 %v4122, 7
    %v4124 = vsub.s32 %v4121, %v4123
    %v4125 = vrot.slane %v3283, %v4124
    %v4127 = vunpack.c.l.s4 269488144
    %v4128 = vunpack.c.0.s8 %v4127
    %v4129 = vlaneseq
    %v4130 = vshrl.u32 %v4129, 7
    %v4131 = vsub.s32 %v4128, %v4130
    %v4132 = vrot.slane %v3285, %v4131
    %v4134 = vunpack.c.l.s4 842150450
    %v4135 = vunpack.c.0.s8 %v4134
    %v4136 = vlaneseq
    %v4137 = vshrl.u32 %v4136, 7
    %v4138 = vsub.s32 %v4135, %v4137
    %v4139 = vrot.slane %v3285, %v4138
    %v4141 = vunpack.c.l.s4 1414812756
    %v4142 = vunpack.c.0.s8 %v4141
    %v4143 = vlaneseq
    %v4144 = vshrl.u32 %v4143, 7
    %v4145 = vsub.s32 %v4142, %v4144
    %v4146 = vrot.slane %v3285, %v4145
    %v4148 = vunpack.c.l.s4 1987475062
    %v4149 = vunpack.c.0.s8 %v4148
    %v4150 = vlaneseq
    %v4151 = vshrl.u32 %v4150, 7
    %v4152 = vsub.s32 %v4149, %v4151
    %v4153 = vrot.slane %v3285, %v4152
    %v4155 = vunpack.c.l.s4 269488144
    %v4156 = vunpack.c.0.s8 %v4155
    %v4157 = vlaneseq
    %v4158 = vshrl.u32 %v4157, 7
    %v4159 = vsub.s32 %v4156, %v4158
    %v4160 = vrot.slane %v3287, %v4159
    %v4162 = vunpack.c.l.s4 842150450
    %v4163 = vunpack.c.0.s8 %v4162
    %v4164 = vlaneseq
    %v4165 = vshrl.u32 %v4164, 7
    %v4166 = vsub.s32 %v4163, %v4165
    %v4167 = vrot.slane %v3287, %v4166
    %v4169 = vunpack.c.l.s4 1414812756
    %v4170 = vunpack.c.0.s8 %v4169
    %v4171 = vlaneseq
    %v4172 = vshrl.u32 %v4171, 7
    %v4173 = vsub.s32 %v4170, %v4172
    %v4174 = vrot.slane %v3287, %v4173
    %v4176 = vunpack.c.l.s4 1987475062
    %v4177 = vunpack.c.0.s8 %v4176
    %v4178 = vlaneseq
    %v4179 = vshrl.u32 %v4178, 7
    %v4180 = vsub.s32 %v4177, %v4179
    %v4181 = vrot.slane %v3287, %v4180
    %v4183 = vunpack.c.l.s4 269488144
    %v4184 = vunpack.c.0.s8 %v4183
    %v4185 = vlaneseq
    %v4186 = vshrl.u32 %v4185, 7
    %v4187 = vsub.s32 %v4184, %v4186
    %v4188 = vrot.slane %v3289, %v4187
    %v4190 = vunpack.c.l.s4 842150450
    %v4191 = vunpack.c.0.s8 %v4190
    %v4192 = vlaneseq
    %v4193 = vshrl.u32 %v4192, 7
    %v4194 = vsub.s32 %v4191, %v4193
    %v4195 = vrot.slane %v3289, %v4194
    %v4197 = vunpack.c.l.s4 1414812756
    %v4198 = vunpack.c.0.s8 %v4197
    %v4199 = vlaneseq
    %v4200 = vshrl.u32 %v4199, 7
    %v4201 = vsub.s32 %v4198, %v4200
    %v4202 = vrot.slane %v3289, %v4201
    %v4204 = vunpack.c.l.s4 1987475062
    %v4205 = vunpack.c.0.s8 %v4204
    %v4206 = vlaneseq
    %v4207 = vshrl.u32 %v4206, 7
    %v4208 = vsub.s32 %v4205, %v4207
    %v4209 = vrot.slane %v3289, %v4208
    %v4211 = vunpack.c.l.s4 269488144
    %v4212 = vunpack.c.0.s8 %v4211
    %v4213 = vlaneseq
    %v4214 = vshrl.u32 %v4213, 7
    %v4215 = vsub.s32 %v4212, %v4214
    %v4216 = vrot.slane %v3291, %v4215
    %v4218 = vunpack.c.l.s4 842150450
    %v4219 = vunpack.c.0.s8 %v4218
    %v4220 = vlaneseq
    %v4221 = vshrl.u32 %v4220, 7
    %v4222 = vsub.s32 %v4219, %v4221
    %v4223 = vrot.slane %v3291, %v4222
    %v4225 = vunpack.c.l.s4 1414812756
    %v4226 = vunpack.c.0.s8 %v4225
    %v4227 = vlaneseq
    %v4228 = vshrl.u32 %v4227, 7
    %v4229 = vsub.s32 %v4226, %v4228
    %v4230 = vrot.slane %v3291, %v4229
    %v4232 = vunpack.c.l.s4 1987475062
    %v4233 = vunpack.c.0.s8 %v4232
    %v4234 = vlaneseq
    %v4235 = vshrl.u32 %v4234, 7
    %v4236 = vsub.s32 %v4233, %v4235
    %v4237 = vrot.slane %v3291, %v4236
    %v4239 = vunpack.c.l.s4 269488144
    %v4240 = vunpack.c.0.s8 %v4239
    %v4241 = vlaneseq
    %v4242 = vshrl.u32 %v4241, 7
    %v4243 = vsub.s32 %v4240, %v4242
    %v4244 = vrot.slane %v3293, %v4243
    %v4246 = vunpack.c.l.s4 842150450
    %v4247 = vunpack.c.0.s8 %v4246
    %v4248 = vlaneseq
    %v4249 = vshrl.u32 %v4248, 7
    %v4250 = vsub.s32 %v4247, %v4249
    %v4251 = vrot.slane %v3293, %v4250
    %v4253 = vunpack.c.l.s4 1414812756
    %v4254 = vunpack.c.0.s8 %v4253
    %v4255 = vlaneseq
    %v4256 = vshrl.u32 %v4255, 7
    %v4257 = vsub.s32 %v4254, %v4256
    %v4258 = vrot.slane %v3293, %v4257
    %v4260 = vunpack.c.l.s4 1987475062
    %v4261 = vunpack.c.0.s8 %v4260
    %v4262 = vlaneseq
    %v4263 = vshrl.u32 %v4262, 7
    %v4264 = vsub.s32 %v4261, %v4263
    %v4265 = vrot.slane %v3293, %v4264
    %v4267 = vunpack.c.l.s4 269488144
    %v4268 = vunpack.c.0.s8 %v4267
    %v4269 = vlaneseq
    %v4270 = vshrl.u32 %v4269, 7
    %v4271 = vsub.s32 %v4268, %v4270
    %v4272 = vrot.slane %v3295, %v4271
    %v4274 = vunpack.c.l.s4 842150450
    %v4275 = vunpack.c.0.s8 %v4274
    %v4276 = vlaneseq
    %v4277 = vshrl.u32 %v4276, 7
    %v4278 = vsub.s32 %v4275, %v4277
    %v4279 = vrot.slane %v3295, %v4278
    %v4281 = vunpack.c.l.s4 1414812756
    %v4282 = vunpack.c.0.s8 %v4281
    %v4283 = vlaneseq
    %v4284 = vshrl.u32 %v4283, 7
    %v4285 = vsub.s32 %v4282, %v4284
    %v4286 = vrot.slane %v3295, %v4285
    %v4288 = vunpack.c.l.s4 1987475062
    %v4289 = vunpack.c.0.s8 %v4288
    %v4290 = vlaneseq
    %v4291 = vshrl.u32 %v4290, 7
    %v4292 = vsub.s32 %v4289, %v4291
    %v4293 = vrot.slane %v3295, %v4292
    %v4295 = vunpack.c.l.s4 269488144
    %v4296 = vunpack.c.0.s8 %v4295
    %v4297 = vlaneseq
    %v4298 = vshrl.u32 %v4297, 7
    %v4299 = vsub.s32 %v4296, %v4298
    %v4300 = vrot.slane %v3297, %v4299
    %v4302 = vunpack.c.l.s4 842150450
    %v4303 = vunpack.c.0.s8 %v4302
    %v4304 = vlaneseq
    %v4305 = vshrl.u32 %v4304, 7
    %v4306 = vsub.s32 %v4303, %v4305
    %v4307 = vrot.slane %v3297, %v4306
    %v4309 = vunpack.c.l.s4 1414812756
    %v4310 = vunpack.c.0.s8 %v4309
    %v4311 = vlaneseq
    %v4312 = vshrl.u32 %v4311, 7
    %v4313 = vsub.s32 %v4310, %v4312
    %v4314 = vrot.slane %v3297, %v4313
    %v4316 = vunpack.c.l.s4 1987475062
    %v4317 = vunpack.c.0.s8 %v4316
    %v4318 = vlaneseq
    %v4319 = vshrl.u32 %v4318, 7
    %v4320 = vsub.s32 %v4317, %v4319
    %v4321 = vrot.slane %v3297, %v4320
    %v4323 = vunpack.c.l.s4 269488144
    %v4324 = vunpack.c.0.s8 %v4323
    %v4325 = vlaneseq
    %v4326 = vshrl.u32 %v4325, 7
    %v4327 = vsub.s32 %v4324, %v4326
    %v4328 = vrot.slane %v3299, %v4327
    %v4330 = vunpack.c.l.s4 842150450
    %v4331 = vunpack.c.0.s8 %v4330
    %v4332 = vlaneseq
    %v4333 = vshrl.u32 %v4332, 7
    %v4334 = vsub.s32 %v4331, %v4333
    %v4335 = vrot.slane %v3299, %v4334
    %v4337 = vunpack.c.l.s4 1414812756
    %v4338 = vunpack.c.0.s8 %v4337
    %v4339 = vlaneseq
    %v4340 = vshrl.u32 %v4339, 7
    %v4341 = vsub.s32 %v4338, %v4340
    %v4342 = vrot.slane %v3299, %v4341
    %v4344 = vunpack.c.l.s4 1987475062
    %v4345 = vunpack.c.0.s8 %v4344
    %v4346 = vlaneseq
    %v4347 = vshrl.u32 %v4346, 7
    %v4348 = vsub.s32 %v4345, %v4347
    %v4349 = vrot.slane %v3299, %v4348
    %v4351 = vunpack.c.l.s4 269488144
    %v4352 = vunpack.c.0.s8 %v4351
    %v4353 = vlaneseq
    %v4354 = vshrl.u32 %v4353, 7
    %v4355 = vsub.s32 %v4352, %v4354
    %v4356 = vrot.slane %v3301, %v4355
    %v4358 = vunpack.c.l.s4 842150450
    %v4359 = vunpack.c.0.s8 %v4358
    %v4360 = vlaneseq
    %v4361 = vshrl.u32 %v4360, 7
    %v4362 = vsub.s32 %v4359, %v4361
    %v4363 = vrot.slane %v3301, %v4362
    %v4365 = vunpack.c.l.s4 1414812756
    %v4366 = vunpack.c.0.s8 %v4365
    %v4367 = vlaneseq
    %v4368 = vshrl.u32 %v4367, 7
    %v4369 = vsub.s32 %v4366, %v4368
    %v4370 = vrot.slane %v3301, %v4369
    %v4372 = vunpack.c.l.s4 1987475062
    %v4373 = vunpack.c.0.s8 %v4372
    %v4374 = vlaneseq
    %v4375 = vshrl.u32 %v4374, 7
    %v4376 = vsub.s32 %v4373, %v4375
    %v4377 = vrot.slane %v3301, %v4376
    %v4379 = vunpack.c.l.s4 269488144
    %v4380 = vunpack.c.0.s8 %v4379
    %v4381 = vlaneseq
    %v4382 = vshrl.u32 %v4381, 7
    %v4383 = vsub.s32 %v4380, %v4382
    %v4384 = vrot.slane %v3303, %v4383
    %v4386 = vunpack.c.l.s4 842150450
    %v4387 = vunpack.c.0.s8 %v4386
    %v4388 = vlaneseq
    %v4389 = vshrl.u32 %v4388, 7
    %v4390 = vsub.s32 %v4387, %v4389
    %v4391 = vrot.slane %v3303, %v4390
    %v4393 = vunpack.c.l.s4 1414812756
    %v4394 = vunpack.c.0.s8 %v4393
    %v4395 = vlaneseq
    %v4396 = vshrl.u32 %v4395, 7
    %v4397 = vsub.s32 %v4394, %v4396
    %v4398 = vrot.slane %v3303, %v4397
    %v4400 = vunpack.c.l.s4 1987475062
    %v4401 = vunpack.c.0.s8 %v4400
    %v4402 = vlaneseq
    %v4403 = vshrl.u32 %v4402, 7
    %v4404 = vsub.s32 %v4401, %v4403
    %v4405 = vrot.slane %v3303, %v4404
    %v4407 = vunpack.c.l.s4 269488144
    %v4408 = vunpack.c.0.s8 %v4407
    %v4409 = vlaneseq
    %v4410 = vshrl.u32 %v4409, 7
    %v4411 = vsub.s32 %v4408, %v4410
    %v4412 = vrot.slane %v3305, %v4411
    %v4414 = vunpack.c.l.s4 842150450
    %v4415 = vunpack.c.0.s8 %v4414
    %v4416 = vlaneseq
    %v4417 = vshrl.u32 %v4416, 7
    %v4418 = vsub.s32 %v4415, %v4417
    %v4419 = vrot.slane %v3305, %v4418
    %v4421 = vunpack.c.l.s4 1414812756
    %v4422 = vunpack.c.0.s8 %v4421
    %v4423 = vlaneseq
    %v4424 = vshrl.u32 %v4423, 7
    %v4425 = vsub.s32 %v4422, %v4424
    %v4426 = vrot.slane %v3305, %v4425
    %v4428 = vunpack.c.l.s4 1987475062
    %v4429 = vunpack.c.0.s8 %v4428
    %v4430 = vlaneseq
    %v4431 = vshrl.u32 %v4430, 7
    %v4432 = vsub.s32 %v4429, %v4431
    %v4433 = vrot.slane %v3305, %v4432
    %v4435 = vunpack.c.l.s4 269488144
    %v4436 = vunpack.c.0.s8 %v4435
    %v4437 = vlaneseq
    %v4438 = vshrl.u32 %v4437, 7
    %v4439 = vsub.s32 %v4436, %v4438
    %v4440 = vrot.slane %v3307, %v4439
    %v4442 = vunpack.c.l.s4 842150450
    %v4443 = vunpack.c.0.s8 %v4442
    %v4444 = vlaneseq
    %v4445 = vshrl.u32 %v4444, 7
    %v4446 = vsub.s32 %v4443, %v4445
    %v4447 = vrot.slane %v3307, %v4446
    %v4449 = vunpack.c.l.s4 1414812756
    %v4450 = vunpack.c.0.s8 %v4449
    %v4451 = vlaneseq
    %v4452 = vshrl.u32 %v4451, 7
    %v4453 = vsub.s32 %v4450, %v4452
    %v4454 = vrot.slane %v3307, %v4453
    %v4456 = vunpack.c.l.s4 1987475062
    %v4457 = vunpack.c.0.s8 %v4456
    %v4458 = vlaneseq
    %v4459 = vshrl.u32 %v4458, 7
    %v4460 = vsub.s32 %v4457, %v4459
    %v4461 = vrot.slane %v3307, %v4460
    %v4463 = vunpack.c.l.s4 269488144
    %v4464 = vunpack.c.0.s8 %v4463
    %v4465 = vlaneseq
    %v4466 = vshrl.u32 %v4465, 7
    %v4467 = vsub.s32 %v4464, %v4466
    %v4468 = vrot.slane %v3309, %v4467
    %v4470 = vunpack.c.l.s4 842150450
    %v4471 = vunpack.c.0.s8 %v4470
    %v4472 = vlaneseq
    %v4473 = vshrl.u32 %v4472, 7
    %v4474 = vsub.s32 %v4471, %v4473
    %v4475 = vrot.slane %v3309, %v4474
    %v4477 = vunpack.c.l.s4 1414812756
    %v4478 = vunpack.c.0.s8 %v4477
    %v4479 = vlaneseq
    %v4480 = vshrl.u32 %v4479, 7
    %v4481 = vsub.s32 %v4478, %v4480
    %v4482 = vrot.slane %v3309, %v4481
    %v4484 = vunpack.c.l.s4 1987475062
    %v4485 = vunpack.c.0.s8 %v4484
    %v4486 = vlaneseq
    %v4487 = vshrl.u32 %v4486, 7
    %v4488 = vsub.s32 %v4485, %v4487
    %v4489 = vrot.slane %v3309, %v4488
    %v4491 = vunpack.c.l.s4 269488144
    %v4492 = vunpack.c.0.s8 %v4491
    %v4493 = vlaneseq
    %v4494 = vshrl.u32 %v4493, 7
    %v4495 = vsub.s32 %v4492, %v4494
    %v4496 = vrot.slane %v3311, %v4495
    %v4498 = vunpack.c.l.s4 842150450
    %v4499 = vunpack.c.0.s8 %v4498
    %v4500 = vlaneseq
    %v4501 = vshrl.u32 %v4500, 7
    %v4502 = vsub.s32 %v4499, %v4501
    %v4503 = vrot.slane %v3311, %v4502
    %v4505 = vunpack.c.l.s4 1414812756
    %v4506 = vunpack.c.0.s8 %v4505
    %v4507 = vlaneseq
    %v4508 = vshrl.u32 %v4507, 7
    %v4509 = vsub.s32 %v4506, %v4508
    %v4510 = vrot.slane %v3311, %v4509
    %v4512 = vunpack.c.l.s4 1987475062
    %v4513 = vunpack.c.0.s8 %v4512
    %v4514 = vlaneseq
    %v4515 = vshrl.u32 %v4514, 7
    %v4516 = vsub.s32 %v4513, %v4515
    %v4517 = vrot.slane %v3311, %v4516
    %v4519 = vunpack.c.l.s4 269488144
    %v4520 = vunpack.c.0.s8 %v4519
    %v4521 = vlaneseq
    %v4522 = vshrl.u32 %v4521, 7
    %v4523 = vsub.s32 %v4520, %v4522
    %v4524 = vrot.slane %v3313, %v4523
    %v4526 = vunpack.c.l.s4 842150450
    %v4527 = vunpack.c.0.s8 %v4526
    %v4528 = vlaneseq
    %v4529 = vshrl.u32 %v4528, 7
    %v4530 = vsub.s32 %v4527, %v4529
    %v4531 = vrot.slane %v3313, %v4530
    %v4533 = vunpack.c.l.s4 1414812756
    %v4534 = vunpack.c.0.s8 %v4533
    %v4535 = vlaneseq
    %v4536 = vshrl.u32 %v4535, 7
    %v4537 = vsub.s32 %v4534, %v4536
    %v4538 = vrot.slane %v3313, %v4537
    %v4540 = vunpack.c.l.s4 1987475062
    %v4541 = vunpack.c.0.s8 %v4540
    %v4542 = vlaneseq
    %v4543 = vshrl.u32 %v4542, 7
    %v4544 = vsub.s32 %v4541, %v4543
    %v4545 = vrot.slane %v3313, %v4544
    %v4547 = vunpack.c.l.s4 269488144
    %v4548 = vunpack.c.0.s8 %v4547
    %v4549 = vlaneseq
    %v4550 = vshrl.u32 %v4549, 7
    %v4551 = vsub.s32 %v4548, %v4550
    %v4552 = vrot.slane %v3315, %v4551
    %v4554 = vunpack.c.l.s4 842150450
    %v4555 = vunpack.c.0.s8 %v4554
    %v4556 = vlaneseq
    %v4557 = vshrl.u32 %v4556, 7
    %v4558 = vsub.s32 %v4555, %v4557
    %v4559 = vrot.slane %v3315, %v4558
    %v4561 = vunpack.c.l.s4 1414812756
    %v4562 = vunpack.c.0.s8 %v4561
    %v4563 = vlaneseq
    %v4564 = vshrl.u32 %v4563, 7
    %v4565 = vsub.s32 %v4562, %v4564
    %v4566 = vrot.slane %v3315, %v4565
    %v4568 = vunpack.c.l.s4 1987475062
    %v4569 = vunpack.c.0.s8 %v4568
    %v4570 = vlaneseq
    %v4571 = vshrl.u32 %v4570, 7
    %v4572 = vsub.s32 %v4569, %v4571
    %v4573 = vrot.slane %v3315, %v4572
    %v4575 = vunpack.c.l.s4 269488144
    %v4576 = vunpack.c.0.s8 %v4575
    %v4577 = vlaneseq
    %v4578 = vshrl.u32 %v4577, 7
    %v4579 = vsub.s32 %v4576, %v4578
    %v4580 = vrot.slane %v3317, %v4579
    %v4582 = vunpack.c.l.s4 842150450
    %v4583 = vunpack.c.0.s8 %v4582
    %v4584 = vlaneseq
    %v4585 = vshrl.u32 %v4584, 7
    %v4586 = vsub.s32 %v4583, %v4585
    %v4587 = vrot.slane %v3317, %v4586
    %v4589 = vunpack.c.l.s4 1414812756
    %v4590 = vunpack.c.0.s8 %v4589
    %v4591 = vlaneseq
    %v4592 = vshrl.u32 %v4591, 7
    %v4593 = vsub.s32 %v4590, %v4592
    %v4594 = vrot.slane %v3317, %v4593
    %v4596 = vunpack.c.l.s4 1987475062
    %v4597 = vunpack.c.0.s8 %v4596
    %v4598 = vlaneseq
    %v4599 = vshrl.u32 %v4598, 7
    %v4600 = vsub.s32 %v4597, %v4599
    %v4601 = vrot.slane %v3317, %v4600
    %v4603 = vunpack.c.l.s4 269488144
    %v4604 = vunpack.c.0.s8 %v4603
    %v4605 = vlaneseq
    %v4606 = vshrl.u32 %v4605, 7
    %v4607 = vsub.s32 %v4604, %v4606
    %v4608 = vrot.slane %v3319, %v4607
    %v4610 = vunpack.c.l.s4 842150450
    %v4611 = vunpack.c.0.s8 %v4610
    %v4612 = vlaneseq
    %v4613 = vshrl.u32 %v4612, 7
    %v4614 = vsub.s32 %v4611, %v4613
    %v4615 = vrot.slane %v3319, %v4614
    %v4617 = vunpack.c.l.s4 1414812756
    %v4618 = vunpack.c.0.s8 %v4617
    %v4619 = vlaneseq
    %v4620 = vshrl.u32 %v4619, 7
    %v4621 = vsub.s32 %v4618, %v4620
    %v4622 = vrot.slane %v3319, %v4621
    %v4624 = vunpack.c.l.s4 1987475062
    %v4625 = vunpack.c.0.s8 %v4624
    %v4626 = vlaneseq
    %v4627 = vshrl.u32 %v4626, 7
    %v4628 = vsub.s32 %v4625, %v4627
    %v4629 = vrot.slane %v3319, %v4628
    %v4631 = vunpack.c.l.s4 269488144
    %v4632 = vunpack.c.0.s8 %v4631
    %v4633 = vlaneseq
    %v4634 = vshrl.u32 %v4633, 7
    %v4635 = vsub.s32 %v4632, %v4634
    %v4636 = vrot.slane %v3321, %v4635
    %v4638 = vunpack.c.l.s4 842150450
    %v4639 = vunpack.c.0.s8 %v4638
    %v4640 = vlaneseq
    %v4641 = vshrl.u32 %v4640, 7
    %v4642 = vsub.s32 %v4639, %v4641
    %v4643 = vrot.slane %v3321, %v4642
    %v4645 = vunpack.c.l.s4 1414812756
    %v4646 = vunpack.c.0.s8 %v4645
    %v4647 = vlaneseq
    %v4648 = vshrl.u32 %v4647, 7
    %v4649 = vsub.s32 %v4646, %v4648
    %v4650 = vrot.slane %v3321, %v4649
    %v4652 = vunpack.c.l.s4 1987475062
    %v4653 = vunpack.c.0.s8 %v4652
    %v4654 = vlaneseq
    %v4655 = vshrl.u32 %v4654, 7
    %v4656 = vsub.s32 %v4653, %v4655
    %v4657 = vrot.slane %v3321, %v4656
    %v4659 = vunpack.c.l.s4 269488144
    %v4660 = vunpack.c.0.s8 %v4659
    %v4661 = vlaneseq
    %v4662 = vshrl.u32 %v4661, 7
    %v4663 = vsub.s32 %v4660, %v4662
    %v4664 = vrot.slane %v3323, %v4663
    %v4666 = vunpack.c.l.s4 842150450
    %v4667 = vunpack.c.0.s8 %v4666
    %v4668 = vlaneseq
    %v4669 = vshrl.u32 %v4668, 7
    %v4670 = vsub.s32 %v4667, %v4669
    %v4671 = vrot.slane %v3323, %v4670
    %v4673 = vunpack.c.l.s4 1414812756
    %v4674 = vunpack.c.0.s8 %v4673
    %v4675 = vlaneseq
    %v4676 = vshrl.u32 %v4675, 7
    %v4677 = vsub.s32 %v4674, %v4676
    %v4678 = vrot.slane %v3323, %v4677
    %v4680 = vunpack.c.l.s4 1987475062
    %v4681 = vunpack.c.0.s8 %v4680
    %v4682 = vlaneseq
    %v4683 = vshrl.u32 %v4682, 7
    %v4684 = vsub.s32 %v4681, %v4683
    %v4685 = vrot.slane %v3323, %v4684
    %v4687 = vunpack.c.l.s4 269488144
    %v4688 = vunpack.c.0.s8 %v4687
    %v4689 = vlaneseq
    %v4690 = vshrl.u32 %v4689, 7
    %v4691 = vsub.s32 %v4688, %v4690
    %v4692 = vrot.slane %v3325, %v4691
    %v4694 = vunpack.c.l.s4 842150450
    %v4695 = vunpack.c.0.s8 %v4694
    %v4696 = vlaneseq
    %v4697 = vshrl.u32 %v4696, 7
    %v4698 = vsub.s32 %v4695, %v4697
    %v4699 = vrot.slane %v3325, %v4698
    %v4701 = vunpack.c.l.s4 1414812756
    %v4702 = vunpack.c.0.s8 %v4701
    %v4703 = vlaneseq
    %v4704 = vshrl.u32 %v4703, 7
    %v4705 = vsub.s32 %v4702, %v4704
    %v4706 = vrot.slane %v3325, %v4705
    %v4708 = vunpack.c.l.s4 1987475062
    %v4709 = vunpack.c.0.s8 %v4708
    %v4710 = vlaneseq
    %v4711 = vshrl.u32 %v4710, 7
    %v4712 = vsub.s32 %v4709, %v4711
    %v4713 = vrot.slane %v3325, %v4712
    %v4715 = vunpack.c.l.s4 269488144
    %v4716 = vunpack.c.0.s8 %v4715
    %v4717 = vlaneseq
    %v4718 = vshrl.u32 %v4717, 7
    %v4719 = vsub.s32 %v4716, %v4718
    %v4720 = vrot.slane %v3327, %v4719
    %v4722 = vunpack.c.l.s4 842150450
    %v4723 = vunpack.c.0.s8 %v4722
    %v4724 = vlaneseq
    %v4725 = vshrl.u32 %v4724, 7
    %v4726 = vsub.s32 %v4723, %v4725
    %v4727 = vrot.slane %v3327, %v4726
    %v4729 = vunpack.c.l.s4 1414812756
    %v4730 = vunpack.c.0.s8 %v4729
    %v4731 = vlaneseq
    %v4732 = vshrl.u32 %v4731, 7
    %v4733 = vsub.s32 %v4730, %v4732
    %v4734 = vrot.slane %v3327, %v4733
    %v4736 = vunpack.c.l.s4 1987475062
    %v4737 = vunpack.c.0.s8 %v4736
    %v4738 = vlaneseq
    %v4739 = vshrl.u32 %v4738, 7
    %v4740 = vsub.s32 %v4737, %v4739
    %v4741 = vrot.slane %v3327, %v4740
    %v4743 = vunpack.c.l.s4 269488144
    %v4744 = vunpack.c.0.s8 %v4743
    %v4745 = vlaneseq
    %v4746 = vshrl.u32 %v4745, 7
    %v4747 = vsub.s32 %v4744, %v4746
    %v4748 = vrot.slane %v3329, %v4747
    %v4750 = vunpack.c.l.s4 842150450
    %v4751 = vunpack.c.0.s8 %v4750
    %v4752 = vlaneseq
    %v4753 = vshrl.u32 %v4752, 7
    %v4754 = vsub.s32 %v4751, %v4753
    %v4755 = vrot.slane %v3329, %v4754
    %v4757 = vunpack.c.l.s4 1414812756
    %v4758 = vunpack.c.0.s8 %v4757
    %v4759 = vlaneseq
    %v4760 = vshrl.u32 %v4759, 7
    %v4761 = vsub.s32 %v4758, %v4760
    %v4762 = vrot.slane %v3329, %v4761
    %v4764 = vunpack.c.l.s4 1987475062
    %v4765 = vunpack.c.0.s8 %v4764
    %v4766 = vlaneseq
    %v4767 = vshrl.u32 %v4766, 7
    %v4768 = vsub.s32 %v4765, %v4767
    %v4769 = vrot.slane %v3329, %v4768
    %v4771 = vunpack.c.l.s4 269488144
    %v4772 = vunpack.c.0.s8 %v4771
    %v4773 = vlaneseq
    %v4774 = vshrl.u32 %v4773, 7
    %v4775 = vsub.s32 %v4772, %v4774
    %v4776 = vrot.slane %v3331, %v4775
    %v4778 = vunpack.c.l.s4 842150450
    %v4779 = vunpack.c.0.s8 %v4778
    %v4780 = vlaneseq
    %v4781 = vshrl.u32 %v4780, 7
    %v4782 = vsub.s32 %v4779, %v4781
    %v4783 = vrot.slane %v3331, %v4782
    %v4785 = vunpack.c.l.s4 1414812756
    %v4786 = vunpack.c.0.s8 %v4785
    %v4787 = vlaneseq
    %v4788 = vshrl.u32 %v4787, 7
    %v4789 = vsub.s32 %v4786, %v4788
    %v4790 = vrot.slane %v3331, %v4789
    %v4792 = vunpack.c.l.s4 1987475062
    %v4793 = vunpack.c.0.s8 %v4792
    %v4794 = vlaneseq
    %v4795 = vshrl.u32 %v4794, 7
    %v4796 = vsub.s32 %v4793, %v4795
    %v4797 = vrot.slane %v3331, %v4796
    %v4799 = vunpack.c.l.s4 269488144
    %v4800 = vunpack.c.0.s8 %v4799
    %v4801 = vlaneseq
    %v4802 = vshrl.u32 %v4801, 7
    %v4803 = vsub.s32 %v4800, %v4802
    %v4804 = vrot.slane %v3333, %v4803
    %v4806 = vunpack.c.l.s4 842150450
    %v4807 = vunpack.c.0.s8 %v4806
    %v4808 = vlaneseq
    %v4809 = vshrl.u32 %v4808, 7
    %v4810 = vsub.s32 %v4807, %v4809
    %v4811 = vrot.slane %v3333, %v4810
    %v4813 = vunpack.c.l.s4 1414812756
    %v4814 = vunpack.c.0.s8 %v4813
    %v4815 = vlaneseq
    %v4816 = vshrl.u32 %v4815, 7
    %v4817 = vsub.s32 %v4814, %v4816
    %v4818 = vrot.slane %v3333, %v4817
    %v4820 = vunpack.c.l.s4 1987475062
    %v4821 = vunpack.c.0.s8 %v4820
    %v4822 = vlaneseq
    %v4823 = vshrl.u32 %v4822, 7
    %v4824 = vsub.s32 %v4821, %v4823
    %v4825 = vrot.slane %v3333, %v4824
    %v4827 = vunpack.c.l.s4 269488144
    %v4828 = vunpack.c.0.s8 %v4827
    %v4829 = vlaneseq
    %v4830 = vshrl.u32 %v4829, 7
    %v4831 = vsub.s32 %v4828, %v4830
    %v4832 = vrot.slane %v3335, %v4831
    %v4834 = vunpack.c.l.s4 842150450
    %v4835 = vunpack.c.0.s8 %v4834
    %v4836 = vlaneseq
    %v4837 = vshrl.u32 %v4836, 7
    %v4838 = vsub.s32 %v4835, %v4837
    %v4839 = vrot.slane %v3335, %v4838
    %v4841 = vunpack.c.l.s4 1414812756
    %v4842 = vunpack.c.0.s8 %v4841
    %v4843 = vlaneseq
    %v4844 = vshrl.u32 %v4843, 7
    %v4845 = vsub.s32 %v4842, %v4844
    %v4846 = vrot.slane %v3335, %v4845
    %v4848 = vunpack.c.l.s4 1987475062
    %v4849 = vunpack.c.0.s8 %v4848
    %v4850 = vlaneseq
    %v4851 = vshrl.u32 %v4850, 7
    %v4852 = vsub.s32 %v4849, %v4851
    %v4853 = vrot.slane %v3335, %v4852
    %v4855 = vunpack.c.l.s4 269488144
    %v4856 = vunpack.c.0.s8 %v4855
    %v4857 = vlaneseq
    %v4858 = vshrl.u32 %v4857, 7
    %v4859 = vsub.s32 %v4856, %v4858
    %v4860 = vrot.slane %v3337, %v4859
    %v4862 = vunpack.c.l.s4 842150450
    %v4863 = vunpack.c.0.s8 %v4862
    %v4864 = vlaneseq
    %v4865 = vshrl.u32 %v4864, 7
    %v4866 = vsub.s32 %v4863, %v4865
    %v4867 = vrot.slane %v3337, %v4866
    %v4869 = vunpack.c.l.s4 1414812756
    %v4870 = vunpack.c.0.s8 %v4869
    %v4871 = vlaneseq
    %v4872 = vshrl.u32 %v4871, 7
    %v4873 = vsub.s32 %v4870, %v4872
    %v4874 = vrot.slane %v3337, %v4873
    %v4876 = vunpack.c.l.s4 1987475062
    %v4877 = vunpack.c.0.s8 %v4876
    %v4878 = vlaneseq
    %v4879 = vshrl.u32 %v4878, 7
    %v4880 = vsub.s32 %v4877, %v4879
    %v4881 = vrot.slane %v3337, %v4880
    %v4883 = vunpack.c.l.s4 269488144
    %v4884 = vunpack.c.0.s8 %v4883
    %v4885 = vlaneseq
    %v4886 = vshrl.u32 %v4885, 7
    %v4887 = vsub.s32 %v4884, %v4886
    %v4888 = vrot.slane %v3339, %v4887
    %v4890 = vunpack.c.l.s4 842150450
    %v4891 = vunpack.c.0.s8 %v4890
    %v4892 = vlaneseq
    %v4893 = vshrl.u32 %v4892, 7
    %v4894 = vsub.s32 %v4891, %v4893
    %v4895 = vrot.slane %v3339, %v4894
    %v4897 = vunpack.c.l.s4 1414812756
    %v4898 = vunpack.c.0.s8 %v4897
    %v4899 = vlaneseq
    %v4900 = vshrl.u32 %v4899, 7
    %v4901 = vsub.s32 %v4898, %v4900
    %v4902 = vrot.slane %v3339, %v4901
    %v4904 = vunpack.c.l.s4 1987475062
    %v4905 = vunpack.c.0.s8 %v4904
    %v4906 = vlaneseq
    %v4907 = vshrl.u32 %v4906, 7
    %v4908 = vsub.s32 %v4905, %v4907
    %v4909 = vrot.slane %v3339, %v4908
    %v4911 = vunpack.c.l.s4 269488144
    %v4912 = vunpack.c.0.s8 %v4911
    %v4913 = vlaneseq
    %v4914 = vshrl.u32 %v4913, 7
    %v4915 = vsub.s32 %v4912, %v4914
    %v4916 = vrot.slane %v3341, %v4915
    %v4918 = vunpack.c.l.s4 842150450
    %v4919 = vunpack.c.0.s8 %v4918
    %v4920 = vlaneseq
    %v4921 = vshrl.u32 %v4920, 7
    %v4922 = vsub.s32 %v4919, %v4921
    %v4923 = vrot.slane %v3341, %v4922
    %v4925 = vunpack.c.l.s4 1414812756
    %v4926 = vunpack.c.0.s8 %v4925
    %v4927 = vlaneseq
    %v4928 = vshrl.u32 %v4927, 7
    %v4929 = vsub.s32 %v4926, %v4928
    %v4930 = vrot.slane %v3341, %v4929
    %v4932 = vunpack.c.l.s4 1987475062
    %v4933 = vunpack.c.0.s8 %v4932
    %v4934 = vlaneseq
    %v4935 = vshrl.u32 %v4934, 7
    %v4936 = vsub.s32 %v4933, %v4935
    %v4937 = vrot.slane %v3341, %v4936
    %v4939 = vunpack.c.l.s4 269488144
    %v4940 = vunpack.c.0.s8 %v4939
    %v4941 = vlaneseq
    %v4942 = vshrl.u32 %v4941, 7
    %v4943 = vsub.s32 %v4940, %v4942
    %v4944 = vrot.slane %v3343, %v4943
    %v4946 = vunpack.c.l.s4 842150450
    %v4947 = vunpack.c.0.s8 %v4946
    %v4948 = vlaneseq
    %v4949 = vshrl.u32 %v4948, 7
    %v4950 = vsub.s32 %v4947, %v4949
    %v4951 = vrot.slane %v3343, %v4950
    %v4953 = vunpack.c.l.s4 1414812756
    %v4954 = vunpack.c.0.s8 %v4953
    %v4955 = vlaneseq
    %v4956 = vshrl.u32 %v4955, 7
    %v4957 = vsub.s32 %v4954, %v4956
    %v4958 = vrot.slane %v3343, %v4957
    %v4960 = vunpack.c.l.s4 1987475062
    %v4961 = vunpack.c.0.s8 %v4960
    %v4962 = vlaneseq
    %v4963 = vshrl.u32 %v4962, 7
    %v4964 = vsub.s32 %v4961, %v4963
    %v4965 = vrot.slane %v3343, %v4964
    %v4967 = vunpack.c.l.s4 269488144
    %v4968 = vunpack.c.0.s8 %v4967
    %v4969 = vlaneseq
    %v4970 = vshrl.u32 %v4969, 7
    %v4971 = vsub.s32 %v4968, %v4970
    %v4972 = vrot.slane %v3345, %v4971
    %v4974 = vunpack.c.l.s4 842150450
    %v4975 = vunpack.c.0.s8 %v4974
    %v4976 = vlaneseq
    %v4977 = vshrl.u32 %v4976, 7
    %v4978 = vsub.s32 %v4975, %v4977
    %v4979 = vrot.slane %v3345, %v4978
    %v4981 = vunpack.c.l.s4 1414812756
    %v4982 = vunpack.c.0.s8 %v4981
    %v4983 = vlaneseq
    %v4984 = vshrl.u32 %v4983, 7
    %v4985 = vsub.s32 %v4982, %v4984
    %v4986 = vrot.slane %v3345, %v4985
    %v4988 = vunpack.c.l.s4 1987475062
    %v4989 = vunpack.c.0.s8 %v4988
    %v4990 = vlaneseq
    %v4991 = vshrl.u32 %v4990, 7
    %v4992 = vsub.s32 %v4989, %v4991
    %v4993 = vrot.slane %v3345, %v4992
    %v4995 = vunpack.c.l.s4 269488144
    %v4996 = vunpack.c.0.s8 %v4995
    %v4997 = vlaneseq
    %v4998 = vshrl.u32 %v4997, 7
    %v4999 = vsub.s32 %v4996, %v4998
    %v5000 = vrot.slane %v3347, %v4999
    %v5002 = vunpack.c.l.s4 842150450
    %v5003 = vunpack.c.0.s8 %v5002
    %v5004 = vlaneseq
    %v5005 = vshrl.u32 %v5004, 7
    %v5006 = vsub.s32 %v5003, %v5005
    %v5007 = vrot.slane %v3347, %v5006
    %v5009 = vunpack.c.l.s4 1414812756
    %v5010 = vunpack.c.0.s8 %v5009
    %v5011 = vlaneseq
    %v5012 = vshrl.u32 %v5011, 7
    %v5013 = vsub.s32 %v5010, %v5012
    %v5014 = vrot.slane %v3347, %v5013
    %v5016 = vunpack.c.l.s4 1987475062
    %v5017 = vunpack.c.0.s8 %v5016
    %v5018 = vlaneseq
    %v5019 = vshrl.u32 %v5018, 7
    %v5020 = vsub.s32 %v5017, %v5019
    %v5021 = vrot.slane %v3347, %v5020
    %v5023 = vunpack.c.l.s4 269488144
    %v5024 = vunpack.c.0.s8 %v5023
    %v5025 = vlaneseq
    %v5026 = vshrl.u32 %v5025, 7
    %v5027 = vsub.s32 %v5024, %v5026
    %v5028 = vrot.slane %v3349, %v5027
    %v5030 = vunpack.c.l.s4 842150450
    %v5031 = vunpack.c.0.s8 %v5030
    %v5032 = vlaneseq
    %v5033 = vshrl.u32 %v5032, 7
    %v5034 = vsub.s32 %v5031, %v5033
    %v5035 = vrot.slane %v3349, %v5034
    %v5037 = vunpack.c.l.s4 1414812756
    %v5038 = vunpack.c.0.s8 %v5037
    %v5039 = vlaneseq
    %v5040 = vshrl.u32 %v5039, 7
    %v5041 = vsub.s32 %v5038, %v5040
    %v5042 = vrot.slane %v3349, %v5041
    %v5044 = vunpack.c.l.s4 1987475062
    %v5045 = vunpack.c.0.s8 %v5044
    %v5046 = vlaneseq
    %v5047 = vshrl.u32 %v5046, 7
    %v5048 = vsub.s32 %v5045, %v5047
    %v5049 = vrot.slane %v3349, %v5048
    %v5051 = vunpack.c.l.s4 269488144
    %v5052 = vunpack.c.0.s8 %v5051
    %v5053 = vlaneseq
    %v5054 = vshrl.u32 %v5053, 7
    %v5055 = vsub.s32 %v5052, %v5054
    %v5056 = vrot.slane %v3351, %v5055
    %v5058 = vunpack.c.l.s4 842150450
    %v5059 = vunpack.c.0.s8 %v5058
    %v5060 = vlaneseq
    %v5061 = vshrl.u32 %v5060, 7
    %v5062 = vsub.s32 %v5059, %v5061
    %v5063 = vrot.slane %v3351, %v5062
    %v5065 = vunpack.c.l.s4 1414812756
    %v5066 = vunpack.c.0.s8 %v5065
    %v5067 = vlaneseq
    %v5068 = vshrl.u32 %v5067, 7
    %v5069 = vsub.s32 %v5066, %v5068
    %v5070 = vrot.slane %v3351, %v5069
    %v5072 = vunpack.c.l.s4 1987475062
    %v5073 = vunpack.c.0.s8 %v5072
    %v5074 = vlaneseq
    %v5075 = vshrl.u32 %v5074, 7
    %v5076 = vsub.s32 %v5073, %v5075
    %v5077 = vrot.slane %v3351, %v5076
    %v5079 = vunpack.c.l.s4 269488144
    %v5080 = vunpack.c.0.s8 %v5079
    %v5081 = vlaneseq
    %v5082 = vshrl.u32 %v5081, 7
    %v5083 = vsub.s32 %v5080, %v5082
    %v5084 = vrot.slane %v3353, %v5083
    %v5086 = vunpack.c.l.s4 842150450
    %v5087 = vunpack.c.0.s8 %v5086
    %v5088 = vlaneseq
    %v5089 = vshrl.u32 %v5088, 7
    %v5090 = vsub.s32 %v5087, %v5089
    %v5091 = vrot.slane %v3353, %v5090
    %v5093 = vunpack.c.l.s4 1414812756
    %v5094 = vunpack.c.0.s8 %v5093
    %v5095 = vlaneseq
    %v5096 = vshrl.u32 %v5095, 7
    %v5097 = vsub.s32 %v5094, %v5096
    %v5098 = vrot.slane %v3353, %v5097
    %v5100 = vunpack.c.l.s4 1987475062
    %v5101 = vunpack.c.0.s8 %v5100
    %v5102 = vlaneseq
    %v5103 = vshrl.u32 %v5102, 7
    %v5104 = vsub.s32 %v5101, %v5103
    %v5105 = vrot.slane %v3353, %v5104
    %v5107 = vunpack.c.l.s4 269488144
    %v5108 = vunpack.c.0.s8 %v5107
    %v5109 = vlaneseq
    %v5110 = vshrl.u32 %v5109, 7
    %v5111 = vsub.s32 %v5108, %v5110
    %v5112 = vrot.slane %v3355, %v5111
    %v5114 = vunpack.c.l.s4 842150450
    %v5115 = vunpack.c.0.s8 %v5114
    %v5116 = vlaneseq
    %v5117 = vshrl.u32 %v5116, 7
    %v5118 = vsub.s32 %v5115, %v5117
    %v5119 = vrot.slane %v3355, %v5118
    %v5121 = vunpack.c.l.s4 1414812756
    %v5122 = vunpack.c.0.s8 %v5121
    %v5123 = vlaneseq
    %v5124 = vshrl.u32 %v5123, 7
    %v5125 = vsub.s32 %v5122, %v5124
    %v5126 = vrot.slane %v3355, %v5125
    %v5128 = vunpack.c.l.s4 1987475062
    %v5129 = vunpack.c.0.s8 %v5128
    %v5130 = vlaneseq
    %v5131 = vshrl.u32 %v5130, 7
    %v5132 = vsub.s32 %v5129, %v5131
    %v5133 = vrot.slane %v3355, %v5132
    %v5135 = vunpack.c.l.s4 269488144
    %v5136 = vunpack.c.0.s8 %v5135
    %v5137 = vlaneseq
    %v5138 = vshrl.u32 %v5137, 7
    %v5139 = vsub.s32 %v5136, %v5138
    %v5140 = vrot.slane %v3357, %v5139
    %v5142 = vunpack.c.l.s4 842150450
    %v5143 = vunpack.c.0.s8 %v5142
    %v5144 = vlaneseq
    %v5145 = vshrl.u32 %v5144, 7
    %v5146 = vsub.s32 %v5143, %v5145
    %v5147 = vrot.slane %v3357, %v5146
    %v5149 = vunpack.c.l.s4 1414812756
    %v5150 = vunpack.c.0.s8 %v5149
    %v5151 = vlaneseq
    %v5152 = vshrl.u32 %v5151, 7
    %v5153 = vsub.s32 %v5150, %v5152
    %v5154 = vrot.slane %v3357, %v5153
    %v5156 = vunpack.c.l.s4 1987475062
    %v5157 = vunpack.c.0.s8 %v5156
    %v5158 = vlaneseq
    %v5159 = vshrl.u32 %v5158, 7
    %v5160 = vsub.s32 %v5157, %v5159
    %v5161 = vrot.slane %v3357, %v5160
    %v5163 = vunpack.c.l.s4 269488144
    %v5164 = vunpack.c.0.s8 %v5163
    %v5165 = vlaneseq
    %v5166 = vshrl.u32 %v5165, 7
    %v5167 = vsub.s32 %v5164, %v5166
    %v5168 = vrot.slane %v3359, %v5167
    %v5170 = vunpack.c.l.s4 842150450
    %v5171 = vunpack.c.0.s8 %v5170
    %v5172 = vlaneseq
    %v5173 = vshrl.u32 %v5172, 7
    %v5174 = vsub.s32 %v5171, %v5173
    %v5175 = vrot.slane %v3359, %v5174
    %v5177 = vunpack.c.l.s4 1414812756
    %v5178 = vunpack.c.0.s8 %v5177
    %v5179 = vlaneseq
    %v5180 = vshrl.u32 %v5179, 7
    %v5181 = vsub.s32 %v5178, %v5180
    %v5182 = vrot.slane %v3359, %v5181
    %v5184 = vunpack.c.l.s4 1987475062
    %v5185 = vunpack.c.0.s8 %v5184
    %v5186 = vlaneseq
    %v5187 = vshrl.u32 %v5186, 7
    %v5188 = vsub.s32 %v5185, %v5187
    %v5189 = vrot.slane %v3359, %v5188
    %v5191 = vunpack.c.l.s4 269488144
    %v5192 = vunpack.c.0.s8 %v5191
    %v5193 = vlaneseq
    %v5194 = vshrl.u32 %v5193, 7
    %v5195 = vsub.s32 %v5192, %v5194
    %v5196 = vrot.slane %v3361, %v5195
    %v5198 = vunpack.c.l.s4 842150450
    %v5199 = vunpack.c.0.s8 %v5198
    %v5200 = vlaneseq
    %v5201 = vshrl.u32 %v5200, 7
    %v5202 = vsub.s32 %v5199, %v5201
    %v5203 = vrot.slane %v3361, %v5202
    %v5205 = vunpack.c.l.s4 1414812756
    %v5206 = vunpack.c.0.s8 %v5205
    %v5207 = vlaneseq
    %v5208 = vshrl.u32 %v5207, 7
    %v5209 = vsub.s32 %v5206, %v5208
    %v5210 = vrot.slane %v3361, %v5209
    %v5212 = vunpack.c.l.s4 1987475062
    %v5213 = vunpack.c.0.s8 %v5212
    %v5214 = vlaneseq
    %v5215 = vshrl.u32 %v5214, 7
    %v5216 = vsub.s32 %v5213, %v5215
    %v5217 = vrot.slane %v3361, %v5216
    %v5218 = vcombine.low %v3432, %v3439
    %v5219 = vcombine.low %v3446, %v3453
    %v5221 = vunpack.c.l.s4 1983009808
    %v5222 = vunpack.c.0.s8 %v5221
    %v5223 = vlaneseq
    %v5224 = vshrl.u32 %v5223, 7
    %v5225 = vsub.s32 %v5222, %v5224
    %v5226 = vrot.slane %v5218, %v5225
    %v5228 = vunpack.c.l.s4 1983009808
    %v5229 = vunpack.c.0.s8 %v5228
    %v5230 = vlaneseq
    %v5231 = vshrl.u32 %v5230, 7
    %v5232 = vsub.s32 %v5229, %v5231
    %v5233 = vrot.slane %v5219, %v5232
    %v5234 = vcombine.low %v5226, %v5233
    %v5235 = vcombine.low %v3460, %v3467
    %v5236 = vcombine.low %v3474, %v3481
    %v5238 = vunpack.c.l.s4 1983009808
    %v5239 = vunpack.c.0.s8 %v5238
    %v5240 = vlaneseq
    %v5241 = vshrl.u32 %v5240, 7
    %v5242 = vsub.s32 %v5239, %v5241
    %v5243 = vrot.slane %v5235, %v5242
    %v5245 = vunpack.c.l.s4 1983009808
    %v5246 = vunpack.c.0.s8 %v5245
    %v5247 = vlaneseq
    %v5248 = vshrl.u32 %v5247, 7
    %v5249 = vsub.s32 %v5246, %v5248
    %v5250 = vrot.slane %v5236, %v5249
    %v5251 = vcombine.low %v5243, %v5250
    %v5252 = vcombine.low %v3488, %v3495
    %v5253 = vcombine.low %v3502, %v3509
    %v5255 = vunpack.c.l.s4 1983009808
    %v5256 = vunpack.c.0.s8 %v5255
    %v5257 = vlaneseq
    %v5258 = vshrl.u32 %v5257, 7
    %v5259 = vsub.s32 %v5256, %v5258
    %v5260 = vrot.slane %v5252, %v5259
    %v5262 = vunpack.c.l.s4 1983009808
    %v5263 = vunpack.c.0.s8 %v5262
    %v5264 = vlaneseq
    %v5265 = vshrl.u32 %v5264, 7
    %v5266 = vsub.s32 %v5263, %v5265
    %v5267 = vrot.slane %v5253, %v5266
    %v5268 = vcombine.low %v5260, %v5267
    %v5269 = vcombine.low %v3516, %v3523
    %v5270 = vcombine.low %v3530, %v3537
    %v5272 = vunpack.c.l.s4 1983009808
    %v5273 = vunpack.c.0.s8 %v5272
    %v5274 = vlaneseq
    %v5275 = vshrl.u32 %v5274, 7
    %v5276 = vsub.s32 %v5273, %v5275
    %v5277 = vrot.slane %v5269, %v5276
    %v5279 = vunpack.c.l.s4 1983009808
    %v5280 = vunpack.c.0.s8 %v5279
    %v5281 = vlaneseq
    %v5282 = vshrl.u32 %v5281, 7
    %v5283 = vsub.s32 %v5280, %v5282
    %v5284 = vrot.slane %v5270, %v5283
    %v5285 = vcombine.low %v5277, %v5284
    %v5286 = vcombine.low %v3544, %v3551
    %v5287 = vcombine.low %v3558, %v3565
    %v5289 = vunpack.c.l.s4 1983009808
    %v5290 = vunpack.c.0.s8 %v5289
    %v5291 = vlaneseq
    %v5292 = vshrl.u32 %v5291, 7
    %v5293 = vsub.s32 %v5290, %v5292
    %v5294 = vrot.slane %v5286, %v5293
    %v5296 = vunpack.c.l.s4 1983009808
    %v5297 = vunpack.c.0.s8 %v5296
    %v5298 = vlaneseq
    %v5299 = vshrl.u32 %v5298, 7
    %v5300 = vsub.s32 %v5297, %v5299
    %v5301 = vrot.slane %v5287, %v5300
    %v5302 = vcombine.low %v5294, %v5301
    %v5303 = vcombine.low %v3572, %v3579
    %v5304 = vcombine.low %v3586, %v3593
    %v5306 = vunpack.c.l.s4 1983009808
    %v5307 = vunpack.c.0.s8 %v5306
    %v5308 = vlaneseq
    %v5309 = vshrl.u32 %v5308, 7
    %v5310 = vsub.s32 %v5307, %v5309
    %v5311 = vrot.slane %v5303, %v5310
    %v5313 = vunpack.c.l.s4 1983009808
    %v5314 = vunpack.c.0.s8 %v5313
    %v5315 = vlaneseq
    %v5316 = vshrl.u32 %v5315, 7
    %v5317 = vsub.s32 %v5314, %v5316
    %v5318 = vrot.slane %v5304, %v5317
    %v5319 = vcombine.low %v5311, %v5318
    %v5320 = vcombine.low %v3600, %v3607
    %v5321 = vcombine.low %v3614, %v3621
    %v5323 = vunpack.c.l.s4 1983009808
    %v5324 = vunpack.c.0.s8 %v5323
    %v5325 = vlaneseq
    %v5326 = vshrl.u32 %v5325, 7
    %v5327 = vsub.s32 %v5324, %v5326
    %v5328 = vrot.slane %v5320, %v5327
    %v5330 = vunpack.c.l.s4 1983009808
    %v5331 = vunpack.c.0.s8 %v5330
    %v5332 = vlaneseq
    %v5333 = vshrl.u32 %v5332, 7
    %v5334 = vsub.s32 %v5331, %v5333
    %v5335 = vrot.slane %v5321, %v5334
    %v5336 = vcombine.low %v5328, %v5335
    %v5337 = vcombine.low %v3628, %v3635
    %v5338 = vcombine.low %v3642, %v3649
    %v5340 = vunpack.c.l.s4 1983009808
    %v5341 = vunpack.c.0.s8 %v5340
    %v5342 = vlaneseq
    %v5343 = vshrl.u32 %v5342, 7
    %v5344 = vsub.s32 %v5341, %v5343
    %v5345 = vrot.slane %v5337, %v5344
    %v5347 = vunpack.c.l.s4 1983009808
    %v5348 = vunpack.c.0.s8 %v5347
    %v5349 = vlaneseq
    %v5350 = vshrl.u32 %v5349, 7
    %v5351 = vsub.s32 %v5348, %v5350
    %v5352 = vrot.slane %v5338, %v5351
    %v5353 = vcombine.low %v5345, %v5352
    %v5354 = vcombine.low %v3656, %v3663
    %v5355 = vcombine.low %v3670, %v3677
    %v5357 = vunpack.c.l.s4 1983009808
    %v5358 = vunpack.c.0.s8 %v5357
    %v5359 = vlaneseq
    %v5360 = vshrl.u32 %v5359, 7
    %v5361 = vsub.s32 %v5358, %v5360
    %v5362 = vrot.slane %v5354, %v5361
    %v5364 = vunpack.c.l.s4 1983009808
    %v5365 = vunpack.c.0.s8 %v5364
    %v5366 = vlaneseq
    %v5367 = vshrl.u32 %v5366, 7
    %v5368 = vsub.s32 %v5365, %v5367
    %v5369 = vrot.slane %v5355, %v5368
    %v5370 = vcombine.low %v5362, %v5369
    %v5371 = vcombine.low %v3684, %v3691
    %v5372 = vcombine.low %v3698, %v3705
    %v5374 = vunpack.c.l.s4 1983009808
    %v5375 = vunpack.c.0.s8 %v5374
    %v5376 = vlaneseq
    %v5377 = vshrl.u32 %v5376, 7
    %v5378 = vsub.s32 %v5375, %v5377
    %v5379 = vrot.slane %v5371, %v5378
    %v5381 = vunpack.c.l.s4 1983009808
    %v5382 = vunpack.c.0.s8 %v5381
    %v5383 = vlaneseq
    %v5384 = vshrl.u32 %v5383, 7
    %v5385 = vsub.s32 %v5382, %v5384
    %v5386 = vrot.slane %v5372, %v5385
    %v5387 = vcombine.low %v5379, %v5386
    %v5388 = vcombine.low %v3712, %v3719
    %v5389 = vcombine.low %v3726, %v3733
    %v5391 = vunpack.c.l.s4 1983009808
    %v5392 = vunpack.c.0.s8 %v5391
    %v5393 = vlaneseq
    %v5394 = vshrl.u32 %v5393, 7
    %v5395 = vsub.s32 %v5392, %v5394
    %v5396 = vrot.slane %v5388, %v5395
    %v5398 = vunpack.c.l.s4 1983009808
    %v5399 = vunpack.c.0.s8 %v5398
    %v5400 = vlaneseq
    %v5401 = vshrl.u32 %v5400, 7
    %v5402 = vsub.s32 %v5399, %v5401
    %v5403 = vrot.slane %v5389, %v5402
    %v5404 = vcombine.low %v5396, %v5403
    %v5405 = vcombine.low %v3740, %v3747
    %v5406 = vcombine.low %v3754, %v3761
    %v5408 = vunpack.c.l.s4 1983009808
    %v5409 = vunpack.c.0.s8 %v5408
    %v5410 = vlaneseq
    %v5411 = vshrl.u32 %v5410, 7
    %v5412 = vsub.s32 %v5409, %v5411
    %v5413 = vrot.slane %v5405, %v5412
    %v5415 = vunpack.c.l.s4 1983009808
    %v5416 = vunpack.c.0.s8 %v5415
    %v5417 = vlaneseq
    %v5418 = vshrl.u32 %v5417, 7
    %v5419 = vsub.s32 %v5416, %v5418
    %v5420 = vrot.slane %v5406, %v5419
    %v5421 = vcombine.low %v5413, %v5420
    %v5422 = vcombine.low %v3768, %v3775
    %v5423 = vcombine.low %v3782, %v3789
    %v5425 = vunpack.c.l.s4 1983009808
    %v5426 = vunpack.c.0.s8 %v5425
    %v5427 = vlaneseq
    %v5428 = vshrl.u32 %v5427, 7
    %v5429 = vsub.s32 %v5426, %v5428
    %v5430 = vrot.slane %v5422, %v5429
    %v5432 = vunpack.c.l.s4 1983009808
    %v5433 = vunpack.c.0.s8 %v5432
    %v5434 = vlaneseq
    %v5435 = vshrl.u32 %v5434, 7
    %v5436 = vsub.s32 %v5433, %v5435
    %v5437 = vrot.slane %v5423, %v5436
    %v5438 = vcombine.low %v5430, %v5437
    %v5439 = vcombine.low %v3796, %v3803
    %v5440 = vcombine.low %v3810, %v3817
    %v5442 = vunpack.c.l.s4 1983009808
    %v5443 = vunpack.c.0.s8 %v5442
    %v5444 = vlaneseq
    %v5445 = vshrl.u32 %v5444, 7
    %v5446 = vsub.s32 %v5443, %v5445
    %v5447 = vrot.slane %v5439, %v5446
    %v5449 = vunpack.c.l.s4 1983009808
    %v5450 = vunpack.c.0.s8 %v5449
    %v5451 = vlaneseq
    %v5452 = vshrl.u32 %v5451, 7
    %v5453 = vsub.s32 %v5450, %v5452
    %v5454 = vrot.slane %v5440, %v5453
    %v5455 = vcombine.low %v5447, %v5454
    %v5456 = vcombine.low %v3824, %v3831
    %v5457 = vcombine.low %v3838, %v3845
    %v5459 = vunpack.c.l.s4 1983009808
    %v5460 = vunpack.c.0.s8 %v5459
    %v5461 = vlaneseq
    %v5462 = vshrl.u32 %v5461, 7
    %v5463 = vsub.s32 %v5460, %v5462
    %v5464 = vrot.slane %v5456, %v5463
    %v5466 = vunpack.c.l.s4 1983009808
    %v5467 = vunpack.c.0.s8 %v5466
    %v5468 = vlaneseq
    %v5469 = vshrl.u32 %v5468, 7
    %v5470 = vsub.s32 %v5467, %v5469
    %v5471 = vrot.slane %v5457, %v5470
    %v5472 = vcombine.low %v5464, %v5471
    %v5473 = vcombine.low %v3852, %v3859
    %v5474 = vcombine.low %v3866, %v3873
    %v5476 = vunpack.c.l.s4 1983009808
    %v5477 = vunpack.c.0.s8 %v5476
    %v5478 = vlaneseq
    %v5479 = vshrl.u32 %v5478, 7
    %v5480 = vsub.s32 %v5477, %v5479
    %v5481 = vrot.slane %v5473, %v5480
    %v5483 = vunpack.c.l.s4 1983009808
    %v5484 = vunpack.c.0.s8 %v5483
    %v5485 = vlaneseq
    %v5486 = vshrl.u32 %v5485, 7
    %v5487 = vsub.s32 %v5484, %v5486
    %v5488 = vrot.slane %v5474, %v5487
    %v5489 = vcombine.low %v5481, %v5488
    %v5490 = vcombine.low %v3880, %v3887
    %v5491 = vcombine.low %v3894, %v3901
    %v5493 = vunpack.c.l.s4 1983009808
    %v5494 = vunpack.c.0.s8 %v5493
    %v5495 = vlaneseq
    %v5496 = vshrl.u32 %v5495, 7
    %v5497 = vsub.s32 %v5494, %v5496
    %v5498 = vrot.slane %v5490, %v5497
    %v5500 = vunpack.c.l.s4 1983009808
    %v5501 = vunpack.c.0.s8 %v5500
    %v5502 = vlaneseq
    %v5503 = vshrl.u32 %v5502, 7
    %v5504 = vsub.s32 %v5501, %v5503
    %v5505 = vrot.slane %v5491, %v5504
    %v5506 = vcombine.low %v5498, %v5505
    %v5507 = vcombine.low %v3908, %v3915
    %v5508 = vcombine.low %v3922, %v3929
    %v5510 = vunpack.c.l.s4 1983009808
    %v5511 = vunpack.c.0.s8 %v5510
    %v5512 = vlaneseq
    %v5513 = vshrl.u32 %v5512, 7
    %v5514 = vsub.s32 %v5511, %v5513
    %v5515 = vrot.slane %v5507, %v5514
    %v5517 = vunpack.c.l.s4 1983009808
    %v5518 = vunpack.c.0.s8 %v5517
    %v5519 = vlaneseq
    %v5520 = vshrl.u32 %v5519, 7
    %v5521 = vsub.s32 %v5518, %v5520
    %v5522 = vrot.slane %v5508, %v5521
    %v5523 = vcombine.low %v5515, %v5522
    %v5524 = vcombine.low %v3936, %v3943
    %v5525 = vcombine.low %v3950, %v3957
    %v5527 = vunpack.c.l.s4 1983009808
    %v5528 = vunpack.c.0.s8 %v5527
    %v5529 = vlaneseq
    %v5530 = vshrl.u32 %v5529, 7
    %v5531 = vsub.s32 %v5528, %v5530
    %v5532 = vrot.slane %v5524, %v5531
    %v5534 = vunpack.c.l.s4 1983009808
    %v5535 = vunpack.c.0.s8 %v5534
    %v5536 = vlaneseq
    %v5537 = vshrl.u32 %v5536, 7
    %v5538 = vsub.s32 %v5535, %v5537
    %v5539 = vrot.slane %v5525, %v5538
    %v5540 = vcombine.low %v5532, %v5539
    %v5541 = vcombine.low %v3964, %v3971
    %v5542 = vcombine.low %v3978, %v3985
    %v5544 = vunpack.c.l.s4 1983009808
    %v5545 = vunpack.c.0.s8 %v5544
    %v5546 = vlaneseq
    %v5547 = vshrl.u32 %v5546, 7
    %v5548 = vsub.s32 %v5545, %v5547
    %v5549 = vrot.slane %v5541, %v5548
    %v5551 = vunpack.c.l.s4 1983009808
    %v5552 = vunpack.c.0.s8 %v5551
    %v5553 = vlaneseq
    %v5554 = vshrl.u32 %v5553, 7
    %v5555 = vsub.s32 %v5552, %v5554
    %v5556 = vrot.slane %v5542, %v5555
    %v5557 = vcombine.low %v5549, %v5556
    %v5558 = vcombine.low %v3992, %v3999
    %v5559 = vcombine.low %v4006, %v4013
    %v5561 = vunpack.c.l.s4 1983009808
    %v5562 = vunpack.c.0.s8 %v5561
    %v5563 = vlaneseq
    %v5564 = vshrl.u32 %v5563, 7
    %v5565 = vsub.s32 %v5562, %v5564
    %v5566 = vrot.slane %v5558, %v5565
    %v5568 = vunpack.c.l.s4 1983009808
    %v5569 = vunpack.c.0.s8 %v5568
    %v5570 = vlaneseq
    %v5571 = vshrl.u32 %v5570, 7
    %v5572 = vsub.s32 %v5569, %v5571
    %v5573 = vrot.slane %v5559, %v5572
    %v5574 = vcombine.low %v5566, %v5573
    %v5575 = vcombine.low %v4020, %v4027
    %v5576 = vcombine.low %v4034, %v4041
    %v5578 = vunpack.c.l.s4 1983009808
    %v5579 = vunpack.c.0.s8 %v5578
    %v5580 = vlaneseq
    %v5581 = vshrl.u32 %v5580, 7
    %v5582 = vsub.s32 %v5579, %v5581
    %v5583 = vrot.slane %v5575, %v5582
    %v5585 = vunpack.c.l.s4 1983009808
    %v5586 = vunpack.c.0.s8 %v5585
    %v5587 = vlaneseq
    %v5588 = vshrl.u32 %v5587, 7
    %v5589 = vsub.s32 %v5586, %v5588
    %v5590 = vrot.slane %v5576, %v5589
    %v5591 = vcombine.low %v5583, %v5590
    %v5592 = vcombine.low %v4048, %v4055
    %v5593 = vcombine.low %v4062, %v4069
    %v5595 = vunpack.c.l.s4 1983009808
    %v5596 = vunpack.c.0.s8 %v5595
    %v5597 = vlaneseq
    %v5598 = vshrl.u32 %v5597, 7
    %v5599 = vsub.s32 %v5596, %v5598
    %v5600 = vrot.slane %v5592, %v5599
    %v5602 = vunpack.c.l.s4 1983009808
    %v5603 = vunpack.c.0.s8 %v5602
    %v5604 = vlaneseq
    %v5605 = vshrl.u32 %v5604, 7
    %v5606 = vsub.s32 %v5603, %v5605
    %v5607 = vrot.slane %v5593, %v5606
    %v5608 = vcombine.low %v5600, %v5607
    %v5609 = vcombine.low %v4076, %v4083
    %v5610 = vcombine.low %v4090, %v4097
    %v5612 = vunpack.c.l.s4 1983009808
    %v5613 = vunpack.c.0.s8 %v5612
    %v5614 = vlaneseq
    %v5615 = vshrl.u32 %v5614, 7
    %v5616 = vsub.s32 %v5613, %v5615
    %v5617 = vrot.slane %v5609, %v5616
    %v5619 = vunpack.c.l.s4 1983009808
    %v5620 = vunpack.c.0.s8 %v5619
    %v5621 = vlaneseq
    %v5622 = vshrl.u32 %v5621, 7
    %v5623 = vsub.s32 %v5620, %v5622
    %v5624 = vrot.slane %v5610, %v5623
    %v5625 = vcombine.low %v5617, %v5624
    %v5626 = vcombine.low %v4104, %v4111
    %v5627 = vcombine.low %v4118, %v4125
    %v5629 = vunpack.c.l.s4 1983009808
    %v5630 = vunpack.c.0.s8 %v5629
    %v5631 = vlaneseq
    %v5632 = vshrl.u32 %v5631, 7
    %v5633 = vsub.s32 %v5630, %v5632
    %v5634 = vrot.slane %v5626, %v5633
    %v5636 = vunpack.c.l.s4 1983009808
    %v5637 = vunpack.c.0.s8 %v5636
    %v5638 = vlaneseq
    %v5639 = vshrl.u32 %v5638, 7
    %v5640 = vsub.s32 %v5637, %v5639
    %v5641 = vrot.slane %v5627, %v5640
    %v5642 = vcombine.low %v5634, %v5641
    %v5643 = vcombine.low %v4132, %v4139
    %v5644 = vcombine.low %v4146, %v4153
    %v5646 = vunpack.c.l.s4 1983009808
    %v5647 = vunpack.c.0.s8 %v5646
    %v5648 = vlaneseq
    %v5649 = vshrl.u32 %v5648, 7
    %v5650 = vsub.s32 %v5647, %v5649
    %v5651 = vrot.slane %v5643, %v5650
    %v5653 = vunpack.c.l.s4 1983009808
    %v5654 = vunpack.c.0.s8 %v5653
    %v5655 = vlaneseq
    %v5656 = vshrl.u32 %v5655, 7
    %v5657 = vsub.s32 %v5654, %v5656
    %v5658 = vrot.slane %v5644, %v5657
    %v5659 = vcombine.low %v5651, %v5658
    %v5660 = vcombine.low %v4160, %v4167
    %v5661 = vcombine.low %v4174, %v4181
    %v5663 = vunpack.c.l.s4 1983009808
    %v5664 = vunpack.c.0.s8 %v5663
    %v5665 = vlaneseq
    %v5666 = vshrl.u32 %v5665, 7
    %v5667 = vsub.s32 %v5664, %v5666
    %v5668 = vrot.slane %v5660, %v5667
    %v5670 = vunpack.c.l.s4 1983009808
    %v5671 = vunpack.c.0.s8 %v5670
    %v5672 = vlaneseq
    %v5673 = vshrl.u32 %v5672, 7
    %v5674 = vsub.s32 %v5671, %v5673
    %v5675 = vrot.slane %v5661, %v5674
    %v5676 = vcombine.low %v5668, %v5675
    %v5677 = vcombine.low %v4188, %v4195
    %v5678 = vcombine.low %v4202, %v4209
    %v5680 = vunpack.c.l.s4 1983009808
    %v5681 = vunpack.c.0.s8 %v5680
    %v5682 = vlaneseq
    %v5683 = vshrl.u32 %v5682, 7
    %v5684 = vsub.s32 %v5681, %v5683
    %v5685 = vrot.slane %v5677, %v5684
    %v5687 = vunpack.c.l.s4 1983009808
    %v5688 = vunpack.c.0.s8 %v5687
    %v5689 = vlaneseq
    %v5690 = vshrl.u32 %v5689, 7
    %v5691 = vsub.s32 %v5688, %v5690
    %v5692 = vrot.slane %v5678, %v5691
    %v5693 = vcombine.low %v5685, %v5692
    %v5694 = vcombine.low %v4216, %v4223
    %v5695 = vcombine.low %v4230, %v4237
    %v5697 = vunpack.c.l.s4 1983009808
    %v5698 = vunpack.c.0.s8 %v5697
    %v5699 = vlaneseq
    %v5700 = vshrl.u32 %v5699, 7
    %v5701 = vsub.s32 %v5698, %v5700
    %v5702 = vrot.slane %v5694, %v5701
    %v5704 = vunpack.c.l.s4 1983009808
    %v5705 = vunpack.c.0.s8 %v5704
    %v5706 = vlaneseq
    %v5707 = vshrl.u32 %v5706, 7
    %v5708 = vsub.s32 %v5705, %v5707
    %v5709 = vrot.slane %v5695, %v5708
    %v5710 = vcombine.low %v5702, %v5709
    %v5711 = vcombine.low %v4244, %v4251
    %v5712 = vcombine.low %v4258, %v4265
    %v5714 = vunpack.c.l.s4 1983009808
    %v5715 = vunpack.c.0.s8 %v5714
    %v5716 = vlaneseq
    %v5717 = vshrl.u32 %v5716, 7
    %v5718 = vsub.s32 %v5715, %v5717
    %v5719 = vrot.slane %v5711, %v5718
    %v5721 = vunpack.c.l.s4 1983009808
    %v5722 = vunpack.c.0.s8 %v5721
    %v5723 = vlaneseq
    %v5724 = vshrl.u32 %v5723, 7
    %v5725 = vsub.s32 %v5722, %v5724
    %v5726 = vrot.slane %v5712, %v5725
    %v5727 = vcombine.low %v5719, %v5726
    %v5728 = vcombine.low %v4272, %v4279
    %v5729 = vcombine.low %v4286, %v4293
    %v5731 = vunpack.c.l.s4 1983009808
    %v5732 = vunpack.c.0.s8 %v5731
    %v5733 = vlaneseq
    %v5734 = vshrl.u32 %v5733, 7
    %v5735 = vsub.s32 %v5732, %v5734
    %v5736 = vrot.slane %v5728, %v5735
    %v5738 = vunpack.c.l.s4 1983009808
    %v5739 = vunpack.c.0.s8 %v5738
    %v5740 = vlaneseq
    %v5741 = vshrl.u32 %v5740, 7
    %v5742 = vsub.s32 %v5739, %v5741
    %v5743 = vrot.slane %v5729, %v5742
    %v5744 = vcombine.low %v5736, %v5743
    %v5745 = vcombine.low %v4300, %v4307
    %v5746 = vcombine.low %v4314, %v4321
    %v5748 = vunpack.c.l.s4 1983009808
    %v5749 = vunpack.c.0.s8 %v5748
    %v5750 = vlaneseq
    %v5751 = vshrl.u32 %v5750, 7
    %v5752 = vsub.s32 %v5749, %v5751
    %v5753 = vrot.slane %v5745, %v5752
    %v5755 = vunpack.c.l.s4 1983009808
    %v5756 = vunpack.c.0.s8 %v5755
    %v5757 = vlaneseq
    %v5758 = vshrl.u32 %v5757, 7
    %v5759 = vsub.s32 %v5756, %v5758
    %v5760 = vrot.slane %v5746, %v5759
    %v5761 = vcombine.low %v5753, %v5760
    %v5762 = vcombine.low %v4328, %v4335
    %v5763 = vcombine.low %v4342, %v4349
    %v5765 = vunpack.c.l.s4 1983009808
    %v5766 = vunpack.c.0.s8 %v5765
    %v5767 = vlaneseq
    %v5768 = vshrl.u32 %v5767, 7
    %v5769 = vsub.s32 %v5766, %v5768
    %v5770 = vrot.slane %v5762, %v5769
    %v5772 = vunpack.c.l.s4 1983009808
    %v5773 = vunpack.c.0.s8 %v5772
    %v5774 = vlaneseq
    %v5775 = vshrl.u32 %v5774, 7
    %v5776 = vsub.s32 %v5773, %v5775
    %v5777 = vrot.slane %v5763, %v5776
    %v5778 = vcombine.low %v5770, %v5777
    %v5779 = vcombine.low %v4356, %v4363
    %v5780 = vcombine.low %v4370, %v4377
    %v5782 = vunpack.c.l.s4 1983009808
    %v5783 = vunpack.c.0.s8 %v5782
    %v5784 = vlaneseq
    %v5785 = vshrl.u32 %v5784, 7
    %v5786 = vsub.s32 %v5783, %v5785
    %v5787 = vrot.slane %v5779, %v5786
    %v5789 = vunpack.c.l.s4 1983009808
    %v5790 = vunpack.c.0.s8 %v5789
    %v5791 = vlaneseq
    %v5792 = vshrl.u32 %v5791, 7
    %v5793 = vsub.s32 %v5790, %v5792
    %v5794 = vrot.slane %v5780, %v5793
    %v5795 = vcombine.low %v5787, %v5794
    %v5796 = vcombine.low %v4384, %v4391
    %v5797 = vcombine.low %v4398, %v4405
    %v5799 = vunpack.c.l.s4 1983009808
    %v5800 = vunpack.c.0.s8 %v5799
    %v5801 = vlaneseq
    %v5802 = vshrl.u32 %v5801, 7
    %v5803 = vsub.s32 %v5800, %v5802
    %v5804 = vrot.slane %v5796, %v5803
    %v5806 = vunpack.c.l.s4 1983009808
    %v5807 = vunpack.c.0.s8 %v5806
    %v5808 = vlaneseq
    %v5809 = vshrl.u32 %v5808, 7
    %v5810 = vsub.s32 %v5807, %v5809
    %v5811 = vrot.slane %v5797, %v5810
    %v5812 = vcombine.low %v5804, %v5811
    %v5813 = vcombine.low %v4412, %v4419
    %v5814 = vcombine.low %v4426, %v4433
    %v5816 = vunpack.c.l.s4 1983009808
    %v5817 = vunpack.c.0.s8 %v5816
    %v5818 = vlaneseq
    %v5819 = vshrl.u32 %v5818, 7
    %v5820 = vsub.s32 %v5817, %v5819
    %v5821 = vrot.slane %v5813, %v5820
    %v5823 = vunpack.c.l.s4 1983009808
    %v5824 = vunpack.c.0.s8 %v5823
    %v5825 = vlaneseq
    %v5826 = vshrl.u32 %v5825, 7
    %v5827 = vsub.s32 %v5824, %v5826
    %v5828 = vrot.slane %v5814, %v5827
    %v5829 = vcombine.low %v5821, %v5828
    %v5830 = vcombine.low %v4440, %v4447
    %v5831 = vcombine.low %v4454, %v4461
    %v5833 = vunpack.c.l.s4 1983009808
    %v5834 = vunpack.c.0.s8 %v5833
    %v5835 = vlaneseq
    %v5836 = vshrl.u32 %v5835, 7
    %v5837 = vsub.s32 %v5834, %v5836
    %v5838 = vrot.slane %v5830, %v5837
    %v5840 = vunpack.c.l.s4 1983009808
    %v5841 = vunpack.c.0.s8 %v5840
    %v5842 = vlaneseq
    %v5843 = vshrl.u32 %v5842, 7
    %v5844 = vsub.s32 %v5841, %v5843
    %v5845 = vrot.slane %v5831, %v5844
    %v5846 = vcombine.low %v5838, %v5845
    %v5847 = vcombine.low %v4468, %v4475
    %v5848 = vcombine.low %v4482, %v4489
    %v5850 = vunpack.c.l.s4 1983009808
    %v5851 = vunpack.c.0.s8 %v5850
    %v5852 = vlaneseq
    %v5853 = vshrl.u32 %v5852, 7
    %v5854 = vsub.s32 %v5851, %v5853
    %v5855 = vrot.slane %v5847, %v5854
    %v5857 = vunpack.c.l.s4 1983009808
    %v5858 = vunpack.c.0.s8 %v5857
    %v5859 = vlaneseq
    %v5860 = vshrl.u32 %v5859, 7
    %v5861 = vsub.s32 %v5858, %v5860
    %v5862 = vrot.slane %v5848, %v5861
    %v5863 = vcombine.low %v5855, %v5862
    %v5864 = vcombine.low %v4496, %v4503
    %v5865 = vcombine.low %v4510, %v4517
    %v5867 = vunpack.c.l.s4 1983009808
    %v5868 = vunpack.c.0.s8 %v5867
    %v5869 = vlaneseq
    %v5870 = vshrl.u32 %v5869, 7
    %v5871 = vsub.s32 %v5868, %v5870
    %v5872 = vrot.slane %v5864, %v5871
    %v5874 = vunpack.c.l.s4 1983009808
    %v5875 = vunpack.c.0.s8 %v5874
    %v5876 = vlaneseq
    %v5877 = vshrl.u32 %v5876, 7
    %v5878 = vsub.s32 %v5875, %v5877
    %v5879 = vrot.slane %v5865, %v5878
    %v5880 = vcombine.low %v5872, %v5879
    %v5881 = vcombine.low %v4524, %v4531
    %v5882 = vcombine.low %v4538, %v4545
    %v5884 = vunpack.c.l.s4 1983009808
    %v5885 = vunpack.c.0.s8 %v5884
    %v5886 = vlaneseq
    %v5887 = vshrl.u32 %v5886, 7
    %v5888 = vsub.s32 %v5885, %v5887
    %v5889 = vrot.slane %v5881, %v5888
    %v5891 = vunpack.c.l.s4 1983009808
    %v5892 = vunpack.c.0.s8 %v5891
    %v5893 = vlaneseq
    %v5894 = vshrl.u32 %v5893, 7
    %v5895 = vsub.s32 %v5892, %v5894
    %v5896 = vrot.slane %v5882, %v5895
    %v5897 = vcombine.low %v5889, %v5896
    %v5898 = vcombine.low %v4552, %v4559
    %v5899 = vcombine.low %v4566, %v4573
    %v5901 = vunpack.c.l.s4 1983009808
    %v5902 = vunpack.c.0.s8 %v5901
    %v5903 = vlaneseq
    %v5904 = vshrl.u32 %v5903, 7
    %v5905 = vsub.s32 %v5902, %v5904
    %v5906 = vrot.slane %v5898, %v5905
    %v5908 = vunpack.c.l.s4 1983009808
    %v5909 = vunpack.c.0.s8 %v5908
    %v5910 = vlaneseq
    %v5911 = vshrl.u32 %v5910, 7
    %v5912 = vsub.s32 %v5909, %v5911
    %v5913 = vrot.slane %v5899, %v5912
    %v5914 = vcombine.low %v5906, %v5913
    %v5915 = vcombine.low %v4580, %v4587
    %v5916 = vcombine.low %v4594, %v4601
    %v5918 = vunpack.c.l.s4 1983009808
    %v5919 = vunpack.c.0.s8 %v5918
    %v5920 = vlaneseq
    %v5921 = vshrl.u32 %v5920, 7
    %v5922 = vsub.s32 %v5919, %v5921
    %v5923 = vrot.slane %v5915, %v5922
    %v5925 = vunpack.c.l.s4 1983009808
    %v5926 = vunpack.c.0.s8 %v5925
    %v5927 = vlaneseq
    %v5928 = vshrl.u32 %v5927, 7
    %v5929 = vsub.s32 %v5926, %v5928
    %v5930 = vrot.slane %v5916, %v5929
    %v5931 = vcombine.low %v5923, %v5930
    %v5932 = vcombine.low %v4608, %v4615
    %v5933 = vcombine.low %v4622, %v4629
    %v5935 = vunpack.c.l.s4 1983009808
    %v5936 = vunpack.c.0.s8 %v5935
    %v5937 = vlaneseq
    %v5938 = vshrl.u32 %v5937, 7
    %v5939 = vsub.s32 %v5936, %v5938
    %v5940 = vrot.slane %v5932, %v5939
    %v5942 = vunpack.c.l.s4 1983009808
    %v5943 = vunpack.c.0.s8 %v5942
    %v5944 = vlaneseq
    %v5945 = vshrl.u32 %v5944, 7
    %v5946 = vsub.s32 %v5943, %v5945
    %v5947 = vrot.slane %v5933, %v5946
    %v5948 = vcombine.low %v5940, %v5947
    %v5949 = vcombine.low %v4636, %v4643
    %v5950 = vcombine.low %v4650, %v4657
    %v5952 = vunpack.c.l.s4 1983009808
    %v5953 = vunpack.c.0.s8 %v5952
    %v5954 = vlaneseq
    %v5955 = vshrl.u32 %v5954, 7
    %v5956 = vsub.s32 %v5953, %v5955
    %v5957 = vrot.slane %v5949, %v5956
    %v5959 = vunpack.c.l.s4 1983009808
    %v5960 = vunpack.c.0.s8 %v5959
    %v5961 = vlaneseq
    %v5962 = vshrl.u32 %v5961, 7
    %v5963 = vsub.s32 %v5960, %v5962
    %v5964 = vrot.slane %v5950, %v5963
    %v5965 = vcombine.low %v5957, %v5964
    %v5966 = vcombine.low %v4664, %v4671
    %v5967 = vcombine.low %v4678, %v4685
    %v5969 = vunpack.c.l.s4 1983009808
    %v5970 = vunpack.c.0.s8 %v5969
    %v5971 = vlaneseq
    %v5972 = vshrl.u32 %v5971, 7
    %v5973 = vsub.s32 %v5970, %v5972
    %v5974 = vrot.slane %v5966, %v5973
    %v5976 = vunpack.c.l.s4 1983009808
    %v5977 = vunpack.c.0.s8 %v5976
    %v5978 = vlaneseq
    %v5979 = vshrl.u32 %v5978, 7
    %v5980 = vsub.s32 %v5977, %v5979
    %v5981 = vrot.slane %v5967, %v5980
    %v5982 = vcombine.low %v5974, %v5981
    %v5983 = vcombine.low %v4692, %v4699
    %v5984 = vcombine.low %v4706, %v4713
    %v5986 = vunpack.c.l.s4 1983009808
    %v5987 = vunpack.c.0.s8 %v5986
    %v5988 = vlaneseq
    %v5989 = vshrl.u32 %v5988, 7
    %v5990 = vsub.s32 %v5987, %v5989
    %v5991 = vrot.slane %v5983, %v5990
    %v5993 = vunpack.c.l.s4 1983009808
    %v5994 = vunpack.c.0.s8 %v5993
    %v5995 = vlaneseq
    %v5996 = vshrl.u32 %v5995, 7
    %v5997 = vsub.s32 %v5994, %v5996
    %v5998 = vrot.slane %v5984, %v5997
    %v5999 = vcombine.low %v5991, %v5998
    %v6000 = vcombine.low %v4720, %v4727
    %v6001 = vcombine.low %v4734, %v4741
    %v6003 = vunpack.c.l.s4 1983009808
    %v6004 = vunpack.c.0.s8 %v6003
    %v6005 = vlaneseq
    %v6006 = vshrl.u32 %v6005, 7
    %v6007 = vsub.s32 %v6004, %v6006
    %v6008 = vrot.slane %v6000, %v6007
    %v6010 = vunpack.c.l.s4 1983009808
    %v6011 = vunpack.c.0.s8 %v6010
    %v6012 = vlaneseq
    %v6013 = vshrl.u32 %v6012, 7
    %v6014 = vsub.s32 %v6011, %v6013
    %v6015 = vrot.slane %v6001, %v6014
    %v6016 = vcombine.low %v6008, %v6015
    %v6017 = vcombine.low %v4748, %v4755
    %v6018 = vcombine.low %v4762, %v4769
    %v6020 = vunpack.c.l.s4 1983009808
    %v6021 = vunpack.c.0.s8 %v6020
    %v6022 = vlaneseq
    %v6023 = vshrl.u32 %v6022, 7
    %v6024 = vsub.s32 %v6021, %v6023
    %v6025 = vrot.slane %v6017, %v6024
    %v6027 = vunpack.c.l.s4 1983009808
    %v6028 = vunpack.c.0.s8 %v6027
    %v6029 = vlaneseq
    %v6030 = vshrl.u32 %v6029, 7
    %v6031 = vsub.s32 %v6028, %v6030
    %v6032 = vrot.slane %v6018, %v6031
    %v6033 = vcombine.low %v6025, %v6032
    %v6034 = vcombine.low %v4776, %v4783
    %v6035 = vcombine.low %v4790, %v4797
    %v6037 = vunpack.c.l.s4 1983009808
    %v6038 = vunpack.c.0.s8 %v6037
    %v6039 = vlaneseq
    %v6040 = vshrl.u32 %v6039, 7
    %v6041 = vsub.s32 %v6038, %v6040
    %v6042 = vrot.slane %v6034, %v6041
    %v6044 = vunpack.c.l.s4 1983009808
    %v6045 = vunpack.c.0.s8 %v6044
    %v6046 = vlaneseq
    %v6047 = vshrl.u32 %v6046, 7
    %v6048 = vsub.s32 %v6045, %v6047
    %v6049 = vrot.slane %v6035, %v6048
    %v6050 = vcombine.low %v6042, %v6049
    %v6051 = vcombine.low %v4804, %v4811
    %v6052 = vcombine.low %v4818, %v4825
    %v6054 = vunpack.c.l.s4 1983009808
    %v6055 = vunpack.c.0.s8 %v6054
    %v6056 = vlaneseq
    %v6057 = vshrl.u32 %v6056, 7
    %v6058 = vsub.s32 %v6055, %v6057
    %v6059 = vrot.slane %v6051, %v6058
    %v6061 = vunpack.c.l.s4 1983009808
    %v6062 = vunpack.c.0.s8 %v6061
    %v6063 = vlaneseq
    %v6064 = vshrl.u32 %v6063, 7
    %v6065 = vsub.s32 %v6062, %v6064
    %v6066 = vrot.slane %v6052, %v6065
    %v6067 = vcombine.low %v6059, %v6066
    %v6068 = vcombine.low %v4832, %v4839
    %v6069 = vcombine.low %v4846, %v4853
    %v6071 = vunpack.c.l.s4 1983009808
    %v6072 = vunpack.c.0.s8 %v6071
    %v6073 = vlaneseq
    %v6074 = vshrl.u32 %v6073, 7
    %v6075 = vsub.s32 %v6072, %v6074
    %v6076 = vrot.slane %v6068, %v6075
    %v6078 = vunpack.c.l.s4 1983009808
    %v6079 = vunpack.c.0.s8 %v6078
    %v6080 = vlaneseq
    %v6081 = vshrl.u32 %v6080, 7
    %v6082 = vsub.s32 %v6079, %v6081
    %v6083 = vrot.slane %v6069, %v6082
    %v6084 = vcombine.low %v6076, %v6083
    %v6085 = vcombine.low %v4860, %v4867
    %v6086 = vcombine.low %v4874, %v4881
    %v6088 = vunpack.c.l.s4 1983009808
    %v6089 = vunpack.c.0.s8 %v6088
    %v6090 = vlaneseq
    %v6091 = vshrl.u32 %v6090, 7
    %v6092 = vsub.s32 %v6089, %v6091
    %v6093 = vrot.slane %v6085, %v6092
    %v6095 = vunpack.c.l.s4 1983009808
    %v6096 = vunpack.c.0.s8 %v6095
    %v6097 = vlaneseq
    %v6098 = vshrl.u32 %v6097, 7
    %v6099 = vsub.s32 %v6096, %v6098
    %v6100 = vrot.slane %v6086, %v6099
    %v6101 = vcombine.low %v6093, %v6100
    %v6102 = vcombine.low %v4888, %v4895
    %v6103 = vcombine.low %v4902, %v4909
    %v6105 = vunpack.c.l.s4 1983009808
    %v6106 = vunpack.c.0.s8 %v6105
    %v6107 = vlaneseq
    %v6108 = vshrl.u32 %v6107, 7
    %v6109 = vsub.s32 %v6106, %v6108
    %v6110 = vrot.slane %v6102, %v6109
    %v6112 = vunpack.c.l.s4 1983009808
    %v6113 = vunpack.c.0.s8 %v6112
    %v6114 = vlaneseq
    %v6115 = vshrl.u32 %v6114, 7
    %v6116 = vsub.s32 %v6113, %v6115
    %v6117 = vrot.slane %v6103, %v6116
    %v6118 = vcombine.low %v6110, %v6117
    %v6119 = vcombine.low %v4916, %v4923
    %v6120 = vcombine.low %v4930, %v4937
    %v6122 = vunpack.c.l.s4 1983009808
    %v6123 = vunpack.c.0.s8 %v6122
    %v6124 = vlaneseq
    %v6125 = vshrl.u32 %v6124, 7
    %v6126 = vsub.s32 %v6123, %v6125
    %v6127 = vrot.slane %v6119, %v6126
    %v6129 = vunpack.c.l.s4 1983009808
    %v6130 = vunpack.c.0.s8 %v6129
    %v6131 = vlaneseq
    %v6132 = vshrl.u32 %v6131, 7
    %v6133 = vsub.s32 %v6130, %v6132
    %v6134 = vrot.slane %v6120, %v6133
    %v6135 = vcombine.low %v6127, %v6134
    %v6136 = vcombine.low %v4944, %v4951
    %v6137 = vcombine.low %v4958, %v4965
    %v6139 = vunpack.c.l.s4 1983009808
    %v6140 = vunpack.c.0.s8 %v6139
    %v6141 = vlaneseq
    %v6142 = vshrl.u32 %v6141, 7
    %v6143 = vsub.s32 %v6140, %v6142
    %v6144 = vrot.slane %v6136, %v6143
    %v6146 = vunpack.c.l.s4 1983009808
    %v6147 = vunpack.c.0.s8 %v6146
    %v6148 = vlaneseq
    %v6149 = vshrl.u32 %v6148, 7
    %v6150 = vsub.s32 %v6147, %v6149
    %v6151 = vrot.slane %v6137, %v6150
    %v6152 = vcombine.low %v6144, %v6151
    %v6153 = vcombine.low %v4972, %v4979
    %v6154 = vcombine.low %v4986, %v4993
    %v6156 = vunpack.c.l.s4 1983009808
    %v6157 = vunpack.c.0.s8 %v6156
    %v6158 = vlaneseq
    %v6159 = vshrl.u32 %v6158, 7
    %v6160 = vsub.s32 %v6157, %v6159
    %v6161 = vrot.slane %v6153, %v6160
    %v6163 = vunpack.c.l.s4 1983009808
    %v6164 = vunpack.c.0.s8 %v6163
    %v6165 = vlaneseq
    %v6166 = vshrl.u32 %v6165, 7
    %v6167 = vsub.s32 %v6164, %v6166
    %v6168 = vrot.slane %v6154, %v6167
    %v6169 = vcombine.low %v6161, %v6168
    %v6170 = vcombine.low %v5000, %v5007
    %v6171 = vcombine.low %v5014, %v5021
    %v6173 = vunpack.c.l.s4 1983009808
    %v6174 = vunpack.c.0.s8 %v6173
    %v6175 = vlaneseq
    %v6176 = vshrl.u32 %v6175, 7
    %v6177 = vsub.s32 %v6174, %v6176
    %v6178 = vrot.slane %v6170, %v6177
    %v6180 = vunpack.c.l.s4 1983009808
    %v6181 = vunpack.c.0.s8 %v6180
    %v6182 = vlaneseq
    %v6183 = vshrl.u32 %v6182, 7
    %v6184 = vsub.s32 %v6181, %v6183
    %v6185 = vrot.slane %v6171, %v6184
    %v6186 = vcombine.low %v6178, %v6185
    %v6187 = vcombine.low %v5028, %v5035
    %v6188 = vcombine.low %v5042, %v5049
    %v6190 = vunpack.c.l.s4 1983009808
    %v6191 = vunpack.c.0.s8 %v6190
    %v6192 = vlaneseq
    %v6193 = vshrl.u32 %v6192, 7
    %v6194 = vsub.s32 %v6191, %v6193
    %v6195 = vrot.slane %v6187, %v6194
    %v6197 = vunpack.c.l.s4 1983009808
    %v6198 = vunpack.c.0.s8 %v6197
    %v6199 = vlaneseq
    %v6200 = vshrl.u32 %v6199, 7
    %v6201 = vsub.s32 %v6198, %v6200
    %v6202 = vrot.slane %v6188, %v6201
    %v6203 = vcombine.low %v6195, %v6202
    %v6204 = vcombine.low %v5056, %v5063
    %v6205 = vcombine.low %v5070, %v5077
    %v6207 = vunpack.c.l.s4 1983009808
    %v6208 = vunpack.c.0.s8 %v6207
    %v6209 = vlaneseq
    %v6210 = vshrl.u32 %v6209, 7
    %v6211 = vsub.s32 %v6208, %v6210
    %v6212 = vrot.slane %v6204, %v6211
    %v6214 = vunpack.c.l.s4 1983009808
    %v6215 = vunpack.c.0.s8 %v6214
    %v6216 = vlaneseq
    %v6217 = vshrl.u32 %v6216, 7
    %v6218 = vsub.s32 %v6215, %v6217
    %v6219 = vrot.slane %v6205, %v6218
    %v6220 = vcombine.low %v6212, %v6219
    %v6221 = vcombine.low %v5084, %v5091
    %v6222 = vcombine.low %v5098, %v5105
    %v6224 = vunpack.c.l.s4 1983009808
    %v6225 = vunpack.c.0.s8 %v6224
    %v6226 = vlaneseq
    %v6227 = vshrl.u32 %v6226, 7
    %v6228 = vsub.s32 %v6225, %v6227
    %v6229 = vrot.slane %v6221, %v6228
    %v6231 = vunpack.c.l.s4 1983009808
    %v6232 = vunpack.c.0.s8 %v6231
    %v6233 = vlaneseq
    %v6234 = vshrl.u32 %v6233, 7
    %v6235 = vsub.s32 %v6232, %v6234
    %v6236 = vrot.slane %v6222, %v6235
    %v6237 = vcombine.low %v6229, %v6236
    %v6238 = vcombine.low %v5112, %v5119
    %v6239 = vcombine.low %v5126, %v5133
    %v6241 = vunpack.c.l.s4 1983009808
    %v6242 = vunpack.c.0.s8 %v6241
    %v6243 = vlaneseq
    %v6244 = vshrl.u32 %v6243, 7
    %v6245 = vsub.s32 %v6242, %v6244
    %v6246 = vrot.slane %v6238, %v6245
    %v6248 = vunpack.c.l.s4 1983009808
    %v6249 = vunpack.c.0.s8 %v6248
    %v6250 = vlaneseq
    %v6251 = vshrl.u32 %v6250, 7
    %v6252 = vsub.s32 %v6249, %v6251
    %v6253 = vrot.slane %v6239, %v6252
    %v6254 = vcombine.low %v6246, %v6253
    %v6255 = vcombine.low %v5140, %v5147
    %v6256 = vcombine.low %v5154, %v5161
    %v6258 = vunpack.c.l.s4 1983009808
    %v6259 = vunpack.c.0.s8 %v6258
    %v6260 = vlaneseq
    %v6261 = vshrl.u32 %v6260, 7
    %v6262 = vsub.s32 %v6259, %v6261
    %v6263 = vrot.slane %v6255, %v6262
    %v6265 = vunpack.c.l.s4 1983009808
    %v6266 = vunpack.c.0.s8 %v6265
    %v6267 = vlaneseq
    %v6268 = vshrl.u32 %v6267, 7
    %v6269 = vsub.s32 %v6266, %v6268
    %v6270 = vrot.slane %v6256, %v6269
    %v6271 = vcombine.low %v6263, %v6270
    %v6272 = vcombine.low %v5168, %v5175
    %v6273 = vcombine.low %v5182, %v5189
    %v6275 = vunpack.c.l.s4 1983009808
    %v6276 = vunpack.c.0.s8 %v6275
    %v6277 = vlaneseq
    %v6278 = vshrl.u32 %v6277, 7
    %v6279 = vsub.s32 %v6276, %v6278
    %v6280 = vrot.slane %v6272, %v6279
    %v6282 = vunpack.c.l.s4 1983009808
    %v6283 = vunpack.c.0.s8 %v6282
    %v6284 = vlaneseq
    %v6285 = vshrl.u32 %v6284, 7
    %v6286 = vsub.s32 %v6283, %v6285
    %v6287 = vrot.slane %v6273, %v6286
    %v6288 = vcombine.low %v6280, %v6287
    %v6289 = vcombine.low %v5196, %v5203
    %v6290 = vcombine.low %v5210, %v5217
    %v6292 = vunpack.c.l.s4 1983009808
    %v6293 = vunpack.c.0.s8 %v6292
    %v6294 = vlaneseq
    %v6295 = vshrl.u32 %v6294, 7
    %v6296 = vsub.s32 %v6293, %v6295
    %v6297 = vrot.slane %v6289, %v6296
    %v6299 = vunpack.c.l.s4 1983009808
    %v6300 = vunpack.c.0.s8 %v6299
    %v6301 = vlaneseq
    %v6302 = vshrl.u32 %v6301, 7
    %v6303 = vsub.s32 %v6300, %v6302
    %v6304 = vrot.slane %v6290, %v6303
    %v6305 = vcombine.low %v6297, %v6304
    %6306 = vset.pattern.permute.xlu0 0
    %6307 = vperm.xlu0 %6306, %v5234
    %v6308 = vpop.permute.xlu0 %6307
    %6309 = vset.pattern.permute.xlu0 0
    %6310 = vperm.xlu0 %6309, %v5251
    %v6311 = vpop.permute.xlu0 %6310
    %6312 = vset.pattern.permute.xlu0 0
    %6313 = vperm.xlu0 %6312, %v5268
    %v6314 = vpop.permute.xlu0 %6313
    %6315 = vset.pattern.permute.xlu0 0
    %6316 = vperm.xlu0 %6315, %v5285
    %v6317 = vpop.permute.xlu0 %6316
    %6318 = vset.pattern.permute.xlu0 0
    %6319 = vperm.xlu0 %6318, %v5302
    %v6320 = vpop.permute.xlu0 %6319
    %6321 = vset.pattern.permute.xlu0 0
    %6322 = vperm.xlu0 %6321, %v5319
    %v6323 = vpop.permute.xlu0 %6322
    %6324 = vset.pattern.permute.xlu0 0
    %6325 = vperm.xlu0 %6324, %v5336
    %v6326 = vpop.permute.xlu0 %6325
    %6327 = vset.pattern.permute.xlu0 0
    %6328 = vperm.xlu0 %6327, %v5353
    %v6329 = vpop.permute.xlu0 %6328
    %6330 = vset.pattern.permute.xlu0 0
    %6331 = vperm.xlu0 %6330, %v5370
    %v6332 = vpop.permute.xlu0 %6331
    %6333 = vset.pattern.permute.xlu0 0
    %6334 = vperm.xlu0 %6333, %v5387
    %v6335 = vpop.permute.xlu0 %6334
    %6336 = vset.pattern.permute.xlu0 0
    %6337 = vperm.xlu0 %6336, %v5404
    %v6338 = vpop.permute.xlu0 %6337
    %6339 = vset.pattern.permute.xlu0 0
    %6340 = vperm.xlu0 %6339, %v5421
    %v6341 = vpop.permute.xlu0 %6340
    %6342 = vset.pattern.permute.xlu0 0
    %6343 = vperm.xlu0 %6342, %v5438
    %v6344 = vpop.permute.xlu0 %6343
    %6345 = vset.pattern.permute.xlu0 0
    %6346 = vperm.xlu0 %6345, %v5455
    %v6347 = vpop.permute.xlu0 %6346
    %6348 = vset.pattern.permute.xlu0 0
    %6349 = vperm.xlu0 %6348, %v5472
    %v6350 = vpop.permute.xlu0 %6349
    %6351 = vset.pattern.permute.xlu0 0
    %6352 = vperm.xlu0 %6351, %v5489
    %v6353 = vpop.permute.xlu0 %6352
    %6354 = vset.pattern.permute.xlu0 0
    %6355 = vperm.xlu0 %6354, %v5506
    %v6356 = vpop.permute.xlu0 %6355
    %6357 = vset.pattern.permute.xlu0 0
    %6358 = vperm.xlu0 %6357, %v5523
    %v6359 = vpop.permute.xlu0 %6358
    %6360 = vset.pattern.permute.xlu0 0
    %6361 = vperm.xlu0 %6360, %v5540
    %v6362 = vpop.permute.xlu0 %6361
    %6363 = vset.pattern.permute.xlu0 0
    %6364 = vperm.xlu0 %6363, %v5557
    %v6365 = vpop.permute.xlu0 %6364
    %6366 = vset.pattern.permute.xlu0 0
    %6367 = vperm.xlu0 %6366, %v5574
    %v6368 = vpop.permute.xlu0 %6367
    %6369 = vset.pattern.permute.xlu0 0
    %6370 = vperm.xlu0 %6369, %v5591
    %v6371 = vpop.permute.xlu0 %6370
    %6372 = vset.pattern.permute.xlu0 0
    %6373 = vperm.xlu0 %6372, %v5608
    %v6374 = vpop.permute.xlu0 %6373
    %6375 = vset.pattern.permute.xlu0 0
    %6376 = vperm.xlu0 %6375, %v5625
    %v6377 = vpop.permute.xlu0 %6376
    %6378 = vset.pattern.permute.xlu0 0
    %6379 = vperm.xlu0 %6378, %v5642
    %v6380 = vpop.permute.xlu0 %6379
    %6381 = vset.pattern.permute.xlu0 0
    %6382 = vperm.xlu0 %6381, %v5659
    %v6383 = vpop.permute.xlu0 %6382
    %6384 = vset.pattern.permute.xlu0 0
    %6385 = vperm.xlu0 %6384, %v5676
    %v6386 = vpop.permute.xlu0 %6385
    %6387 = vset.pattern.permute.xlu0 0
    %6388 = vperm.xlu0 %6387, %v5693
    %v6389 = vpop.permute.xlu0 %6388
    %6390 = vset.pattern.permute.xlu0 0
    %6391 = vperm.xlu0 %6390, %v5710
    %v6392 = vpop.permute.xlu0 %6391
    %6393 = vset.pattern.permute.xlu0 0
    %6394 = vperm.xlu0 %6393, %v5727
    %v6395 = vpop.permute.xlu0 %6394
    %6396 = vset.pattern.permute.xlu0 0
    %6397 = vperm.xlu0 %6396, %v5744
    %v6398 = vpop.permute.xlu0 %6397
    %6399 = vset.pattern.permute.xlu0 0
    %6400 = vperm.xlu0 %6399, %v5761
    %v6401 = vpop.permute.xlu0 %6400
    %6402 = vset.pattern.permute.xlu0 0
    %6403 = vperm.xlu0 %6402, %v5778
    %v6404 = vpop.permute.xlu0 %6403
    %6405 = vset.pattern.permute.xlu0 0
    %6406 = vperm.xlu0 %6405, %v5795
    %v6407 = vpop.permute.xlu0 %6406
    %6408 = vset.pattern.permute.xlu0 0
    %6409 = vperm.xlu0 %6408, %v5812
    %v6410 = vpop.permute.xlu0 %6409
    %6411 = vset.pattern.permute.xlu0 0
    %6412 = vperm.xlu0 %6411, %v5829
    %v6413 = vpop.permute.xlu0 %6412
    %6414 = vset.pattern.permute.xlu0 0
    %6415 = vperm.xlu0 %6414, %v5846
    %v6416 = vpop.permute.xlu0 %6415
    %6417 = vset.pattern.permute.xlu0 0
    %6418 = vperm.xlu0 %6417, %v5863
    %v6419 = vpop.permute.xlu0 %6418
    %6420 = vset.pattern.permute.xlu0 0
    %6421 = vperm.xlu0 %6420, %v5880
    %v6422 = vpop.permute.xlu0 %6421
    %6423 = vset.pattern.permute.xlu0 0
    %6424 = vperm.xlu0 %6423, %v5897
    %v6425 = vpop.permute.xlu0 %6424
    %6426 = vset.pattern.permute.xlu0 0
    %6427 = vperm.xlu0 %6426, %v5914
    %v6428 = vpop.permute.xlu0 %6427
    %6429 = vset.pattern.permute.xlu0 0
    %6430 = vperm.xlu0 %6429, %v5931
    %v6431 = vpop.permute.xlu0 %6430
    %6432 = vset.pattern.permute.xlu0 0
    %6433 = vperm.xlu0 %6432, %v5948
    %v6434 = vpop.permute.xlu0 %6433
    %6435 = vset.pattern.permute.xlu0 0
    %6436 = vperm.xlu0 %6435, %v5965
    %v6437 = vpop.permute.xlu0 %6436
    %6438 = vset.pattern.permute.xlu0 0
    %6439 = vperm.xlu0 %6438, %v5982
    %v6440 = vpop.permute.xlu0 %6439
    %6441 = vset.pattern.permute.xlu0 0
    %6442 = vperm.xlu0 %6441, %v5999
    %v6443 = vpop.permute.xlu0 %6442
    %6444 = vset.pattern.permute.xlu0 0
    %6445 = vperm.xlu0 %6444, %v6016
    %v6446 = vpop.permute.xlu0 %6445
    %6447 = vset.pattern.permute.xlu0 0
    %6448 = vperm.xlu0 %6447, %v6033
    %v6449 = vpop.permute.xlu0 %6448
    %6450 = vset.pattern.permute.xlu0 0
    %6451 = vperm.xlu0 %6450, %v6050
    %v6452 = vpop.permute.xlu0 %6451
    %6453 = vset.pattern.permute.xlu0 0
    %6454 = vperm.xlu0 %6453, %v6067
    %v6455 = vpop.permute.xlu0 %6454
    %6456 = vset.pattern.permute.xlu0 0
    %6457 = vperm.xlu0 %6456, %v6084
    %v6458 = vpop.permute.xlu0 %6457
    %6459 = vset.pattern.permute.xlu0 0
    %6460 = vperm.xlu0 %6459, %v6101
    %v6461 = vpop.permute.xlu0 %6460
    %6462 = vset.pattern.permute.xlu0 0
    %6463 = vperm.xlu0 %6462, %v6118
    %v6464 = vpop.permute.xlu0 %6463
    %6465 = vset.pattern.permute.xlu0 0
    %6466 = vperm.xlu0 %6465, %v6135
    %v6467 = vpop.permute.xlu0 %6466
    %6468 = vset.pattern.permute.xlu0 0
    %6469 = vperm.xlu0 %6468, %v6152
    %v6470 = vpop.permute.xlu0 %6469
    %6471 = vset.pattern.permute.xlu0 0
    %6472 = vperm.xlu0 %6471, %v6169
    %v6473 = vpop.permute.xlu0 %6472
    %6474 = vset.pattern.permute.xlu0 0
    %6475 = vperm.xlu0 %6474, %v6186
    %v6476 = vpop.permute.xlu0 %6475
    %6477 = vset.pattern.permute.xlu0 0
    %6478 = vperm.xlu0 %6477, %v6203
    %v6479 = vpop.permute.xlu0 %6478
    %6480 = vset.pattern.permute.xlu0 0
    %6481 = vperm.xlu0 %6480, %v6220
    %v6482 = vpop.permute.xlu0 %6481
    %6483 = vset.pattern.permute.xlu0 0
    %6484 = vperm.xlu0 %6483, %v6237
    %v6485 = vpop.permute.xlu0 %6484
    %6486 = vset.pattern.permute.xlu0 0
    %6487 = vperm.xlu0 %6486, %v6254
    %v6488 = vpop.permute.xlu0 %6487
    %6489 = vset.pattern.permute.xlu0 0
    %6490 = vperm.xlu0 %6489, %v6271
    %v6491 = vpop.permute.xlu0 %6490
    %6492 = vset.pattern.permute.xlu0 0
    %6493 = vperm.xlu0 %6492, %v6288
    %v6494 = vpop.permute.xlu0 %6493
    %6495 = vset.pattern.permute.xlu0 0
    %6496 = vperm.xlu0 %6495, %v6305
    %v6497 = vpop.permute.xlu0 %6496
    %v6498 = vlaneseq
    %v6499 = vand.u32 %v6498, 127
    %v6500 = vlaneseq
    %v6501 = vshrl.u32 %v6500, 7
    %v6502 = vsub.s32 %v6499, %v6501
    %v6503 = vrot.slane %v6308, %v6502
    %v6504 = vadd.s32 %v6499, 4294967288
    %v6505 = vlaneseq
    %v6506 = vshrl.u32 %v6505, 7
    %v6507 = vsub.s32 %v6504, %v6506
    %v6508 = vrot.slane %v6311, %v6507
    %vm6509 = vcmask 130112
    %v6510 = vsel %vm6509, %v6508, %v6503
    %v6511 = vadd.s32 %v6499, 4294967280
    %v6512 = vlaneseq
    %v6513 = vshrl.u32 %v6512, 7
    %v6514 = vsub.s32 %v6511, %v6513
    %v6515 = vrot.slane %v6314, %v6514
    %vm6516 = vcmask 195712
    %v6517 = vsel %vm6516, %v6515, %v6510
    %v6518 = vadd.s32 %v6499, 4294967272
    %v6519 = vlaneseq
    %v6520 = vshrl.u32 %v6519, 7
    %v6521 = vsub.s32 %v6518, %v6520
    %v6522 = vrot.slane %v6317, %v6521
    %vm6523 = vcmask 261312
    %v6524 = vsel %vm6523, %v6522, %v6517
    %v6525 = vadd.s32 %v6499, 4294967264
    %v6526 = vlaneseq
    %v6527 = vshrl.u32 %v6526, 7
    %v6528 = vsub.s32 %v6525, %v6527
    %v6529 = vrot.slane %v6320, %v6528
    %vm6530 = vcmask 326912
    %v6531 = vsel %vm6530, %v6529, %v6524
    %v6532 = vadd.s32 %v6499, 4294967256
    %v6533 = vlaneseq
    %v6534 = vshrl.u32 %v6533, 7
    %v6535 = vsub.s32 %v6532, %v6534
    %v6536 = vrot.slane %v6323, %v6535
    %vm6537 = vcmask 392512
    %v6538 = vsel %vm6537, %v6536, %v6531
    %v6539 = vadd.s32 %v6499, 4294967248
    %v6540 = vlaneseq
    %v6541 = vshrl.u32 %v6540, 7
    %v6542 = vsub.s32 %v6539, %v6541
    %v6543 = vrot.slane %v6326, %v6542
    %vm6544 = vcmask 458112
    %v6545 = vsel %vm6544, %v6543, %v6538
    %v6546 = vadd.s32 %v6499, 4294967240
    %v6547 = vlaneseq
    %v6548 = vshrl.u32 %v6547, 7
    %v6549 = vsub.s32 %v6546, %v6548
    %v6550 = vrot.slane %v6329, %v6549
    %vm6551 = vcmask 523712
    %v6552 = vsel %vm6551, %v6550, %v6545
    %v6553 = vadd.s32 %v6499, 4294967232
    %v6554 = vlaneseq
    %v6555 = vshrl.u32 %v6554, 7
    %v6556 = vsub.s32 %v6553, %v6555
    %v6557 = vrot.slane %v6332, %v6556
    %vm6558 = vcmask 589312
    %v6559 = vsel %vm6558, %v6557, %v6552
    %v6560 = vadd.s32 %v6499, 4294967224
    %v6561 = vlaneseq
    %v6562 = vshrl.u32 %v6561, 7
    %v6563 = vsub.s32 %v6560, %v6562
    %v6564 = vrot.slane %v6335, %v6563
    %vm6565 = vcmask 654912
    %v6566 = vsel %vm6565, %v6564, %v6559
    %v6567 = vadd.s32 %v6499, 4294967216
    %v6568 = vlaneseq
    %v6569 = vshrl.u32 %v6568, 7
    %v6570 = vsub.s32 %v6567, %v6569
    %v6571 = vrot.slane %v6338, %v6570
    %vm6572 = vcmask 720512
    %v6573 = vsel %vm6572, %v6571, %v6566
    %v6574 = vadd.s32 %v6499, 4294967208
    %v6575 = vlaneseq
    %v6576 = vshrl.u32 %v6575, 7
    %v6577 = vsub.s32 %v6574, %v6576
    %v6578 = vrot.slane %v6341, %v6577
    %vm6579 = vcmask 786112
    %v6580 = vsel %vm6579, %v6578, %v6573
    %v6581 = vadd.s32 %v6499, 4294967200
    %v6582 = vlaneseq
    %v6583 = vshrl.u32 %v6582, 7
    %v6584 = vsub.s32 %v6581, %v6583
    %v6585 = vrot.slane %v6344, %v6584
    %vm6586 = vcmask 851712
    %v6587 = vsel %vm6586, %v6585, %v6580
    %v6588 = vadd.s32 %v6499, 4294967192
    %v6589 = vlaneseq
    %v6590 = vshrl.u32 %v6589, 7
    %v6591 = vsub.s32 %v6588, %v6590
    %v6592 = vrot.slane %v6347, %v6591
    %vm6593 = vcmask 917312
    %v6594 = vsel %vm6593, %v6592, %v6587
    %v6595 = vadd.s32 %v6499, 4294967184
    %v6596 = vlaneseq
    %v6597 = vshrl.u32 %v6596, 7
    %v6598 = vsub.s32 %v6595, %v6597
    %v6599 = vrot.slane %v6350, %v6598
    %vm6600 = vcmask 982912
    %v6601 = vsel %vm6600, %v6599, %v6594
    %v6602 = vadd.s32 %v6499, 4294967176
    %v6603 = vlaneseq
    %v6604 = vshrl.u32 %v6603, 7
    %v6605 = vsub.s32 %v6602, %v6604
    %v6606 = vrot.slane %v6353, %v6605
    %vm6607 = vcmask 1048512
    %v6608 = vsel %vm6607, %v6606, %v6601
    %v6609 = vlaneseq
    %v6610 = vshrl.u32 %v6609, 7
    %v6611 = vsub.s32 %v6499, %v6610
    %v6612 = vrot.slane %v6356, %v6611
    %v6613 = vlaneseq
    %v6614 = vshrl.u32 %v6613, 7
    %v6615 = vsub.s32 %v6504, %v6614
    %v6616 = vrot.slane %v6359, %v6615
    %v6617 = vsel %vm6509, %v6616, %v6612
    %v6618 = vlaneseq
    %v6619 = vshrl.u32 %v6618, 7
    %v6620 = vsub.s32 %v6511, %v6619
    %v6621 = vrot.slane %v6362, %v6620
    %v6622 = vsel %vm6516, %v6621, %v6617
    %v6623 = vlaneseq
    %v6624 = vshrl.u32 %v6623, 7
    %v6625 = vsub.s32 %v6518, %v6624
    %v6626 = vrot.slane %v6365, %v6625
    %v6627 = vsel %vm6523, %v6626, %v6622
    %v6628 = vlaneseq
    %v6629 = vshrl.u32 %v6628, 7
    %v6630 = vsub.s32 %v6525, %v6629
    %v6631 = vrot.slane %v6368, %v6630
    %v6632 = vsel %vm6530, %v6631, %v6627
    %v6633 = vlaneseq
    %v6634 = vshrl.u32 %v6633, 7
    %v6635 = vsub.s32 %v6532, %v6634
    %v6636 = vrot.slane %v6371, %v6635
    %v6637 = vsel %vm6537, %v6636, %v6632
    %v6638 = vlaneseq
    %v6639 = vshrl.u32 %v6638, 7
    %v6640 = vsub.s32 %v6539, %v6639
    %v6641 = vrot.slane %v6374, %v6640
    %v6642 = vsel %vm6544, %v6641, %v6637
    %v6643 = vlaneseq
    %v6644 = vshrl.u32 %v6643, 7
    %v6645 = vsub.s32 %v6546, %v6644
    %v6646 = vrot.slane %v6377, %v6645
    %v6647 = vsel %vm6551, %v6646, %v6642
    %v6648 = vlaneseq
    %v6649 = vshrl.u32 %v6648, 7
    %v6650 = vsub.s32 %v6553, %v6649
    %v6651 = vrot.slane %v6380, %v6650
    %v6652 = vsel %vm6558, %v6651, %v6647
    %v6653 = vlaneseq
    %v6654 = vshrl.u32 %v6653, 7
    %v6655 = vsub.s32 %v6560, %v6654
    %v6656 = vrot.slane %v6383, %v6655
    %v6657 = vsel %vm6565, %v6656, %v6652
    %v6658 = vlaneseq
    %v6659 = vshrl.u32 %v6658, 7
    %v6660 = vsub.s32 %v6567, %v6659
    %v6661 = vrot.slane %v6386, %v6660
    %v6662 = vsel %vm6572, %v6661, %v6657
    %v6663 = vlaneseq
    %v6664 = vshrl.u32 %v6663, 7
    %v6665 = vsub.s32 %v6574, %v6664
    %v6666 = vrot.slane %v6389, %v6665
    %v6667 = vsel %vm6579, %v6666, %v6662
    %v6668 = vlaneseq
    %v6669 = vshrl.u32 %v6668, 7
    %v6670 = vsub.s32 %v6581, %v6669
    %v6671 = vrot.slane %v6392, %v6670
    %v6672 = vsel %vm6586, %v6671, %v6667
    %v6673 = vlaneseq
    %v6674 = vshrl.u32 %v6673, 7
    %v6675 = vsub.s32 %v6588, %v6674
    %v6676 = vrot.slane %v6395, %v6675
    %v6677 = vsel %vm6593, %v6676, %v6672
    %v6678 = vlaneseq
    %v6679 = vshrl.u32 %v6678, 7
    %v6680 = vsub.s32 %v6595, %v6679
    %v6681 = vrot.slane %v6398, %v6680
    %v6682 = vsel %vm6600, %v6681, %v6677
    %v6683 = vlaneseq
    %v6684 = vshrl.u32 %v6683, 7
    %v6685 = vsub.s32 %v6602, %v6684
    %v6686 = vrot.slane %v6401, %v6685
    %v6687 = vsel %vm6607, %v6686, %v6682
    %v6688 = vlaneseq
    %v6689 = vshrl.u32 %v6688, 7
    %v6690 = vsub.s32 %v6499, %v6689
    %v6691 = vrot.slane %v6404, %v6690
    %v6692 = vlaneseq
    %v6693 = vshrl.u32 %v6692, 7
    %v6694 = vsub.s32 %v6504, %v6693
    %v6695 = vrot.slane %v6407, %v6694
    %v6696 = vsel %vm6509, %v6695, %v6691
    %v6697 = vlaneseq
    %v6698 = vshrl.u32 %v6697, 7
    %v6699 = vsub.s32 %v6511, %v6698
    %v6700 = vrot.slane %v6410, %v6699
    %v6701 = vsel %vm6516, %v6700, %v6696
    %v6702 = vlaneseq
    %v6703 = vshrl.u32 %v6702, 7
    %v6704 = vsub.s32 %v6518, %v6703
    %v6705 = vrot.slane %v6413, %v6704
    %v6706 = vsel %vm6523, %v6705, %v6701
    %v6707 = vlaneseq
    %v6708 = vshrl.u32 %v6707, 7
    %v6709 = vsub.s32 %v6525, %v6708
    %v6710 = vrot.slane %v6416, %v6709
    %v6711 = vsel %vm6530, %v6710, %v6706
    %v6712 = vlaneseq
    %v6713 = vshrl.u32 %v6712, 7
    %v6714 = vsub.s32 %v6532, %v6713
    %v6715 = vrot.slane %v6419, %v6714
    %v6716 = vsel %vm6537, %v6715, %v6711
    %v6717 = vlaneseq
    %v6718 = vshrl.u32 %v6717, 7
    %v6719 = vsub.s32 %v6539, %v6718
    %v6720 = vrot.slane %v6422, %v6719
    %v6721 = vsel %vm6544, %v6720, %v6716
    %v6722 = vlaneseq
    %v6723 = vshrl.u32 %v6722, 7
    %v6724 = vsub.s32 %v6546, %v6723
    %v6725 = vrot.slane %v6425, %v6724
    %v6726 = vsel %vm6551, %v6725, %v6721
    %v6727 = vlaneseq
    %v6728 = vshrl.u32 %v6727, 7
    %v6729 = vsub.s32 %v6553, %v6728
    %v6730 = vrot.slane %v6428, %v6729
    %v6731 = vsel %vm6558, %v6730, %v6726
    %v6732 = vlaneseq
    %v6733 = vshrl.u32 %v6732, 7
    %v6734 = vsub.s32 %v6560, %v6733
    %v6735 = vrot.slane %v6431, %v6734
    %v6736 = vsel %vm6565, %v6735, %v6731
    %v6737 = vlaneseq
    %v6738 = vshrl.u32 %v6737, 7
    %v6739 = vsub.s32 %v6567, %v6738
    %v6740 = vrot.slane %v6434, %v6739
    %v6741 = vsel %vm6572, %v6740, %v6736
    %v6742 = vlaneseq
    %v6743 = vshrl.u32 %v6742, 7
    %v6744 = vsub.s32 %v6574, %v6743
    %v6745 = vrot.slane %v6437, %v6744
    %v6746 = vsel %vm6579, %v6745, %v6741
    %v6747 = vlaneseq
    %v6748 = vshrl.u32 %v6747, 7
    %v6749 = vsub.s32 %v6581, %v6748
    %v6750 = vrot.slane %v6440, %v6749
    %v6751 = vsel %vm6586, %v6750, %v6746
    %v6752 = vlaneseq
    %v6753 = vshrl.u32 %v6752, 7
    %v6754 = vsub.s32 %v6588, %v6753
    %v6755 = vrot.slane %v6443, %v6754
    %v6756 = vsel %vm6593, %v6755, %v6751
    %v6757 = vlaneseq
    %v6758 = vshrl.u32 %v6757, 7
    %v6759 = vsub.s32 %v6595, %v6758
    %v6760 = vrot.slane %v6446, %v6759
    %v6761 = vsel %vm6600, %v6760, %v6756
    %v6762 = vlaneseq
    %v6763 = vshrl.u32 %v6762, 7
    %v6764 = vsub.s32 %v6602, %v6763
    %v6765 = vrot.slane %v6449, %v6764
    %v6766 = vsel %vm6607, %v6765, %v6761
    %v6767 = vlaneseq
    %v6768 = vshrl.u32 %v6767, 7
    %v6769 = vsub.s32 %v6499, %v6768
    %v6770 = vrot.slane %v6452, %v6769
    %v6771 = vlaneseq
    %v6772 = vshrl.u32 %v6771, 7
    %v6773 = vsub.s32 %v6504, %v6772
    %v6774 = vrot.slane %v6455, %v6773
    %v6775 = vsel %vm6509, %v6774, %v6770
    %v6776 = vlaneseq
    %v6777 = vshrl.u32 %v6776, 7
    %v6778 = vsub.s32 %v6511, %v6777
    %v6779 = vrot.slane %v6458, %v6778
    %v6780 = vsel %vm6516, %v6779, %v6775
    %v6781 = vlaneseq
    %v6782 = vshrl.u32 %v6781, 7
    %v6783 = vsub.s32 %v6518, %v6782
    %v6784 = vrot.slane %v6461, %v6783
    %v6785 = vsel %vm6523, %v6784, %v6780
    %v6786 = vlaneseq
    %v6787 = vshrl.u32 %v6786, 7
    %v6788 = vsub.s32 %v6525, %v6787
    %v6789 = vrot.slane %v6464, %v6788
    %v6790 = vsel %vm6530, %v6789, %v6785
    %v6791 = vlaneseq
    %v6792 = vshrl.u32 %v6791, 7
    %v6793 = vsub.s32 %v6532, %v6792
    %v6794 = vrot.slane %v6467, %v6793
    %v6795 = vsel %vm6537, %v6794, %v6790
    %v6796 = vlaneseq
    %v6797 = vshrl.u32 %v6796, 7
    %v6798 = vsub.s32 %v6539, %v6797
    %v6799 = vrot.slane %v6470, %v6798
    %v6800 = vsel %vm6544, %v6799, %v6795
    %v6801 = vlaneseq
    %v6802 = vshrl.u32 %v6801, 7
    %v6803 = vsub.s32 %v6546, %v6802
    %v6804 = vrot.slane %v6473, %v6803
    %v6805 = vsel %vm6551, %v6804, %v6800
    %v6806 = vlaneseq
    %v6807 = vshrl.u32 %v6806, 7
    %v6808 = vsub.s32 %v6553, %v6807
    %v6809 = vrot.slane %v6476, %v6808
    %v6810 = vsel %vm6558, %v6809, %v6805
    %v6811 = vlaneseq
    %v6812 = vshrl.u32 %v6811, 7
    %v6813 = vsub.s32 %v6560, %v6812
    %v6814 = vrot.slane %v6479, %v6813
    %v6815 = vsel %vm6565, %v6814, %v6810
    %v6816 = vlaneseq
    %v6817 = vshrl.u32 %v6816, 7
    %v6818 = vsub.s32 %v6567, %v6817
    %v6819 = vrot.slane %v6482, %v6818
    %v6820 = vsel %vm6572, %v6819, %v6815
    %v6821 = vlaneseq
    %v6822 = vshrl.u32 %v6821, 7
    %v6823 = vsub.s32 %v6574, %v6822
    %v6824 = vrot.slane %v6485, %v6823
    %v6825 = vsel %vm6579, %v6824, %v6820
    %v6826 = vlaneseq
    %v6827 = vshrl.u32 %v6826, 7
    %v6828 = vsub.s32 %v6581, %v6827
    %v6829 = vrot.slane %v6488, %v6828
    %v6830 = vsel %vm6586, %v6829, %v6825
    %v6831 = vlaneseq
    %v6832 = vshrl.u32 %v6831, 7
    %v6833 = vsub.s32 %v6588, %v6832
    %v6834 = vrot.slane %v6491, %v6833
    %v6835 = vsel %vm6593, %v6834, %v6830
    %v6836 = vlaneseq
    %v6837 = vshrl.u32 %v6836, 7
    %v6838 = vsub.s32 %v6595, %v6837
    %v6839 = vrot.slane %v6494, %v6838
    %v6840 = vsel %vm6600, %v6839, %v6835
    %v6841 = vlaneseq
    %v6842 = vshrl.u32 %v6841, 7
    %v6843 = vsub.s32 %v6602, %v6842
    %v6844 = vrot.slane %v6497, %v6843
    %v6845 = vsel %vm6607, %v6844, %v6840
    %v6846 = vsel %vm113, %v6766, %v6608
    %v6847 = vsel %vm113, %v6845, %v6687
    %v6848 = vcombine.low %v6846, %v6847
    %v6850 = vunpack.c.l.s4 1983009808
    %v6851 = vunpack.c.0.s8 %v6850
    %v6852 = vlaneseq
    %v6853 = vshrl.u32 %v6852, 7
    %v6854 = vsub.s32 %v6851, %v6853
    %v6855 = vrot.slane %v6848, %v6854
    %6857 = vst [vmem:[%s24] sm:$0xf] %v6855
    %v6858 = vpack.c.bf16 %v2134, %v2133
    %v6859 = vpack.c.bf16 %v2136, %v2135
    %v6860 = vld [vmem:[%s15] sm:$0xf]
    %v6861 = vld [vmem:[%s15 + $0x4] sm:$0xf]
    %v6862 = vld [vmem:[%s15 + $0x8] sm:$0xf]
    %v6863 = vld [vmem:[%s15 + $0xc] sm:$0xf]
    %v6864 = vld [vmem:[%s16] sm:$0x1]
    %v6866 = vlaneseq
    %v6867 = vshrl.u32 %v6866, 7
    %v6868 = vsub.s32 0, %v6867
    %v6869 = vrot.slane %v6864, %v6868
    %v6875 = vunpack.c.l.b16 %v6860
    %v6876 = vunpack.c.l.b16 %v6861
    %v6877 = vunpack.c.l.b16 %v6862
    %v6878 = vunpack.c.l.b16 %v6863
    %v6879 = vpack.c.b16 %v6876, %v6875
    %v6880 = vpack.c.b16 %v6878, %v6877
    %v6884 = vsel %vm82, %v6858, 0
    %v6887 = vsel %vm82, %v6859, 0
    %6889 = vmatprep.subr.bf16.mxu0 0
    %6890 = vmatpush1.bf16.msra.mxu0 %v6879
    %6891 = vmatprep.subr.bf16.mxu0 0
    %6892 = vmatpush1.bf16.msra.mxu0 %v6880
    %6893 = vmatprep.subr.bf16.mxu0 0
    %6894 = vmatpush1.bf16.msra.mxu0 0
    %6895 = vmatprep.subr.bf16.mxu0 0
    %6896 = vmatpush1.bf16.msra.mxu0 0
    %6897 = vmatprep.subr.bf16.mxu0 0
    %6898 = vmatpush1.bf16.msra.mxu0 0
    %6899 = vmatprep.subr.bf16.mxu0 0
    %6900 = vmatpush1.bf16.msra.mxu0 0
    %6901 = vmatprep.subr.bf16.mxu0 0
    %6902 = vmatpush1.bf16.msra.mxu0 0
    %6903 = vmatprep.subr.bf16.mxu0 0
    %6904 = vmatpush1.bf16.msra.mxu0 0
    %6905 = vmatprep.subr.bf16.mxu0 0
    %6906 = vmatpush1.bf16.msra.mxu0 0
    %6907 = vmatprep.subr.bf16.mxu0 0
    %6908 = vmatpush1.bf16.msra.mxu0 0
    %6909 = vmatprep.subr.bf16.mxu0 0
    %6910 = vmatpush1.bf16.msra.mxu0 0
    %6911 = vmatprep.subr.bf16.mxu0 0
    %6912 = vmatpush1.bf16.msra.mxu0 0
    %6913 = vmatprep.subr.bf16.mxu0 0
    %6914 = vmatpush1.bf16.msra.mxu0 0
    %6915 = vmatprep.subr.bf16.mxu0 0
    %6916 = vmatpush1.bf16.msra.mxu0 0
    %6917 = vmatprep.subr.bf16.mxu0 0
    %6918 = vmatpush1.bf16.msra.mxu0 0
    %6919 = vmatprep.subr.bf16.mxu0 0
    %6920 = vmatpush1.bf16.msra.mxu0 0
    %6921 = vmatprep.mubr.bf16.mxu0 0
    %6922 = vmatmul.mubr.bf16.gmra.mrb[0].mxu0 %v6884
    %v6923 = vpop.f32.mrb[0].mxu0
    %v6924 = vadd.f32 %v6869, %v6923
    %v6925 = vpop.f32.mrb[0].mxu0
    %v6926 = vpop.f32.mrb[0].mxu0
    %v6927 = vadd.f32 %v6869, %v6926
    %v6928 = vpop.f32.mrb[0].mxu0
    %6929 = vmatprep.mubr.bf16.mxu0 0
    %6930 = vmatmul.mubr.bf16.gmra.mrb[0].mxu0 %v6887
    %v6931 = vpop.f32.mrb[0].mxu0
    %v6932 = vadd.f32 %v6869, %v6931
    %v6933 = vpop.f32.mrb[0].mxu0
    %v6934 = vpop.f32.mrb[0].mxu0
    %v6935 = vadd.f32 %v6869, %v6934
    %v6936 = vpop.f32.mrb[0].mxu0
    %6937 = vdwg.mxu0
    %v6938 = vmax.f32 %v6924, 0.0
    %v6939 = vmax.f32 %v6927, 0.0
    %v6940 = vmax.f32 %v6932, 0.0
    %v6941 = vmax.f32 %v6935, 0.0
    %v6942 = vld [vmem:[%s17] sm:$0xff]
    %v6943 = vld [vmem:[%s17 + $0x8] sm:$0xff]
    %v6944 = vld [vmem:[%s17 + $0x10] sm:$0xff]
    %v6945 = vld [vmem:[%s17 + $0x18] sm:$0xff]
    %6946 = vmatprep.subr.mxu0 0.0
    %6947 = vmatpush1.msra.mxu0 %v6942
    %6948 = vmatprep.subr.mxu0 0.0
    %6949 = vmatpush1.msra.mxu0 %v6943
    %6950 = vmatprep.subr.mxu0 0.0
    %6951 = vmatpush1.msra.mxu0 %v6944
    %6952 = vmatprep.subr.mxu0 0.0
    %6953 = vmatpush1.msra.mxu0 %v6945
    %6954 = vmatprep.subr.mxu0 0.0
    %6955 = vmatpush1.msra.mxu0 0.0
    %6956 = vmatprep.subr.mxu0 0.0
    %6957 = vmatpush1.msra.mxu0 0.0
    %6958 = vmatprep.subr.mxu0 0.0
    %6959 = vmatpush1.msra.mxu0 0.0
    %6960 = vmatprep.subr.mxu0 0.0
    %6961 = vmatpush1.msra.mxu0 0.0
    %6962 = vmatprep.subr.mxu0 0.0
    %6963 = vmatpush1.msra.mxu0 0.0
    %6964 = vmatprep.subr.mxu0 0.0
    %6965 = vmatpush1.msra.mxu0 0.0
    %6966 = vmatprep.subr.mxu0 0.0
    %6967 = vmatpush1.msra.mxu0 0.0
    %6968 = vmatprep.subr.mxu0 0.0
    %6969 = vmatpush1.msra.mxu0 0.0
    %6970 = vmatprep.subr.mxu0 0.0
    %6971 = vmatpush1.msra.mxu0 0.0
    %6972 = vmatprep.subr.mxu0 0.0
    %6973 = vmatpush1.msra.mxu0 0.0
    %6974 = vmatprep.subr.mxu0 0.0
    %6975 = vmatpush1.msra.mxu0 0.0
    %6976 = vmatprep.subr.mxu0 0.0
    %6977 = vmatpush1.msra.mxu0 0.0
    %6978 = vmatprep.subr.mxu0 0.0
    %6979 = vmatpush1.msra.mxu0 0.0
    %6980 = vmatprep.subr.mxu0 0.0
    %6981 = vmatpush1.msra.mxu0 0.0
    %6982 = vmatprep.subr.mxu0 0.0
    %6983 = vmatpush1.msra.mxu0 0.0
    %6984 = vmatprep.subr.mxu0 0.0
    %6985 = vmatpush1.msra.mxu0 0.0
    %6986 = vmatprep.subr.mxu0 0.0
    %6987 = vmatpush1.msra.mxu0 0.0
    %6988 = vmatprep.subr.mxu0 0.0
    %6989 = vmatpush1.msra.mxu0 0.0
    %6990 = vmatprep.subr.mxu0 0.0
    %6991 = vmatpush1.msra.mxu0 0.0
    %6992 = vmatprep.subr.mxu0 0.0
    %6993 = vmatpush1.msra.mxu0 0.0
    %6994 = vmatprep.subr.mxu0 0.0
    %6995 = vmatpush1.msra.mxu0 0.0
    %6996 = vmatprep.subr.mxu0 0.0
    %6997 = vmatpush1.msra.mxu0 0.0
    %6998 = vmatprep.subr.mxu0 0.0
    %6999 = vmatpush1.msra.mxu0 0.0
    %7000 = vmatprep.subr.mxu0 0.0
    %7001 = vmatpush1.msra.mxu0 0.0
    %7002 = vmatprep.subr.mxu0 0.0
    %7003 = vmatpush1.msra.mxu0 0.0
    %7004 = vmatprep.subr.mxu0 0.0
    %7005 = vmatpush1.msra.mxu0 0.0
    %7006 = vmatprep.subr.mxu0 0.0
    %7007 = vmatpush1.msra.mxu0 0.0
    %7008 = vmatprep.subr.mxu0 0.0
    %7009 = vmatpush1.msra.mxu0 0.0
    %7010 = vmatprep.mubr.f32.mxu0 0.0
    %7011 = vmatmul.mubr.f32.gmra.mrb[0].mxu0 %v200
    %v7012 = vpop.f32.mrb[0].mxu0
    %v7013 = vadd.f32 0.0, %v7012
    %v7014 = vpop.f32.mrb[0].mxu0
    %7015 = vdwg.mxu0
    %v7018 = vunpack.c.l.s4 1966171168
    %v7019 = vunpack.c.0.s8 %v7018
    %v7020 = vlaneseq
    %v7021 = vshrl.u32 %v7020, 7
    %v7022 = vsub.s32 %v7019, %v7021
    %v7023 = vrot.slane %v7013, %v7022
    %v7024 = vcombine.high %v7023, %v7023
    %v7026 = vunpack.c.l.s4 1966171168
    %v7027 = vunpack.c.0.s8 %v7026
    %v7028 = vlaneseq
    %v7029 = vshrl.u32 %v7028, 7
    %v7030 = vsub.s32 %v7027, %v7029
    %v7031 = vrot.slane %v7023, %v7030
    %v7033 = vunpack.c.l.s4 1966171168
    %v7034 = vunpack.c.0.s8 %v7033
    %v7035 = vlaneseq
    %v7036 = vshrl.u32 %v7035, 7
    %v7037 = vsub.s32 %v7034, %v7036
    %v7038 = vrot.slane %v7024, %v7037
    %v7039 = vlaneseq
    %v7040 = vshrl.u32 %v7039, 7
    %v7041 = vsub.s32 0, %v7040
    %v7042 = vrot.slane %v7031, %v7041
    %v7043 = vlaneseq
    %v7044 = vshrl.u32 %v7043, 7
    %v7045 = vsub.s32 0, %v7044
    %v7046 = vrot.slane %v7038, %v7045
    %v7049 = vmul.f32 %v6938, %v7042
    %v7050 = vmul.f32 %v6939, %v7042
    %v7051 = vmul.f32 %v6940, %v7046
    %v7052 = vmul.f32 %v6941, %v7046
    %v7053 = vsel %vm82, %v7049, 0.0
    %7054 = vadd.xlane.f32.xlu0 %v7053
    %v7055 = vpop.xlane.xlu0 %7054
    %v7056 = vsel %vm82, %v7050, 0.0
    %7057 = vadd.xlane.f32.xlu0 %v7056
    %v7058 = vpop.xlane.xlu0 %7057
    %v7059 = vsel %vm82, %v7051, 0.0
    %7060 = vadd.xlane.f32.xlu0 %v7059
    %v7061 = vpop.xlane.xlu0 %7060
    %v7062 = vsel %vm82, %v7052, 0.0
    %7063 = vadd.xlane.f32.xlu0 %v7062
    %v7064 = vpop.xlane.xlu0 %7063
    %v7065 = vmul.f32 %v7055, 0.17677669
    %v7066 = vmul.f32 %v7058, 0.17677669
    %v7067 = vmul.f32 %v7061, 0.17677669
    %v7068 = vmul.f32 %v7064, 0.17677669
    %v7069 = vmax.f32 %v7065, %v7066
    %v7070 = vrot.slane %v7069, 4
    %v7071 = vmax.f32 %v7069, %v7070
    %v7072 = vrot.slane %v7071, 2
    %v7073 = vmax.f32 %v7071, %v7072
    %v7074 = vrot.slane %v7073, 1
    %v7075 = vmax.f32 %v7073, %v7074
    %v7076 = vmax.f32 %v7067, %v7068
    %v7077 = vrot.slane %v7076, 4
    %v7078 = vmax.f32 %v7076, %v7077
    %v7079 = vrot.slane %v7078, 2
    %v7080 = vmax.f32 %v7078, %v7079
    %v7081 = vrot.slane %v7080, 1
    %v7082 = vmax.f32 %v7080, %v7081
    %v7083 = vsub.f32 %v7065, %v7075
    %v7084 = vsub.f32 %v7066, %v7075
    %v7085 = vsub.f32 %v7067, %v7082
    %v7086 = vsub.f32 %v7068, %v7082
    %v7087 = vmul.f32 %v7083, 1.442695
    %v7088 = vpow.pop %v7087
    %v7089 = vmul.f32 %v7084, 1.442695
    %v7090 = vpow.pop %v7089
    %v7091 = vmul.f32 %v7085, 1.442695
    %v7092 = vpow.pop %v7091
    %v7093 = vmul.f32 %v7086, 1.442695
    %v7094 = vpow.pop %v7093
    %v7095 = vadd.f32 %v7088, %v7090
    %v7096 = vrot.slane %v7095, 4
    %v7097 = vadd.f32 %v7095, %v7096
    %v7098 = vrot.slane %v7097, 2
    %v7099 = vadd.f32 %v7097, %v7098
    %v7100 = vrot.slane %v7099, 1
    %v7101 = vadd.f32 %v7099, %v7100
    %v7102 = vadd.f32 %v7092, %v7094
    %v7103 = vrot.slane %v7102, 4
    %v7104 = vadd.f32 %v7102, %v7103
    %v7105 = vrot.slane %v7104, 2
    %v7106 = vadd.f32 %v7104, %v7105
    %v7107 = vrot.slane %v7106, 1
    %v7108 = vadd.f32 %v7106, %v7107
    %v7109 = vrcp.pop %v7101
    %v7110 = vrcp.pop %v7108
    %v7111 = vmul.f32 %v7088, %v7109
    %v7112 = vmul.f32 %v7090, %v7109
    %v7113 = vmul.f32 %v7092, %v7110
    %v7114 = vmul.f32 %v7094, %v7110
    %v7115 = vpack.c.bf16 %v6939, %v6938
    %v7116 = vpack.c.bf16 %v6941, %v6940
    %v7117 = vld [vmem:[%s18] sm:$0xf]
    %v7118 = vld [vmem:[%s18 + $0x4] sm:$0xf]
    %v7119 = vld [vmem:[%s18 + $0x8] sm:$0xf]
    %v7120 = vld [vmem:[%s18 + $0xc] sm:$0xf]
    %v7125 = vunpack.c.l.b16 %v7117
    %v7126 = vunpack.c.l.b16 %v7118
    %v7127 = vunpack.c.l.b16 %v7119
    %v7128 = vunpack.c.l.b16 %v7120
    %v7129 = vpack.c.b16 %v7126, %v7125
    %v7130 = vpack.c.b16 %v7128, %v7127
    %v7134 = vsel %vm82, %v7115, 0
    %v7137 = vsel %vm82, %v7116, 0
    %7139 = vmatprep.subr.bf16.mxu0 0
    %7140 = vmatpush1.bf16.msra.mxu0 %v7129
    %7141 = vmatprep.subr.bf16.mxu0 0
    %7142 = vmatpush1.bf16.msra.mxu0 %v7130
    %7143 = vmatprep.subr.bf16.mxu0 0
    %7144 = vmatpush1.bf16.msra.mxu0 0
    %7145 = vmatprep.subr.bf16.mxu0 0
    %7146 = vmatpush1.bf16.msra.mxu0 0
    %7147 = vmatprep.subr.bf16.mxu0 0
    %7148 = vmatpush1.bf16.msra.mxu0 0
    %7149 = vmatprep.subr.bf16.mxu0 0
    %7150 = vmatpush1.bf16.msra.mxu0 0
    %7151 = vmatprep.subr.bf16.mxu0 0
    %7152 = vmatpush1.bf16.msra.mxu0 0
    %7153 = vmatprep.subr.bf16.mxu0 0
    %7154 = vmatpush1.bf16.msra.mxu0 0
    %7155 = vmatprep.subr.bf16.mxu0 0
    %7156 = vmatpush1.bf16.msra.mxu0 0
    %7157 = vmatprep.subr.bf16.mxu0 0
    %7158 = vmatpush1.bf16.msra.mxu0 0
    %7159 = vmatprep.subr.bf16.mxu0 0
    %7160 = vmatpush1.bf16.msra.mxu0 0
    %7161 = vmatprep.subr.bf16.mxu0 0
    %7162 = vmatpush1.bf16.msra.mxu0 0
    %7163 = vmatprep.subr.bf16.mxu0 0
    %7164 = vmatpush1.bf16.msra.mxu0 0
    %7165 = vmatprep.subr.bf16.mxu0 0
    %7166 = vmatpush1.bf16.msra.mxu0 0
    %7167 = vmatprep.subr.bf16.mxu0 0
    %7168 = vmatpush1.bf16.msra.mxu0 0
    %7169 = vmatprep.subr.bf16.mxu0 0
    %7170 = vmatpush1.bf16.msra.mxu0 0
    %7171 = vmatprep.mubr.bf16.mxu0 0
    %7172 = vmatmul.mubr.bf16.gmra.mrb[0].mxu0 %v7134
    %v7173 = vpop.f32.mrb[0].mxu0
    %v7174 = vadd.f32 0.0, %v7173
    %v7175 = vpop.f32.mrb[0].mxu0
    %v7176 = vpop.f32.mrb[0].mxu0
    %v7177 = vadd.f32 0.0, %v7176
    %v7178 = vpop.f32.mrb[0].mxu0
    %7179 = vmatprep.mubr.bf16.mxu0 0
    %7180 = vmatmul.mubr.bf16.gmra.mrb[0].mxu0 %v7137
    %v7181 = vpop.f32.mrb[0].mxu0
    %v7182 = vadd.f32 0.0, %v7181
    %v7183 = vpop.f32.mrb[0].mxu0
    %v7184 = vpop.f32.mrb[0].mxu0
    %v7185 = vadd.f32 0.0, %v7184
    %v7186 = vpop.f32.mrb[0].mxu0
    %7187 = vdwg.mxu0
    %v7188 = vmul.f32 %v7174, %v7111
    %v7189 = vmul.f32 %v7177, %v7112
    %v7190 = vmul.f32 %v7182, %v7113
    %v7191 = vmul.f32 %v7185, %v7114
    %v7192 = vadd.f32 %v6938, %v7188
    %v7193 = vadd.f32 %v6939, %v7189
    %v7194 = vadd.f32 %v6940, %v7190
    %v7195 = vadd.f32 %v6941, %v7191
    %v7196 = vsel %vm82, %v7192, 0.0
    %v7197 = vsel %vm82, %v7193, 0.0
    %v7198 = vadd.f32 %v7196, %v7197
    %v7199 = vrot.slane %v7198, 4
    %v7200 = vadd.f32 %v7198, %v7199
    %v7201 = vrot.slane %v7200, 2
    %v7202 = vadd.f32 %v7200, %v7201
    %v7203 = vrot.slane %v7202, 1
    %v7204 = vadd.f32 %v7202, %v7203
    %v7205 = vsel %vm82, %v7194, 0.0
    %v7206 = vsel %vm82, %v7195, 0.0
    %v7207 = vadd.f32 %v7205, %v7206
    %v7208 = vrot.slane %v7207, 4
    %v7209 = vadd.f32 %v7207, %v7208
    %v7210 = vrot.slane %v7209, 2
    %v7211 = vadd.f32 %v7209, %v7210
    %v7212 = vrot.slane %v7211, 1
    %v7213 = vadd.f32 %v7211, %v7212
    %v7214 = vmul.f32 %v7204, %v2030
    %v7215 = vmul.f32 %v7213, %v2030
    %v7216 = vld [vmem:[%s19] sm:$0xff]
    %v7217 = vld [vmem:[%s19 + $0x8] sm:$0xff]
    %v7218 = vld [vmem:[%s19 + $0x10] sm:$0xff]
    %v7219 = vld [vmem:[%s19 + $0x18] sm:$0xff]
    %v7220 = vld [vmem:[%s20] sm:$0x1]
    %v7222 = vlaneseq
    %v7223 = vshrl.u32 %v7222, 7
    %v7224 = vsub.s32 0, %v7223
    %v7225 = vrot.slane %v7220, %v7224
    %v7229 = vsel %vm113, %v7215, %v7214
    %v7230 = vsel %vm82, %v7229, 0
    %7232 = vmatprep.subr.mxu0 0.0
    %7233 = vmatpush1.msra.mxu0 %v7216
    %7234 = vmatprep.subr.mxu0 0.0
    %7235 = vmatpush1.msra.mxu0 %v7217
    %7236 = vmatprep.subr.mxu0 0.0
    %7237 = vmatpush1.msra.mxu0 %v7218
    %7238 = vmatprep.subr.mxu0 0.0
    %7239 = vmatpush1.msra.mxu0 %v7219
    %7240 = vmatprep.subr.mxu0 0.0
    %7241 = vmatpush1.msra.mxu0 0.0
    %7242 = vmatprep.subr.mxu0 0.0
    %7243 = vmatpush1.msra.mxu0 0.0
    %7244 = vmatprep.subr.mxu0 0.0
    %7245 = vmatpush1.msra.mxu0 0.0
    %7246 = vmatprep.subr.mxu0 0.0
    %7247 = vmatpush1.msra.mxu0 0.0
    %7248 = vmatprep.subr.mxu0 0.0
    %7249 = vmatpush1.msra.mxu0 0.0
    %7250 = vmatprep.subr.mxu0 0.0
    %7251 = vmatpush1.msra.mxu0 0.0
    %7252 = vmatprep.subr.mxu0 0.0
    %7253 = vmatpush1.msra.mxu0 0.0
    %7254 = vmatprep.subr.mxu0 0.0
    %7255 = vmatpush1.msra.mxu0 0.0
    %7256 = vmatprep.subr.mxu0 0.0
    %7257 = vmatpush1.msra.mxu0 0.0
    %7258 = vmatprep.subr.mxu0 0.0
    %7259 = vmatpush1.msra.mxu0 0.0
    %7260 = vmatprep.subr.mxu0 0.0
    %7261 = vmatpush1.msra.mxu0 0.0
    %7262 = vmatprep.subr.mxu0 0.0
    %7263 = vmatpush1.msra.mxu0 0.0
    %7264 = vmatprep.subr.mxu0 0.0
    %7265 = vmatpush1.msra.mxu0 0.0
    %7266 = vmatprep.subr.mxu0 0.0
    %7267 = vmatpush1.msra.mxu0 0.0
    %7268 = vmatprep.subr.mxu0 0.0
    %7269 = vmatpush1.msra.mxu0 0.0
    %7270 = vmatprep.subr.mxu0 0.0
    %7271 = vmatpush1.msra.mxu0 0.0
    %7272 = vmatprep.subr.mxu0 0.0
    %7273 = vmatpush1.msra.mxu0 0.0
    %7274 = vmatprep.subr.mxu0 0.0
    %7275 = vmatpush1.msra.mxu0 0.0
    %7276 = vmatprep.subr.mxu0 0.0
    %7277 = vmatpush1.msra.mxu0 0.0
    %7278 = vmatprep.subr.mxu0 0.0
    %7279 = vmatpush1.msra.mxu0 0.0
    %7280 = vmatprep.subr.mxu0 0.0
    %7281 = vmatpush1.msra.mxu0 0.0
    %7282 = vmatprep.subr.mxu0 0.0
    %7283 = vmatpush1.msra.mxu0 0.0
    %7284 = vmatprep.subr.mxu0 0.0
    %7285 = vmatpush1.msra.mxu0 0.0
    %7286 = vmatprep.subr.mxu0 0.0
    %7287 = vmatpush1.msra.mxu0 0.0
    %7288 = vmatprep.subr.mxu0 0.0
    %7289 = vmatpush1.msra.mxu0 0.0
    %7290 = vmatprep.subr.mxu0 0.0
    %7291 = vmatpush1.msra.mxu0 0.0
    %7292 = vmatprep.subr.mxu0 0.0
    %7293 = vmatpush1.msra.mxu0 0.0
    %7294 = vmatprep.subr.mxu0 0.0
    %7295 = vmatpush1.msra.mxu0 0.0
    %7296 = vmatprep.mubr.f32.mxu0 0.0
    %7297 = vmatmul.mubr.f32.gmra.mrb[0].mxu0 %v7230
    %v7298 = vpop.f32.mrb[0].mxu0
    %v7299 = vadd.f32 %v7225, %v7298
    %v7300 = vpop.f32.mrb[0].mxu0
    %7301 = vdwg.mxu0
    %v7302 = vxor.u32 %v7299, 2147483648
    %v7303 = vmul.f32 %v7302, 1.442695
    %v7304 = vpow.pop %v7303
    %v7305 = vadd.f32 %v7304, 1.0
    %v7306 = vrcp.pop %v7305
    %v7307 = vmul.f32 1.0, %v7306
    %vm7308 = vcmask 25600
    %7309 = vst.msk [vmem:[#allocation3] sm:$0x3] %vm7308, %v7307
    // Predicated region
    $region94: #{simrec_forward.7} parent=1 // pred_check
      _
    $region95: #{simrec_forward.7} parent=1 // pred_check_branch
      %7311 = sbr.rel (0) target = $region97
    $region96: #{simrec_forward.7} parent=1 // pred_region
      %s7313 = ssub.s32 32, 32
      %7314 = vsyncadd [#allocation4], %s7313
      %s7316 = sshll.u32 [#allocation3], 4
      %s7317 = int_to_ptr.vmem [resolvable:$true] %s7316
      %7319 = dma.vmem_to_hbm [thread:$0]  %s7317, 32, %s23, [#allocation4]
    $region97: #{simrec_forward.7} parent=1 // pred_fallthru
      _
    // Predicated region
    $region98: #{simrec_forward.7} parent=1 // pred_check
      _
    $region99: #{simrec_forward.7} parent=1 // pred_check_branch
      %7321 = sbr.rel (0) target = $region101
    $region100: #{simrec_forward.7} parent=1 // pred_region
      _
    $region101: #{simrec_forward.7} parent=1 // pred_fallthru
      _
    // Predicated region
    $region102: #{simrec_forward.7} parent=1 // pred_check
      _
    $region103: #{simrec_forward.7} parent=1 // pred_check_branch
      %7323 = sbr.rel (0) target = $region105
    $region104: #{simrec_forward.7} parent=1 // pred_region
      %7324 = dma.done [#allocation4], 32
    $region105: #{simrec_forward.7} parent=1 // pred_fallthru
      _
    // Predicated region
    $region106: #{simrec_forward.7} parent=1 // pred_check
      _
    $region107: #{simrec_forward.7} parent=1 // pred_check_branch
      %7326 = sbr.rel (0) target = $region109
    $region108: #{simrec_forward.7} parent=1 // pred_region
      _
    $region109: #{simrec_forward.7} parent=1 // pred_fallthru
      _
    %7327 = vsyncpa [#allocation4], 1

</llo_original>
